<compile_context>
chip_gen: v5e
topology: v5e:2x2
jax: 0.10.0
libtpu: 0.0.40
codegen_flags: <defaults>
</compile_context>

<pallas_src>
import functools

import jax
import jax.numpy as jnp
from jax.experimental import pallas as pl
from jax.experimental.pallas import tpu as pltpu

EPS = 1e-5  # nn.BatchNorm2d default eps
_VMEM_LIMIT = 32 * 1024 * 1024  # safe on v5e/v6e/v7x; working set per step is ~2 MiB


def _round_up(x, m):
    return (x + m - 1) // m * m


def _m_tiling(M):
    """Pick a lane-friendly tile along M.  Returns (tile_m, padded_M)."""
    for t in (512, 256, 128):
        if M % t == 0:
            return t, M
    if M <= 512:
        return M, M          # small layer: one full-extent block (allowed by Pallas)
    Mp = _round_up(M, 512)
    return 512, Mp


# ---------------------------------------------------------------------------
# Pallas kernels
# ---------------------------------------------------------------------------
def _conv_bn_kernel(w_ref, s_ref, b_ref, p_ref, o_ref, *, relu):
    # w: [Cout, K] bf16, p: [K, TILE_M] bf16, s/b: [Cout, 1] f32 -> out [Cout, TILE_M] f32
    acc = jnp.dot(w_ref[...], p_ref[...], preferred_element_type=jnp.float32)
    y = acc * s_ref[...] + b_ref[...]
    if relu:
        y = jnp.maximum(y, 0.0)
    o_ref[...] = y.astype(o_ref.dtype)


def _conv_bn_res_kernel(w_ref, s_ref, b_ref, p_ref, r_ref, o_ref, *, relu):
    # same as above + residual add (pre-ReLU), residual in f32
    acc = jnp.dot(w_ref[...], p_ref[...], preferred_element_type=jnp.float32)
    y = acc * s_ref[...] + b_ref[...] + r_ref[...]
    if relu:
        y = jnp.maximum(y, 0.0)
    o_ref[...] = y.astype(o_ref.dtype)


def _pool_fc_kernel(x_ref, w_ref, b_ref, o_ref):
    # x: [C, N, HW] f32, w: [ncls, C] f32, b: [ncls, 1] f32 -> out [ncls, N]
    pooled = jnp.mean(x_ref[...], axis=-1)                       # [C, N]
    y = jnp.dot(w_ref[...], pooled, preferred_element_type=jnp.float32) + b_ref[...]
    o_ref[...] = y.astype(o_ref.dtype)


# ---------------------------------------------------------------------------
# Fused conv matmul wrapper (tiled over M, parallel grid)
# ---------------------------------------------------------------------------
def _fused_conv_matmul(lp, patches_t, residual, relu):
    wt, scale, bias = lp["wt"], lp["scale"], lp["bias"]
    Cout, Kp = wt.shape
    K, M = patches_t.shape
    if Kp > K:
        patches_t = jnp.pad(patches_t, ((0, Kp - K), (0, 0)))
    tm, Mp = _m_tiling(M)
    if Mp > M:
        patches_t = jnp.pad(patches_t, ((0, 0), (0, Mp - M)))
        if residual is not None:
            residual = jnp.pad(residual, ((0, 0), (0, Mp - M)))

    w_spec = pl.BlockSpec((Cout, Kp), lambda i: (0, 0))
    v_spec = pl.BlockSpec((Cout, 1), lambda i: (0, 0))
    p_spec = pl.BlockSpec((Kp, tm), lambda i: (0, i))
    o_spec = pl.BlockSpec((Cout, tm), lambda i: (0, i))

    if residual is None:
        kern = functools.partial(_conv_bn_kernel, relu=relu)
        in_specs = [w_spec, v_spec, v_spec, p_spec]
        args = (wt, scale, bias, patches_t)
    else:
        kern = functools.partial(_conv_bn_res_kernel, relu=relu)
        in_specs = [w_spec, v_spec, v_spec, p_spec,
                    pl.BlockSpec((Cout, tm), lambda i: (0, i))]
        args = (wt, scale, bias, patches_t, residual)

    out = pl.pallas_call(
        kern,
        out_shape=jax.ShapeDtypeStruct((Cout, Mp), jnp.float32),
        grid=(Mp // tm,),
        in_specs=in_specs,
        out_specs=o_spec,
        compiler_params=pltpu.CompilerParams(
            dimension_semantics=("parallel",),
            vmem_limit_bytes=_VMEM_LIMIT,
        ),
    )(*args)
    if Mp > M:
        out = out[:, :M]
    return out


# ---------------------------------------------------------------------------
# JAX glue: transposed im2col, conv+bn wrapper, pool+fc wrapper
# ---------------------------------------------------------------------------
def _im2col_t(x_cnhw, kh, kw, stride, pad):
    """Channels-first im2col producing bf16 patches [K, N*Ho*Wo], K order (kh, kw, C)."""
    x = x_cnhw.astype(jnp.bfloat16)
    C, N, H, W = x.shape
    if pad:
        x = jnp.pad(x, ((0, 0), (0, 0), (pad, pad), (pad, pad)))
    Hp, Wp = H + 2 * pad, W + 2 * pad
    Ho = (Hp - kh) // stride + 1
    Wo = (Wp - kw) // stride + 1
    rows = []
    for i in range(kh):
        for j in range(kw):
            rows.append(x[:, :, i:i + stride * Ho:stride, j:j + stride * Wo:stride])
    pt = jnp.concatenate(rows, axis=0)          # [kh*kw*C, N, Ho, Wo]
    return pt.reshape(kh * kw * C, N * Ho * Wo), Ho, Wo


def conv_bn(x_cm, shp, lp, stride, pad, relu, residual=None):
    """QuantizePowerConv2d (qbit=0 => plain conv) + BatchNorm2d (+residual) (+ReLU)."""
    C, N, H, W = shp
    pt, Ho, Wo = _im2col_t(x_cm.reshape(C, N, H, W), lp["kh"], lp["kw"], stride, pad)
    out = _fused_conv_matmul(lp, pt, residual, relu)      # [Cout, N*Ho*Wo] f32
    Cout = lp["wt"].shape[0]
    return out, (Cout, N, Ho, Wo)


def pool_fc(x_cm, shp, fcp):
    C, N, H, W = shp
    assert H == 4 and W == 4, "AvgPool2d(4,4) here assumes the final 4x4 feature map"
    HW = H * W
    x3 = x_cm.reshape(C, N, HW)
    w, b = fcp["w"], fcp["b"]                              # [ncls, C], [ncls, 1]
    ncls = w.shape[0]
    out = pl.pallas_call(
        _pool_fc_kernel,
        out_shape=jax.ShapeDtypeStruct((ncls, N), jnp.float32),
        grid=(1,),
        in_specs=[pl.BlockSpec((C, N, HW), lambda i: (0, 0, 0)),
                  pl.BlockSpec((ncls, C), lambda i: (0, 0)),
                  pl.BlockSpec((ncls, 1), lambda i: (0, 0))],
        out_specs=pl.BlockSpec((ncls, N), lambda i: (0, 0)),
        compiler_params=pltpu.CompilerParams(vmem_limit_bytes=_VMEM_LIMIT),
    )(x3, w, b)
    return out.T                                           # [N, ncls]


# ---------------------------------------------------------------------------
# Parameters: raw deterministic init + one-time preprocessing (BN fold, transpose, bf16)
# ---------------------------------------------------------------------------
def _init_conv_bn(key, cin, cout, k):
    ks = jax.random.split(key, 6)
    std = 1.0 / jnp.sqrt(float(cin * k * k))
    return {
        "w": jax.random.normal(ks[0], (cout, cin, k, k), jnp.float32) * std,
        "b": jax.random.normal(ks[1], (cout,), jnp.float32) * 0.05,
        "gamma": 1.0 + 0.1 * jax.random.normal(ks[2], (cout,), jnp.float32),
        "beta": 0.1 * jax.random.normal(ks[3], (cout,), jnp.float32),
        "mean": 0.1 * jax.random.normal(ks[4], (cout,), jnp.float32),
        "var": 0.5 + jax.random.uniform(ks[5], (cout,), jnp.float32),
    }


def init_params(key, num_classes):
    layer_defs = [
        ("conv1", 3, 16, 3),
        ("conv2a_1", 16, 16, 3), ("conv2a_2", 16, 16, 3),
        ("conv2b_1", 16, 16, 3), ("conv2b_2", 16, 16, 3),
        ("conv3a_1", 16, 16, 3), ("conv3a_2", 16, 16, 3), ("conv3a_3", 16, 16, 1),
        ("conv3b_1", 16, 16, 3), ("conv3b_2", 16, 16, 3),
        ("conv4a_1", 16, 32, 3), ("conv4a_2", 32, 32, 3), ("conv4a_3", 16, 32, 1),
        ("conv4b_1", 32, 32, 3), ("conv4b_2", 32, 32, 3),
        ("conv5a_1", 32, 64, 3), ("conv5a_2", 64, 64, 3), ("conv5a_3", 32, 64, 1),
        ("conv5b_1", 64, 64, 3), ("conv5b_2", 64, 64, 3),
    ]
    keys = jax.random.split(key, len(layer_defs) + 2)
    params = {}
    for (name, cin, cout, k), kk in zip(layer_defs, keys[:len(layer_defs)]):
        params[name] = _init_conv_bn(kk, cin, cout, k)
    params["fc_w"] = jax.random.normal(keys[-2], (num_classes, 64), jnp.float32) * (1.0 / 8.0)
    params["fc_b"] = jax.random.normal(keys[-1], (num_classes,), jnp.float32) * 0.05
    return params


def _fold_layer(raw):
    """Fold conv bias + BN into per-channel affine; pre-transpose weight to [Cout, K] bf16."""
    w, cb = raw["w"], raw["b"]
    Cout, Cin, kh, kw = w.shape
    scale = raw["gamma"] / jnp.sqrt(raw["var"] + EPS)
    bias = raw["beta"] + scale * (cb - raw["mean"])
    K = kh * kw * Cin
    wt = jnp.transpose(w, (0, 2, 3, 1)).reshape(Cout, K)   # K order (kh, kw, Cin)
    Kp = _round_up(K, 16)                                   # bf16 sublane-pair friendly
    if Kp > K:
        wt = jnp.pad(wt, ((0, 0), (0, Kp - K)))
    return {
        "wt": wt.astype(jnp.bfloat16),
        "scale": scale.reshape(Cout, 1).astype(jnp.float32),
        "bias": bias.reshape(Cout, 1).astype(jnp.float32),
        "kh": kh, "kw": kw,
    }


def preprocess_params(raw):
    params = {}
    for name, lp in raw.items():
        if name in ("fc_w", "fc_b"):
            continue
        params[name] = _fold_layer(lp)
    params["fc"] = {
        "w": raw["fc_w"].astype(jnp.float32),
        "b": raw["fc_b"].reshape(-1, 1).astype(jnp.float32),
    }
    return params


# ---------------------------------------------------------------------------
# Forward pass (mirrors ResNet18.forward)
# ---------------------------------------------------------------------------
def resnet18_forward(params, x_nchw):
    # TODO(synk): QuantizePowerConv2d's power accounting / power-of-two quantization
    # has no effect with qbit=0; `power` is returned as the zeros(1) the module creates.
    x = jnp.transpose(x_nchw, (1, 0, 2, 3)).astype(jnp.float32)   # NCHW -> [C, N, H, W]
    C, N, H, W = x.shape
    xf, shp = x.reshape(C, N * H * W), (C, N, H, W)

    # conv1 + bn1 + relu1
    xf, shp = conv_bn(xf, shp, params["conv1"], 1, 1, relu=True)

    # stage 2: two identity residual blocks (16 -> 16)
    for blk in ("2a", "2b"):
        x1, s1 = conv_bn(xf, shp, params[f"conv{blk}_1"], 1, 1, relu=True)
        xf, shp = conv_bn(x1, s1, params[f"conv{blk}_2"], 1, 1, relu=True, residual=xf)

    # stages 3, 4, 5: first block downsamples (stride 2) with a 1x1 projection shortcut
    for stage in ("3", "4", "5"):
        x1, s1 = conv_bn(xf, shp, params[f"conv{stage}a_1"], 2, 1, relu=True)
        x3, _s3 = conv_bn(xf, shp, params[f"conv{stage}a_3"], 2, 0, relu=False)
        xf, shp = conv_bn(x1, s1, params[f"conv{stage}a_2"], 1, 1, relu=True, residual=x3)
        x1, s1 = conv_bn(xf, shp, params[f"conv{stage}b_1"], 1, 1, relu=True)
        xf, shp = conv_bn(x1, s1, params[f"conv{stage}b_2"], 1, 1, relu=True, residual=xf)

    logits = pool_fc(xf, shp, params["fc"])
    power = jnp.zeros((1,), jnp.float32)
    return logits, power


if __name__ == "__main__":
    key = jax.random.PRNGKey(0)
    pkey, xkey = jax.random.split(key)
    num_classes = 10
    raw_params = init_params(pkey, num_classes)
    params = preprocess_params(raw_params)          # one-time BN fold / transpose / bf16
    # CIFAR-style input implied by the architecture (avg_pool(4) needs 4x4 final maps)
    x = jax.random.normal(xkey, (2, 3, 32, 32), jnp.float32)  # NCHW like PyTorch
    fwd = jax.jit(functools.partial(resnet18_forward, params))
    logits, power = fwd(x)
    jax.block_until_ready((logits, power))
    assert logits.shape == (2, num_classes) and power.shape == (1,)
    print("KERNEL_OK")
</pallas_src>

<mosaic_0001>
module attributes {stable_mosaic.version = 11 : i64} {
  func.func @_conv_bn_kernel(%arg0: i32, %arg1: memref<16x32xbf16, #tpu.memory_space<vmem>>, %arg2: memref<16x1xf32, #tpu.memory_space<vmem>>, %arg3: memref<16x1xf32, #tpu.memory_space<vmem>>, %arg4: memref<32x512xbf16, #tpu.memory_space<vmem>>, %arg5: memref<16x512xf32, #tpu.memory_space<vmem>>) attributes {dimension_semantics = [#tpu.dimension_semantics<parallel>], iteration_bounds = array<i64: 4>, scalar_prefetch = 0 : i64, scratch_operands = 0 : i64, tpu.core_type = #tpu.core_type<tc>, window_params = [{pipeline_mode = #tpu.pipeline_mode<synchronous>, transform_indices = @transform_0, window_bounds = array<i64: 16, 32>}, {pipeline_mode = #tpu.pipeline_mode<synchronous>, transform_indices = @transform_1, window_bounds = array<i64: 16, 1>}, {pipeline_mode = #tpu.pipeline_mode<synchronous>, transform_indices = @transform_2, window_bounds = array<i64: 16, 1>}, {transform_indices = @transform_3, window_bounds = array<i64: 32, 512>}, {transform_indices = @transform_4, window_bounds = array<i64: 16, 512>}]} {
    %c0 = arith.constant 0 : index
    %c0_0 = arith.constant 0 : index
    %0 = vector.load %arg1[%c0, %c0_0] : memref<16x32xbf16, #tpu.memory_space<vmem>>, vector<16x32xbf16>
    %c0_1 = arith.constant 0 : index
    %c0_2 = arith.constant 0 : index
    %1 = vector.load %arg4[%c0_1, %c0_2] : memref<32x512xbf16, #tpu.memory_space<vmem>>, vector<32x512xbf16>
    %cst = arith.constant dense<0.000000e+00> : vector<16x512xf32>
    %2 = tpu.matmul %0, %1, %cst {dimension_numbers = #tpu.dot_dimension_numbers<[1], [0], [0], [1], [0, 0, 1, 1], [], []>} : vector<16x32xbf16>, vector<32x512xbf16>, vector<16x512xf32> -> vector<16x512xf32>
    %c0_3 = arith.constant 0 : index
    %c0_4 = arith.constant 0 : index
    %3 = vector.load %arg2[%c0_3, %c0_4] : memref<16x1xf32, #tpu.memory_space<vmem>>, vector<16x1xf32>
    %4 = vector.broadcast %3 : vector<16x1xf32> to vector<16x512xf32>
    %5 = arith.mulf %2, %4 : vector<16x512xf32>
    %c0_5 = arith.constant 0 : index
    %c0_6 = arith.constant 0 : index
    %6 = vector.load %arg3[%c0_5, %c0_6] : memref<16x1xf32, #tpu.memory_space<vmem>>, vector<16x1xf32>
    %7 = vector.broadcast %6 : vector<16x1xf32> to vector<16x512xf32>
    %8 = arith.addf %5, %7 : vector<16x512xf32>
    %cst_7 = arith.constant 0.000000e+00 : f32
    %9 = vector.broadcast %cst_7 : f32 to vector<16x512xf32>
    %10 = arith.maximumf %8, %9 : vector<16x512xf32>
    %c0_8 = arith.constant 0 : index
    %c0_9 = arith.constant 0 : index
    %11 = vector.load %arg5[%c0_8, %c0_9] : memref<16x512xf32, #tpu.memory_space<vmem>>, vector<16x512xf32>
    tpu.vector_store %arg5[%c0_8, %c0_9], %10 {strides = array<i32>} : memref<16x512xf32, #tpu.memory_space<vmem>>, vector<16x512xf32>,
    return
  }
  func.func @transform_0(%arg0: i32) -> (i32, i32) {
    %c0_i32 = arith.constant 0 : i32
    %c0_i32_0 = arith.constant 0 : i32
    %c0_i32_1 = arith.constant 0 : i32
    return %c0_i32, %c0_i32_0 : i32, i32
  }
  func.func @transform_1(%arg0: i32) -> (i32, i32) {
    %c0_i32 = arith.constant 0 : i32
    %c0_i32_0 = arith.constant 0 : i32
    %c0_i32_1 = arith.constant 0 : i32
    return %c0_i32, %c0_i32_0 : i32, i32
  }
  func.func @transform_2(%arg0: i32) -> (i32, i32) {
    %c0_i32 = arith.constant 0 : i32
    %c0_i32_0 = arith.constant 0 : i32
    %c0_i32_1 = arith.constant 0 : i32
    return %c0_i32, %c0_i32_0 : i32, i32
  }
  func.func @transform_3(%arg0: i32) -> (i32, i32) {
    %c0_i32 = arith.constant 0 : i32
    %c0_i32_0 = arith.constant 0 : i32
    return %c0_i32, %arg0 : i32, i32
  }
  func.func @transform_4(%arg0: i32) -> (i32, i32) {
    %c0_i32 = arith.constant 0 : i32
    %c0_i32_0 = arith.constant 0 : i32
    return %c0_i32, %arg0 : i32, i32
  }
}

module attributes {stable_mosaic.version = 11 : i64} {
  func.func @_conv_bn_kernel(%arg0: i32, %arg1: memref<16x144xbf16, #tpu.memory_space<vmem>>, %arg2: memref<16x1xf32, #tpu.memory_space<vmem>>, %arg3: memref<16x1xf32, #tpu.memory_space<vmem>>, %arg4: memref<144x512xbf16, #tpu.memory_space<vmem>>, %arg5: memref<16x512xf32, #tpu.memory_space<vmem>>) attributes {dimension_semantics = [#tpu.dimension_semantics<parallel>], iteration_bounds = array<i64: 4>, scalar_prefetch = 0 : i64, scratch_operands = 0 : i64, tpu.core_type = #tpu.core_type<tc>, window_params = [{pipeline_mode = #tpu.pipeline_mode<synchronous>, transform_indices = @transform_0, window_bounds = array<i64: 16, 144>}, {pipeline_mode = #tpu.pipeline_mode<synchronous>, transform_indices = @transform_1, window_bounds = array<i64: 16, 1>}, {pipeline_mode = #tpu.pipeline_mode<synchronous>, transform_indices = @transform_2, window_bounds = array<i64: 16, 1>}, {transform_indices = @transform_3, window_bounds = array<i64: 144, 512>}, {transform_indices = @transform_4, window_bounds = array<i64: 16, 512>}]} {
    %c0 = arith.constant 0 : index
    %c0_0 = arith.constant 0 : index
    %0 = vector.load %arg1[%c0, %c0_0] : memref<16x144xbf16, #tpu.memory_space<vmem>>, vector<16x144xbf16>
    %c0_1 = arith.constant 0 : index
    %c0_2 = arith.constant 0 : index
    %1 = vector.load %arg4[%c0_1, %c0_2] : memref<144x512xbf16, #tpu.memory_space<vmem>>, vector<144x512xbf16>
    %cst = arith.constant dense<0.000000e+00> : vector<16x512xf32>
    %2 = tpu.matmul %0, %1, %cst {dimension_numbers = #tpu.dot_dimension_numbers<[1], [0], [0], [1], [0, 0, 1, 1], [], []>} : vector<16x144xbf16>, vector<144x512xbf16>, vector<16x512xf32> -> vector<16x512xf32>
    %c0_3 = arith.constant 0 : index
    %c0_4 = arith.constant 0 : index
    %3 = vector.load %arg2[%c0_3, %c0_4] : memref<16x1xf32, #tpu.memory_space<vmem>>, vector<16x1xf32>
    %4 = vector.broadcast %3 : vector<16x1xf32> to vector<16x512xf32>
    %5 = arith.mulf %2, %4 : vector<16x512xf32>
    %c0_5 = arith.constant 0 : index
    %c0_6 = arith.constant 0 : index
    %6 = vector.load %arg3[%c0_5, %c0_6] : memref<16x1xf32, #tpu.memory_space<vmem>>, vector<16x1xf32>
    %7 = vector.broadcast %6 : vector<16x1xf32> to vector<16x512xf32>
    %8 = arith.addf %5, %7 : vector<16x512xf32>
    %cst_7 = arith.constant 0.000000e+00 : f32
    %9 = vector.broadcast %cst_7 : f32 to vector<16x512xf32>
    %10 = arith.maximumf %8, %9 : vector<16x512xf32>
    %c0_8 = arith.constant 0 : index
    %c0_9 = arith.constant 0 : index
    %11 = vector.load %arg5[%c0_8, %c0_9] : memref<16x512xf32, #tpu.memory_space<vmem>>, vector<16x512xf32>
    tpu.vector_store %arg5[%c0_8, %c0_9], %10 {strides = array<i32>} : memref<16x512xf32, #tpu.memory_space<vmem>>, vector<16x512xf32>,
    return
  }
  func.func @transform_0(%arg0: i32) -> (i32, i32) {
    %c0_i32 = arith.constant 0 : i32
    %c0_i32_0 = arith.constant 0 : i32
    %c0_i32_1 = arith.constant 0 : i32
    return %c0_i32, %c0_i32_0 : i32, i32
  }
  func.func @transform_1(%arg0: i32) -> (i32, i32) {
    %c0_i32 = arith.constant 0 : i32
    %c0_i32_0 = arith.constant 0 : i32
    %c0_i32_1 = arith.constant 0 : i32
    return %c0_i32, %c0_i32_0 : i32, i32
  }
  func.func @transform_2(%arg0: i32) -> (i32, i32) {
    %c0_i32 = arith.constant 0 : i32
    %c0_i32_0 = arith.constant 0 : i32
    %c0_i32_1 = arith.constant 0 : i32
    return %c0_i32, %c0_i32_0 : i32, i32
  }
  func.func @transform_3(%arg0: i32) -> (i32, i32) {
    %c0_i32 = arith.constant 0 : i32
    %c0_i32_0 = arith.constant 0 : i32
    return %c0_i32, %arg0 : i32, i32
  }
  func.func @transform_4(%arg0: i32) -> (i32, i32) {
    %c0_i32 = arith.constant 0 : i32
    %c0_i32_0 = arith.constant 0 : i32
    return %c0_i32, %arg0 : i32, i32
  }
}

module attributes {stable_mosaic.version = 11 : i64} {
  func.func @_conv_bn_res_kernel(%arg0: i32, %arg1: memref<16x144xbf16, #tpu.memory_space<vmem>>, %arg2: memref<16x1xf32, #tpu.memory_space<vmem>>, %arg3: memref<16x1xf32, #tpu.memory_space<vmem>>, %arg4: memref<144x512xbf16, #tpu.memory_space<vmem>>, %arg5: memref<16x512xf32, #tpu.memory_space<vmem>>, %arg6: memref<16x512xf32, #tpu.memory_space<vmem>>) attributes {dimension_semantics = [#tpu.dimension_semantics<parallel>], iteration_bounds = array<i64: 4>, scalar_prefetch = 0 : i64, scratch_operands = 0 : i64, tpu.core_type = #tpu.core_type<tc>, window_params = [{pipeline_mode = #tpu.pipeline_mode<synchronous>, transform_indices = @transform_0, window_bounds = array<i64: 16, 144>}, {pipeline_mode = #tpu.pipeline_mode<synchronous>, transform_indices = @transform_1, window_bounds = array<i64: 16, 1>}, {pipeline_mode = #tpu.pipeline_mode<synchronous>, transform_indices = @transform_2, window_bounds = array<i64: 16, 1>}, {transform_indices = @transform_3, window_bounds = array<i64: 144, 512>}, {transform_indices = @transform_4, window_bounds = array<i64: 16, 512>}, {transform_indices = @transform_5, window_bounds = array<i64: 16, 512>}]} {
    %c0 = arith.constant 0 : index
    %c0_0 = arith.constant 0 : index
    %0 = vector.load %arg1[%c0, %c0_0] : memref<16x144xbf16, #tpu.memory_space<vmem>>, vector<16x144xbf16>
    %c0_1 = arith.constant 0 : index
    %c0_2 = arith.constant 0 : index
    %1 = vector.load %arg4[%c0_1, %c0_2] : memref<144x512xbf16, #tpu.memory_space<vmem>>, vector<144x512xbf16>
    %cst = arith.constant dense<0.000000e+00> : vector<16x512xf32>
    %2 = tpu.matmul %0, %1, %cst {dimension_numbers = #tpu.dot_dimension_numbers<[1], [0], [0], [1], [0, 0, 1, 1], [], []>} : vector<16x144xbf16>, vector<144x512xbf16>, vector<16x512xf32> -> vector<16x512xf32>
    %c0_3 = arith.constant 0 : index
    %c0_4 = arith.constant 0 : index
    %3 = vector.load %arg2[%c0_3, %c0_4] : memref<16x1xf32, #tpu.memory_space<vmem>>, vector<16x1xf32>
    %4 = vector.broadcast %3 : vector<16x1xf32> to vector<16x512xf32>
    %5 = arith.mulf %2, %4 : vector<16x512xf32>
    %c0_5 = arith.constant 0 : index
    %c0_6 = arith.constant 0 : index
    %6 = vector.load %arg3[%c0_5, %c0_6] : memref<16x1xf32, #tpu.memory_space<vmem>>, vector<16x1xf32>
    %7 = vector.broadcast %6 : vector<16x1xf32> to vector<16x512xf32>
    %8 = arith.addf %5, %7 : vector<16x512xf32>
    %c0_7 = arith.constant 0 : index
    %c0_8 = arith.constant 0 : index
    %9 = vector.load %arg5[%c0_7, %c0_8] : memref<16x512xf32, #tpu.memory_space<vmem>>, vector<16x512xf32>
    %10 = arith.addf %8, %9 : vector<16x512xf32>
    %cst_9 = arith.constant 0.000000e+00 : f32
    %11 = vector.broadcast %cst_9 : f32 to vector<16x512xf32>
    %12 = arith.maximumf %10, %11 : vector<16x512xf32>
    %c0_10 = arith.constant 0 : index
    %c0_11 = arith.constant 0 : index
    %13 = vector.load %arg6[%c0_10, %c0_11] : memref<16x512xf32, #tpu.memory_space<vmem>>, vector<16x512xf32>
    tpu.vector_store %arg6[%c0_10, %c0_11], %12 {strides = array<i32>} : memref<16x512xf32, #tpu.memory_space<vmem>>, vector<16x512xf32>,
    return
  }
  func.func @transform_0(%arg0: i32) -> (i32, i32) {
    %c0_i32 = arith.constant 0 : i32
    %c0_i32_0 = arith.constant 0 : i32
    %c0_i32_1 = arith.constant 0 : i32
    return %c0_i32, %c0_i32_0 : i32, i32
  }
  func.func @transform_1(%arg0: i32) -> (i32, i32) {
    %c0_i32 = arith.constant 0 : i32
    %c0_i32_0 = arith.constant 0 : i32
    %c0_i32_1 = arith.constant 0 : i32
    return %c0_i32, %c0_i32_0 : i32, i32
  }
  func.func @transform_2(%arg0: i32) -> (i32, i32) {
    %c0_i32 = arith.constant 0 : i32
    %c0_i32_0 = arith.constant 0 : i32
    %c0_i32_1 = arith.constant 0 : i32
    return %c0_i32, %c0_i32_0 : i32, i32
  }
  func.func @transform_3(%arg0: i32) -> (i32, i32) {
    %c0_i32 = arith.constant 0 : i32
    %c0_i32_0 = arith.constant 0 : i32
    return %c0_i32, %arg0 : i32, i32
  }
  func.func @transform_4(%arg0: i32) -> (i32, i32) {
    %c0_i32 = arith.constant 0 : i32
    %c0_i32_0 = arith.constant 0 : i32
    return %c0_i32, %arg0 : i32, i32
  }
  func.func @transform_5(%arg0: i32) -> (i32, i32) {
    %c0_i32 = arith.constant 0 : i32
    %c0_i32_0 = arith.constant 0 : i32
    return %c0_i32, %arg0 : i32, i32
  }
}

module attributes {stable_mosaic.version = 11 : i64} {
  func.func @_conv_bn_kernel(%arg0: i32, %arg1: memref<16x144xbf16, #tpu.memory_space<vmem>>, %arg2: memref<16x1xf32, #tpu.memory_space<vmem>>, %arg3: memref<16x1xf32, #tpu.memory_space<vmem>>, %arg4: memref<144x512xbf16, #tpu.memory_space<vmem>>, %arg5: memref<16x512xf32, #tpu.memory_space<vmem>>) attributes {dimension_semantics = [#tpu.dimension_semantics<parallel>], iteration_bounds = array<i64: 1>, scalar_prefetch = 0 : i64, scratch_operands = 0 : i64, tpu.core_type = #tpu.core_type<tc>, window_params = [{pipeline_mode = #tpu.pipeline_mode<synchronous>, transform_indices = @transform_0, window_bounds = array<i64: 16, 144>}, {pipeline_mode = #tpu.pipeline_mode<synchronous>, transform_indices = @transform_1, window_bounds = array<i64: 16, 1>}, {pipeline_mode = #tpu.pipeline_mode<synchronous>, transform_indices = @transform_2, window_bounds = array<i64: 16, 1>}, {transform_indices = @transform_3, window_bounds = array<i64: 144, 512>}, {transform_indices = @transform_4, window_bounds = array<i64: 16, 512>}]} {
    %c0 = arith.constant 0 : index
    %c0_0 = arith.constant 0 : index
    %0 = vector.load %arg1[%c0, %c0_0] : memref<16x144xbf16, #tpu.memory_space<vmem>>, vector<16x144xbf16>
    %c0_1 = arith.constant 0 : index
    %c0_2 = arith.constant 0 : index
    %1 = vector.load %arg4[%c0_1, %c0_2] : memref<144x512xbf16, #tpu.memory_space<vmem>>, vector<144x512xbf16>
    %cst = arith.constant dense<0.000000e+00> : vector<16x512xf32>
    %2 = tpu.matmul %0, %1, %cst {dimension_numbers = #tpu.dot_dimension_numbers<[1], [0], [0], [1], [0, 0, 1, 1], [], []>} : vector<16x144xbf16>, vector<144x512xbf16>, vector<16x512xf32> -> vector<16x512xf32>
    %c0_3 = arith.constant 0 : index
    %c0_4 = arith.constant 0 : index
    %3 = vector.load %arg2[%c0_3, %c0_4] : memref<16x1xf32, #tpu.memory_space<vmem>>, vector<16x1xf32>
    %4 = vector.broadcast %3 : vector<16x1xf32> to vector<16x512xf32>
    %5 = arith.mulf %2, %4 : vector<16x512xf32>
    %c0_5 = arith.constant 0 : index
    %c0_6 = arith.constant 0 : index
    %6 = vector.load %arg3[%c0_5, %c0_6] : memref<16x1xf32, #tpu.memory_space<vmem>>, vector<16x1xf32>
    %7 = vector.broadcast %6 : vector<16x1xf32> to vector<16x512xf32>
    %8 = arith.addf %5, %7 : vector<16x512xf32>
    %cst_7 = arith.constant 0.000000e+00 : f32
    %9 = vector.broadcast %cst_7 : f32 to vector<16x512xf32>
    %10 = arith.maximumf %8, %9 : vector<16x512xf32>
    %c0_8 = arith.constant 0 : index
    %c0_9 = arith.constant 0 : index
    %11 = vector.load %arg5[%c0_8, %c0_9] : memref<16x512xf32, #tpu.memory_space<vmem>>, vector<16x512xf32>
    tpu.vector_store %arg5[%c0_8, %c0_9], %10 {strides = array<i32>} : memref<16x512xf32, #tpu.memory_space<vmem>>, vector<16x512xf32>,
    return
  }
  func.func @transform_0(%arg0: i32) -> (i32, i32) {
    %c0_i32 = arith.constant 0 : i32
    %c0_i32_0 = arith.constant 0 : i32
    %c0_i32_1 = arith.constant 0 : i32
    return %c0_i32, %c0_i32_0 : i32, i32
  }
  func.func @transform_1(%arg0: i32) -> (i32, i32) {
    %c0_i32 = arith.constant 0 : i32
    %c0_i32_0 = arith.constant 0 : i32
    %c0_i32_1 = arith.constant 0 : i32
    return %c0_i32, %c0_i32_0 : i32, i32
  }
  func.func @transform_2(%arg0: i32) -> (i32, i32) {
    %c0_i32 = arith.constant 0 : i32
    %c0_i32_0 = arith.constant 0 : i32
    %c0_i32_1 = arith.constant 0 : i32
    return %c0_i32, %c0_i32_0 : i32, i32
  }
  func.func @transform_3(%arg0: i32) -> (i32, i32) {
    %c0_i32 = arith.constant 0 : i32
    %c0_i32_0 = arith.constant 0 : i32
    return %c0_i32, %arg0 : i32, i32
  }
  func.func @transform_4(%arg0: i32) -> (i32, i32) {
    %c0_i32 = arith.constant 0 : i32
    %c0_i32_0 = arith.constant 0 : i32
    return %c0_i32, %arg0 : i32, i32
  }
}

module attributes {stable_mosaic.version = 11 : i64} {
  func.func @_conv_bn_kernel(%arg0: i32, %arg1: memref<16x16xbf16, #tpu.memory_space<vmem>>, %arg2: memref<16x1xf32, #tpu.memory_space<vmem>>, %arg3: memref<16x1xf32, #tpu.memory_space<vmem>>, %arg4: memref<16x512xbf16, #tpu.memory_space<vmem>>, %arg5: memref<16x512xf32, #tpu.memory_space<vmem>>) attributes {dimension_semantics = [#tpu.dimension_semantics<parallel>], iteration_bounds = array<i64: 1>, scalar_prefetch = 0 : i64, scratch_operands = 0 : i64, tpu.core_type = #tpu.core_type<tc>, window_params = [{pipeline_mode = #tpu.pipeline_mode<synchronous>, transform_indices = @transform_0, window_bounds = array<i64: 16, 16>}, {pipeline_mode = #tpu.pipeline_mode<synchronous>, transform_indices = @transform_1, window_bounds = array<i64: 16, 1>}, {pipeline_mode = #tpu.pipeline_mode<synchronous>, transform_indices = @transform_2, window_bounds = array<i64: 16, 1>}, {transform_indices = @transform_3, window_bounds = array<i64: 16, 512>}, {transform_indices = @transform_4, window_bounds = array<i64: 16, 512>}]} {
    %c0 = arith.constant 0 : index
    %c0_0 = arith.constant 0 : index
    %0 = vector.load %arg1[%c0, %c0_0] : memref<16x16xbf16, #tpu.memory_space<vmem>>, vector<16x16xbf16>
    %c0_1 = arith.constant 0 : index
    %c0_2 = arith.constant 0 : index
    %1 = vector.load %arg4[%c0_1, %c0_2] : memref<16x512xbf16, #tpu.memory_space<vmem>>, vector<16x512xbf16>
    %cst = arith.constant dense<0.000000e+00> : vector<16x512xf32>
    %2 = tpu.matmul %0, %1, %cst {dimension_numbers = #tpu.dot_dimension_numbers<[1], [0], [0], [1], [0, 0, 1, 1], [], []>} : vector<16x16xbf16>, vector<16x512xbf16>, vector<16x512xf32> -> vector<16x512xf32>
    %c0_3 = arith.constant 0 : index
    %c0_4 = arith.constant 0 : index
    %3 = vector.load %arg2[%c0_3, %c0_4] : memref<16x1xf32, #tpu.memory_space<vmem>>, vector<16x1xf32>
    %4 = vector.broadcast %3 : vector<16x1xf32> to vector<16x512xf32>
    %5 = arith.mulf %2, %4 : vector<16x512xf32>
    %c0_5 = arith.constant 0 : index
    %c0_6 = arith.constant 0 : index
    %6 = vector.load %arg3[%c0_5, %c0_6] : memref<16x1xf32, #tpu.memory_space<vmem>>, vector<16x1xf32>
    %7 = vector.broadcast %6 : vector<16x1xf32> to vector<16x512xf32>
    %8 = arith.addf %5, %7 : vector<16x512xf32>
    %c0_7 = arith.constant 0 : index
    %c0_8 = arith.constant 0 : index
    %9 = vector.load %arg5[%c0_7, %c0_8] : memref<16x512xf32, #tpu.memory_space<vmem>>, vector<16x512xf32>
    tpu.vector_store %arg5[%c0_7, %c0_8], %8 {strides = array<i32>} : memref<16x512xf32, #tpu.memory_space<vmem>>, vector<16x512xf32>,
    return
  }
  func.func @transform_0(%arg0: i32) -> (i32, i32) {
    %c0_i32 = arith.constant 0 : i32
    %c0_i32_0 = arith.constant 0 : i32
    %c0_i32_1 = arith.constant 0 : i32
    return %c0_i32, %c0_i32_0 : i32, i32
  }
  func.func @transform_1(%arg0: i32) -> (i32, i32) {
    %c0_i32 = arith.constant 0 : i32
    %c0_i32_0 = arith.constant 0 : i32
    %c0_i32_1 = arith.constant 0 : i32
    return %c0_i32, %c0_i32_0 : i32, i32
  }
  func.func @transform_2(%arg0: i32) -> (i32, i32) {
    %c0_i32 = arith.constant 0 : i32
    %c0_i32_0 = arith.constant 0 : i32
    %c0_i32_1 = arith.constant 0 : i32
    return %c0_i32, %c0_i32_0 : i32, i32
  }
  func.func @transform_3(%arg0: i32) -> (i32, i32) {
    %c0_i32 = arith.constant 0 : i32
    %c0_i32_0 = arith.constant 0 : i32
    return %c0_i32, %arg0 : i32, i32
  }
  func.func @transform_4(%arg0: i32) -> (i32, i32) {
    %c0_i32 = arith.constant 0 : i32
    %c0_i32_0 = arith.constant 0 : i32
    return %c0_i32, %arg0 : i32, i32
  }
}

module attributes {stable_mosaic.version = 11 : i64} {
  func.func @_conv_bn_res_kernel(%arg0: i32, %arg1: memref<16x144xbf16, #tpu.memory_space<vmem>>, %arg2: memref<16x1xf32, #tpu.memory_space<vmem>>, %arg3: memref<16x1xf32, #tpu.memory_space<vmem>>, %arg4: memref<144x512xbf16, #tpu.memory_space<vmem>>, %arg5: memref<16x512xf32, #tpu.memory_space<vmem>>, %arg6: memref<16x512xf32, #tpu.memory_space<vmem>>) attributes {dimension_semantics = [#tpu.dimension_semantics<parallel>], iteration_bounds = array<i64: 1>, scalar_prefetch = 0 : i64, scratch_operands = 0 : i64, tpu.core_type = #tpu.core_type<tc>, window_params = [{pipeline_mode = #tpu.pipeline_mode<synchronous>, transform_indices = @transform_0, window_bounds = array<i64: 16, 144>}, {pipeline_mode = #tpu.pipeline_mode<synchronous>, transform_indices = @transform_1, window_bounds = array<i64: 16, 1>}, {pipeline_mode = #tpu.pipeline_mode<synchronous>, transform_indices = @transform_2, window_bounds = array<i64: 16, 1>}, {transform_indices = @transform_3, window_bounds = array<i64: 144, 512>}, {transform_indices = @transform_4, window_bounds = array<i64: 16, 512>}, {transform_indices = @transform_5, window_bounds = array<i64: 16, 512>}]} {
    %c0 = arith.constant 0 : index
    %c0_0 = arith.constant 0 : index
    %0 = vector.load %arg1[%c0, %c0_0] : memref<16x144xbf16, #tpu.memory_space<vmem>>, vector<16x144xbf16>
    %c0_1 = arith.constant 0 : index
    %c0_2 = arith.constant 0 : index
    %1 = vector.load %arg4[%c0_1, %c0_2] : memref<144x512xbf16, #tpu.memory_space<vmem>>, vector<144x512xbf16>
    %cst = arith.constant dense<0.000000e+00> : vector<16x512xf32>
    %2 = tpu.matmul %0, %1, %cst {dimension_numbers = #tpu.dot_dimension_numbers<[1], [0], [0], [1], [0, 0, 1, 1], [], []>} : vector<16x144xbf16>, vector<144x512xbf16>, vector<16x512xf32> -> vector<16x512xf32>
    %c0_3 = arith.constant 0 : index
    %c0_4 = arith.constant 0 : index
    %3 = vector.load %arg2[%c0_3, %c0_4] : memref<16x1xf32, #tpu.memory_space<vmem>>, vector<16x1xf32>
    %4 = vector.broadcast %3 : vector<16x1xf32> to vector<16x512xf32>
    %5 = arith.mulf %2, %4 : vector<16x512xf32>
    %c0_5 = arith.constant 0 : index
    %c0_6 = arith.constant 0 : index
    %6 = vector.load %arg3[%c0_5, %c0_6] : memref<16x1xf32, #tpu.memory_space<vmem>>, vector<16x1xf32>
    %7 = vector.broadcast %6 : vector<16x1xf32> to vector<16x512xf32>
    %8 = arith.addf %5, %7 : vector<16x512xf32>
    %c0_7 = arith.constant 0 : index
    %c0_8 = arith.constant 0 : index
    %9 = vector.load %arg5[%c0_7, %c0_8] : memref<16x512xf32, #tpu.memory_space<vmem>>, vector<16x512xf32>
    %10 = arith.addf %8, %9 : vector<16x512xf32>
    %cst_9 = arith.constant 0.000000e+00 : f32
    %11 = vector.broadcast %cst_9 : f32 to vector<16x512xf32>
    %12 = arith.maximumf %10, %11 : vector<16x512xf32>
    %c0_10 = arith.constant 0 : index
    %c0_11 = arith.constant 0 : index
    %13 = vector.load %arg6[%c0_10, %c0_11] : memref<16x512xf32, #tpu.memory_space<vmem>>, vector<16x512xf32>
    tpu.vector_store %arg6[%c0_10, %c0_11], %12 {strides = array<i32>} : memref<16x512xf32, #tpu.memory_space<vmem>>, vector<16x512xf32>,
    return
  }
  func.func @transform_0(%arg0: i32) -> (i32, i32) {
    %c0_i32 = arith.constant 0 : i32
    %c0_i32_0 = arith.constant 0 : i32
    %c0_i32_1 = arith.constant 0 : i32
    return %c0_i32, %c0_i32_0 : i32, i32
  }
  func.func @transform_1(%arg0: i32) -> (i32, i32) {
    %c0_i32 = arith.constant 0 : i32
    %c0_i32_0 = arith.constant 0 : i32
    %c0_i32_1 = arith.constant 0 : i32
    return %c0_i32, %c0_i32_0 : i32, i32
  }
  func.func @transform_2(%arg0: i32) -> (i32, i32) {
    %c0_i32 = arith.constant 0 : i32
    %c0_i32_0 = arith.constant 0 : i32
    %c0_i32_1 = arith.constant 0 : i32
    return %c0_i32, %c0_i32_0 : i32, i32
  }
  func.func @transform_3(%arg0: i32) -> (i32, i32) {
    %c0_i32 = arith.constant 0 : i32
    %c0_i32_0 = arith.constant 0 : i32
    return %c0_i32, %arg0 : i32, i32
  }
  func.func @transform_4(%arg0: i32) -> (i32, i32) {
    %c0_i32 = arith.constant 0 : i32
    %c0_i32_0 = arith.constant 0 : i32
    return %c0_i32, %arg0 : i32, i32
  }
  func.func @transform_5(%arg0: i32) -> (i32, i32) {
    %c0_i32 = arith.constant 0 : i32
    %c0_i32_0 = arith.constant 0 : i32
    return %c0_i32, %arg0 : i32, i32
  }
}

module attributes {stable_mosaic.version = 11 : i64} {
  func.func @_conv_bn_kernel(%arg0: i32, %arg1: memref<32x144xbf16, #tpu.memory_space<vmem>>, %arg2: memref<32x1xf32, #tpu.memory_space<vmem>>, %arg3: memref<32x1xf32, #tpu.memory_space<vmem>>, %arg4: memref<144x128xbf16, #tpu.memory_space<vmem>>, %arg5: memref<32x128xf32, #tpu.memory_space<vmem>>) attributes {dimension_semantics = [#tpu.dimension_semantics<parallel>], iteration_bounds = array<i64: 1>, scalar_prefetch = 0 : i64, scratch_operands = 0 : i64, tpu.core_type = #tpu.core_type<tc>, window_params = [{pipeline_mode = #tpu.pipeline_mode<synchronous>, transform_indices = @transform_0, window_bounds = array<i64: 32, 144>}, {pipeline_mode = #tpu.pipeline_mode<synchronous>, transform_indices = @transform_1, window_bounds = array<i64: 32, 1>}, {pipeline_mode = #tpu.pipeline_mode<synchronous>, transform_indices = @transform_2, window_bounds = array<i64: 32, 1>}, {transform_indices = @transform_3, window_bounds = array<i64: 144, 128>}, {transform_indices = @transform_4, window_bounds = array<i64: 32, 128>}]} {
    %c0 = arith.constant 0 : index
    %c0_0 = arith.constant 0 : index
    %0 = vector.load %arg1[%c0, %c0_0] : memref<32x144xbf16, #tpu.memory_space<vmem>>, vector<32x144xbf16>
    %c0_1 = arith.constant 0 : index
    %c0_2 = arith.constant 0 : index
    %1 = vector.load %arg4[%c0_1, %c0_2] : memref<144x128xbf16, #tpu.memory_space<vmem>>, vector<144x128xbf16>
    %cst = arith.constant dense<0.000000e+00> : vector<32x128xf32>
    %2 = tpu.matmul %0, %1, %cst {dimension_numbers = #tpu.dot_dimension_numbers<[1], [0], [0], [1], [0, 0, 1, 1], [], []>} : vector<32x144xbf16>, vector<144x128xbf16>, vector<32x128xf32> -> vector<32x128xf32>
    %c0_3 = arith.constant 0 : index
    %c0_4 = arith.constant 0 : index
    %3 = vector.load %arg2[%c0_3, %c0_4] : memref<32x1xf32, #tpu.memory_space<vmem>>, vector<32x1xf32>
    %4 = vector.broadcast %3 : vector<32x1xf32> to vector<32x128xf32>
    %5 = arith.mulf %2, %4 : vector<32x128xf32>
    %c0_5 = arith.constant 0 : index
    %c0_6 = arith.constant 0 : index
    %6 = vector.load %arg3[%c0_5, %c0_6] : memref<32x1xf32, #tpu.memory_space<vmem>>, vector<32x1xf32>
    %7 = vector.broadcast %6 : vector<32x1xf32> to vector<32x128xf32>
    %8 = arith.addf %5, %7 : vector<32x128xf32>
    %cst_7 = arith.constant 0.000000e+00 : f32
    %9 = vector.broadcast %cst_7 : f32 to vector<32x128xf32>
    %10 = arith.maximumf %8, %9 : vector<32x128xf32>
    %c0_8 = arith.constant 0 : index
    %c0_9 = arith.constant 0 : index
    %11 = vector.load %arg5[%c0_8, %c0_9] : memref<32x128xf32, #tpu.memory_space<vmem>>, vector<32x128xf32>
    tpu.vector_store %arg5[%c0_8, %c0_9], %10 {strides = array<i32>} : memref<32x128xf32, #tpu.memory_space<vmem>>, vector<32x128xf32>,
    return
  }
  func.func @transform_0(%arg0: i32) -> (i32, i32) {
    %c0_i32 = arith.constant 0 : i32
    %c0_i32_0 = arith.constant 0 : i32
    %c0_i32_1 = arith.constant 0 : i32
    return %c0_i32, %c0_i32_0 : i32, i32
  }
  func.func @transform_1(%arg0: i32) -> (i32, i32) {
    %c0_i32 = arith.constant 0 : i32
    %c0_i32_0 = arith.constant 0 : i32
    %c0_i32_1 = arith.constant 0 : i32
    return %c0_i32, %c0_i32_0 : i32, i32
  }
  func.func @transform_2(%arg0: i32) -> (i32, i32) {
    %c0_i32 = arith.constant 0 : i32
    %c0_i32_0 = arith.constant 0 : i32
    %c0_i32_1 = arith.constant 0 : i32
    return %c0_i32, %c0_i32_0 : i32, i32
  }
  func.func @transform_3(%arg0: i32) -> (i32, i32) {
    %c0_i32 = arith.constant 0 : i32
    %c0_i32_0 = arith.constant 0 : i32
    return %c0_i32, %arg0 : i32, i32
  }
  func.func @transform_4(%arg0: i32) -> (i32, i32) {
    %c0_i32 = arith.constant 0 : i32
    %c0_i32_0 = arith.constant 0 : i32
    return %c0_i32, %arg0 : i32, i32
  }
}

module attributes {stable_mosaic.version = 11 : i64} {
  func.func @_conv_bn_kernel(%arg0: i32, %arg1: memref<32x16xbf16, #tpu.memory_space<vmem>>, %arg2: memref<32x1xf32, #tpu.memory_space<vmem>>, %arg3: memref<32x1xf32, #tpu.memory_space<vmem>>, %arg4: memref<16x128xbf16, #tpu.memory_space<vmem>>, %arg5: memref<32x128xf32, #tpu.memory_space<vmem>>) attributes {dimension_semantics = [#tpu.dimension_semantics<parallel>], iteration_bounds = array<i64: 1>, scalar_prefetch = 0 : i64, scratch_operands = 0 : i64, tpu.core_type = #tpu.core_type<tc>, window_params = [{pipeline_mode = #tpu.pipeline_mode<synchronous>, transform_indices = @transform_0, window_bounds = array<i64: 32, 16>}, {pipeline_mode = #tpu.pipeline_mode<synchronous>, transform_indices = @transform_1, window_bounds = array<i64: 32, 1>}, {pipeline_mode = #tpu.pipeline_mode<synchronous>, transform_indices = @transform_2, window_bounds = array<i64: 32, 1>}, {transform_indices = @transform_3, window_bounds = array<i64: 16, 128>}, {transform_indices = @transform_4, window_bounds = array<i64: 32, 128>}]} {
    %c0 = arith.constant 0 : index
    %c0_0 = arith.constant 0 : index
    %0 = vector.load %arg1[%c0, %c0_0] : memref<32x16xbf16, #tpu.memory_space<vmem>>, vector<32x16xbf16>
    %c0_1 = arith.constant 0 : index
    %c0_2 = arith.constant 0 : index
    %1 = vector.load %arg4[%c0_1, %c0_2] : memref<16x128xbf16, #tpu.memory_space<vmem>>, vector<16x128xbf16>
    %cst = arith.constant dense<0.000000e+00> : vector<32x128xf32>
    %2 = tpu.matmul %0, %1, %cst {dimension_numbers = #tpu.dot_dimension_numbers<[1], [0], [0], [1], [0, 0, 1, 1], [], []>} : vector<32x16xbf16>, vector<16x128xbf16>, vector<32x128xf32> -> vector<32x128xf32>
    %c0_3 = arith.constant 0 : index
    %c0_4 = arith.constant 0 : index
    %3 = vector.load %arg2[%c0_3, %c0_4] : memref<32x1xf32, #tpu.memory_space<vmem>>, vector<32x1xf32>
    %4 = vector.broadcast %3 : vector<32x1xf32> to vector<32x128xf32>
    %5 = arith.mulf %2, %4 : vector<32x128xf32>
    %c0_5 = arith.constant 0 : index
    %c0_6 = arith.constant 0 : index
    %6 = vector.load %arg3[%c0_5, %c0_6] : memref<32x1xf32, #tpu.memory_space<vmem>>, vector<32x1xf32>
    %7 = vector.broadcast %6 : vector<32x1xf32> to vector<32x128xf32>
    %8 = arith.addf %5, %7 : vector<32x128xf32>
    %c0_7 = arith.constant 0 : index
    %c0_8 = arith.constant 0 : index
    %9 = vector.load %arg5[%c0_7, %c0_8] : memref<32x128xf32, #tpu.memory_space<vmem>>, vector<32x128xf32>
    tpu.vector_store %arg5[%c0_7, %c0_8], %8 {strides = array<i32>} : memref<32x128xf32, #tpu.memory_space<vmem>>, vector<32x128xf32>,
    return
  }
  func.func @transform_0(%arg0: i32) -> (i32, i32) {
    %c0_i32 = arith.constant 0 : i32
    %c0_i32_0 = arith.constant 0 : i32
    %c0_i32_1 = arith.constant 0 : i32
    return %c0_i32, %c0_i32_0 : i32, i32
  }
  func.func @transform_1(%arg0: i32) -> (i32, i32) {
    %c0_i32 = arith.constant 0 : i32
    %c0_i32_0 = arith.constant 0 : i32
    %c0_i32_1 = arith.constant 0 : i32
    return %c0_i32, %c0_i32_0 : i32, i32
  }
  func.func @transform_2(%arg0: i32) -> (i32, i32) {
    %c0_i32 = arith.constant 0 : i32
    %c0_i32_0 = arith.constant 0 : i32
    %c0_i32_1 = arith.constant 0 : i32
    return %c0_i32, %c0_i32_0 : i32, i32
  }
  func.func @transform_3(%arg0: i32) -> (i32, i32) {
    %c0_i32 = arith.constant 0 : i32
    %c0_i32_0 = arith.constant 0 : i32
    return %c0_i32, %arg0 : i32, i32
  }
  func.func @transform_4(%arg0: i32) -> (i32, i32) {
    %c0_i32 = arith.constant 0 : i32
    %c0_i32_0 = arith.constant 0 : i32
    return %c0_i32, %arg0 : i32, i32
  }
}

module attributes {stable_mosaic.version = 11 : i64} {
  func.func @_conv_bn_res_kernel(%arg0: i32, %arg1: memref<32x288xbf16, #tpu.memory_space<vmem>>, %arg2: memref<32x1xf32, #tpu.memory_space<vmem>>, %arg3: memref<32x1xf32, #tpu.memory_space<vmem>>, %arg4: memref<288x128xbf16, #tpu.memory_space<vmem>>, %arg5: memref<32x128xf32, #tpu.memory_space<vmem>>, %arg6: memref<32x128xf32, #tpu.memory_space<vmem>>) attributes {dimension_semantics = [#tpu.dimension_semantics<parallel>], iteration_bounds = array<i64: 1>, scalar_prefetch = 0 : i64, scratch_operands = 0 : i64, tpu.core_type = #tpu.core_type<tc>, window_params = [{pipeline_mode = #tpu.pipeline_mode<synchronous>, transform_indices = @transform_0, window_bounds = array<i64: 32, 288>}, {pipeline_mode = #tpu.pipeline_mode<synchronous>, transform_indices = @transform_1, window_bounds = array<i64: 32, 1>}, {pipeline_mode = #tpu.pipeline_mode<synchronous>, transform_indices = @transform_2, window_bounds = array<i64: 32, 1>}, {transform_indices = @transform_3, window_bounds = array<i64: 288, 128>}, {transform_indices = @transform_4, window_bounds = array<i64: 32, 128>}, {transform_indices = @transform_5, window_bounds = array<i64: 32, 128>}]} {
    %c0 = arith.constant 0 : index
    %c0_0 = arith.constant 0 : index
    %0 = vector.load %arg1[%c0, %c0_0] : memref<32x288xbf16, #tpu.memory_space<vmem>>, vector<32x288xbf16>
    %c0_1 = arith.constant 0 : index
    %c0_2 = arith.constant 0 : index
    %1 = vector.load %arg4[%c0_1, %c0_2] : memref<288x128xbf16, #tpu.memory_space<vmem>>, vector<288x128xbf16>
    %cst = arith.constant dense<0.000000e+00> : vector<32x128xf32>
    %2 = tpu.matmul %0, %1, %cst {dimension_numbers = #tpu.dot_dimension_numbers<[1], [0], [0], [1], [0, 0, 1, 1], [], []>} : vector<32x288xbf16>, vector<288x128xbf16>, vector<32x128xf32> -> vector<32x128xf32>
    %c0_3 = arith.constant 0 : index
    %c0_4 = arith.constant 0 : index
    %3 = vector.load %arg2[%c0_3, %c0_4] : memref<32x1xf32, #tpu.memory_space<vmem>>, vector<32x1xf32>
    %4 = vector.broadcast %3 : vector<32x1xf32> to vector<32x128xf32>
    %5 = arith.mulf %2, %4 : vector<32x128xf32>
    %c0_5 = arith.constant 0 : index
    %c0_6 = arith.constant 0 : index
    %6 = vector.load %arg3[%c0_5, %c0_6] : memref<32x1xf32, #tpu.memory_space<vmem>>, vector<32x1xf32>
    %7 = vector.broadcast %6 : vector<32x1xf32> to vector<32x128xf32>
    %8 = arith.addf %5, %7 : vector<32x128xf32>
    %c0_7 = arith.constant 0 : index
    %c0_8 = arith.constant 0 : index
    %9 = vector.load %arg5[%c0_7, %c0_8] : memref<32x128xf32, #tpu.memory_space<vmem>>, vector<32x128xf32>
    %10 = arith.addf %8, %9 : vector<32x128xf32>
    %cst_9 = arith.constant 0.000000e+00 : f32
    %11 = vector.broadcast %cst_9 : f32 to vector<32x128xf32>
    %12 = arith.maximumf %10, %11 : vector<32x128xf32>
    %c0_10 = arith.constant 0 : index
    %c0_11 = arith.constant 0 : index
    %13 = vector.load %arg6[%c0_10, %c0_11] : memref<32x128xf32, #tpu.memory_space<vmem>>, vector<32x128xf32>
    tpu.vector_store %arg6[%c0_10, %c0_11], %12 {strides = array<i32>} : memref<32x128xf32, #tpu.memory_space<vmem>>, vector<32x128xf32>,
    return
  }
  func.func @transform_0(%arg0: i32) -> (i32, i32) {
    %c0_i32 = arith.constant 0 : i32
    %c0_i32_0 = arith.constant 0 : i32
    %c0_i32_1 = arith.constant 0 : i32
    return %c0_i32, %c0_i32_0 : i32, i32
  }
  func.func @transform_1(%arg0: i32) -> (i32, i32) {
    %c0_i32 = arith.constant 0 : i32
    %c0_i32_0 = arith.constant 0 : i32
    %c0_i32_1 = arith.constant 0 : i32
    return %c0_i32, %c0_i32_0 : i32, i32
  }
  func.func @transform_2(%arg0: i32) -> (i32, i32) {
    %c0_i32 = arith.constant 0 : i32
    %c0_i32_0 = arith.constant 0 : i32
    %c0_i32_1 = arith.constant 0 : i32
    return %c0_i32, %c0_i32_0 : i32, i32
  }
  func.func @transform_3(%arg0: i32) -> (i32, i32) {
    %c0_i32 = arith.constant 0 : i32
    %c0_i32_0 = arith.constant 0 : i32
    return %c0_i32, %arg0 : i32, i32
  }
  func.func @transform_4(%arg0: i32) -> (i32, i32) {
    %c0_i32 = arith.constant 0 : i32
    %c0_i32_0 = arith.constant 0 : i32
    return %c0_i32, %arg0 : i32, i32
  }
  func.func @transform_5(%arg0: i32) -> (i32, i32) {
    %c0_i32 = arith.constant 0 : i32
    %c0_i32_0 = arith.constant 0 : i32
    return %c0_i32, %arg0 : i32, i32
  }
}

module attributes {stable_mosaic.version = 11 : i64} {
  func.func @_conv_bn_kernel(%arg0: i32, %arg1: memref<32x288xbf16, #tpu.memory_space<vmem>>, %arg2: memref<32x1xf32, #tpu.memory_space<vmem>>, %arg3: memref<32x1xf32, #tpu.memory_space<vmem>>, %arg4: memref<288x128xbf16, #tpu.memory_space<vmem>>, %arg5: memref<32x128xf32, #tpu.memory_space<vmem>>) attributes {dimension_semantics = [#tpu.dimension_semantics<parallel>], iteration_bounds = array<i64: 1>, scalar_prefetch = 0 : i64, scratch_operands = 0 : i64, tpu.core_type = #tpu.core_type<tc>, window_params = [{pipeline_mode = #tpu.pipeline_mode<synchronous>, transform_indices = @transform_0, window_bounds = array<i64: 32, 288>}, {pipeline_mode = #tpu.pipeline_mode<synchronous>, transform_indices = @transform_1, window_bounds = array<i64: 32, 1>}, {pipeline_mode = #tpu.pipeline_mode<synchronous>, transform_indices = @transform_2, window_bounds = array<i64: 32, 1>}, {transform_indices = @transform_3, window_bounds = array<i64: 288, 128>}, {transform_indices = @transform_4, window_bounds = array<i64: 32, 128>}]} {
    %c0 = arith.constant 0 : index
    %c0_0 = arith.constant 0 : index
    %0 = vector.load %arg1[%c0, %c0_0] : memref<32x288xbf16, #tpu.memory_space<vmem>>, vector<32x288xbf16>
    %c0_1 = arith.constant 0 : index
    %c0_2 = arith.constant 0 : index
    %1 = vector.load %arg4[%c0_1, %c0_2] : memref<288x128xbf16, #tpu.memory_space<vmem>>, vector<288x128xbf16>
    %cst = arith.constant dense<0.000000e+00> : vector<32x128xf32>
    %2 = tpu.matmul %0, %1, %cst {dimension_numbers = #tpu.dot_dimension_numbers<[1], [0], [0], [1], [0, 0, 1, 1], [], []>} : vector<32x288xbf16>, vector<288x128xbf16>, vector<32x128xf32> -> vector<32x128xf32>
    %c0_3 = arith.constant 0 : index
    %c0_4 = arith.constant 0 : index
    %3 = vector.load %arg2[%c0_3, %c0_4] : memref<32x1xf32, #tpu.memory_space<vmem>>, vector<32x1xf32>
    %4 = vector.broadcast %3 : vector<32x1xf32> to vector<32x128xf32>
    %5 = arith.mulf %2, %4 : vector<32x128xf32>
    %c0_5 = arith.constant 0 : index
    %c0_6 = arith.constant 0 : index
    %6 = vector.load %arg3[%c0_5, %c0_6] : memref<32x1xf32, #tpu.memory_space<vmem>>, vector<32x1xf32>
    %7 = vector.broadcast %6 : vector<32x1xf32> to vector<32x128xf32>
    %8 = arith.addf %5, %7 : vector<32x128xf32>
    %cst_7 = arith.constant 0.000000e+00 : f32
    %9 = vector.broadcast %cst_7 : f32 to vector<32x128xf32>
    %10 = arith.maximumf %8, %9 : vector<32x128xf32>
    %c0_8 = arith.constant 0 : index
    %c0_9 = arith.constant 0 : index
    %11 = vector.load %arg5[%c0_8, %c0_9] : memref<32x128xf32, #tpu.memory_space<vmem>>, vector<32x128xf32>
    tpu.vector_store %arg5[%c0_8, %c0_9], %10 {strides = array<i32>} : memref<32x128xf32, #tpu.memory_space<vmem>>, vector<32x128xf32>,
    return
  }
  func.func @transform_0(%arg0: i32) -> (i32, i32) {
    %c0_i32 = arith.constant 0 : i32
    %c0_i32_0 = arith.constant 0 : i32
    %c0_i32_1 = arith.constant 0 : i32
    return %c0_i32, %c0_i32_0 : i32, i32
  }
  func.func @transform_1(%arg0: i32) -> (i32, i32) {
    %c0_i32 = arith.constant 0 : i32
    %c0_i32_0 = arith.constant 0 : i32
    %c0_i32_1 = arith.constant 0 : i32
    return %c0_i32, %c0_i32_0 : i32, i32
  }
  func.func @transform_2(%arg0: i32) -> (i32, i32) {
    %c0_i32 = arith.constant 0 : i32
    %c0_i32_0 = arith.constant 0 : i32
    %c0_i32_1 = arith.constant 0 : i32
    return %c0_i32, %c0_i32_0 : i32, i32
  }
  func.func @transform_3(%arg0: i32) -> (i32, i32) {
    %c0_i32 = arith.constant 0 : i32
    %c0_i32_0 = arith.constant 0 : i32
    return %c0_i32, %arg0 : i32, i32
  }
  func.func @transform_4(%arg0: i32) -> (i32, i32) {
    %c0_i32 = arith.constant 0 : i32
    %c0_i32_0 = arith.constant 0 : i32
    return %c0_i32, %arg0 : i32, i32
  }
}

module attributes {stable_mosaic.version = 11 : i64} {
  func.func @_conv_bn_kernel(%arg0: i32, %arg1: memref<64x288xbf16, #tpu.memory_space<vmem>>, %arg2: memref<64x1xf32, #tpu.memory_space<vmem>>, %arg3: memref<64x1xf32, #tpu.memory_space<vmem>>, %arg4: memref<288x32xbf16, #tpu.memory_space<vmem>>, %arg5: memref<64x32xf32, #tpu.memory_space<vmem>>) attributes {dimension_semantics = [#tpu.dimension_semantics<parallel>], iteration_bounds = array<i64: 1>, scalar_prefetch = 0 : i64, scratch_operands = 0 : i64, tpu.core_type = #tpu.core_type<tc>, window_params = [{pipeline_mode = #tpu.pipeline_mode<synchronous>, transform_indices = @transform_0, window_bounds = array<i64: 64, 288>}, {pipeline_mode = #tpu.pipeline_mode<synchronous>, transform_indices = @transform_1, window_bounds = array<i64: 64, 1>}, {pipeline_mode = #tpu.pipeline_mode<synchronous>, transform_indices = @transform_2, window_bounds = array<i64: 64, 1>}, {transform_indices = @transform_3, window_bounds = array<i64: 288, 32>}, {transform_indices = @transform_4, window_bounds = array<i64: 64, 32>}]} {
    %c0 = arith.constant 0 : index
    %c0_0 = arith.constant 0 : index
    %0 = vector.load %arg1[%c0, %c0_0] : memref<64x288xbf16, #tpu.memory_space<vmem>>, vector<64x288xbf16>
    %c0_1 = arith.constant 0 : index
    %c0_2 = arith.constant 0 : index
    %1 = vector.load %arg4[%c0_1, %c0_2] : memref<288x32xbf16, #tpu.memory_space<vmem>>, vector<288x32xbf16>
    %cst = arith.constant dense<0.000000e+00> : vector<64x32xf32>
    %2 = tpu.matmul %0, %1, %cst {dimension_numbers = #tpu.dot_dimension_numbers<[1], [0], [0], [1], [0, 0, 1, 1], [], []>} : vector<64x288xbf16>, vector<288x32xbf16>, vector<64x32xf32> -> vector<64x32xf32>
    %c0_3 = arith.constant 0 : index
    %c0_4 = arith.constant 0 : index
    %3 = vector.load %arg2[%c0_3, %c0_4] : memref<64x1xf32, #tpu.memory_space<vmem>>, vector<64x1xf32>
    %4 = vector.broadcast %3 : vector<64x1xf32> to vector<64x32xf32>
    %5 = arith.mulf %2, %4 : vector<64x32xf32>
    %c0_5 = arith.constant 0 : index
    %c0_6 = arith.constant 0 : index
    %6 = vector.load %arg3[%c0_5, %c0_6] : memref<64x1xf32, #tpu.memory_space<vmem>>, vector<64x1xf32>
    %7 = vector.broadcast %6 : vector<64x1xf32> to vector<64x32xf32>
    %8 = arith.addf %5, %7 : vector<64x32xf32>
    %cst_7 = arith.constant 0.000000e+00 : f32
    %9 = vector.broadcast %cst_7 : f32 to vector<64x32xf32>
    %10 = arith.maximumf %8, %9 : vector<64x32xf32>
    %c0_8 = arith.constant 0 : index
    %c0_9 = arith.constant 0 : index
    %11 = vector.load %arg5[%c0_8, %c0_9] : memref<64x32xf32, #tpu.memory_space<vmem>>, vector<64x32xf32>
    tpu.vector_store %arg5[%c0_8, %c0_9], %10 {strides = array<i32>} : memref<64x32xf32, #tpu.memory_space<vmem>>, vector<64x32xf32>,
    return
  }
  func.func @transform_0(%arg0: i32) -> (i32, i32) {
    %c0_i32 = arith.constant 0 : i32
    %c0_i32_0 = arith.constant 0 : i32
    %c0_i32_1 = arith.constant 0 : i32
    return %c0_i32, %c0_i32_0 : i32, i32
  }
  func.func @transform_1(%arg0: i32) -> (i32, i32) {
    %c0_i32 = arith.constant 0 : i32
    %c0_i32_0 = arith.constant 0 : i32
    %c0_i32_1 = arith.constant 0 : i32
    return %c0_i32, %c0_i32_0 : i32, i32
  }
  func.func @transform_2(%arg0: i32) -> (i32, i32) {
    %c0_i32 = arith.constant 0 : i32
    %c0_i32_0 = arith.constant 0 : i32
    %c0_i32_1 = arith.constant 0 : i32
    return %c0_i32, %c0_i32_0 : i32, i32
  }
  func.func @transform_3(%arg0: i32) -> (i32, i32) {
    %c0_i32 = arith.constant 0 : i32
    %c0_i32_0 = arith.constant 0 : i32
    return %c0_i32, %arg0 : i32, i32
  }
  func.func @transform_4(%arg0: i32) -> (i32, i32) {
    %c0_i32 = arith.constant 0 : i32
    %c0_i32_0 = arith.constant 0 : i32
    return %c0_i32, %arg0 : i32, i32
  }
}

module attributes {stable_mosaic.version = 11 : i64} {
  func.func @_conv_bn_kernel(%arg0: i32, %arg1: memref<64x32xbf16, #tpu.memory_space<vmem>>, %arg2: memref<64x1xf32, #tpu.memory_space<vmem>>, %arg3: memref<64x1xf32, #tpu.memory_space<vmem>>, %arg4: memref<32x32xbf16, #tpu.memory_space<vmem>>, %arg5: memref<64x32xf32, #tpu.memory_space<vmem>>) attributes {dimension_semantics = [#tpu.dimension_semantics<parallel>], iteration_bounds = array<i64: 1>, scalar_prefetch = 0 : i64, scratch_operands = 0 : i64, tpu.core_type = #tpu.core_type<tc>, window_params = [{pipeline_mode = #tpu.pipeline_mode<synchronous>, transform_indices = @transform_0, window_bounds = array<i64: 64, 32>}, {pipeline_mode = #tpu.pipeline_mode<synchronous>, transform_indices = @transform_1, window_bounds = array<i64: 64, 1>}, {pipeline_mode = #tpu.pipeline_mode<synchronous>, transform_indices = @transform_2, window_bounds = array<i64: 64, 1>}, {transform_indices = @transform_3, window_bounds = array<i64: 32, 32>}, {transform_indices = @transform_4, window_bounds = array<i64: 64, 32>}]} {
    %c0 = arith.constant 0 : index
    %c0_0 = arith.constant 0 : index
    %0 = vector.load %arg1[%c0, %c0_0] : memref<64x32xbf16, #tpu.memory_space<vmem>>, vector<64x32xbf16>
    %c0_1 = arith.constant 0 : index
    %c0_2 = arith.constant 0 : index
    %1 = vector.load %arg4[%c0_1, %c0_2] : memref<32x32xbf16, #tpu.memory_space<vmem>>, vector<32x32xbf16>
    %cst = arith.constant dense<0.000000e+00> : vector<64x32xf32>
    %2 = tpu.matmul %0, %1, %cst {dimension_numbers = #tpu.dot_dimension_numbers<[1], [0], [0], [1], [0, 0, 1, 1], [], []>} : vector<64x32xbf16>, vector<32x32xbf16>, vector<64x32xf32> -> vector<64x32xf32>
    %c0_3 = arith.constant 0 : index
    %c0_4 = arith.constant 0 : index
    %3 = vector.load %arg2[%c0_3, %c0_4] : memref<64x1xf32, #tpu.memory_space<vmem>>, vector<64x1xf32>
    %4 = vector.broadcast %3 : vector<64x1xf32> to vector<64x32xf32>
    %5 = arith.mulf %2, %4 : vector<64x32xf32>
    %c0_5 = arith.constant 0 : index
    %c0_6 = arith.constant 0 : index
    %6 = vector.load %arg3[%c0_5, %c0_6] : memref<64x1xf32, #tpu.memory_space<vmem>>, vector<64x1xf32>
    %7 = vector.broadcast %6 : vector<64x1xf32> to vector<64x32xf32>
    %8 = arith.addf %5, %7 : vector<64x32xf32>
    %c0_7 = arith.constant 0 : index
    %c0_8 = arith.constant 0 : index
    %9 = vector.load %arg5[%c0_7, %c0_8] : memref<64x32xf32, #tpu.memory_space<vmem>>, vector<64x32xf32>
    tpu.vector_store %arg5[%c0_7, %c0_8], %8 {strides = array<i32>} : memref<64x32xf32, #tpu.memory_space<vmem>>, vector<64x32xf32>,
    return
  }
  func.func @transform_0(%arg0: i32) -> (i32, i32) {
    %c0_i32 = arith.constant 0 : i32
    %c0_i32_0 = arith.constant 0 : i32
    %c0_i32_1 = arith.constant 0 : i32
    return %c0_i32, %c0_i32_0 : i32, i32
  }
  func.func @transform_1(%arg0: i32) -> (i32, i32) {
    %c0_i32 = arith.constant 0 : i32
    %c0_i32_0 = arith.constant 0 : i32
    %c0_i32_1 = arith.constant 0 : i32
    return %c0_i32, %c0_i32_0 : i32, i32
  }
  func.func @transform_2(%arg0: i32) -> (i32, i32) {
    %c0_i32 = arith.constant 0 : i32
    %c0_i32_0 = arith.constant 0 : i32
    %c0_i32_1 = arith.constant 0 : i32
    return %c0_i32, %c0_i32_0 : i32, i32
  }
  func.func @transform_3(%arg0: i32) -> (i32, i32) {
    %c0_i32 = arith.constant 0 : i32
    %c0_i32_0 = arith.constant 0 : i32
    return %c0_i32, %arg0 : i32, i32
  }
  func.func @transform_4(%arg0: i32) -> (i32, i32) {
    %c0_i32 = arith.constant 0 : i32
    %c0_i32_0 = arith.constant 0 : i32
    return %c0_i32, %arg0 : i32, i32
  }
}

module attributes {stable_mosaic.version = 11 : i64} {
  func.func @_conv_bn_kernel(%arg0: i32, %arg1: memref<64x576xbf16, #tpu.memory_space<vmem>>, %arg2: memref<64x1xf32, #tpu.memory_space<vmem>>, %arg3: memref<64x1xf32, #tpu.memory_space<vmem>>, %arg4: memref<576x32xbf16, #tpu.memory_space<vmem>>, %arg5: memref<64x32xf32, #tpu.memory_space<vmem>>) attributes {dimension_semantics = [#tpu.dimension_semantics<parallel>], iteration_bounds = array<i64: 1>, scalar_prefetch = 0 : i64, scratch_operands = 0 : i64, tpu.core_type = #tpu.core_type<tc>, window_params = [{pipeline_mode = #tpu.pipeline_mode<synchronous>, transform_indices = @transform_0, window_bounds = array<i64: 64, 576>}, {pipeline_mode = #tpu.pipeline_mode<synchronous>, transform_indices = @transform_1, window_bounds = array<i64: 64, 1>}, {pipeline_mode = #tpu.pipeline_mode<synchronous>, transform_indices = @transform_2, window_bounds = array<i64: 64, 1>}, {transform_indices = @transform_3, window_bounds = array<i64: 576, 32>}, {transform_indices = @transform_4, window_bounds = array<i64: 64, 32>}]} {
    %c0 = arith.constant 0 : index
    %c0_0 = arith.constant 0 : index
    %0 = vector.load %arg1[%c0, %c0_0] : memref<64x576xbf16, #tpu.memory_space<vmem>>, vector<64x576xbf16>
    %c0_1 = arith.constant 0 : index
    %c0_2 = arith.constant 0 : index
    %1 = vector.load %arg4[%c0_1, %c0_2] : memref<576x32xbf16, #tpu.memory_space<vmem>>, vector<576x32xbf16>
    %cst = arith.constant dense<0.000000e+00> : vector<64x32xf32>
    %2 = tpu.matmul %0, %1, %cst {dimension_numbers = #tpu.dot_dimension_numbers<[1], [0], [0], [1], [0, 0, 1, 1], [], []>} : vector<64x576xbf16>, vector<576x32xbf16>, vector<64x32xf32> -> vector<64x32xf32>
    %c0_3 = arith.constant 0 : index
    %c0_4 = arith.constant 0 : index
    %3 = vector.load %arg2[%c0_3, %c0_4] : memref<64x1xf32, #tpu.memory_space<vmem>>, vector<64x1xf32>
    %4 = vector.broadcast %3 : vector<64x1xf32> to vector<64x32xf32>
    %5 = arith.mulf %2, %4 : vector<64x32xf32>
    %c0_5 = arith.constant 0 : index
    %c0_6 = arith.constant 0 : index
    %6 = vector.load %arg3[%c0_5, %c0_6] : memref<64x1xf32, #tpu.memory_space<vmem>>, vector<64x1xf32>
    %7 = vector.broadcast %6 : vector<64x1xf32> to vector<64x32xf32>
    %8 = arith.addf %5, %7 : vector<64x32xf32>
    %cst_7 = arith.constant 0.000000e+00 : f32
    %9 = vector.broadcast %cst_7 : f32 to vector<64x32xf32>
    %10 = arith.maximumf %8, %9 : vector<64x32xf32>
    %c0_8 = arith.constant 0 : index
    %c0_9 = arith.constant 0 : index
    %11 = vector.load %arg5[%c0_8, %c0_9] : memref<64x32xf32, #tpu.memory_space<vmem>>, vector<64x32xf32>
    tpu.vector_store %arg5[%c0_8, %c0_9], %10 {strides = array<i32>} : memref<64x32xf32, #tpu.memory_space<vmem>>, vector<64x32xf32>,
    return
  }
  func.func @transform_0(%arg0: i32) -> (i32, i32) {
    %c0_i32 = arith.constant 0 : i32
    %c0_i32_0 = arith.constant 0 : i32
    %c0_i32_1 = arith.constant 0 : i32
    return %c0_i32, %c0_i32_0 : i32, i32
  }
  func.func @transform_1(%arg0: i32) -> (i32, i32) {
    %c0_i32 = arith.constant 0 : i32
    %c0_i32_0 = arith.constant 0 : i32
    %c0_i32_1 = arith.constant 0 : i32
    return %c0_i32, %c0_i32_0 : i32, i32
  }
  func.func @transform_2(%arg0: i32) -> (i32, i32) {
    %c0_i32 = arith.constant 0 : i32
    %c0_i32_0 = arith.constant 0 : i32
    %c0_i32_1 = arith.constant 0 : i32
    return %c0_i32, %c0_i32_0 : i32, i32
  }
  func.func @transform_3(%arg0: i32) -> (i32, i32) {
    %c0_i32 = arith.constant 0 : i32
    %c0_i32_0 = arith.constant 0 : i32
    return %c0_i32, %arg0 : i32, i32
  }
  func.func @transform_4(%arg0: i32) -> (i32, i32) {
    %c0_i32 = arith.constant 0 : i32
    %c0_i32_0 = arith.constant 0 : i32
    return %c0_i32, %arg0 : i32, i32
  }
}

module attributes {stable_mosaic.version = 11 : i64} {
  func.func @_conv_bn_res_kernel(%arg0: i32, %arg1: memref<64x576xbf16, #tpu.memory_space<vmem>>, %arg2: memref<64x1xf32, #tpu.memory_space<vmem>>, %arg3: memref<64x1xf32, #tpu.memory_space<vmem>>, %arg4: memref<576x32xbf16, #tpu.memory_space<vmem>>, %arg5: memref<64x32xf32, #tpu.memory_space<vmem>>, %arg6: memref<64x32xf32, #tpu.memory_space<vmem>>) attributes {dimension_semantics = [#tpu.dimension_semantics<parallel>], iteration_bounds = array<i64: 1>, scalar_prefetch = 0 : i64, scratch_operands = 0 : i64, tpu.core_type = #tpu.core_type<tc>, window_params = [{pipeline_mode = #tpu.pipeline_mode<synchronous>, transform_indices = @transform_0, window_bounds = array<i64: 64, 576>}, {pipeline_mode = #tpu.pipeline_mode<synchronous>, transform_indices = @transform_1, window_bounds = array<i64: 64, 1>}, {pipeline_mode = #tpu.pipeline_mode<synchronous>, transform_indices = @transform_2, window_bounds = array<i64: 64, 1>}, {transform_indices = @transform_3, window_bounds = array<i64: 576, 32>}, {transform_indices = @transform_4, window_bounds = array<i64: 64, 32>}, {transform_indices = @transform_5, window_bounds = array<i64: 64, 32>}]} {
    %c0 = arith.constant 0 : index
    %c0_0 = arith.constant 0 : index
    %0 = vector.load %arg1[%c0, %c0_0] : memref<64x576xbf16, #tpu.memory_space<vmem>>, vector<64x576xbf16>
    %c0_1 = arith.constant 0 : index
    %c0_2 = arith.constant 0 : index
    %1 = vector.load %arg4[%c0_1, %c0_2] : memref<576x32xbf16, #tpu.memory_space<vmem>>, vector<576x32xbf16>
    %cst = arith.constant dense<0.000000e+00> : vector<64x32xf32>
    %2 = tpu.matmul %0, %1, %cst {dimension_numbers = #tpu.dot_dimension_numbers<[1], [0], [0], [1], [0, 0, 1, 1], [], []>} : vector<64x576xbf16>, vector<576x32xbf16>, vector<64x32xf32> -> vector<64x32xf32>
    %c0_3 = arith.constant 0 : index
    %c0_4 = arith.constant 0 : index
    %3 = vector.load %arg2[%c0_3, %c0_4] : memref<64x1xf32, #tpu.memory_space<vmem>>, vector<64x1xf32>
    %4 = vector.broadcast %3 : vector<64x1xf32> to vector<64x32xf32>
    %5 = arith.mulf %2, %4 : vector<64x32xf32>
    %c0_5 = arith.constant 0 : index
    %c0_6 = arith.constant 0 : index
    %6 = vector.load %arg3[%c0_5, %c0_6] : memref<64x1xf32, #tpu.memory_space<vmem>>, vector<64x1xf32>
    %7 = vector.broadcast %6 : vector<64x1xf32> to vector<64x32xf32>
    %8 = arith.addf %5, %7 : vector<64x32xf32>
    %c0_7 = arith.constant 0 : index
    %c0_8 = arith.constant 0 : index
    %9 = vector.load %arg5[%c0_7, %c0_8] : memref<64x32xf32, #tpu.memory_space<vmem>>, vector<64x32xf32>
    %10 = arith.addf %8, %9 : vector<64x32xf32>
    %cst_9 = arith.constant 0.000000e+00 : f32
    %11 = vector.broadcast %cst_9 : f32 to vector<64x32xf32>
    %12 = arith.maximumf %10, %11 : vector<64x32xf32>
    %c0_10 = arith.constant 0 : index
    %c0_11 = arith.constant 0 : index
    %13 = vector.load %arg6[%c0_10, %c0_11] : memref<64x32xf32, #tpu.memory_space<vmem>>, vector<64x32xf32>
    tpu.vector_store %arg6[%c0_10, %c0_11], %12 {strides = array<i32>} : memref<64x32xf32, #tpu.memory_space<vmem>>, vector<64x32xf32>,
    return
  }
  func.func @transform_0(%arg0: i32) -> (i32, i32) {
    %c0_i32 = arith.constant 0 : i32
    %c0_i32_0 = arith.constant 0 : i32
    %c0_i32_1 = arith.constant 0 : i32
    return %c0_i32, %c0_i32_0 : i32, i32
  }
  func.func @transform_1(%arg0: i32) -> (i32, i32) {
    %c0_i32 = arith.constant 0 : i32
    %c0_i32_0 = arith.constant 0 : i32
    %c0_i32_1 = arith.constant 0 : i32
    return %c0_i32, %c0_i32_0 : i32, i32
  }
  func.func @transform_2(%arg0: i32) -> (i32, i32) {
    %c0_i32 = arith.constant 0 : i32
    %c0_i32_0 = arith.constant 0 : i32
    %c0_i32_1 = arith.constant 0 : i32
    return %c0_i32, %c0_i32_0 : i32, i32
  }
  func.func @transform_3(%arg0: i32) -> (i32, i32) {
    %c0_i32 = arith.constant 0 : i32
    %c0_i32_0 = arith.constant 0 : i32
    return %c0_i32, %arg0 : i32, i32
  }
  func.func @transform_4(%arg0: i32) -> (i32, i32) {
    %c0_i32 = arith.constant 0 : i32
    %c0_i32_0 = arith.constant 0 : i32
    return %c0_i32, %arg0 : i32, i32
  }
  func.func @transform_5(%arg0: i32) -> (i32, i32) {
    %c0_i32 = arith.constant 0 : i32
    %c0_i32_0 = arith.constant 0 : i32
    return %c0_i32, %arg0 : i32, i32
  }
}

module attributes {stable_mosaic.version = 11 : i64} {
  func.func @_pool_fc_kernel(%arg0: i32, %arg1: memref<64x2x16xf32, #tpu.memory_space<vmem>>, %arg2: memref<10x64xf32, #tpu.memory_space<vmem>>, %arg3: memref<10x1xf32, #tpu.memory_space<vmem>>, %arg4: memref<10x2xf32, #tpu.memory_space<vmem>>) attributes {dimension_semantics = [#tpu.dimension_semantics<arbitrary>], iteration_bounds = array<i64: 1>, scalar_prefetch = 0 : i64, scratch_operands = 0 : i64, tpu.core_type = #tpu.core_type<tc>, window_params = [{pipeline_mode = #tpu.pipeline_mode<synchronous>, transform_indices = @transform_0, window_bounds = array<i64: 64, 2, 16>}, {pipeline_mode = #tpu.pipeline_mode<synchronous>, transform_indices = @transform_1, window_bounds = array<i64: 10, 64>}, {pipeline_mode = #tpu.pipeline_mode<synchronous>, transform_indices = @transform_2, window_bounds = array<i64: 10, 1>}, {pipeline_mode = #tpu.pipeline_mode<synchronous>, transform_indices = @transform_3, window_bounds = array<i64: 10, 2>}]} {
    %c0 = arith.constant 0 : index
    %c0_0 = arith.constant 0 : index
    %c0_1 = arith.constant 0 : index
    %0 = vector.load %arg1[%c0, %c0_0, %c0_1] : memref<64x2x16xf32, #tpu.memory_space<vmem>>, vector<64x2x16xf32>
    %cst = arith.constant dense<0.000000e+00> : vector<64x2xf32>
    %1 = vector.multi_reduction <add>, %0, %cst [2] : vector<64x2x16xf32> to vector<64x2xf32>
    %cst_2 = arith.constant 1.600000e+01 : f32
    %2 = vector.broadcast %cst_2 : f32 to vector<64x2xf32>
    %3 = arith.divf %1, %2 : vector<64x2xf32>
    %c0_3 = arith.constant 0 : index
    %c0_4 = arith.constant 0 : index
    %4 = vector.load %arg2[%c0_3, %c0_4] : memref<10x64xf32, #tpu.memory_space<vmem>>, vector<10x64xf32>
    %cst_5 = arith.constant dense<0.000000e+00> : vector<10x2xf32>
    %5 = tpu.matmul %4, %3, %cst_5 {dimension_numbers = #tpu.dot_dimension_numbers<[1], [0], [0], [1], [0, 0, 1, 1], [], []>} : vector<10x64xf32>, vector<64x2xf32>, vector<10x2xf32> -> vector<10x2xf32>
    %c0_6 = arith.constant 0 : index
    %c0_7 = arith.constant 0 : index
    %6 = vector.load %arg3[%c0_6, %c0_7] : memref<10x1xf32, #tpu.memory_space<vmem>>, vector<10x1xf32>
    %7 = vector.broadcast %6 : vector<10x1xf32> to vector<10x2xf32>
    %8 = arith.addf %5, %7 : vector<10x2xf32>
    %c0_8 = arith.constant 0 : index
    %c0_9 = arith.constant 0 : index
    %9 = vector.load %arg4[%c0_8, %c0_9] : memref<10x2xf32, #tpu.memory_space<vmem>>, vector<10x2xf32>
    tpu.vector_store %arg4[%c0_8, %c0_9], %8 {strides = array<i32>} : memref<10x2xf32, #tpu.memory_space<vmem>>, vector<10x2xf32>,
    return
  }
  func.func @transform_0(%arg0: i32) -> (i32, i32, i32) {
    %c0_i32 = arith.constant 0 : i32
    %c0_i32_0 = arith.constant 0 : i32
    %c0_i32_1 = arith.constant 0 : i32
    %c0_i32_2 = arith.constant 0 : i32
    return %c0_i32, %c0_i32_0, %c0_i32_1 : i32, i32, i32
  }
  func.func @transform_1(%arg0: i32) -> (i32, i32) {
    %c0_i32 = arith.constant 0 : i32
    %c0_i32_0 = arith.constant 0 : i32
    %c0_i32_1 = arith.constant 0 : i32
    return %c0_i32, %c0_i32_0 : i32, i32
  }
  func.func @transform_2(%arg0: i32) -> (i32, i32) {
    %c0_i32 = arith.constant 0 : i32
    %c0_i32_0 = arith.constant 0 : i32
    %c0_i32_1 = arith.constant 0 : i32
    return %c0_i32, %c0_i32_0 : i32, i32
  }
  func.func @transform_3(%arg0: i32) -> (i32, i32) {
    %c0_i32 = arith.constant 0 : i32
    %c0_i32_0 = arith.constant 0 : i32
    %c0_i32_1 = arith.constant 0 : i32
    return %c0_i32, %c0_i32_0 : i32, i32
  }
}

</mosaic_0001>

<llo_original>
// kernel: resnet18_forward.21
$region0: #{resnet18_forward.21}
  #allocation0 [shape = 'u32[]', space=smem, size = 0x4, offset = 0x4, fixed_abs, tag = 'smem constant byte address 0x4 - core index']
  #allocation1 [shape = 'u32[72,128]{1,0:T(1,128)}', space=vmem, size = 0x9000, scoped, tag = 'internal scratch']
  %s0 = inlined_call_operand.vmem [shape: bf16[16,32], index: 0, kind: input, shape index: {}]
  %s1 = inlined_call_operand.vmem [shape: f32[16,1], index: 1, kind: input, shape index: {}]
  %s2 = inlined_call_operand.vmem [shape: f32[16,1], index: 2, kind: input, shape index: {}]
  %s3 = inlined_call_operand.vmem [shape: bf16[32,2048], index: 3, kind: input, shape index: {}]
  %s4 = inlined_call_operand.vmem [shape: f32[16,2048], index: 4, kind: output, shape index: {}]
  %s5 = sld [smem:[#allocation0]]
  $region91: #{resnet18_forward.21} parent=0
    _
  %s7 = ssub.s32 1, %s5
  %s8 = scalar_select 0, %s7, %s5
  $region1: #{resnet18_forward.21} parent=0
    #allocation2 [shape = 'u8[65536]{0}', space=vmem, size = 0x10000, scoped, tag = 'input window, operand 3']
    #allocation3 [shape = 'u8[65536]{0}', space=vmem, size = 0x10000, scoped, tag = 'output window, operand 0']
    loop: start=0, step=1, limit=6
    $region2: #{resnet18_forward.21} parent=1 // loop_pre_header
      _
    $region3: #{resnet18_forward.21} parent=1 // loop_header
      %s10 = sphi 0, %s14
      %p11 = scmp.ge.s32.totalorder %s10, 6
      %s18 = sphi 0, %s18
      %s20 = sphi 0, %s18
      %s21 = sphi 0, %s20
      %s35 = sphi 0, %s21
      %s39 = sphi 0, %s39
      %s41 = sphi 0, %s39
      %s42 = sphi 0, %s41
      %s56 = sphi 0, %s42
      %s60 = sphi 0, %s60
      %s62 = sphi 0, %s60
      %s63 = sphi 0, %s62
      %s77 = sphi 0, %s63
      %s83 = sphi 0, %s85
      %s86 = sphi 0, %s83
      %s87 = sphi 0, %s86
      %s103 = sphi 0, %s87
      %s109 = sphi 0, %s111
      %s112 = sphi 0, %s109
      %s113 = sphi 0, %s112
      %s129 = sphi 0, %s113
    $region4: #{resnet18_forward.21} parent=1 // loop_header_branch
      %13 = sbr.rel (%p11) target = $region8
    $region5: #{resnet18_forward.21} parent=1 // loop_body
      %s15 = ssub.s32 %s10, 1
      %s16 = ssub.s32 %s10, 2
      %s17 = sadd.s32 %s10, 1
      %s19 = sadd.s32 %s18, 1
      %p22 = scmp.eq.s32.totalorder %s10, 3
      %p23 = scmp.ne.s32.totalorder %s18, %s20
      %p24 = scmp.eq.s32.totalorder %s10, 0
      %p25 = por %p23, %p24
      %p26 = scmp.ne.s32.totalorder %s18, %s20
      %p27 = scmp.eq.s32.totalorder %s15, 3
      %p28 = por %p26, %p27
      %p29 = scmp.ne.s32.totalorder %s20, %s21
      %p30 = scmp.eq.s32.totalorder %s15, 0
      %p31 = por %p29, %p30
      %p32 = scmp.ne.s32.totalorder %s20, %s21
      %p33 = scmp.eq.s32.totalorder %s16, 3
      %p34 = por %p32, %p33
      %p36 = scmp.ne.s32.totalorder %s21, %s35
      %p37 = scmp.eq.s32.totalorder %s16, 0
      %p38 = por %p36, %p37
      %s40 = sadd.s32 %s39, 1
      %p43 = scmp.eq.s32.totalorder %s10, 3
      %p44 = scmp.ne.s32.totalorder %s39, %s41
      %p45 = scmp.eq.s32.totalorder %s10, 0
      %p46 = por %p44, %p45
      %p47 = scmp.ne.s32.totalorder %s39, %s41
      %p48 = scmp.eq.s32.totalorder %s15, 3
      %p49 = por %p47, %p48
      %p50 = scmp.ne.s32.totalorder %s41, %s42
      %p51 = scmp.eq.s32.totalorder %s15, 0
      %p52 = por %p50, %p51
      %p53 = scmp.ne.s32.totalorder %s41, %s42
      %p54 = scmp.eq.s32.totalorder %s16, 3
      %p55 = por %p53, %p54
      %p57 = scmp.ne.s32.totalorder %s42, %s56
      %p58 = scmp.eq.s32.totalorder %s16, 0
      %p59 = por %p57, %p58
      %s61 = sadd.s32 %s60, 1
      %p64 = scmp.eq.s32.totalorder %s10, 3
      %p65 = scmp.ne.s32.totalorder %s60, %s62
      %p66 = scmp.eq.s32.totalorder %s10, 0
      %p67 = por %p65, %p66
      %p68 = scmp.ne.s32.totalorder %s60, %s62
      %p69 = scmp.eq.s32.totalorder %s15, 3
      %p70 = por %p68, %p69
      %p71 = scmp.ne.s32.totalorder %s62, %s63
      %p72 = scmp.eq.s32.totalorder %s15, 0
      %p73 = por %p71, %p72
      %p74 = scmp.ne.s32.totalorder %s62, %s63
      %p75 = scmp.eq.s32.totalorder %s16, 3
      %p76 = por %p74, %p75
      %p78 = scmp.ne.s32.totalorder %s63, %s77
      %p79 = scmp.eq.s32.totalorder %s16, 0
      %p80 = por %p78, %p79
      %s81 = ssub.s32 %s10, %s17
      %p82 = scmp.eq.s32.totalorder %s81, 0
      %s84 = sadd.s32 %s83, 1
      %s85 = scalar_select %p82, %s83, %s84
      %p88 = pneg %p82
      %p89 = scmp.eq.s32.totalorder %s10, 3
      %p90 = por %p88, %p89
      %p91 = scmp.ne.s32.totalorder %s83, %s86
      %p92 = scmp.eq.s32.totalorder %s10, 0
      %p93 = por %p91, %p92
      %p94 = scmp.ne.s32.totalorder %s83, %s86
      %p95 = scmp.eq.s32.totalorder %s15, 3
      %p96 = por %p94, %p95
      %p97 = scmp.ne.s32.totalorder %s86, %s87
      %p98 = scmp.eq.s32.totalorder %s15, 0
      %p99 = por %p97, %p98
      %p100 = scmp.ne.s32.totalorder %s86, %s87
      %p101 = scmp.eq.s32.totalorder %s16, 3
      %p102 = por %p100, %p101
      %p104 = scmp.ne.s32.totalorder %s87, %s103
      %p105 = scmp.eq.s32.totalorder %s16, 0
      %p106 = por %p104, %p105
      %s107 = ssub.s32 %s10, %s17
      %p108 = scmp.eq.s32.totalorder %s107, 0
      %s110 = sadd.s32 %s109, 1
      %s111 = scalar_select %p108, %s109, %s110
      %p114 = pneg %p108
      %p115 = scmp.eq.s32.totalorder %s10, 3
      %p116 = por %p114, %p115
      %p117 = scmp.ne.s32.totalorder %s109, %s112
      %p118 = scmp.eq.s32.totalorder %s10, 0
      %p119 = por %p117, %p118
      %p120 = scmp.ne.s32.totalorder %s109, %s112
      %p121 = scmp.eq.s32.totalorder %s15, 3
      %p122 = por %p120, %p121
      %p123 = scmp.ne.s32.totalorder %s112, %s113
      %p124 = scmp.eq.s32.totalorder %s15, 0
      %p125 = por %p123, %p124
      %p126 = scmp.ne.s32.totalorder %s112, %s113
      %p127 = scmp.eq.s32.totalorder %s16, 3
      %p128 = por %p126, %p127
      %p130 = scmp.ne.s32.totalorder %s113, %s129
      %p131 = scmp.eq.s32.totalorder %s16, 0
      %p132 = por %p130, %p131
      %p133 = scmp.le.s32.totalorder 1, %s10
      %p134 = scmp.lt.s32.totalorder %s10, 5
      %p135 = pnand %p133, %p134
      %p136 = pneg %p135
      // Predicated region
      $region9: #{resnet18_forward.21} parent=5 // pred_check
        _
      $region10: #{resnet18_forward.21} parent=5 // pred_check_branch
        %138 = sbr.rel (%p135) target = $region12
      $region11: #{resnet18_forward.21} parent=5 // pred_region
        %s139 = ssub.s32 %s10, 1
        // Predicated region
        $region13: #{resnet18_forward.21} parent=11 // pred_check
          %p140 = pneg %p31
        $region14: #{resnet18_forward.21} parent=11 // pred_check_branch
          %142 = sbr.rel (%p140) target = $region16
        $region15: #{resnet18_forward.21} parent=11 // pred_region
          _
        $region16: #{resnet18_forward.21} parent=11 // pred_fallthru
          _
        // Predicated region
        $region17: #{resnet18_forward.21} parent=11 // pred_check
          %p143 = pneg %p52
        $region18: #{resnet18_forward.21} parent=11 // pred_check_branch
          %145 = sbr.rel (%p143) target = $region20
        $region19: #{resnet18_forward.21} parent=11 // pred_region
          _
        $region20: #{resnet18_forward.21} parent=11 // pred_fallthru
          _
        // Predicated region
        $region21: #{resnet18_forward.21} parent=11 // pred_check
          %p146 = pneg %p73
        $region22: #{resnet18_forward.21} parent=11 // pred_check_branch
          %148 = sbr.rel (%p146) target = $region24
        $region23: #{resnet18_forward.21} parent=11 // pred_region
          _
        $region24: #{resnet18_forward.21} parent=11 // pred_fallthru
          _
      $region12: #{resnet18_forward.21} parent=5 // pred_fallthru
        _
      %p149 = scmp.lt.s32.totalorder %s10, 4
      // Predicated region
      $region25: #{resnet18_forward.21} parent=5 // pred_check
        %p150 = pneg %p149
      $region26: #{resnet18_forward.21} parent=5 // pred_check_branch
        %152 = sbr.rel (%p150) target = $region28
      $region27: #{resnet18_forward.21} parent=5 // pred_region
        // Predicated region
        $region29: #{resnet18_forward.21} parent=27 // pred_check
          %p153 = pneg %p93
        $region30: #{resnet18_forward.21} parent=27 // pred_check_branch
          %155 = sbr.rel (%p153) target = $region32
        $region31: #{resnet18_forward.21} parent=27 // pred_region
          %s156 = sand.u32 %s83, 1
          %s157 = sand.u32 %s83, 1
          %s158 = smul.addr %s157, 64
          %s159 = scalar_lea.vmem [#allocation2], %s158
          %s160 = smul.u32 4, %s10
          %s161 = smul.addr %s160, 4
          %s162 = scalar_lea.vmem %s3, %s161
          // Predicated region
          $region33: #{resnet18_forward.21} parent=31 // pred_check
            _
          $region34: #{resnet18_forward.21} parent=31 // pred_check_branch
            %164 = sbr.rel (0) target = $region36
          $region35: #{resnet18_forward.21} parent=31 // pred_region
            // Predicated region
            $region37: #{resnet18_forward.21} parent=35 // pred_check
              _
            $region38: #{resnet18_forward.21} parent=35 // pred_check_branch
              %166 = sbr.rel (0) target = $region40
            $region39: #{resnet18_forward.21} parent=35 // pred_region
              loop: start=0, step=1, limit=1
              $region41: #{resnet18_forward.21} parent=39 // loop_pre_header
                _
              $region42: #{resnet18_forward.21} parent=39 // loop_header
                %s168 = sphi 0, %s172
                %p169 = scmp.ge.s32.totalorder %s168, 1
                %s173 = sphi %s162, %s162
                %s174 = sphi %s159, %s159
              $region43: #{resnet18_forward.21} parent=39 // loop_header_branch
                %171 = sbr.rel (%p169) target = $region47
              $region44: #{resnet18_forward.21} parent=39 // loop_body
                %v175 = vld [vmem:[%s173] sm:$0xff]
                %176 = vst [vmem:[%s174] sm:$0xff] %v175
                %v177 = vld [vmem:[%s173 + $0x8] sm:$0xff]
                %178 = vst [vmem:[%s174 + $0x8] sm:$0xff] %v177
                %v179 = vld [vmem:[%s173 + $0x40] sm:$0xff]
                %180 = vst [vmem:[%s174 + $0x10] sm:$0xff] %v179
                %v181 = vld [vmem:[%s173 + $0x48] sm:$0xff]
                %182 = vst [vmem:[%s174 + $0x18] sm:$0xff] %v181
                %v183 = vld [vmem:[%s173 + $0x80] sm:$0xff]
                %184 = vst [vmem:[%s174 + $0x20] sm:$0xff] %v183
                %v185 = vld [vmem:[%s173 + $0x88] sm:$0xff]
                %186 = vst [vmem:[%s174 + $0x28] sm:$0xff] %v185
                %v187 = vld [vmem:[%s173 + $0xc0] sm:$0xff]
                %188 = vst [vmem:[%s174 + $0x30] sm:$0xff] %v187
                %v189 = vld [vmem:[%s173 + $0xc8] sm:$0xff]
                %190 = vst [vmem:[%s174 + $0x38] sm:$0xff] %v189
              $region45: #{resnet18_forward.21} parent=39 // loop_footer
                %s172 = sadd.s32 1, %s168
              $region46: #{resnet18_forward.21} parent=39 // loop_footer_branch
                %167 = sbr.rel target = $region42
              $region47: #{resnet18_forward.21} parent=39 // loop_exit
                _
            $region40: #{resnet18_forward.21} parent=35 // pred_fallthru
              _
            // Predicated region
            $region48: #{resnet18_forward.21} parent=35 // pred_check
              _
            $region49: #{resnet18_forward.21} parent=35 // pred_check_branch
              %192 = sbr.rel target = $region51
            $region50: #{resnet18_forward.21} parent=35 // pred_region
              _
            $region51: #{resnet18_forward.21} parent=35 // pred_fallthru
              _
          $region36: #{resnet18_forward.21} parent=31 // pred_fallthru
            _
          %193 = vnop
        $region32: #{resnet18_forward.21} parent=27 // pred_fallthru
          _
      $region28: #{resnet18_forward.21} parent=5 // pred_fallthru
        _
      %p194 = scmp.le.s32.totalorder 1, %s10
      %p195 = scmp.lt.s32.totalorder %s10, 5
      %p196 = pnand %p194, %p195
      %p197 = pneg %p196
      // Predicated region
      $region52: #{resnet18_forward.21} parent=5 // pred_check
        _
      $region53: #{resnet18_forward.21} parent=5 // pred_check_branch
        %199 = sbr.rel (%p196) target = $region55
      $region54: #{resnet18_forward.21} parent=5 // pred_region
        %s200 = ssub.s32 %s10, 1
        %s201 = sand.u32 %s86, 1
        %s202 = sand.u32 %s86, 1
        %s203 = smul.addr %s202, 64
        %s204 = scalar_lea.vmem [#allocation2], %s203
        // Predicated region
        $region56: #{resnet18_forward.21} parent=54 // pred_check
          %p205 = pneg %p99
        $region57: #{resnet18_forward.21} parent=54 // pred_check_branch
          %207 = sbr.rel (%p205) target = $region59
        $region58: #{resnet18_forward.21} parent=54 // pred_region
          _
        $region59: #{resnet18_forward.21} parent=54 // pred_fallthru
          _
        %p208 = pneg %p31
        %p209 = pneg %p28
        %p210 = pneg %p52
        %p211 = pneg %p49
        %p212 = pneg %p73
        %p213 = pneg %p70
        %s214 = sand.u32 %s86, 1
        %s215 = sand.u32 %s86, 1
        %s216 = smul.addr %s215, 64
        %s217 = scalar_lea.vmem [#allocation2], %s216
        %p218 = pneg %p99
        %p219 = pneg %p96
        %p220 = pneg %p125
        %p221 = pneg %p122
        %s222 = sand.u32 %s112, 1
        %s223 = sand.u32 %s112, 1
        %s224 = smul.addr %s223, 64
        %s225 = scalar_lea.vmem [#allocation3], %s224
        %s226 = smul.u32 4, %s15
        %s227 = smul.u32 4, %s15
        %v229 = vld [vmem:[%s0] sm:$0xf]
        %v230 = vld [vmem:[%s0 + $0x4] sm:$0xf]
        %v231 = vld [vmem:[%s204] sm:$0xff]
        %v232 = vld [vmem:[%s204 + $0x8] sm:$0xff]
        %v233 = vld [vmem:[%s204 + $0x10] sm:$0xff]
        %v234 = vld [vmem:[%s204 + $0x18] sm:$0xff]
        %v235 = vld [vmem:[%s204 + $0x20] sm:$0xff]
        %v236 = vld [vmem:[%s204 + $0x28] sm:$0xff]
        %v237 = vld [vmem:[%s204 + $0x30] sm:$0xff]
        %v238 = vld [vmem:[%s204 + $0x38] sm:$0xff]
        %v241 = vunpack.c.l.b16 %v229
        %v242 = vunpack.c.l.b16 %v230
        %v243 = vpack.c.b16 %v242, %v241
        %v252 = vunpack.c.l.b16 %v231
        %v253 = vunpack.c.h.b16 %v231
        %v254 = vunpack.c.l.b16 %v232
        %v255 = vunpack.c.h.b16 %v232
        %v256 = vunpack.c.l.b16 %v233
        %v257 = vunpack.c.h.b16 %v233
        %v258 = vunpack.c.l.b16 %v234
        %v259 = vunpack.c.h.b16 %v234
        %v260 = vunpack.c.l.b16 %v235
        %v261 = vunpack.c.h.b16 %v235
        %v262 = vunpack.c.l.b16 %v236
        %v263 = vunpack.c.h.b16 %v236
        %v264 = vunpack.c.l.b16 %v237
        %v265 = vunpack.c.h.b16 %v237
        %v266 = vunpack.c.l.b16 %v238
        %v267 = vunpack.c.h.b16 %v238
        %v268 = vpack.c.b16 %v256, %v252
        %v269 = vpack.c.b16 %v257, %v253
        %v270 = vpack.c.b16 %v258, %v254
        %v271 = vpack.c.b16 %v259, %v255
        %v272 = vpack.c.b16 %v264, %v260
        %v273 = vpack.c.b16 %v265, %v261
        %v274 = vpack.c.b16 %v266, %v262
        %v275 = vpack.c.b16 %v267, %v263
        %vm284 = vcmask 261120
        %v286 = vsel %vm284, %v243, 0
        %288 = vmatpush.bf16.msra.mxu0 0
        %289 = vmatpush.bf16.msra.mxu0 0
        %290 = vmatpush.bf16.msra.mxu0 0
        %291 = vmatpush.bf16.msra.mxu0 0
        %292 = vmatpush.bf16.msra.mxu0 0
        %293 = vmatpush.bf16.msra.mxu0 0
        %294 = vmatpush.bf16.msra.mxu0 %v272
        %295 = vmatpush.bf16.msra.mxu0 %v268
        %296 = vmatmul.bf16.gmra.mxu0 %v286
        %v297 = vpop.f32.mrf.mxu0
        %v298 = vadd.f32 0.0, %v297
        %v299 = vpop.f32.mrf.mxu0
        %v300 = vadd.f32 0.0, %v299
        %301 = vdwg.mxu0
        %302 = vmatpush.bf16.msra.mxu0 0
        %303 = vmatpush.bf16.msra.mxu0 0
        %304 = vmatpush.bf16.msra.mxu0 0
        %305 = vmatpush.bf16.msra.mxu0 0
        %306 = vmatpush.bf16.msra.mxu0 0
        %307 = vmatpush.bf16.msra.mxu0 0
        %308 = vmatpush.bf16.msra.mxu0 %v273
        %309 = vmatpush.bf16.msra.mxu0 %v269
        %310 = vmatmul.bf16.gmra.mxu0 %v286
        %v311 = vpop.f32.mrf.mxu0
        %v312 = vadd.f32 0.0, %v311
        %v313 = vpop.f32.mrf.mxu0
        %v314 = vadd.f32 0.0, %v313
        %315 = vdwg.mxu0
        %316 = vmatpush.bf16.msra.mxu0 0
        %317 = vmatpush.bf16.msra.mxu0 0
        %318 = vmatpush.bf16.msra.mxu0 0
        %319 = vmatpush.bf16.msra.mxu0 0
        %320 = vmatpush.bf16.msra.mxu0 0
        %321 = vmatpush.bf16.msra.mxu0 0
        %322 = vmatpush.bf16.msra.mxu0 %v274
        %323 = vmatpush.bf16.msra.mxu0 %v270
        %324 = vmatmul.bf16.gmra.mxu0 %v286
        %v325 = vpop.f32.mrf.mxu0
        %v326 = vadd.f32 0.0, %v325
        %v327 = vpop.f32.mrf.mxu0
        %v328 = vadd.f32 0.0, %v327
        %329 = vdwg.mxu0
        %330 = vmatpush.bf16.msra.mxu0 0
        %331 = vmatpush.bf16.msra.mxu0 0
        %332 = vmatpush.bf16.msra.mxu0 0
        %333 = vmatpush.bf16.msra.mxu0 0
        %334 = vmatpush.bf16.msra.mxu0 0
        %335 = vmatpush.bf16.msra.mxu0 0
        %336 = vmatpush.bf16.msra.mxu0 %v275
        %337 = vmatpush.bf16.msra.mxu0 %v271
        %338 = vmatmul.bf16.gmra.mxu0 %v286
        %v339 = vpop.f32.mrf.mxu0
        %v340 = vadd.f32 0.0, %v339
        %v341 = vpop.f32.mrf.mxu0
        %v342 = vadd.f32 0.0, %v341
        %343 = vdwg.mxu0
        %v344 = vld [vmem:[%s1] sm:$0xff]
        %v345 = vld [vmem:[%s1 + $0x8] sm:$0xff]
        %347 = vset.pattern.permute.xlu0 0
        %348 = vperm.xlu0 %347, %v344
        %v349 = vpop.permute.xlu0 %348
        %352 = vset.pattern.permute.xlu0 0
        %353 = vperm.xlu0 %352, %v345
        %v354 = vpop.permute.xlu0 %353
        %v356 = vmul.f32 %v298, %v349
        %v357 = vmul.f32 %v312, %v349
        %v358 = vmul.f32 %v326, %v349
        %v359 = vmul.f32 %v340, %v349
        %v360 = vmul.f32 %v300, %v354
        %v361 = vmul.f32 %v314, %v354
        %v362 = vmul.f32 %v328, %v354
        %v363 = vmul.f32 %v342, %v354
        %v364 = vld [vmem:[%s2] sm:$0xff]
        %v365 = vld [vmem:[%s2 + $0x8] sm:$0xff]
        %367 = vset.pattern.permute.xlu0 0
        %368 = vperm.xlu0 %367, %v364
        %v369 = vpop.permute.xlu0 %368
        %372 = vset.pattern.permute.xlu0 0
        %373 = vperm.xlu0 %372, %v365
        %v374 = vpop.permute.xlu0 %373
        %v376 = vadd.f32 %v356, %v369
        %v377 = vadd.f32 %v357, %v369
        %v378 = vadd.f32 %v358, %v369
        %v379 = vadd.f32 %v359, %v369
        %v380 = vadd.f32 %v360, %v374
        %v381 = vadd.f32 %v361, %v374
        %v382 = vadd.f32 %v362, %v374
        %v383 = vadd.f32 %v363, %v374
        %v384 = vmax.f32 %v376, 0.0
        %v385 = vmax.f32 %v377, 0.0
        %v386 = vmax.f32 %v378, 0.0
        %v387 = vmax.f32 %v379, 0.0
        %v388 = vmax.f32 %v380, 0.0
        %v389 = vmax.f32 %v381, 0.0
        %v390 = vmax.f32 %v382, 0.0
        %v391 = vmax.f32 %v383, 0.0
        %392 = vst [vmem:[%s225] sm:$0xff] %v384
        %393 = vst [vmem:[%s225 + $0x8] sm:$0xff] %v385
        %394 = vst [vmem:[%s225 + $0x10] sm:$0xff] %v386
        %395 = vst [vmem:[%s225 + $0x18] sm:$0xff] %v387
        %396 = vst [vmem:[%s225 + $0x20] sm:$0xff] %v388
        %397 = vst [vmem:[%s225 + $0x28] sm:$0xff] %v389
        %398 = vst [vmem:[%s225 + $0x30] sm:$0xff] %v390
        %399 = vst [vmem:[%s225 + $0x38] sm:$0xff] %v391
        %s400 = sand.u32 %s112, 1
        %s401 = sand.u32 %s112, 1
        %s402 = smul.addr %s401, 64
        %s403 = scalar_lea.vmem [#allocation3], %s402
        // Predicated region
        $region60: #{resnet18_forward.21} parent=54 // pred_check
          %p404 = pneg %p122
        $region61: #{resnet18_forward.21} parent=54 // pred_check_branch
          %406 = sbr.rel (%p404) target = $region63
        $region62: #{resnet18_forward.21} parent=54 // pred_region
          %s407 = smul.u32 4, %s15
          %s408 = smul.addr %s407, 8
          %s409 = scalar_lea.vmem %s4, %s408
          // Predicated region
          $region64: #{resnet18_forward.21} parent=62 // pred_check
            _
          $region65: #{resnet18_forward.21} parent=62 // pred_check_branch
            %411 = sbr.rel (0) target = $region67
          $region66: #{resnet18_forward.21} parent=62 // pred_region
            // Predicated region
            $region68: #{resnet18_forward.21} parent=66 // pred_check
              _
            $region69: #{resnet18_forward.21} parent=66 // pred_check_branch
              %413 = sbr.rel (0) target = $region71
            $region70: #{resnet18_forward.21} parent=66 // pred_region
              loop: start=0, step=1, limit=1
              $region72: #{resnet18_forward.21} parent=70 // loop_pre_header
                _
              $region73: #{resnet18_forward.21} parent=70 // loop_header
                %s415 = sphi 0, %s419
                %p416 = scmp.ge.s32.totalorder %s415, 1
                %s420 = sphi %s403, %s403
                %s421 = sphi %s409, %s409
              $region74: #{resnet18_forward.21} parent=70 // loop_header_branch
                %418 = sbr.rel (%p416) target = $region78
              $region75: #{resnet18_forward.21} parent=70 // loop_body
                %v422 = vld [vmem:[%s420] sm:$0xff]
                %423 = vst [vmem:[%s421] sm:$0xff] %v422
                %v424 = vld [vmem:[%s420 + $0x8] sm:$0xff]
                %425 = vst [vmem:[%s421 + $0x8] sm:$0xff] %v424
                %v426 = vld [vmem:[%s420 + $0x10] sm:$0xff]
                %427 = vst [vmem:[%s421 + $0x10] sm:$0xff] %v426
                %v428 = vld [vmem:[%s420 + $0x18] sm:$0xff]
                %429 = vst [vmem:[%s421 + $0x18] sm:$0xff] %v428
                %v430 = vld [vmem:[%s420 + $0x20] sm:$0xff]
                %431 = vst [vmem:[%s421 + $0x80] sm:$0xff] %v430
                %v432 = vld [vmem:[%s420 + $0x28] sm:$0xff]
                %433 = vst [vmem:[%s421 + $0x88] sm:$0xff] %v432
                %v434 = vld [vmem:[%s420 + $0x30] sm:$0xff]
                %435 = vst [vmem:[%s421 + $0x90] sm:$0xff] %v434
                %v436 = vld [vmem:[%s420 + $0x38] sm:$0xff]
                %437 = vst [vmem:[%s421 + $0x98] sm:$0xff] %v436
              $region76: #{resnet18_forward.21} parent=70 // loop_footer
                %s419 = sadd.s32 1, %s415
              $region77: #{resnet18_forward.21} parent=70 // loop_footer_branch
                %414 = sbr.rel target = $region73
              $region78: #{resnet18_forward.21} parent=70 // loop_exit
                _
            $region71: #{resnet18_forward.21} parent=66 // pred_fallthru
              _
            // Predicated region
            $region79: #{resnet18_forward.21} parent=66 // pred_check
              _
            $region80: #{resnet18_forward.21} parent=66 // pred_check_branch
              %439 = sbr.rel target = $region82
            $region81: #{resnet18_forward.21} parent=66 // pred_region
              _
            $region82: #{resnet18_forward.21} parent=66 // pred_fallthru
              _
          $region67: #{resnet18_forward.21} parent=62 // pred_fallthru
            _
          %440 = vnop
        $region63: #{resnet18_forward.21} parent=54 // pred_fallthru
          _
      $region55: #{resnet18_forward.21} parent=5 // pred_fallthru
        _
      %p441 = scmp.le.s32.totalorder 2, %s10
      // Predicated region
      $region83: #{resnet18_forward.21} parent=5 // pred_check
        %p442 = pneg %p441
      $region84: #{resnet18_forward.21} parent=5 // pred_check_branch
        %444 = sbr.rel (%p442) target = $region86
      $region85: #{resnet18_forward.21} parent=5 // pred_region
        %s445 = ssub.s32 %s10, 2
        // Predicated region
        $region87: #{resnet18_forward.21} parent=85 // pred_check
          %p446 = pneg %p128
        $region88: #{resnet18_forward.21} parent=85 // pred_check_branch
          %448 = sbr.rel (%p446) target = $region90
        $region89: #{resnet18_forward.21} parent=85 // pred_region
          %s449 = sand.u32 %s113, 1
          %s450 = sand.u32 %s113, 1
          %s451 = smul.addr %s450, 64
          %s452 = scalar_lea.vmem [#allocation3], %s451
        $region90: #{resnet18_forward.21} parent=85 // pred_fallthru
          _
      $region86: #{resnet18_forward.21} parent=5 // pred_fallthru
        _
    $region6: #{resnet18_forward.21} parent=1 // loop_footer
      %s14 = sadd.s32 1, %s10
    $region7: #{resnet18_forward.21} parent=1 // loop_footer_branch
      %9 = sbr.rel target = $region3
    $region8: #{resnet18_forward.21} parent=1 // loop_exit
      _

// kernel: resnet18_forward.22
$region0: #{resnet18_forward.22}
  #allocation0 [shape = 'u32[]', space=smem, size = 0x4, offset = 0x4, fixed_abs, tag = 'smem constant byte address 0x4 - core index']
  #allocation1 [shape = 'u32[72,128]{1,0:T(1,128)}', space=vmem, size = 0x9000, scoped, tag = 'internal scratch']
  %s0 = inlined_call_operand.vmem [shape: bf16[16,144], index: 0, kind: input, shape index: {}]
  %s1 = inlined_call_operand.vmem [shape: f32[16,1], index: 1, kind: input, shape index: {}]
  %s2 = inlined_call_operand.vmem [shape: f32[16,1], index: 2, kind: input, shape index: {}]
  %s3 = inlined_call_operand.vmem [shape: bf16[144,2048], index: 3, kind: input, shape index: {}]
  %s4 = inlined_call_operand.vmem [shape: f32[16,2048], index: 4, kind: output, shape index: {}]
  %s5 = sld [smem:[#allocation0]]
  $region91: #{resnet18_forward.22} parent=0
    _
  %s7 = ssub.s32 1, %s5
  %s8 = scalar_select 0, %s7, %s5
  $region1: #{resnet18_forward.22} parent=0
    #allocation2 [shape = 'u8[294912]{0}', space=vmem, size = 0x48000, scoped, tag = 'input window, operand 3']
    #allocation3 [shape = 'u8[65536]{0}', space=vmem, size = 0x10000, scoped, tag = 'output window, operand 0']
    loop: start=0, step=1, limit=6
    $region2: #{resnet18_forward.22} parent=1 // loop_pre_header
      _
    $region3: #{resnet18_forward.22} parent=1 // loop_header
      %s10 = sphi 0, %s14
      %p11 = scmp.ge.s32.totalorder %s10, 6
      %s18 = sphi 0, %s18
      %s20 = sphi 0, %s18
      %s21 = sphi 0, %s20
      %s35 = sphi 0, %s21
      %s39 = sphi 0, %s39
      %s41 = sphi 0, %s39
      %s42 = sphi 0, %s41
      %s56 = sphi 0, %s42
      %s60 = sphi 0, %s60
      %s62 = sphi 0, %s60
      %s63 = sphi 0, %s62
      %s77 = sphi 0, %s63
      %s83 = sphi 0, %s85
      %s86 = sphi 0, %s83
      %s87 = sphi 0, %s86
      %s103 = sphi 0, %s87
      %s109 = sphi 0, %s111
      %s112 = sphi 0, %s109
      %s113 = sphi 0, %s112
      %s129 = sphi 0, %s113
    $region4: #{resnet18_forward.22} parent=1 // loop_header_branch
      %13 = sbr.rel (%p11) target = $region8
    $region5: #{resnet18_forward.22} parent=1 // loop_body
      %s15 = ssub.s32 %s10, 1
      %s16 = ssub.s32 %s10, 2
      %s17 = sadd.s32 %s10, 1
      %s19 = sadd.s32 %s18, 1
      %p22 = scmp.eq.s32.totalorder %s10, 3
      %p23 = scmp.ne.s32.totalorder %s18, %s20
      %p24 = scmp.eq.s32.totalorder %s10, 0
      %p25 = por %p23, %p24
      %p26 = scmp.ne.s32.totalorder %s18, %s20
      %p27 = scmp.eq.s32.totalorder %s15, 3
      %p28 = por %p26, %p27
      %p29 = scmp.ne.s32.totalorder %s20, %s21
      %p30 = scmp.eq.s32.totalorder %s15, 0
      %p31 = por %p29, %p30
      %p32 = scmp.ne.s32.totalorder %s20, %s21
      %p33 = scmp.eq.s32.totalorder %s16, 3
      %p34 = por %p32, %p33
      %p36 = scmp.ne.s32.totalorder %s21, %s35
      %p37 = scmp.eq.s32.totalorder %s16, 0
      %p38 = por %p36, %p37
      %s40 = sadd.s32 %s39, 1
      %p43 = scmp.eq.s32.totalorder %s10, 3
      %p44 = scmp.ne.s32.totalorder %s39, %s41
      %p45 = scmp.eq.s32.totalorder %s10, 0
      %p46 = por %p44, %p45
      %p47 = scmp.ne.s32.totalorder %s39, %s41
      %p48 = scmp.eq.s32.totalorder %s15, 3
      %p49 = por %p47, %p48
      %p50 = scmp.ne.s32.totalorder %s41, %s42
      %p51 = scmp.eq.s32.totalorder %s15, 0
      %p52 = por %p50, %p51
      %p53 = scmp.ne.s32.totalorder %s41, %s42
      %p54 = scmp.eq.s32.totalorder %s16, 3
      %p55 = por %p53, %p54
      %p57 = scmp.ne.s32.totalorder %s42, %s56
      %p58 = scmp.eq.s32.totalorder %s16, 0
      %p59 = por %p57, %p58
      %s61 = sadd.s32 %s60, 1
      %p64 = scmp.eq.s32.totalorder %s10, 3
      %p65 = scmp.ne.s32.totalorder %s60, %s62
      %p66 = scmp.eq.s32.totalorder %s10, 0
      %p67 = por %p65, %p66
      %p68 = scmp.ne.s32.totalorder %s60, %s62
      %p69 = scmp.eq.s32.totalorder %s15, 3
      %p70 = por %p68, %p69
      %p71 = scmp.ne.s32.totalorder %s62, %s63
      %p72 = scmp.eq.s32.totalorder %s15, 0
      %p73 = por %p71, %p72
      %p74 = scmp.ne.s32.totalorder %s62, %s63
      %p75 = scmp.eq.s32.totalorder %s16, 3
      %p76 = por %p74, %p75
      %p78 = scmp.ne.s32.totalorder %s63, %s77
      %p79 = scmp.eq.s32.totalorder %s16, 0
      %p80 = por %p78, %p79
      %s81 = ssub.s32 %s10, %s17
      %p82 = scmp.eq.s32.totalorder %s81, 0
      %s84 = sadd.s32 %s83, 1
      %s85 = scalar_select %p82, %s83, %s84
      %p88 = pneg %p82
      %p89 = scmp.eq.s32.totalorder %s10, 3
      %p90 = por %p88, %p89
      %p91 = scmp.ne.s32.totalorder %s83, %s86
      %p92 = scmp.eq.s32.totalorder %s10, 0
      %p93 = por %p91, %p92
      %p94 = scmp.ne.s32.totalorder %s83, %s86
      %p95 = scmp.eq.s32.totalorder %s15, 3
      %p96 = por %p94, %p95
      %p97 = scmp.ne.s32.totalorder %s86, %s87
      %p98 = scmp.eq.s32.totalorder %s15, 0
      %p99 = por %p97, %p98
      %p100 = scmp.ne.s32.totalorder %s86, %s87
      %p101 = scmp.eq.s32.totalorder %s16, 3
      %p102 = por %p100, %p101
      %p104 = scmp.ne.s32.totalorder %s87, %s103
      %p105 = scmp.eq.s32.totalorder %s16, 0
      %p106 = por %p104, %p105
      %s107 = ssub.s32 %s10, %s17
      %p108 = scmp.eq.s32.totalorder %s107, 0
      %s110 = sadd.s32 %s109, 1
      %s111 = scalar_select %p108, %s109, %s110
      %p114 = pneg %p108
      %p115 = scmp.eq.s32.totalorder %s10, 3
      %p116 = por %p114, %p115
      %p117 = scmp.ne.s32.totalorder %s109, %s112
      %p118 = scmp.eq.s32.totalorder %s10, 0
      %p119 = por %p117, %p118
      %p120 = scmp.ne.s32.totalorder %s109, %s112
      %p121 = scmp.eq.s32.totalorder %s15, 3
      %p122 = por %p120, %p121
      %p123 = scmp.ne.s32.totalorder %s112, %s113
      %p124 = scmp.eq.s32.totalorder %s15, 0
      %p125 = por %p123, %p124
      %p126 = scmp.ne.s32.totalorder %s112, %s113
      %p127 = scmp.eq.s32.totalorder %s16, 3
      %p128 = por %p126, %p127
      %p130 = scmp.ne.s32.totalorder %s113, %s129
      %p131 = scmp.eq.s32.totalorder %s16, 0
      %p132 = por %p130, %p131
      %p133 = scmp.le.s32.totalorder 1, %s10
      %p134 = scmp.lt.s32.totalorder %s10, 5
      %p135 = pnand %p133, %p134
      %p136 = pneg %p135
      // Predicated region
      $region9: #{resnet18_forward.22} parent=5 // pred_check
        _
      $region10: #{resnet18_forward.22} parent=5 // pred_check_branch
        %138 = sbr.rel (%p135) target = $region12
      $region11: #{resnet18_forward.22} parent=5 // pred_region
        %s139 = ssub.s32 %s10, 1
        // Predicated region
        $region13: #{resnet18_forward.22} parent=11 // pred_check
          %p140 = pneg %p31
        $region14: #{resnet18_forward.22} parent=11 // pred_check_branch
          %142 = sbr.rel (%p140) target = $region16
        $region15: #{resnet18_forward.22} parent=11 // pred_region
          _
        $region16: #{resnet18_forward.22} parent=11 // pred_fallthru
          _
        // Predicated region
        $region17: #{resnet18_forward.22} parent=11 // pred_check
          %p143 = pneg %p52
        $region18: #{resnet18_forward.22} parent=11 // pred_check_branch
          %145 = sbr.rel (%p143) target = $region20
        $region19: #{resnet18_forward.22} parent=11 // pred_region
          _
        $region20: #{resnet18_forward.22} parent=11 // pred_fallthru
          _
        // Predicated region
        $region21: #{resnet18_forward.22} parent=11 // pred_check
          %p146 = pneg %p73
        $region22: #{resnet18_forward.22} parent=11 // pred_check_branch
          %148 = sbr.rel (%p146) target = $region24
        $region23: #{resnet18_forward.22} parent=11 // pred_region
          _
        $region24: #{resnet18_forward.22} parent=11 // pred_fallthru
          _
      $region12: #{resnet18_forward.22} parent=5 // pred_fallthru
        _
      %p149 = scmp.lt.s32.totalorder %s10, 4
      // Predicated region
      $region25: #{resnet18_forward.22} parent=5 // pred_check
        %p150 = pneg %p149
      $region26: #{resnet18_forward.22} parent=5 // pred_check_branch
        %152 = sbr.rel (%p150) target = $region28
      $region27: #{resnet18_forward.22} parent=5 // pred_region
        // Predicated region
        $region29: #{resnet18_forward.22} parent=27 // pred_check
          %p153 = pneg %p93
        $region30: #{resnet18_forward.22} parent=27 // pred_check_branch
          %155 = sbr.rel (%p153) target = $region32
        $region31: #{resnet18_forward.22} parent=27 // pred_region
          %s156 = sand.u32 %s83, 1
          %s157 = sand.u32 %s83, 1
          %s158 = smul.addr %s157, 288
          %s159 = scalar_lea.vmem [#allocation2], %s158
          %s160 = smul.u32 4, %s10
          %s161 = smul.addr %s160, 4
          %s162 = scalar_lea.vmem %s3, %s161
          // Predicated region
          $region33: #{resnet18_forward.22} parent=31 // pred_check
            _
          $region34: #{resnet18_forward.22} parent=31 // pred_check_branch
            %164 = sbr.rel (0) target = $region36
          $region35: #{resnet18_forward.22} parent=31 // pred_region
            // Predicated region
            $region37: #{resnet18_forward.22} parent=35 // pred_check
              _
            $region38: #{resnet18_forward.22} parent=35 // pred_check_branch
              %166 = sbr.rel (0) target = $region40
            $region39: #{resnet18_forward.22} parent=35 // pred_region
              loop: start=0, step=1, limit=1
              $region41: #{resnet18_forward.22} parent=39 // loop_pre_header
                _
              $region42: #{resnet18_forward.22} parent=39 // loop_header
                %s168 = sphi 0, %s172
                %p169 = scmp.ge.s32.totalorder %s168, 1
                %s173 = sphi %s162, %s162
                %s174 = sphi %s159, %s159
              $region43: #{resnet18_forward.22} parent=39 // loop_header_branch
                %171 = sbr.rel (%p169) target = $region47
              $region44: #{resnet18_forward.22} parent=39 // loop_body
                %v175 = vld [vmem:[%s173] sm:$0xff]
                %176 = vst [vmem:[%s174] sm:$0xff] %v175
                %v177 = vld [vmem:[%s173 + $0x8] sm:$0xff]
                %178 = vst [vmem:[%s174 + $0x8] sm:$0xff] %v177
                %v179 = vld [vmem:[%s173 + $0x40] sm:$0xff]
                %180 = vst [vmem:[%s174 + $0x10] sm:$0xff] %v179
                %v181 = vld [vmem:[%s173 + $0x48] sm:$0xff]
                %182 = vst [vmem:[%s174 + $0x18] sm:$0xff] %v181
                %v183 = vld [vmem:[%s173 + $0x80] sm:$0xff]
                %184 = vst [vmem:[%s174 + $0x20] sm:$0xff] %v183
                %v185 = vld [vmem:[%s173 + $0x88] sm:$0xff]
                %186 = vst [vmem:[%s174 + $0x28] sm:$0xff] %v185
                %v187 = vld [vmem:[%s173 + $0xc0] sm:$0xff]
                %188 = vst [vmem:[%s174 + $0x30] sm:$0xff] %v187
                %v189 = vld [vmem:[%s173 + $0xc8] sm:$0xff]
                %190 = vst [vmem:[%s174 + $0x38] sm:$0xff] %v189
                %v191 = vld [vmem:[%s173 + $0x100] sm:$0xff]
                %192 = vst [vmem:[%s174 + $0x40] sm:$0xff] %v191
                %v193 = vld [vmem:[%s173 + $0x108] sm:$0xff]
                %194 = vst [vmem:[%s174 + $0x48] sm:$0xff] %v193
                %v195 = vld [vmem:[%s173 + $0x140] sm:$0xff]
                %196 = vst [vmem:[%s174 + $0x50] sm:$0xff] %v195
                %v197 = vld [vmem:[%s173 + $0x148] sm:$0xff]
                %198 = vst [vmem:[%s174 + $0x58] sm:$0xff] %v197
                %v199 = vld [vmem:[%s173 + $0x180] sm:$0xff]
                %200 = vst [vmem:[%s174 + $0x60] sm:$0xff] %v199
                %v201 = vld [vmem:[%s173 + $0x188] sm:$0xff]
                %202 = vst [vmem:[%s174 + $0x68] sm:$0xff] %v201
                %v203 = vld [vmem:[%s173 + $0x1c0] sm:$0xff]
                %204 = vst [vmem:[%s174 + $0x70] sm:$0xff] %v203
                %v205 = vld [vmem:[%s173 + $0x1c8] sm:$0xff]
                %206 = vst [vmem:[%s174 + $0x78] sm:$0xff] %v205
                %v207 = vld [vmem:[%s173 + $0x200] sm:$0xff]
                %208 = vst [vmem:[%s174 + $0x80] sm:$0xff] %v207
                %v209 = vld [vmem:[%s173 + $0x208] sm:$0xff]
                %210 = vst [vmem:[%s174 + $0x88] sm:$0xff] %v209
                %v211 = vld [vmem:[%s173 + $0x240] sm:$0xff]
                %212 = vst [vmem:[%s174 + $0x90] sm:$0xff] %v211
                %v213 = vld [vmem:[%s173 + $0x248] sm:$0xff]
                %214 = vst [vmem:[%s174 + $0x98] sm:$0xff] %v213
                %v215 = vld [vmem:[%s173 + $0x280] sm:$0xff]
                %216 = vst [vmem:[%s174 + $0xa0] sm:$0xff] %v215
                %v217 = vld [vmem:[%s173 + $0x288] sm:$0xff]
                %218 = vst [vmem:[%s174 + $0xa8] sm:$0xff] %v217
                %v219 = vld [vmem:[%s173 + $0x2c0] sm:$0xff]
                %220 = vst [vmem:[%s174 + $0xb0] sm:$0xff] %v219
                %v221 = vld [vmem:[%s173 + $0x2c8] sm:$0xff]
                %222 = vst [vmem:[%s174 + $0xb8] sm:$0xff] %v221
                %v223 = vld [vmem:[%s173 + $0x300] sm:$0xff]
                %224 = vst [vmem:[%s174 + $0xc0] sm:$0xff] %v223
                %v225 = vld [vmem:[%s173 + $0x308] sm:$0xff]
                %226 = vst [vmem:[%s174 + $0xc8] sm:$0xff] %v225
                %v227 = vld [vmem:[%s173 + $0x340] sm:$0xff]
                %228 = vst [vmem:[%s174 + $0xd0] sm:$0xff] %v227
                %v229 = vld [vmem:[%s173 + $0x348] sm:$0xff]
                %230 = vst [vmem:[%s174 + $0xd8] sm:$0xff] %v229
                %v231 = vld [vmem:[%s173 + $0x380] sm:$0xff]
                %232 = vst [vmem:[%s174 + $0xe0] sm:$0xff] %v231
                %v233 = vld [vmem:[%s173 + $0x388] sm:$0xff]
                %234 = vst [vmem:[%s174 + $0xe8] sm:$0xff] %v233
                %v235 = vld [vmem:[%s173 + $0x3c0] sm:$0xff]
                %236 = vst [vmem:[%s174 + $0xf0] sm:$0xff] %v235
                %v237 = vld [vmem:[%s173 + $0x3c8] sm:$0xff]
                %238 = vst [vmem:[%s174 + $0xf8] sm:$0xff] %v237
                %v239 = vld [vmem:[%s173 + $0x400] sm:$0xff]
                %240 = vst [vmem:[%s174 + $0x100] sm:$0xff] %v239
                %v241 = vld [vmem:[%s173 + $0x408] sm:$0xff]
                %242 = vst [vmem:[%s174 + $0x108] sm:$0xff] %v241
                %v243 = vld [vmem:[%s173 + $0x440] sm:$0xff]
                %244 = vst [vmem:[%s174 + $0x110] sm:$0xff] %v243
                %v245 = vld [vmem:[%s173 + $0x448] sm:$0xff]
                %246 = vst [vmem:[%s174 + $0x118] sm:$0xff] %v245
              $region45: #{resnet18_forward.22} parent=39 // loop_footer
                %s172 = sadd.s32 1, %s168
              $region46: #{resnet18_forward.22} parent=39 // loop_footer_branch
                %167 = sbr.rel target = $region42
              $region47: #{resnet18_forward.22} parent=39 // loop_exit
                _
            $region40: #{resnet18_forward.22} parent=35 // pred_fallthru
              _
            // Predicated region
            $region48: #{resnet18_forward.22} parent=35 // pred_check
              _
            $region49: #{resnet18_forward.22} parent=35 // pred_check_branch
              %248 = sbr.rel target = $region51
            $region50: #{resnet18_forward.22} parent=35 // pred_region
              _
            $region51: #{resnet18_forward.22} parent=35 // pred_fallthru
              _
          $region36: #{resnet18_forward.22} parent=31 // pred_fallthru
            _
          %249 = vnop
        $region32: #{resnet18_forward.22} parent=27 // pred_fallthru
          _
      $region28: #{resnet18_forward.22} parent=5 // pred_fallthru
        _
      %p250 = scmp.le.s32.totalorder 1, %s10
      %p251 = scmp.lt.s32.totalorder %s10, 5
      %p252 = pnand %p250, %p251
      %p253 = pneg %p252
      // Predicated region
      $region52: #{resnet18_forward.22} parent=5 // pred_check
        _
      $region53: #{resnet18_forward.22} parent=5 // pred_check_branch
        %255 = sbr.rel (%p252) target = $region55
      $region54: #{resnet18_forward.22} parent=5 // pred_region
        %s256 = ssub.s32 %s10, 1
        %s257 = sand.u32 %s86, 1
        %s258 = sand.u32 %s86, 1
        %s259 = smul.addr %s258, 288
        %s260 = scalar_lea.vmem [#allocation2], %s259
        // Predicated region
        $region56: #{resnet18_forward.22} parent=54 // pred_check
          %p261 = pneg %p99
        $region57: #{resnet18_forward.22} parent=54 // pred_check_branch
          %263 = sbr.rel (%p261) target = $region59
        $region58: #{resnet18_forward.22} parent=54 // pred_region
          _
        $region59: #{resnet18_forward.22} parent=54 // pred_fallthru
          _
        %p264 = pneg %p31
        %p265 = pneg %p28
        %p266 = pneg %p52
        %p267 = pneg %p49
        %p268 = pneg %p73
        %p269 = pneg %p70
        %s270 = sand.u32 %s86, 1
        %s271 = sand.u32 %s86, 1
        %s272 = smul.addr %s271, 288
        %s273 = scalar_lea.vmem [#allocation2], %s272
        %p274 = pneg %p99
        %p275 = pneg %p96
        %p276 = pneg %p125
        %p277 = pneg %p122
        %s278 = sand.u32 %s112, 1
        %s279 = sand.u32 %s112, 1
        %s280 = smul.addr %s279, 64
        %s281 = scalar_lea.vmem [#allocation3], %s280
        %s282 = smul.u32 4, %s15
        %s283 = smul.u32 4, %s15
        %v285 = vld [vmem:[%s0] sm:$0xff]
        %v286 = vld [vmem:[%s0 + $0x8] sm:$0xff]
        %v287 = vld [vmem:[%s260] sm:$0xff]
        %v288 = vld [vmem:[%s260 + $0x8] sm:$0xff]
        %v289 = vld [vmem:[%s260 + $0x10] sm:$0xff]
        %v290 = vld [vmem:[%s260 + $0x18] sm:$0xff]
        %v291 = vld [vmem:[%s260 + $0x20] sm:$0xff]
        %v292 = vld [vmem:[%s260 + $0x28] sm:$0xff]
        %v293 = vld [vmem:[%s260 + $0x30] sm:$0xff]
        %v294 = vld [vmem:[%s260 + $0x38] sm:$0xff]
        %v295 = vld [vmem:[%s260 + $0x40] sm:$0xff]
        %v296 = vld [vmem:[%s260 + $0x48] sm:$0xff]
        %v297 = vld [vmem:[%s260 + $0x50] sm:$0xff]
        %v298 = vld [vmem:[%s260 + $0x58] sm:$0xff]
        %v299 = vld [vmem:[%s260 + $0x60] sm:$0xff]
        %v300 = vld [vmem:[%s260 + $0x68] sm:$0xff]
        %v301 = vld [vmem:[%s260 + $0x70] sm:$0xff]
        %v302 = vld [vmem:[%s260 + $0x78] sm:$0xff]
        %v303 = vld [vmem:[%s260 + $0x80] sm:$0xff]
        %v304 = vld [vmem:[%s260 + $0x88] sm:$0xff]
        %v305 = vld [vmem:[%s260 + $0x90] sm:$0xff]
        %v306 = vld [vmem:[%s260 + $0x98] sm:$0xff]
        %v307 = vld [vmem:[%s260 + $0xa0] sm:$0xff]
        %v308 = vld [vmem:[%s260 + $0xa8] sm:$0xff]
        %v309 = vld [vmem:[%s260 + $0xb0] sm:$0xff]
        %v310 = vld [vmem:[%s260 + $0xb8] sm:$0xff]
        %v311 = vld [vmem:[%s260 + $0xc0] sm:$0xff]
        %v312 = vld [vmem:[%s260 + $0xc8] sm:$0xff]
        %v313 = vld [vmem:[%s260 + $0xd0] sm:$0xff]
        %v314 = vld [vmem:[%s260 + $0xd8] sm:$0xff]
        %v315 = vld [vmem:[%s260 + $0xe0] sm:$0xff]
        %v316 = vld [vmem:[%s260 + $0xe8] sm:$0xff]
        %v317 = vld [vmem:[%s260 + $0xf0] sm:$0xff]
        %v318 = vld [vmem:[%s260 + $0xf8] sm:$0xff]
        %v319 = vld [vmem:[%s260 + $0x100] sm:$0xff]
        %v320 = vld [vmem:[%s260 + $0x108] sm:$0xff]
        %v321 = vld [vmem:[%s260 + $0x110] sm:$0xff]
        %v322 = vld [vmem:[%s260 + $0x118] sm:$0xff]
        %v325 = vunpack.c.l.b16 %v285
        %v326 = vunpack.c.h.b16 %v285
        %v327 = vunpack.c.l.b16 %v286
        %v328 = vunpack.c.h.b16 %v286
        %v329 = vpack.c.b16 %v327, %v325
        %v330 = vpack.c.b16 %v328, %v326
        %v368 = vunpack.c.l.b16 %v287
        %v369 = vunpack.c.h.b16 %v287
        %v370 = vunpack.c.l.b16 %v288
        %v371 = vunpack.c.h.b16 %v288
        %v372 = vunpack.c.l.b16 %v289
        %v373 = vunpack.c.h.b16 %v289
        %v374 = vunpack.c.l.b16 %v290
        %v375 = vunpack.c.h.b16 %v290
        %v376 = vunpack.c.l.b16 %v291
        %v377 = vunpack.c.h.b16 %v291
        %v378 = vunpack.c.l.b16 %v292
        %v379 = vunpack.c.h.b16 %v292
        %v380 = vunpack.c.l.b16 %v293
        %v381 = vunpack.c.h.b16 %v293
        %v382 = vunpack.c.l.b16 %v294
        %v383 = vunpack.c.h.b16 %v294
        %v384 = vunpack.c.l.b16 %v295
        %v385 = vunpack.c.h.b16 %v295
        %v386 = vunpack.c.l.b16 %v296
        %v387 = vunpack.c.h.b16 %v296
        %v388 = vunpack.c.l.b16 %v297
        %v389 = vunpack.c.h.b16 %v297
        %v390 = vunpack.c.l.b16 %v298
        %v391 = vunpack.c.h.b16 %v298
        %v392 = vunpack.c.l.b16 %v299
        %v393 = vunpack.c.h.b16 %v299
        %v394 = vunpack.c.l.b16 %v300
        %v395 = vunpack.c.h.b16 %v300
        %v396 = vunpack.c.l.b16 %v301
        %v397 = vunpack.c.h.b16 %v301
        %v398 = vunpack.c.l.b16 %v302
        %v399 = vunpack.c.h.b16 %v302
        %v400 = vunpack.c.l.b16 %v303
        %v401 = vunpack.c.h.b16 %v303
        %v402 = vunpack.c.l.b16 %v304
        %v403 = vunpack.c.h.b16 %v304
        %v404 = vunpack.c.l.b16 %v305
        %v405 = vunpack.c.h.b16 %v305
        %v406 = vunpack.c.l.b16 %v306
        %v407 = vunpack.c.h.b16 %v306
        %v408 = vunpack.c.l.b16 %v307
        %v409 = vunpack.c.h.b16 %v307
        %v410 = vunpack.c.l.b16 %v308
        %v411 = vunpack.c.h.b16 %v308
        %v412 = vunpack.c.l.b16 %v309
        %v413 = vunpack.c.h.b16 %v309
        %v414 = vunpack.c.l.b16 %v310
        %v415 = vunpack.c.h.b16 %v310
        %v416 = vunpack.c.l.b16 %v311
        %v417 = vunpack.c.h.b16 %v311
        %v418 = vunpack.c.l.b16 %v312
        %v419 = vunpack.c.h.b16 %v312
        %v420 = vunpack.c.l.b16 %v313
        %v421 = vunpack.c.h.b16 %v313
        %v422 = vunpack.c.l.b16 %v314
        %v423 = vunpack.c.h.b16 %v314
        %v424 = vunpack.c.l.b16 %v315
        %v425 = vunpack.c.h.b16 %v315
        %v426 = vunpack.c.l.b16 %v316
        %v427 = vunpack.c.h.b16 %v316
        %v428 = vunpack.c.l.b16 %v317
        %v429 = vunpack.c.h.b16 %v317
        %v430 = vunpack.c.l.b16 %v318
        %v431 = vunpack.c.h.b16 %v318
        %v432 = vunpack.c.l.b16 %v319
        %v433 = vunpack.c.h.b16 %v319
        %v434 = vunpack.c.l.b16 %v320
        %v435 = vunpack.c.h.b16 %v320
        %v436 = vunpack.c.l.b16 %v321
        %v437 = vunpack.c.h.b16 %v321
        %v438 = vunpack.c.l.b16 %v322
        %v439 = vunpack.c.h.b16 %v322
        %v440 = vpack.c.b16 %v372, %v368
        %v441 = vpack.c.b16 %v373, %v369
        %v442 = vpack.c.b16 %v374, %v370
        %v443 = vpack.c.b16 %v375, %v371
        %v444 = vpack.c.b16 %v380, %v376
        %v445 = vpack.c.b16 %v381, %v377
        %v446 = vpack.c.b16 %v382, %v378
        %v447 = vpack.c.b16 %v383, %v379
        %v448 = vpack.c.b16 %v388, %v384
        %v449 = vpack.c.b16 %v389, %v385
        %v450 = vpack.c.b16 %v390, %v386
        %v451 = vpack.c.b16 %v391, %v387
        %v452 = vpack.c.b16 %v396, %v392
        %v453 = vpack.c.b16 %v397, %v393
        %v454 = vpack.c.b16 %v398, %v394
        %v455 = vpack.c.b16 %v399, %v395
        %v456 = vpack.c.b16 %v404, %v400
        %v457 = vpack.c.b16 %v405, %v401
        %v458 = vpack.c.b16 %v406, %v402
        %v459 = vpack.c.b16 %v407, %v403
        %v460 = vpack.c.b16 %v412, %v408
        %v461 = vpack.c.b16 %v413, %v409
        %v462 = vpack.c.b16 %v414, %v410
        %v463 = vpack.c.b16 %v415, %v411
        %v464 = vpack.c.b16 %v420, %v416
        %v465 = vpack.c.b16 %v421, %v417
        %v466 = vpack.c.b16 %v422, %v418
        %v467 = vpack.c.b16 %v423, %v419
        %v468 = vpack.c.b16 %v428, %v424
        %v469 = vpack.c.b16 %v429, %v425
        %v470 = vpack.c.b16 %v430, %v426
        %v471 = vpack.c.b16 %v431, %v427
        %v472 = vpack.c.b16 %v436, %v432
        %v473 = vpack.c.b16 %v437, %v433
        %v474 = vpack.c.b16 %v438, %v434
        %v475 = vpack.c.b16 %v439, %v435
        %vm512 = vcmask 130048
        %v514 = vsel %vm512, %v330, 0
        %516 = vmatpush.bf16.msra.mxu0 %v468
        %517 = vmatpush.bf16.msra.mxu0 %v464
        %518 = vmatpush.bf16.msra.mxu0 %v460
        %519 = vmatpush.bf16.msra.mxu0 %v456
        %520 = vmatpush.bf16.msra.mxu0 %v452
        %521 = vmatpush.bf16.msra.mxu0 %v448
        %522 = vmatpush.bf16.msra.mxu0 %v444
        %523 = vmatpush.bf16.msra.mxu0 %v440
        %524 = vmatmul.bf16.gmra.mxu0 %v329
        %v525 = vpop.f32.mrf.mxu0
        %v526 = vadd.f32 0.0, %v525
        %v527 = vpop.f32.mrf.mxu0
        %v528 = vadd.f32 0.0, %v527
        %529 = vdwg.mxu0
        %530 = vmatpush.bf16.msra.mxu0 0
        %531 = vmatpush.bf16.msra.mxu0 0
        %532 = vmatpush.bf16.msra.mxu0 0
        %533 = vmatpush.bf16.msra.mxu0 0
        %534 = vmatpush.bf16.msra.mxu0 0
        %535 = vmatpush.bf16.msra.mxu0 0
        %536 = vmatpush.bf16.msra.mxu0 0
        %537 = vmatpush.bf16.msra.mxu0 %v472
        %538 = vmatmul.bf16.gmra.mxu0 %v514
        %v539 = vpop.f32.mrf.mxu0
        %v540 = vadd.f32 %v526, %v539
        %v541 = vpop.f32.mrf.mxu0
        %v542 = vadd.f32 %v528, %v541
        %543 = vdwg.mxu0
        %544 = vmatpush.bf16.msra.mxu0 %v469
        %545 = vmatpush.bf16.msra.mxu0 %v465
        %546 = vmatpush.bf16.msra.mxu0 %v461
        %547 = vmatpush.bf16.msra.mxu0 %v457
        %548 = vmatpush.bf16.msra.mxu0 %v453
        %549 = vmatpush.bf16.msra.mxu0 %v449
        %550 = vmatpush.bf16.msra.mxu0 %v445
        %551 = vmatpush.bf16.msra.mxu0 %v441
        %552 = vmatmul.bf16.gmra.mxu0 %v329
        %v553 = vpop.f32.mrf.mxu0
        %v554 = vadd.f32 0.0, %v553
        %v555 = vpop.f32.mrf.mxu0
        %v556 = vadd.f32 0.0, %v555
        %557 = vdwg.mxu0
        %558 = vmatpush.bf16.msra.mxu0 0
        %559 = vmatpush.bf16.msra.mxu0 0
        %560 = vmatpush.bf16.msra.mxu0 0
        %561 = vmatpush.bf16.msra.mxu0 0
        %562 = vmatpush.bf16.msra.mxu0 0
        %563 = vmatpush.bf16.msra.mxu0 0
        %564 = vmatpush.bf16.msra.mxu0 0
        %565 = vmatpush.bf16.msra.mxu0 %v473
        %566 = vmatmul.bf16.gmra.mxu0 %v514
        %v567 = vpop.f32.mrf.mxu0
        %v568 = vadd.f32 %v554, %v567
        %v569 = vpop.f32.mrf.mxu0
        %v570 = vadd.f32 %v556, %v569
        %571 = vdwg.mxu0
        %572 = vmatpush.bf16.msra.mxu0 %v470
        %573 = vmatpush.bf16.msra.mxu0 %v466
        %574 = vmatpush.bf16.msra.mxu0 %v462
        %575 = vmatpush.bf16.msra.mxu0 %v458
        %576 = vmatpush.bf16.msra.mxu0 %v454
        %577 = vmatpush.bf16.msra.mxu0 %v450
        %578 = vmatpush.bf16.msra.mxu0 %v446
        %579 = vmatpush.bf16.msra.mxu0 %v442
        %580 = vmatmul.bf16.gmra.mxu0 %v329
        %v581 = vpop.f32.mrf.mxu0
        %v582 = vadd.f32 0.0, %v581
        %v583 = vpop.f32.mrf.mxu0
        %v584 = vadd.f32 0.0, %v583
        %585 = vdwg.mxu0
        %586 = vmatpush.bf16.msra.mxu0 0
        %587 = vmatpush.bf16.msra.mxu0 0
        %588 = vmatpush.bf16.msra.mxu0 0
        %589 = vmatpush.bf16.msra.mxu0 0
        %590 = vmatpush.bf16.msra.mxu0 0
        %591 = vmatpush.bf16.msra.mxu0 0
        %592 = vmatpush.bf16.msra.mxu0 0
        %593 = vmatpush.bf16.msra.mxu0 %v474
        %594 = vmatmul.bf16.gmra.mxu0 %v514
        %v595 = vpop.f32.mrf.mxu0
        %v596 = vadd.f32 %v582, %v595
        %v597 = vpop.f32.mrf.mxu0
        %v598 = vadd.f32 %v584, %v597
        %599 = vdwg.mxu0
        %600 = vmatpush.bf16.msra.mxu0 %v471
        %601 = vmatpush.bf16.msra.mxu0 %v467
        %602 = vmatpush.bf16.msra.mxu0 %v463
        %603 = vmatpush.bf16.msra.mxu0 %v459
        %604 = vmatpush.bf16.msra.mxu0 %v455
        %605 = vmatpush.bf16.msra.mxu0 %v451
        %606 = vmatpush.bf16.msra.mxu0 %v447
        %607 = vmatpush.bf16.msra.mxu0 %v443
        %608 = vmatmul.bf16.gmra.mxu0 %v329
        %v609 = vpop.f32.mrf.mxu0
        %v610 = vadd.f32 0.0, %v609
        %v611 = vpop.f32.mrf.mxu0
        %v612 = vadd.f32 0.0, %v611
        %613 = vdwg.mxu0
        %614 = vmatpush.bf16.msra.mxu0 0
        %615 = vmatpush.bf16.msra.mxu0 0
        %616 = vmatpush.bf16.msra.mxu0 0
        %617 = vmatpush.bf16.msra.mxu0 0
        %618 = vmatpush.bf16.msra.mxu0 0
        %619 = vmatpush.bf16.msra.mxu0 0
        %620 = vmatpush.bf16.msra.mxu0 0
        %621 = vmatpush.bf16.msra.mxu0 %v475
        %622 = vmatmul.bf16.gmra.mxu0 %v514
        %v623 = vpop.f32.mrf.mxu0
        %v624 = vadd.f32 %v610, %v623
        %v625 = vpop.f32.mrf.mxu0
        %v626 = vadd.f32 %v612, %v625
        %627 = vdwg.mxu0
        %v628 = vld [vmem:[%s1] sm:$0xff]
        %v629 = vld [vmem:[%s1 + $0x8] sm:$0xff]
        %631 = vset.pattern.permute.xlu0 0
        %632 = vperm.xlu0 %631, %v628
        %v633 = vpop.permute.xlu0 %632
        %636 = vset.pattern.permute.xlu0 0
        %637 = vperm.xlu0 %636, %v629
        %v638 = vpop.permute.xlu0 %637
        %v640 = vmul.f32 %v540, %v633
        %v641 = vmul.f32 %v568, %v633
        %v642 = vmul.f32 %v596, %v633
        %v643 = vmul.f32 %v624, %v633
        %v644 = vmul.f32 %v542, %v638
        %v645 = vmul.f32 %v570, %v638
        %v646 = vmul.f32 %v598, %v638
        %v647 = vmul.f32 %v626, %v638
        %v648 = vld [vmem:[%s2] sm:$0xff]
        %v649 = vld [vmem:[%s2 + $0x8] sm:$0xff]
        %651 = vset.pattern.permute.xlu0 0
        %652 = vperm.xlu0 %651, %v648
        %v653 = vpop.permute.xlu0 %652
        %656 = vset.pattern.permute.xlu0 0
        %657 = vperm.xlu0 %656, %v649
        %v658 = vpop.permute.xlu0 %657
        %v660 = vadd.f32 %v640, %v653
        %v661 = vadd.f32 %v641, %v653
        %v662 = vadd.f32 %v642, %v653
        %v663 = vadd.f32 %v643, %v653
        %v664 = vadd.f32 %v644, %v658
        %v665 = vadd.f32 %v645, %v658
        %v666 = vadd.f32 %v646, %v658
        %v667 = vadd.f32 %v647, %v658
        %v668 = vmax.f32 %v660, 0.0
        %v669 = vmax.f32 %v661, 0.0
        %v670 = vmax.f32 %v662, 0.0
        %v671 = vmax.f32 %v663, 0.0
        %v672 = vmax.f32 %v664, 0.0
        %v673 = vmax.f32 %v665, 0.0
        %v674 = vmax.f32 %v666, 0.0
        %v675 = vmax.f32 %v667, 0.0
        %676 = vst [vmem:[%s281] sm:$0xff] %v668
        %677 = vst [vmem:[%s281 + $0x8] sm:$0xff] %v669
        %678 = vst [vmem:[%s281 + $0x10] sm:$0xff] %v670
        %679 = vst [vmem:[%s281 + $0x18] sm:$0xff] %v671
        %680 = vst [vmem:[%s281 + $0x20] sm:$0xff] %v672
        %681 = vst [vmem:[%s281 + $0x28] sm:$0xff] %v673
        %682 = vst [vmem:[%s281 + $0x30] sm:$0xff] %v674
        %683 = vst [vmem:[%s281 + $0x38] sm:$0xff] %v675
        %s684 = sand.u32 %s112, 1
        %s685 = sand.u32 %s112, 1
        %s686 = smul.addr %s685, 64
        %s687 = scalar_lea.vmem [#allocation3], %s686
        // Predicated region
        $region60: #{resnet18_forward.22} parent=54 // pred_check
          %p688 = pneg %p122
        $region61: #{resnet18_forward.22} parent=54 // pred_check_branch
          %690 = sbr.rel (%p688) target = $region63
        $region62: #{resnet18_forward.22} parent=54 // pred_region
          %s691 = smul.u32 4, %s15
          %s692 = smul.addr %s691, 8
          %s693 = scalar_lea.vmem %s4, %s692
          // Predicated region
          $region64: #{resnet18_forward.22} parent=62 // pred_check
            _
          $region65: #{resnet18_forward.22} parent=62 // pred_check_branch
            %695 = sbr.rel (0) target = $region67
          $region66: #{resnet18_forward.22} parent=62 // pred_region
            // Predicated region
            $region68: #{resnet18_forward.22} parent=66 // pred_check
              _
            $region69: #{resnet18_forward.22} parent=66 // pred_check_branch
              %697 = sbr.rel (0) target = $region71
            $region70: #{resnet18_forward.22} parent=66 // pred_region
              loop: start=0, step=1, limit=1
              $region72: #{resnet18_forward.22} parent=70 // loop_pre_header
                _
              $region73: #{resnet18_forward.22} parent=70 // loop_header
                %s699 = sphi 0, %s703
                %p700 = scmp.ge.s32.totalorder %s699, 1
                %s704 = sphi %s687, %s687
                %s705 = sphi %s693, %s693
              $region74: #{resnet18_forward.22} parent=70 // loop_header_branch
                %702 = sbr.rel (%p700) target = $region78
              $region75: #{resnet18_forward.22} parent=70 // loop_body
                %v706 = vld [vmem:[%s704] sm:$0xff]
                %707 = vst [vmem:[%s705] sm:$0xff] %v706
                %v708 = vld [vmem:[%s704 + $0x8] sm:$0xff]
                %709 = vst [vmem:[%s705 + $0x8] sm:$0xff] %v708
                %v710 = vld [vmem:[%s704 + $0x10] sm:$0xff]
                %711 = vst [vmem:[%s705 + $0x10] sm:$0xff] %v710
                %v712 = vld [vmem:[%s704 + $0x18] sm:$0xff]
                %713 = vst [vmem:[%s705 + $0x18] sm:$0xff] %v712
                %v714 = vld [vmem:[%s704 + $0x20] sm:$0xff]
                %715 = vst [vmem:[%s705 + $0x80] sm:$0xff] %v714
                %v716 = vld [vmem:[%s704 + $0x28] sm:$0xff]
                %717 = vst [vmem:[%s705 + $0x88] sm:$0xff] %v716
                %v718 = vld [vmem:[%s704 + $0x30] sm:$0xff]
                %719 = vst [vmem:[%s705 + $0x90] sm:$0xff] %v718
                %v720 = vld [vmem:[%s704 + $0x38] sm:$0xff]
                %721 = vst [vmem:[%s705 + $0x98] sm:$0xff] %v720
              $region76: #{resnet18_forward.22} parent=70 // loop_footer
                %s703 = sadd.s32 1, %s699
              $region77: #{resnet18_forward.22} parent=70 // loop_footer_branch
                %698 = sbr.rel target = $region73
              $region78: #{resnet18_forward.22} parent=70 // loop_exit
                _
            $region71: #{resnet18_forward.22} parent=66 // pred_fallthru
              _
            // Predicated region
            $region79: #{resnet18_forward.22} parent=66 // pred_check
              _
            $region80: #{resnet18_forward.22} parent=66 // pred_check_branch
              %723 = sbr.rel target = $region82
            $region81: #{resnet18_forward.22} parent=66 // pred_region
              _
            $region82: #{resnet18_forward.22} parent=66 // pred_fallthru
              _
          $region67: #{resnet18_forward.22} parent=62 // pred_fallthru
            _
          %724 = vnop
        $region63: #{resnet18_forward.22} parent=54 // pred_fallthru
          _
      $region55: #{resnet18_forward.22} parent=5 // pred_fallthru
        _
      %p725 = scmp.le.s32.totalorder 2, %s10
      // Predicated region
      $region83: #{resnet18_forward.22} parent=5 // pred_check
        %p726 = pneg %p725
      $region84: #{resnet18_forward.22} parent=5 // pred_check_branch
        %728 = sbr.rel (%p726) target = $region86
      $region85: #{resnet18_forward.22} parent=5 // pred_region
        %s729 = ssub.s32 %s10, 2
        // Predicated region
        $region87: #{resnet18_forward.22} parent=85 // pred_check
          %p730 = pneg %p128
        $region88: #{resnet18_forward.22} parent=85 // pred_check_branch
          %732 = sbr.rel (%p730) target = $region90
        $region89: #{resnet18_forward.22} parent=85 // pred_region
          %s733 = sand.u32 %s113, 1
          %s734 = sand.u32 %s113, 1
          %s735 = smul.addr %s734, 64
          %s736 = scalar_lea.vmem [#allocation3], %s735
        $region90: #{resnet18_forward.22} parent=85 // pred_fallthru
          _
      $region86: #{resnet18_forward.22} parent=5 // pred_fallthru
        _
    $region6: #{resnet18_forward.22} parent=1 // loop_footer
      %s14 = sadd.s32 1, %s10
    $region7: #{resnet18_forward.22} parent=1 // loop_footer_branch
      %9 = sbr.rel target = $region3
    $region8: #{resnet18_forward.22} parent=1 // loop_exit
      _

// kernel: resnet18_forward.23
$region0: #{resnet18_forward.23}
  #allocation0 [shape = 'u32[]', space=smem, size = 0x4, offset = 0x4, fixed_abs, tag = 'smem constant byte address 0x4 - core index']
  #allocation1 [shape = 'u32[72,128]{1,0:T(1,128)}', space=vmem, size = 0x9000, scoped, tag = 'internal scratch']
  %s0 = inlined_call_operand.vmem [shape: bf16[16,144], index: 0, kind: input, shape index: {}]
  %s1 = inlined_call_operand.vmem [shape: f32[16,1], index: 1, kind: input, shape index: {}]
  %s2 = inlined_call_operand.vmem [shape: f32[16,1], index: 2, kind: input, shape index: {}]
  %s3 = inlined_call_operand.vmem [shape: bf16[144,2048], index: 3, kind: input, shape index: {}]
  %s4 = inlined_call_operand.vmem [shape: f32[16,2048], index: 4, kind: input, shape index: {}]
  %s5 = inlined_call_operand.vmem [shape: f32[16,2048], index: 5, kind: output, shape index: {}]
  %s6 = sld [smem:[#allocation0]]
  $region118: #{resnet18_forward.23} parent=0
    _
  %s8 = ssub.s32 1, %s6
  %s9 = scalar_select 0, %s8, %s6
  $region1: #{resnet18_forward.23} parent=0
    #allocation2 [shape = 'u8[294912]{0}', space=vmem, size = 0x48000, scoped, tag = 'input window, operand 3']
    #allocation3 [shape = 'u8[65536]{0}', space=vmem, size = 0x10000, scoped, tag = 'input window, operand 4']
    #allocation4 [shape = 'u8[65536]{0}', space=vmem, size = 0x10000, scoped, tag = 'output window, operand 0']
    loop: start=0, step=1, limit=6
    $region2: #{resnet18_forward.23} parent=1 // loop_pre_header
      _
    $region3: #{resnet18_forward.23} parent=1 // loop_header
      %s11 = sphi 0, %s15
      %p12 = scmp.ge.s32.totalorder %s11, 6
      %s19 = sphi 0, %s19
      %s21 = sphi 0, %s19
      %s22 = sphi 0, %s21
      %s36 = sphi 0, %s22
      %s40 = sphi 0, %s40
      %s42 = sphi 0, %s40
      %s43 = sphi 0, %s42
      %s57 = sphi 0, %s43
      %s61 = sphi 0, %s61
      %s63 = sphi 0, %s61
      %s64 = sphi 0, %s63
      %s78 = sphi 0, %s64
      %s84 = sphi 0, %s86
      %s87 = sphi 0, %s84
      %s88 = sphi 0, %s87
      %s104 = sphi 0, %s88
      %s110 = sphi 0, %s112
      %s113 = sphi 0, %s110
      %s114 = sphi 0, %s113
      %s130 = sphi 0, %s114
      %s136 = sphi 0, %s138
      %s139 = sphi 0, %s136
      %s140 = sphi 0, %s139
      %s156 = sphi 0, %s140
    $region4: #{resnet18_forward.23} parent=1 // loop_header_branch
      %14 = sbr.rel (%p12) target = $region8
    $region5: #{resnet18_forward.23} parent=1 // loop_body
      %s16 = ssub.s32 %s11, 1
      %s17 = ssub.s32 %s11, 2
      %s18 = sadd.s32 %s11, 1
      %s20 = sadd.s32 %s19, 1
      %p23 = scmp.eq.s32.totalorder %s11, 3
      %p24 = scmp.ne.s32.totalorder %s19, %s21
      %p25 = scmp.eq.s32.totalorder %s11, 0
      %p26 = por %p24, %p25
      %p27 = scmp.ne.s32.totalorder %s19, %s21
      %p28 = scmp.eq.s32.totalorder %s16, 3
      %p29 = por %p27, %p28
      %p30 = scmp.ne.s32.totalorder %s21, %s22
      %p31 = scmp.eq.s32.totalorder %s16, 0
      %p32 = por %p30, %p31
      %p33 = scmp.ne.s32.totalorder %s21, %s22
      %p34 = scmp.eq.s32.totalorder %s17, 3
      %p35 = por %p33, %p34
      %p37 = scmp.ne.s32.totalorder %s22, %s36
      %p38 = scmp.eq.s32.totalorder %s17, 0
      %p39 = por %p37, %p38
      %s41 = sadd.s32 %s40, 1
      %p44 = scmp.eq.s32.totalorder %s11, 3
      %p45 = scmp.ne.s32.totalorder %s40, %s42
      %p46 = scmp.eq.s32.totalorder %s11, 0
      %p47 = por %p45, %p46
      %p48 = scmp.ne.s32.totalorder %s40, %s42
      %p49 = scmp.eq.s32.totalorder %s16, 3
      %p50 = por %p48, %p49
      %p51 = scmp.ne.s32.totalorder %s42, %s43
      %p52 = scmp.eq.s32.totalorder %s16, 0
      %p53 = por %p51, %p52
      %p54 = scmp.ne.s32.totalorder %s42, %s43
      %p55 = scmp.eq.s32.totalorder %s17, 3
      %p56 = por %p54, %p55
      %p58 = scmp.ne.s32.totalorder %s43, %s57
      %p59 = scmp.eq.s32.totalorder %s17, 0
      %p60 = por %p58, %p59
      %s62 = sadd.s32 %s61, 1
      %p65 = scmp.eq.s32.totalorder %s11, 3
      %p66 = scmp.ne.s32.totalorder %s61, %s63
      %p67 = scmp.eq.s32.totalorder %s11, 0
      %p68 = por %p66, %p67
      %p69 = scmp.ne.s32.totalorder %s61, %s63
      %p70 = scmp.eq.s32.totalorder %s16, 3
      %p71 = por %p69, %p70
      %p72 = scmp.ne.s32.totalorder %s63, %s64
      %p73 = scmp.eq.s32.totalorder %s16, 0
      %p74 = por %p72, %p73
      %p75 = scmp.ne.s32.totalorder %s63, %s64
      %p76 = scmp.eq.s32.totalorder %s17, 3
      %p77 = por %p75, %p76
      %p79 = scmp.ne.s32.totalorder %s64, %s78
      %p80 = scmp.eq.s32.totalorder %s17, 0
      %p81 = por %p79, %p80
      %s82 = ssub.s32 %s11, %s18
      %p83 = scmp.eq.s32.totalorder %s82, 0
      %s85 = sadd.s32 %s84, 1
      %s86 = scalar_select %p83, %s84, %s85
      %p89 = pneg %p83
      %p90 = scmp.eq.s32.totalorder %s11, 3
      %p91 = por %p89, %p90
      %p92 = scmp.ne.s32.totalorder %s84, %s87
      %p93 = scmp.eq.s32.totalorder %s11, 0
      %p94 = por %p92, %p93
      %p95 = scmp.ne.s32.totalorder %s84, %s87
      %p96 = scmp.eq.s32.totalorder %s16, 3
      %p97 = por %p95, %p96
      %p98 = scmp.ne.s32.totalorder %s87, %s88
      %p99 = scmp.eq.s32.totalorder %s16, 0
      %p100 = por %p98, %p99
      %p101 = scmp.ne.s32.totalorder %s87, %s88
      %p102 = scmp.eq.s32.totalorder %s17, 3
      %p103 = por %p101, %p102
      %p105 = scmp.ne.s32.totalorder %s88, %s104
      %p106 = scmp.eq.s32.totalorder %s17, 0
      %p107 = por %p105, %p106
      %s108 = ssub.s32 %s11, %s18
      %p109 = scmp.eq.s32.totalorder %s108, 0
      %s111 = sadd.s32 %s110, 1
      %s112 = scalar_select %p109, %s110, %s111
      %p115 = pneg %p109
      %p116 = scmp.eq.s32.totalorder %s11, 3
      %p117 = por %p115, %p116
      %p118 = scmp.ne.s32.totalorder %s110, %s113
      %p119 = scmp.eq.s32.totalorder %s11, 0
      %p120 = por %p118, %p119
      %p121 = scmp.ne.s32.totalorder %s110, %s113
      %p122 = scmp.eq.s32.totalorder %s16, 3
      %p123 = por %p121, %p122
      %p124 = scmp.ne.s32.totalorder %s113, %s114
      %p125 = scmp.eq.s32.totalorder %s16, 0
      %p126 = por %p124, %p125
      %p127 = scmp.ne.s32.totalorder %s113, %s114
      %p128 = scmp.eq.s32.totalorder %s17, 3
      %p129 = por %p127, %p128
      %p131 = scmp.ne.s32.totalorder %s114, %s130
      %p132 = scmp.eq.s32.totalorder %s17, 0
      %p133 = por %p131, %p132
      %s134 = ssub.s32 %s11, %s18
      %p135 = scmp.eq.s32.totalorder %s134, 0
      %s137 = sadd.s32 %s136, 1
      %s138 = scalar_select %p135, %s136, %s137
      %p141 = pneg %p135
      %p142 = scmp.eq.s32.totalorder %s11, 3
      %p143 = por %p141, %p142
      %p144 = scmp.ne.s32.totalorder %s136, %s139
      %p145 = scmp.eq.s32.totalorder %s11, 0
      %p146 = por %p144, %p145
      %p147 = scmp.ne.s32.totalorder %s136, %s139
      %p148 = scmp.eq.s32.totalorder %s16, 3
      %p149 = por %p147, %p148
      %p150 = scmp.ne.s32.totalorder %s139, %s140
      %p151 = scmp.eq.s32.totalorder %s16, 0
      %p152 = por %p150, %p151
      %p153 = scmp.ne.s32.totalorder %s139, %s140
      %p154 = scmp.eq.s32.totalorder %s17, 3
      %p155 = por %p153, %p154
      %p157 = scmp.ne.s32.totalorder %s140, %s156
      %p158 = scmp.eq.s32.totalorder %s17, 0
      %p159 = por %p157, %p158
      %p160 = scmp.le.s32.totalorder 1, %s11
      %p161 = scmp.lt.s32.totalorder %s11, 5
      %p162 = pnand %p160, %p161
      %p163 = pneg %p162
      // Predicated region
      $region9: #{resnet18_forward.23} parent=5 // pred_check
        _
      $region10: #{resnet18_forward.23} parent=5 // pred_check_branch
        %165 = sbr.rel (%p162) target = $region12
      $region11: #{resnet18_forward.23} parent=5 // pred_region
        %s166 = ssub.s32 %s11, 1
        // Predicated region
        $region13: #{resnet18_forward.23} parent=11 // pred_check
          %p167 = pneg %p32
        $region14: #{resnet18_forward.23} parent=11 // pred_check_branch
          %169 = sbr.rel (%p167) target = $region16
        $region15: #{resnet18_forward.23} parent=11 // pred_region
          _
        $region16: #{resnet18_forward.23} parent=11 // pred_fallthru
          _
        // Predicated region
        $region17: #{resnet18_forward.23} parent=11 // pred_check
          %p170 = pneg %p53
        $region18: #{resnet18_forward.23} parent=11 // pred_check_branch
          %172 = sbr.rel (%p170) target = $region20
        $region19: #{resnet18_forward.23} parent=11 // pred_region
          _
        $region20: #{resnet18_forward.23} parent=11 // pred_fallthru
          _
        // Predicated region
        $region21: #{resnet18_forward.23} parent=11 // pred_check
          %p173 = pneg %p74
        $region22: #{resnet18_forward.23} parent=11 // pred_check_branch
          %175 = sbr.rel (%p173) target = $region24
        $region23: #{resnet18_forward.23} parent=11 // pred_region
          _
        $region24: #{resnet18_forward.23} parent=11 // pred_fallthru
          _
      $region12: #{resnet18_forward.23} parent=5 // pred_fallthru
        _
      %p176 = scmp.lt.s32.totalorder %s11, 4
      // Predicated region
      $region25: #{resnet18_forward.23} parent=5 // pred_check
        %p177 = pneg %p176
      $region26: #{resnet18_forward.23} parent=5 // pred_check_branch
        %179 = sbr.rel (%p177) target = $region28
      $region27: #{resnet18_forward.23} parent=5 // pred_region
        // Predicated region
        $region29: #{resnet18_forward.23} parent=27 // pred_check
          %p180 = pneg %p94
        $region30: #{resnet18_forward.23} parent=27 // pred_check_branch
          %182 = sbr.rel (%p180) target = $region32
        $region31: #{resnet18_forward.23} parent=27 // pred_region
          %s183 = sand.u32 %s84, 1
          %s184 = sand.u32 %s84, 1
          %s185 = smul.addr %s184, 288
          %s186 = scalar_lea.vmem [#allocation2], %s185
          %s187 = smul.u32 4, %s11
          %s188 = smul.addr %s187, 4
          %s189 = scalar_lea.vmem %s3, %s188
          // Predicated region
          $region33: #{resnet18_forward.23} parent=31 // pred_check
            _
          $region34: #{resnet18_forward.23} parent=31 // pred_check_branch
            %191 = sbr.rel (0) target = $region36
          $region35: #{resnet18_forward.23} parent=31 // pred_region
            // Predicated region
            $region37: #{resnet18_forward.23} parent=35 // pred_check
              _
            $region38: #{resnet18_forward.23} parent=35 // pred_check_branch
              %193 = sbr.rel (0) target = $region40
            $region39: #{resnet18_forward.23} parent=35 // pred_region
              loop: start=0, step=1, limit=1
              $region41: #{resnet18_forward.23} parent=39 // loop_pre_header
                _
              $region42: #{resnet18_forward.23} parent=39 // loop_header
                %s195 = sphi 0, %s199
                %p196 = scmp.ge.s32.totalorder %s195, 1
                %s200 = sphi %s189, %s189
                %s201 = sphi %s186, %s186
              $region43: #{resnet18_forward.23} parent=39 // loop_header_branch
                %198 = sbr.rel (%p196) target = $region47
              $region44: #{resnet18_forward.23} parent=39 // loop_body
                %v202 = vld [vmem:[%s200] sm:$0xff]
                %203 = vst [vmem:[%s201] sm:$0xff] %v202
                %v204 = vld [vmem:[%s200 + $0x8] sm:$0xff]
                %205 = vst [vmem:[%s201 + $0x8] sm:$0xff] %v204
                %v206 = vld [vmem:[%s200 + $0x40] sm:$0xff]
                %207 = vst [vmem:[%s201 + $0x10] sm:$0xff] %v206
                %v208 = vld [vmem:[%s200 + $0x48] sm:$0xff]
                %209 = vst [vmem:[%s201 + $0x18] sm:$0xff] %v208
                %v210 = vld [vmem:[%s200 + $0x80] sm:$0xff]
                %211 = vst [vmem:[%s201 + $0x20] sm:$0xff] %v210
                %v212 = vld [vmem:[%s200 + $0x88] sm:$0xff]
                %213 = vst [vmem:[%s201 + $0x28] sm:$0xff] %v212
                %v214 = vld [vmem:[%s200 + $0xc0] sm:$0xff]
                %215 = vst [vmem:[%s201 + $0x30] sm:$0xff] %v214
                %v216 = vld [vmem:[%s200 + $0xc8] sm:$0xff]
                %217 = vst [vmem:[%s201 + $0x38] sm:$0xff] %v216
                %v218 = vld [vmem:[%s200 + $0x100] sm:$0xff]
                %219 = vst [vmem:[%s201 + $0x40] sm:$0xff] %v218
                %v220 = vld [vmem:[%s200 + $0x108] sm:$0xff]
                %221 = vst [vmem:[%s201 + $0x48] sm:$0xff] %v220
                %v222 = vld [vmem:[%s200 + $0x140] sm:$0xff]
                %223 = vst [vmem:[%s201 + $0x50] sm:$0xff] %v222
                %v224 = vld [vmem:[%s200 + $0x148] sm:$0xff]
                %225 = vst [vmem:[%s201 + $0x58] sm:$0xff] %v224
                %v226 = vld [vmem:[%s200 + $0x180] sm:$0xff]
                %227 = vst [vmem:[%s201 + $0x60] sm:$0xff] %v226
                %v228 = vld [vmem:[%s200 + $0x188] sm:$0xff]
                %229 = vst [vmem:[%s201 + $0x68] sm:$0xff] %v228
                %v230 = vld [vmem:[%s200 + $0x1c0] sm:$0xff]
                %231 = vst [vmem:[%s201 + $0x70] sm:$0xff] %v230
                %v232 = vld [vmem:[%s200 + $0x1c8] sm:$0xff]
                %233 = vst [vmem:[%s201 + $0x78] sm:$0xff] %v232
                %v234 = vld [vmem:[%s200 + $0x200] sm:$0xff]
                %235 = vst [vmem:[%s201 + $0x80] sm:$0xff] %v234
                %v236 = vld [vmem:[%s200 + $0x208] sm:$0xff]
                %237 = vst [vmem:[%s201 + $0x88] sm:$0xff] %v236
                %v238 = vld [vmem:[%s200 + $0x240] sm:$0xff]
                %239 = vst [vmem:[%s201 + $0x90] sm:$0xff] %v238
                %v240 = vld [vmem:[%s200 + $0x248] sm:$0xff]
                %241 = vst [vmem:[%s201 + $0x98] sm:$0xff] %v240
                %v242 = vld [vmem:[%s200 + $0x280] sm:$0xff]
                %243 = vst [vmem:[%s201 + $0xa0] sm:$0xff] %v242
                %v244 = vld [vmem:[%s200 + $0x288] sm:$0xff]
                %245 = vst [vmem:[%s201 + $0xa8] sm:$0xff] %v244
                %v246 = vld [vmem:[%s200 + $0x2c0] sm:$0xff]
                %247 = vst [vmem:[%s201 + $0xb0] sm:$0xff] %v246
                %v248 = vld [vmem:[%s200 + $0x2c8] sm:$0xff]
                %249 = vst [vmem:[%s201 + $0xb8] sm:$0xff] %v248
                %v250 = vld [vmem:[%s200 + $0x300] sm:$0xff]
                %251 = vst [vmem:[%s201 + $0xc0] sm:$0xff] %v250
                %v252 = vld [vmem:[%s200 + $0x308] sm:$0xff]
                %253 = vst [vmem:[%s201 + $0xc8] sm:$0xff] %v252
                %v254 = vld [vmem:[%s200 + $0x340] sm:$0xff]
                %255 = vst [vmem:[%s201 + $0xd0] sm:$0xff] %v254
                %v256 = vld [vmem:[%s200 + $0x348] sm:$0xff]
                %257 = vst [vmem:[%s201 + $0xd8] sm:$0xff] %v256
                %v258 = vld [vmem:[%s200 + $0x380] sm:$0xff]
                %259 = vst [vmem:[%s201 + $0xe0] sm:$0xff] %v258
                %v260 = vld [vmem:[%s200 + $0x388] sm:$0xff]
                %261 = vst [vmem:[%s201 + $0xe8] sm:$0xff] %v260
                %v262 = vld [vmem:[%s200 + $0x3c0] sm:$0xff]
                %263 = vst [vmem:[%s201 + $0xf0] sm:$0xff] %v262
                %v264 = vld [vmem:[%s200 + $0x3c8] sm:$0xff]
                %265 = vst [vmem:[%s201 + $0xf8] sm:$0xff] %v264
                %v266 = vld [vmem:[%s200 + $0x400] sm:$0xff]
                %267 = vst [vmem:[%s201 + $0x100] sm:$0xff] %v266
                %v268 = vld [vmem:[%s200 + $0x408] sm:$0xff]
                %269 = vst [vmem:[%s201 + $0x108] sm:$0xff] %v268
                %v270 = vld [vmem:[%s200 + $0x440] sm:$0xff]
                %271 = vst [vmem:[%s201 + $0x110] sm:$0xff] %v270
                %v272 = vld [vmem:[%s200 + $0x448] sm:$0xff]
                %273 = vst [vmem:[%s201 + $0x118] sm:$0xff] %v272
              $region45: #{resnet18_forward.23} parent=39 // loop_footer
                %s199 = sadd.s32 1, %s195
              $region46: #{resnet18_forward.23} parent=39 // loop_footer_branch
                %194 = sbr.rel target = $region42
              $region47: #{resnet18_forward.23} parent=39 // loop_exit
                _
            $region40: #{resnet18_forward.23} parent=35 // pred_fallthru
              _
            // Predicated region
            $region48: #{resnet18_forward.23} parent=35 // pred_check
              _
            $region49: #{resnet18_forward.23} parent=35 // pred_check_branch
              %275 = sbr.rel target = $region51
            $region50: #{resnet18_forward.23} parent=35 // pred_region
              _
            $region51: #{resnet18_forward.23} parent=35 // pred_fallthru
              _
          $region36: #{resnet18_forward.23} parent=31 // pred_fallthru
            _
          %276 = vnop
        $region32: #{resnet18_forward.23} parent=27 // pred_fallthru
          _
        // Predicated region
        $region52: #{resnet18_forward.23} parent=27 // pred_check
          %p277 = pneg %p120
        $region53: #{resnet18_forward.23} parent=27 // pred_check_branch
          %279 = sbr.rel (%p277) target = $region55
        $region54: #{resnet18_forward.23} parent=27 // pred_region
          %s280 = sand.u32 %s110, 1
          %s281 = sand.u32 %s110, 1
          %s282 = smul.addr %s281, 64
          %s283 = scalar_lea.vmem [#allocation3], %s282
          %s284 = smul.u32 4, %s11
          %s285 = smul.addr %s284, 8
          %s286 = scalar_lea.vmem %s4, %s285
          // Predicated region
          $region56: #{resnet18_forward.23} parent=54 // pred_check
            _
          $region57: #{resnet18_forward.23} parent=54 // pred_check_branch
            %288 = sbr.rel (0) target = $region59
          $region58: #{resnet18_forward.23} parent=54 // pred_region
            // Predicated region
            $region60: #{resnet18_forward.23} parent=58 // pred_check
              _
            $region61: #{resnet18_forward.23} parent=58 // pred_check_branch
              %290 = sbr.rel (0) target = $region63
            $region62: #{resnet18_forward.23} parent=58 // pred_region
              loop: start=0, step=1, limit=1
              $region64: #{resnet18_forward.23} parent=62 // loop_pre_header
                _
              $region65: #{resnet18_forward.23} parent=62 // loop_header
                %s292 = sphi 0, %s296
                %p293 = scmp.ge.s32.totalorder %s292, 1
                %s297 = sphi %s286, %s286
                %s298 = sphi %s283, %s283
              $region66: #{resnet18_forward.23} parent=62 // loop_header_branch
                %295 = sbr.rel (%p293) target = $region70
              $region67: #{resnet18_forward.23} parent=62 // loop_body
                %v299 = vld [vmem:[%s297] sm:$0xff]
                %300 = vst [vmem:[%s298] sm:$0xff] %v299
                %v301 = vld [vmem:[%s297 + $0x8] sm:$0xff]
                %302 = vst [vmem:[%s298 + $0x8] sm:$0xff] %v301
                %v303 = vld [vmem:[%s297 + $0x10] sm:$0xff]
                %304 = vst [vmem:[%s298 + $0x10] sm:$0xff] %v303
                %v305 = vld [vmem:[%s297 + $0x18] sm:$0xff]
                %306 = vst [vmem:[%s298 + $0x18] sm:$0xff] %v305
                %v307 = vld [vmem:[%s297 + $0x80] sm:$0xff]
                %308 = vst [vmem:[%s298 + $0x20] sm:$0xff] %v307
                %v309 = vld [vmem:[%s297 + $0x88] sm:$0xff]
                %310 = vst [vmem:[%s298 + $0x28] sm:$0xff] %v309
                %v311 = vld [vmem:[%s297 + $0x90] sm:$0xff]
                %312 = vst [vmem:[%s298 + $0x30] sm:$0xff] %v311
                %v313 = vld [vmem:[%s297 + $0x98] sm:$0xff]
                %314 = vst [vmem:[%s298 + $0x38] sm:$0xff] %v313
              $region68: #{resnet18_forward.23} parent=62 // loop_footer
                %s296 = sadd.s32 1, %s292
              $region69: #{resnet18_forward.23} parent=62 // loop_footer_branch
                %291 = sbr.rel target = $region65
              $region70: #{resnet18_forward.23} parent=62 // loop_exit
                _
            $region63: #{resnet18_forward.23} parent=58 // pred_fallthru
              _
            // Predicated region
            $region71: #{resnet18_forward.23} parent=58 // pred_check
              _
            $region72: #{resnet18_forward.23} parent=58 // pred_check_branch
              %316 = sbr.rel target = $region74
            $region73: #{resnet18_forward.23} parent=58 // pred_region
              _
            $region74: #{resnet18_forward.23} parent=58 // pred_fallthru
              _
          $region59: #{resnet18_forward.23} parent=54 // pred_fallthru
            _
          %317 = vnop
        $region55: #{resnet18_forward.23} parent=27 // pred_fallthru
          _
      $region28: #{resnet18_forward.23} parent=5 // pred_fallthru
        _
      %p318 = scmp.le.s32.totalorder 1, %s11
      %p319 = scmp.lt.s32.totalorder %s11, 5
      %p320 = pnand %p318, %p319
      %p321 = pneg %p320
      // Predicated region
      $region75: #{resnet18_forward.23} parent=5 // pred_check
        _
      $region76: #{resnet18_forward.23} parent=5 // pred_check_branch
        %323 = sbr.rel (%p320) target = $region78
      $region77: #{resnet18_forward.23} parent=5 // pred_region
        %s324 = ssub.s32 %s11, 1
        %s325 = sand.u32 %s87, 1
        %s326 = sand.u32 %s87, 1
        %s327 = smul.addr %s326, 288
        %s328 = scalar_lea.vmem [#allocation2], %s327
        // Predicated region
        $region79: #{resnet18_forward.23} parent=77 // pred_check
          %p329 = pneg %p100
        $region80: #{resnet18_forward.23} parent=77 // pred_check_branch
          %331 = sbr.rel (%p329) target = $region82
        $region81: #{resnet18_forward.23} parent=77 // pred_region
          _
        $region82: #{resnet18_forward.23} parent=77 // pred_fallthru
          _
        %s332 = sand.u32 %s113, 1
        %s333 = sand.u32 %s113, 1
        %s334 = smul.addr %s333, 64
        %s335 = scalar_lea.vmem [#allocation3], %s334
        // Predicated region
        $region83: #{resnet18_forward.23} parent=77 // pred_check
          %p336 = pneg %p126
        $region84: #{resnet18_forward.23} parent=77 // pred_check_branch
          %338 = sbr.rel (%p336) target = $region86
        $region85: #{resnet18_forward.23} parent=77 // pred_region
          _
        $region86: #{resnet18_forward.23} parent=77 // pred_fallthru
          _
        %p339 = pneg %p32
        %p340 = pneg %p29
        %p341 = pneg %p53
        %p342 = pneg %p50
        %p343 = pneg %p74
        %p344 = pneg %p71
        %s345 = sand.u32 %s87, 1
        %s346 = sand.u32 %s87, 1
        %s347 = smul.addr %s346, 288
        %s348 = scalar_lea.vmem [#allocation2], %s347
        %p349 = pneg %p100
        %p350 = pneg %p97
        %s351 = sand.u32 %s113, 1
        %s352 = sand.u32 %s113, 1
        %s353 = smul.addr %s352, 64
        %s354 = scalar_lea.vmem [#allocation3], %s353
        %p355 = pneg %p126
        %p356 = pneg %p123
        %p357 = pneg %p152
        %p358 = pneg %p149
        %s359 = sand.u32 %s139, 1
        %s360 = sand.u32 %s139, 1
        %s361 = smul.addr %s360, 64
        %s362 = scalar_lea.vmem [#allocation4], %s361
        %s363 = smul.u32 4, %s16
        %s364 = smul.u32 4, %s16
        %s365 = smul.u32 4, %s16
        %v367 = vld [vmem:[%s0] sm:$0xff]
        %v368 = vld [vmem:[%s0 + $0x8] sm:$0xff]
        %v369 = vld [vmem:[%s328] sm:$0xff]
        %v370 = vld [vmem:[%s328 + $0x8] sm:$0xff]
        %v371 = vld [vmem:[%s328 + $0x10] sm:$0xff]
        %v372 = vld [vmem:[%s328 + $0x18] sm:$0xff]
        %v373 = vld [vmem:[%s328 + $0x20] sm:$0xff]
        %v374 = vld [vmem:[%s328 + $0x28] sm:$0xff]
        %v375 = vld [vmem:[%s328 + $0x30] sm:$0xff]
        %v376 = vld [vmem:[%s328 + $0x38] sm:$0xff]
        %v377 = vld [vmem:[%s328 + $0x40] sm:$0xff]
        %v378 = vld [vmem:[%s328 + $0x48] sm:$0xff]
        %v379 = vld [vmem:[%s328 + $0x50] sm:$0xff]
        %v380 = vld [vmem:[%s328 + $0x58] sm:$0xff]
        %v381 = vld [vmem:[%s328 + $0x60] sm:$0xff]
        %v382 = vld [vmem:[%s328 + $0x68] sm:$0xff]
        %v383 = vld [vmem:[%s328 + $0x70] sm:$0xff]
        %v384 = vld [vmem:[%s328 + $0x78] sm:$0xff]
        %v385 = vld [vmem:[%s328 + $0x80] sm:$0xff]
        %v386 = vld [vmem:[%s328 + $0x88] sm:$0xff]
        %v387 = vld [vmem:[%s328 + $0x90] sm:$0xff]
        %v388 = vld [vmem:[%s328 + $0x98] sm:$0xff]
        %v389 = vld [vmem:[%s328 + $0xa0] sm:$0xff]
        %v390 = vld [vmem:[%s328 + $0xa8] sm:$0xff]
        %v391 = vld [vmem:[%s328 + $0xb0] sm:$0xff]
        %v392 = vld [vmem:[%s328 + $0xb8] sm:$0xff]
        %v393 = vld [vmem:[%s328 + $0xc0] sm:$0xff]
        %v394 = vld [vmem:[%s328 + $0xc8] sm:$0xff]
        %v395 = vld [vmem:[%s328 + $0xd0] sm:$0xff]
        %v396 = vld [vmem:[%s328 + $0xd8] sm:$0xff]
        %v397 = vld [vmem:[%s328 + $0xe0] sm:$0xff]
        %v398 = vld [vmem:[%s328 + $0xe8] sm:$0xff]
        %v399 = vld [vmem:[%s328 + $0xf0] sm:$0xff]
        %v400 = vld [vmem:[%s328 + $0xf8] sm:$0xff]
        %v401 = vld [vmem:[%s328 + $0x100] sm:$0xff]
        %v402 = vld [vmem:[%s328 + $0x108] sm:$0xff]
        %v403 = vld [vmem:[%s328 + $0x110] sm:$0xff]
        %v404 = vld [vmem:[%s328 + $0x118] sm:$0xff]
        %v407 = vunpack.c.l.b16 %v367
        %v408 = vunpack.c.h.b16 %v367
        %v409 = vunpack.c.l.b16 %v368
        %v410 = vunpack.c.h.b16 %v368
        %v411 = vpack.c.b16 %v409, %v407
        %v412 = vpack.c.b16 %v410, %v408
        %v450 = vunpack.c.l.b16 %v369
        %v451 = vunpack.c.h.b16 %v369
        %v452 = vunpack.c.l.b16 %v370
        %v453 = vunpack.c.h.b16 %v370
        %v454 = vunpack.c.l.b16 %v371
        %v455 = vunpack.c.h.b16 %v371
        %v456 = vunpack.c.l.b16 %v372
        %v457 = vunpack.c.h.b16 %v372
        %v458 = vunpack.c.l.b16 %v373
        %v459 = vunpack.c.h.b16 %v373
        %v460 = vunpack.c.l.b16 %v374
        %v461 = vunpack.c.h.b16 %v374
        %v462 = vunpack.c.l.b16 %v375
        %v463 = vunpack.c.h.b16 %v375
        %v464 = vunpack.c.l.b16 %v376
        %v465 = vunpack.c.h.b16 %v376
        %v466 = vunpack.c.l.b16 %v377
        %v467 = vunpack.c.h.b16 %v377
        %v468 = vunpack.c.l.b16 %v378
        %v469 = vunpack.c.h.b16 %v378
        %v470 = vunpack.c.l.b16 %v379
        %v471 = vunpack.c.h.b16 %v379
        %v472 = vunpack.c.l.b16 %v380
        %v473 = vunpack.c.h.b16 %v380
        %v474 = vunpack.c.l.b16 %v381
        %v475 = vunpack.c.h.b16 %v381
        %v476 = vunpack.c.l.b16 %v382
        %v477 = vunpack.c.h.b16 %v382
        %v478 = vunpack.c.l.b16 %v383
        %v479 = vunpack.c.h.b16 %v383
        %v480 = vunpack.c.l.b16 %v384
        %v481 = vunpack.c.h.b16 %v384
        %v482 = vunpack.c.l.b16 %v385
        %v483 = vunpack.c.h.b16 %v385
        %v484 = vunpack.c.l.b16 %v386
        %v485 = vunpack.c.h.b16 %v386
        %v486 = vunpack.c.l.b16 %v387
        %v487 = vunpack.c.h.b16 %v387
        %v488 = vunpack.c.l.b16 %v388
        %v489 = vunpack.c.h.b16 %v388
        %v490 = vunpack.c.l.b16 %v389
        %v491 = vunpack.c.h.b16 %v389
        %v492 = vunpack.c.l.b16 %v390
        %v493 = vunpack.c.h.b16 %v390
        %v494 = vunpack.c.l.b16 %v391
        %v495 = vunpack.c.h.b16 %v391
        %v496 = vunpack.c.l.b16 %v392
        %v497 = vunpack.c.h.b16 %v392
        %v498 = vunpack.c.l.b16 %v393
        %v499 = vunpack.c.h.b16 %v393
        %v500 = vunpack.c.l.b16 %v394
        %v501 = vunpack.c.h.b16 %v394
        %v502 = vunpack.c.l.b16 %v395
        %v503 = vunpack.c.h.b16 %v395
        %v504 = vunpack.c.l.b16 %v396
        %v505 = vunpack.c.h.b16 %v396
        %v506 = vunpack.c.l.b16 %v397
        %v507 = vunpack.c.h.b16 %v397
        %v508 = vunpack.c.l.b16 %v398
        %v509 = vunpack.c.h.b16 %v398
        %v510 = vunpack.c.l.b16 %v399
        %v511 = vunpack.c.h.b16 %v399
        %v512 = vunpack.c.l.b16 %v400
        %v513 = vunpack.c.h.b16 %v400
        %v514 = vunpack.c.l.b16 %v401
        %v515 = vunpack.c.h.b16 %v401
        %v516 = vunpack.c.l.b16 %v402
        %v517 = vunpack.c.h.b16 %v402
        %v518 = vunpack.c.l.b16 %v403
        %v519 = vunpack.c.h.b16 %v403
        %v520 = vunpack.c.l.b16 %v404
        %v521 = vunpack.c.h.b16 %v404
        %v522 = vpack.c.b16 %v454, %v450
        %v523 = vpack.c.b16 %v455, %v451
        %v524 = vpack.c.b16 %v456, %v452
        %v525 = vpack.c.b16 %v457, %v453
        %v526 = vpack.c.b16 %v462, %v458
        %v527 = vpack.c.b16 %v463, %v459
        %v528 = vpack.c.b16 %v464, %v460
        %v529 = vpack.c.b16 %v465, %v461
        %v530 = vpack.c.b16 %v470, %v466
        %v531 = vpack.c.b16 %v471, %v467
        %v532 = vpack.c.b16 %v472, %v468
        %v533 = vpack.c.b16 %v473, %v469
        %v534 = vpack.c.b16 %v478, %v474
        %v535 = vpack.c.b16 %v479, %v475
        %v536 = vpack.c.b16 %v480, %v476
        %v537 = vpack.c.b16 %v481, %v477
        %v538 = vpack.c.b16 %v486, %v482
        %v539 = vpack.c.b16 %v487, %v483
        %v540 = vpack.c.b16 %v488, %v484
        %v541 = vpack.c.b16 %v489, %v485
        %v542 = vpack.c.b16 %v494, %v490
        %v543 = vpack.c.b16 %v495, %v491
        %v544 = vpack.c.b16 %v496, %v492
        %v545 = vpack.c.b16 %v497, %v493
        %v546 = vpack.c.b16 %v502, %v498
        %v547 = vpack.c.b16 %v503, %v499
        %v548 = vpack.c.b16 %v504, %v500
        %v549 = vpack.c.b16 %v505, %v501
        %v550 = vpack.c.b16 %v510, %v506
        %v551 = vpack.c.b16 %v511, %v507
        %v552 = vpack.c.b16 %v512, %v508
        %v553 = vpack.c.b16 %v513, %v509
        %v554 = vpack.c.b16 %v518, %v514
        %v555 = vpack.c.b16 %v519, %v515
        %v556 = vpack.c.b16 %v520, %v516
        %v557 = vpack.c.b16 %v521, %v517
        %vm594 = vcmask 130048
        %v596 = vsel %vm594, %v412, 0
        %598 = vmatpush.bf16.msra.mxu0 %v550
        %599 = vmatpush.bf16.msra.mxu0 %v546
        %600 = vmatpush.bf16.msra.mxu0 %v542
        %601 = vmatpush.bf16.msra.mxu0 %v538
        %602 = vmatpush.bf16.msra.mxu0 %v534
        %603 = vmatpush.bf16.msra.mxu0 %v530
        %604 = vmatpush.bf16.msra.mxu0 %v526
        %605 = vmatpush.bf16.msra.mxu0 %v522
        %606 = vmatmul.bf16.gmra.mxu0 %v411
        %v607 = vpop.f32.mrf.mxu0
        %v608 = vadd.f32 0.0, %v607
        %v609 = vpop.f32.mrf.mxu0
        %v610 = vadd.f32 0.0, %v609
        %611 = vdwg.mxu0
        %612 = vmatpush.bf16.msra.mxu0 0
        %613 = vmatpush.bf16.msra.mxu0 0
        %614 = vmatpush.bf16.msra.mxu0 0
        %615 = vmatpush.bf16.msra.mxu0 0
        %616 = vmatpush.bf16.msra.mxu0 0
        %617 = vmatpush.bf16.msra.mxu0 0
        %618 = vmatpush.bf16.msra.mxu0 0
        %619 = vmatpush.bf16.msra.mxu0 %v554
        %620 = vmatmul.bf16.gmra.mxu0 %v596
        %v621 = vpop.f32.mrf.mxu0
        %v622 = vadd.f32 %v608, %v621
        %v623 = vpop.f32.mrf.mxu0
        %v624 = vadd.f32 %v610, %v623
        %625 = vdwg.mxu0
        %626 = vmatpush.bf16.msra.mxu0 %v551
        %627 = vmatpush.bf16.msra.mxu0 %v547
        %628 = vmatpush.bf16.msra.mxu0 %v543
        %629 = vmatpush.bf16.msra.mxu0 %v539
        %630 = vmatpush.bf16.msra.mxu0 %v535
        %631 = vmatpush.bf16.msra.mxu0 %v531
        %632 = vmatpush.bf16.msra.mxu0 %v527
        %633 = vmatpush.bf16.msra.mxu0 %v523
        %634 = vmatmul.bf16.gmra.mxu0 %v411
        %v635 = vpop.f32.mrf.mxu0
        %v636 = vadd.f32 0.0, %v635
        %v637 = vpop.f32.mrf.mxu0
        %v638 = vadd.f32 0.0, %v637
        %639 = vdwg.mxu0
        %640 = vmatpush.bf16.msra.mxu0 0
        %641 = vmatpush.bf16.msra.mxu0 0
        %642 = vmatpush.bf16.msra.mxu0 0
        %643 = vmatpush.bf16.msra.mxu0 0
        %644 = vmatpush.bf16.msra.mxu0 0
        %645 = vmatpush.bf16.msra.mxu0 0
        %646 = vmatpush.bf16.msra.mxu0 0
        %647 = vmatpush.bf16.msra.mxu0 %v555
        %648 = vmatmul.bf16.gmra.mxu0 %v596
        %v649 = vpop.f32.mrf.mxu0
        %v650 = vadd.f32 %v636, %v649
        %v651 = vpop.f32.mrf.mxu0
        %v652 = vadd.f32 %v638, %v651
        %653 = vdwg.mxu0
        %654 = vmatpush.bf16.msra.mxu0 %v552
        %655 = vmatpush.bf16.msra.mxu0 %v548
        %656 = vmatpush.bf16.msra.mxu0 %v544
        %657 = vmatpush.bf16.msra.mxu0 %v540
        %658 = vmatpush.bf16.msra.mxu0 %v536
        %659 = vmatpush.bf16.msra.mxu0 %v532
        %660 = vmatpush.bf16.msra.mxu0 %v528
        %661 = vmatpush.bf16.msra.mxu0 %v524
        %662 = vmatmul.bf16.gmra.mxu0 %v411
        %v663 = vpop.f32.mrf.mxu0
        %v664 = vadd.f32 0.0, %v663
        %v665 = vpop.f32.mrf.mxu0
        %v666 = vadd.f32 0.0, %v665
        %667 = vdwg.mxu0
        %668 = vmatpush.bf16.msra.mxu0 0
        %669 = vmatpush.bf16.msra.mxu0 0
        %670 = vmatpush.bf16.msra.mxu0 0
        %671 = vmatpush.bf16.msra.mxu0 0
        %672 = vmatpush.bf16.msra.mxu0 0
        %673 = vmatpush.bf16.msra.mxu0 0
        %674 = vmatpush.bf16.msra.mxu0 0
        %675 = vmatpush.bf16.msra.mxu0 %v556
        %676 = vmatmul.bf16.gmra.mxu0 %v596
        %v677 = vpop.f32.mrf.mxu0
        %v678 = vadd.f32 %v664, %v677
        %v679 = vpop.f32.mrf.mxu0
        %v680 = vadd.f32 %v666, %v679
        %681 = vdwg.mxu0
        %682 = vmatpush.bf16.msra.mxu0 %v553
        %683 = vmatpush.bf16.msra.mxu0 %v549
        %684 = vmatpush.bf16.msra.mxu0 %v545
        %685 = vmatpush.bf16.msra.mxu0 %v541
        %686 = vmatpush.bf16.msra.mxu0 %v537
        %687 = vmatpush.bf16.msra.mxu0 %v533
        %688 = vmatpush.bf16.msra.mxu0 %v529
        %689 = vmatpush.bf16.msra.mxu0 %v525
        %690 = vmatmul.bf16.gmra.mxu0 %v411
        %v691 = vpop.f32.mrf.mxu0
        %v692 = vadd.f32 0.0, %v691
        %v693 = vpop.f32.mrf.mxu0
        %v694 = vadd.f32 0.0, %v693
        %695 = vdwg.mxu0
        %696 = vmatpush.bf16.msra.mxu0 0
        %697 = vmatpush.bf16.msra.mxu0 0
        %698 = vmatpush.bf16.msra.mxu0 0
        %699 = vmatpush.bf16.msra.mxu0 0
        %700 = vmatpush.bf16.msra.mxu0 0
        %701 = vmatpush.bf16.msra.mxu0 0
        %702 = vmatpush.bf16.msra.mxu0 0
        %703 = vmatpush.bf16.msra.mxu0 %v557
        %704 = vmatmul.bf16.gmra.mxu0 %v596
        %v705 = vpop.f32.mrf.mxu0
        %v706 = vadd.f32 %v692, %v705
        %v707 = vpop.f32.mrf.mxu0
        %v708 = vadd.f32 %v694, %v707
        %709 = vdwg.mxu0
        %v710 = vld [vmem:[%s1] sm:$0xff]
        %v711 = vld [vmem:[%s1 + $0x8] sm:$0xff]
        %713 = vset.pattern.permute.xlu0 0
        %714 = vperm.xlu0 %713, %v710
        %v715 = vpop.permute.xlu0 %714
        %718 = vset.pattern.permute.xlu0 0
        %719 = vperm.xlu0 %718, %v711
        %v720 = vpop.permute.xlu0 %719
        %v722 = vmul.f32 %v622, %v715
        %v723 = vmul.f32 %v650, %v715
        %v724 = vmul.f32 %v678, %v715
        %v725 = vmul.f32 %v706, %v715
        %v726 = vmul.f32 %v624, %v720
        %v727 = vmul.f32 %v652, %v720
        %v728 = vmul.f32 %v680, %v720
        %v729 = vmul.f32 %v708, %v720
        %v730 = vld [vmem:[%s2] sm:$0xff]
        %v731 = vld [vmem:[%s2 + $0x8] sm:$0xff]
        %733 = vset.pattern.permute.xlu0 0
        %734 = vperm.xlu0 %733, %v730
        %v735 = vpop.permute.xlu0 %734
        %738 = vset.pattern.permute.xlu0 0
        %739 = vperm.xlu0 %738, %v731
        %v740 = vpop.permute.xlu0 %739
        %v742 = vadd.f32 %v722, %v735
        %v743 = vadd.f32 %v723, %v735
        %v744 = vadd.f32 %v724, %v735
        %v745 = vadd.f32 %v725, %v735
        %v746 = vadd.f32 %v726, %v740
        %v747 = vadd.f32 %v727, %v740
        %v748 = vadd.f32 %v728, %v740
        %v749 = vadd.f32 %v729, %v740
        %v750 = vld [vmem:[%s335] sm:$0xff]
        %v751 = vld [vmem:[%s335 + $0x8] sm:$0xff]
        %v752 = vld [vmem:[%s335 + $0x10] sm:$0xff]
        %v753 = vld [vmem:[%s335 + $0x18] sm:$0xff]
        %v754 = vld [vmem:[%s335 + $0x20] sm:$0xff]
        %v755 = vld [vmem:[%s335 + $0x28] sm:$0xff]
        %v756 = vld [vmem:[%s335 + $0x30] sm:$0xff]
        %v757 = vld [vmem:[%s335 + $0x38] sm:$0xff]
        %v758 = vadd.f32 %v742, %v750
        %v759 = vadd.f32 %v743, %v751
        %v760 = vadd.f32 %v744, %v752
        %v761 = vadd.f32 %v745, %v753
        %v762 = vadd.f32 %v746, %v754
        %v763 = vadd.f32 %v747, %v755
        %v764 = vadd.f32 %v748, %v756
        %v765 = vadd.f32 %v749, %v757
        %v766 = vmax.f32 %v758, 0.0
        %v767 = vmax.f32 %v759, 0.0
        %v768 = vmax.f32 %v760, 0.0
        %v769 = vmax.f32 %v761, 0.0
        %v770 = vmax.f32 %v762, 0.0
        %v771 = vmax.f32 %v763, 0.0
        %v772 = vmax.f32 %v764, 0.0
        %v773 = vmax.f32 %v765, 0.0
        %774 = vst [vmem:[%s362] sm:$0xff] %v766
        %775 = vst [vmem:[%s362 + $0x8] sm:$0xff] %v767
        %776 = vst [vmem:[%s362 + $0x10] sm:$0xff] %v768
        %777 = vst [vmem:[%s362 + $0x18] sm:$0xff] %v769
        %778 = vst [vmem:[%s362 + $0x20] sm:$0xff] %v770
        %779 = vst [vmem:[%s362 + $0x28] sm:$0xff] %v771
        %780 = vst [vmem:[%s362 + $0x30] sm:$0xff] %v772
        %781 = vst [vmem:[%s362 + $0x38] sm:$0xff] %v773
        %s782 = sand.u32 %s139, 1
        %s783 = sand.u32 %s139, 1
        %s784 = smul.addr %s783, 64
        %s785 = scalar_lea.vmem [#allocation4], %s784
        // Predicated region
        $region87: #{resnet18_forward.23} parent=77 // pred_check
          %p786 = pneg %p149
        $region88: #{resnet18_forward.23} parent=77 // pred_check_branch
          %788 = sbr.rel (%p786) target = $region90
        $region89: #{resnet18_forward.23} parent=77 // pred_region
          %s789 = smul.u32 4, %s16
          %s790 = smul.addr %s789, 8
          %s791 = scalar_lea.vmem %s5, %s790
          // Predicated region
          $region91: #{resnet18_forward.23} parent=89 // pred_check
            _
          $region92: #{resnet18_forward.23} parent=89 // pred_check_branch
            %793 = sbr.rel (0) target = $region94
          $region93: #{resnet18_forward.23} parent=89 // pred_region
            // Predicated region
            $region95: #{resnet18_forward.23} parent=93 // pred_check
              _
            $region96: #{resnet18_forward.23} parent=93 // pred_check_branch
              %795 = sbr.rel (0) target = $region98
            $region97: #{resnet18_forward.23} parent=93 // pred_region
              loop: start=0, step=1, limit=1
              $region99: #{resnet18_forward.23} parent=97 // loop_pre_header
                _
              $region100: #{resnet18_forward.23} parent=97 // loop_header
                %s797 = sphi 0, %s801
                %p798 = scmp.ge.s32.totalorder %s797, 1
                %s802 = sphi %s785, %s785
                %s803 = sphi %s791, %s791
              $region101: #{resnet18_forward.23} parent=97 // loop_header_branch
                %800 = sbr.rel (%p798) target = $region105
              $region102: #{resnet18_forward.23} parent=97 // loop_body
                %v804 = vld [vmem:[%s802] sm:$0xff]
                %805 = vst [vmem:[%s803] sm:$0xff] %v804
                %v806 = vld [vmem:[%s802 + $0x8] sm:$0xff]
                %807 = vst [vmem:[%s803 + $0x8] sm:$0xff] %v806
                %v808 = vld [vmem:[%s802 + $0x10] sm:$0xff]
                %809 = vst [vmem:[%s803 + $0x10] sm:$0xff] %v808
                %v810 = vld [vmem:[%s802 + $0x18] sm:$0xff]
                %811 = vst [vmem:[%s803 + $0x18] sm:$0xff] %v810
                %v812 = vld [vmem:[%s802 + $0x20] sm:$0xff]
                %813 = vst [vmem:[%s803 + $0x80] sm:$0xff] %v812
                %v814 = vld [vmem:[%s802 + $0x28] sm:$0xff]
                %815 = vst [vmem:[%s803 + $0x88] sm:$0xff] %v814
                %v816 = vld [vmem:[%s802 + $0x30] sm:$0xff]
                %817 = vst [vmem:[%s803 + $0x90] sm:$0xff] %v816
                %v818 = vld [vmem:[%s802 + $0x38] sm:$0xff]
                %819 = vst [vmem:[%s803 + $0x98] sm:$0xff] %v818
              $region103: #{resnet18_forward.23} parent=97 // loop_footer
                %s801 = sadd.s32 1, %s797
              $region104: #{resnet18_forward.23} parent=97 // loop_footer_branch
                %796 = sbr.rel target = $region100
              $region105: #{resnet18_forward.23} parent=97 // loop_exit
                _
            $region98: #{resnet18_forward.23} parent=93 // pred_fallthru
              _
            // Predicated region
            $region106: #{resnet18_forward.23} parent=93 // pred_check
              _
            $region107: #{resnet18_forward.23} parent=93 // pred_check_branch
              %821 = sbr.rel target = $region109
            $region108: #{resnet18_forward.23} parent=93 // pred_region
              _
            $region109: #{resnet18_forward.23} parent=93 // pred_fallthru
              _
          $region94: #{resnet18_forward.23} parent=89 // pred_fallthru
            _
          %822 = vnop
        $region90: #{resnet18_forward.23} parent=77 // pred_fallthru
          _
      $region78: #{resnet18_forward.23} parent=5 // pred_fallthru
        _
      %p823 = scmp.le.s32.totalorder 2, %s11
      // Predicated region
      $region110: #{resnet18_forward.23} parent=5 // pred_check
        %p824 = pneg %p823
      $region111: #{resnet18_forward.23} parent=5 // pred_check_branch
        %826 = sbr.rel (%p824) target = $region113
      $region112: #{resnet18_forward.23} parent=5 // pred_region
        %s827 = ssub.s32 %s11, 2
        // Predicated region
        $region114: #{resnet18_forward.23} parent=112 // pred_check
          %p828 = pneg %p155
        $region115: #{resnet18_forward.23} parent=112 // pred_check_branch
          %830 = sbr.rel (%p828) target = $region117
        $region116: #{resnet18_forward.23} parent=112 // pred_region
          %s831 = sand.u32 %s140, 1
          %s832 = sand.u32 %s140, 1
          %s833 = smul.addr %s832, 64
          %s834 = scalar_lea.vmem [#allocation4], %s833
        $region117: #{resnet18_forward.23} parent=112 // pred_fallthru
          _
      $region113: #{resnet18_forward.23} parent=5 // pred_fallthru
        _
    $region6: #{resnet18_forward.23} parent=1 // loop_footer
      %s15 = sadd.s32 1, %s11
    $region7: #{resnet18_forward.23} parent=1 // loop_footer_branch
      %10 = sbr.rel target = $region3
    $region8: #{resnet18_forward.23} parent=1 // loop_exit
      _

// kernel: resnet18_forward.26
$region0: #{resnet18_forward.26}
  #allocation0 [shape = 'u32[]', space=smem, size = 0x4, offset = 0x4, fixed_abs, tag = 'smem constant byte address 0x4 - core index']
  #allocation1 [shape = 'u32[72,128]{1,0:T(1,128)}', space=vmem, size = 0x9000, scoped, tag = 'internal scratch']
  %s0 = inlined_call_operand.vmem [shape: bf16[16,144], index: 0, kind: input, shape index: {}]
  %s1 = inlined_call_operand.vmem [shape: f32[16,1], index: 1, kind: input, shape index: {}]
  %s2 = inlined_call_operand.vmem [shape: f32[16,1], index: 2, kind: input, shape index: {}]
  %s3 = inlined_call_operand.vmem [shape: bf16[144,512], index: 3, kind: input, shape index: {}]
  %s4 = inlined_call_operand.vmem [shape: f32[16,512], index: 4, kind: output, shape index: {}]
  %s5 = sld [smem:[#allocation0]]
  $region26: #{resnet18_forward.26} parent=0
    _
  %s7 = ssub.s32 1, %s5
  %s8 = scalar_select 0, %s7, %s5
  // Predicated region
  $region2: #{resnet18_forward.26} parent=0 // pred_check
    _
  $region3: #{resnet18_forward.26} parent=0 // pred_check_branch
    %10 = sbr.rel (0) target = $region5
  $region4: #{resnet18_forward.26} parent=0 // pred_region
    _
  $region5: #{resnet18_forward.26} parent=0 // pred_fallthru
    _
  // Predicated region
  $region6: #{resnet18_forward.26} parent=0 // pred_check
    _
  $region7: #{resnet18_forward.26} parent=0 // pred_check_branch
    %12 = sbr.rel (0) target = $region9
  $region8: #{resnet18_forward.26} parent=0 // pred_region
    _
  $region9: #{resnet18_forward.26} parent=0 // pred_fallthru
    _
  // Predicated region
  $region10: #{resnet18_forward.26} parent=0 // pred_check
    _
  $region11: #{resnet18_forward.26} parent=0 // pred_check_branch
    %14 = sbr.rel (0) target = $region13
  $region12: #{resnet18_forward.26} parent=0 // pred_region
    _
  $region13: #{resnet18_forward.26} parent=0 // pred_fallthru
    _
  // Predicated region
  $region14: #{resnet18_forward.26} parent=0 // pred_check
    _
  $region15: #{resnet18_forward.26} parent=0 // pred_check_branch
    %16 = sbr.rel (0) target = $region17
  $region16: #{resnet18_forward.26} parent=0 // pred_region
    _
  $region17: #{resnet18_forward.26} parent=0 // pred_fallthru
    _
  %v18 = vld [vmem:[%s0] sm:$0xff]
  %v19 = vld [vmem:[%s0 + $0x8] sm:$0xff]
  %v20 = vld [vmem:[%s3] sm:$0xff]
  %v21 = vld [vmem:[%s3 + $0x8] sm:$0xff]
  %v22 = vld [vmem:[%s3 + $0x10] sm:$0xff]
  %v23 = vld [vmem:[%s3 + $0x18] sm:$0xff]
  %v24 = vld [vmem:[%s3 + $0x20] sm:$0xff]
  %v25 = vld [vmem:[%s3 + $0x28] sm:$0xff]
  %v26 = vld [vmem:[%s3 + $0x30] sm:$0xff]
  %v27 = vld [vmem:[%s3 + $0x38] sm:$0xff]
  %v28 = vld [vmem:[%s3 + $0x40] sm:$0xff]
  %v29 = vld [vmem:[%s3 + $0x48] sm:$0xff]
  %v30 = vld [vmem:[%s3 + $0x50] sm:$0xff]
  %v31 = vld [vmem:[%s3 + $0x58] sm:$0xff]
  %v32 = vld [vmem:[%s3 + $0x60] sm:$0xff]
  %v33 = vld [vmem:[%s3 + $0x68] sm:$0xff]
  %v34 = vld [vmem:[%s3 + $0x70] sm:$0xff]
  %v35 = vld [vmem:[%s3 + $0x78] sm:$0xff]
  %v36 = vld [vmem:[%s3 + $0x80] sm:$0xff]
  %v37 = vld [vmem:[%s3 + $0x88] sm:$0xff]
  %v38 = vld [vmem:[%s3 + $0x90] sm:$0xff]
  %v39 = vld [vmem:[%s3 + $0x98] sm:$0xff]
  %v40 = vld [vmem:[%s3 + $0xa0] sm:$0xff]
  %v41 = vld [vmem:[%s3 + $0xa8] sm:$0xff]
  %v42 = vld [vmem:[%s3 + $0xb0] sm:$0xff]
  %v43 = vld [vmem:[%s3 + $0xb8] sm:$0xff]
  %v44 = vld [vmem:[%s3 + $0xc0] sm:$0xff]
  %v45 = vld [vmem:[%s3 + $0xc8] sm:$0xff]
  %v46 = vld [vmem:[%s3 + $0xd0] sm:$0xff]
  %v47 = vld [vmem:[%s3 + $0xd8] sm:$0xff]
  %v48 = vld [vmem:[%s3 + $0xe0] sm:$0xff]
  %v49 = vld [vmem:[%s3 + $0xe8] sm:$0xff]
  %v50 = vld [vmem:[%s3 + $0xf0] sm:$0xff]
  %v51 = vld [vmem:[%s3 + $0xf8] sm:$0xff]
  %v52 = vld [vmem:[%s3 + $0x100] sm:$0xff]
  %v53 = vld [vmem:[%s3 + $0x108] sm:$0xff]
  %v54 = vld [vmem:[%s3 + $0x110] sm:$0xff]
  %v55 = vld [vmem:[%s3 + $0x118] sm:$0xff]
  %v58 = vunpack.c.l.b16 %v18
  %v59 = vunpack.c.h.b16 %v18
  %v60 = vunpack.c.l.b16 %v19
  %v61 = vunpack.c.h.b16 %v19
  %v62 = vpack.c.b16 %v60, %v58
  %v63 = vpack.c.b16 %v61, %v59
  %v101 = vunpack.c.l.b16 %v20
  %v102 = vunpack.c.h.b16 %v20
  %v103 = vunpack.c.l.b16 %v21
  %v104 = vunpack.c.h.b16 %v21
  %v105 = vunpack.c.l.b16 %v22
  %v106 = vunpack.c.h.b16 %v22
  %v107 = vunpack.c.l.b16 %v23
  %v108 = vunpack.c.h.b16 %v23
  %v109 = vunpack.c.l.b16 %v24
  %v110 = vunpack.c.h.b16 %v24
  %v111 = vunpack.c.l.b16 %v25
  %v112 = vunpack.c.h.b16 %v25
  %v113 = vunpack.c.l.b16 %v26
  %v114 = vunpack.c.h.b16 %v26
  %v115 = vunpack.c.l.b16 %v27
  %v116 = vunpack.c.h.b16 %v27
  %v117 = vunpack.c.l.b16 %v28
  %v118 = vunpack.c.h.b16 %v28
  %v119 = vunpack.c.l.b16 %v29
  %v120 = vunpack.c.h.b16 %v29
  %v121 = vunpack.c.l.b16 %v30
  %v122 = vunpack.c.h.b16 %v30
  %v123 = vunpack.c.l.b16 %v31
  %v124 = vunpack.c.h.b16 %v31
  %v125 = vunpack.c.l.b16 %v32
  %v126 = vunpack.c.h.b16 %v32
  %v127 = vunpack.c.l.b16 %v33
  %v128 = vunpack.c.h.b16 %v33
  %v129 = vunpack.c.l.b16 %v34
  %v130 = vunpack.c.h.b16 %v34
  %v131 = vunpack.c.l.b16 %v35
  %v132 = vunpack.c.h.b16 %v35
  %v133 = vunpack.c.l.b16 %v36
  %v134 = vunpack.c.h.b16 %v36
  %v135 = vunpack.c.l.b16 %v37
  %v136 = vunpack.c.h.b16 %v37
  %v137 = vunpack.c.l.b16 %v38
  %v138 = vunpack.c.h.b16 %v38
  %v139 = vunpack.c.l.b16 %v39
  %v140 = vunpack.c.h.b16 %v39
  %v141 = vunpack.c.l.b16 %v40
  %v142 = vunpack.c.h.b16 %v40
  %v143 = vunpack.c.l.b16 %v41
  %v144 = vunpack.c.h.b16 %v41
  %v145 = vunpack.c.l.b16 %v42
  %v146 = vunpack.c.h.b16 %v42
  %v147 = vunpack.c.l.b16 %v43
  %v148 = vunpack.c.h.b16 %v43
  %v149 = vunpack.c.l.b16 %v44
  %v150 = vunpack.c.h.b16 %v44
  %v151 = vunpack.c.l.b16 %v45
  %v152 = vunpack.c.h.b16 %v45
  %v153 = vunpack.c.l.b16 %v46
  %v154 = vunpack.c.h.b16 %v46
  %v155 = vunpack.c.l.b16 %v47
  %v156 = vunpack.c.h.b16 %v47
  %v157 = vunpack.c.l.b16 %v48
  %v158 = vunpack.c.h.b16 %v48
  %v159 = vunpack.c.l.b16 %v49
  %v160 = vunpack.c.h.b16 %v49
  %v161 = vunpack.c.l.b16 %v50
  %v162 = vunpack.c.h.b16 %v50
  %v163 = vunpack.c.l.b16 %v51
  %v164 = vunpack.c.h.b16 %v51
  %v165 = vunpack.c.l.b16 %v52
  %v166 = vunpack.c.h.b16 %v52
  %v167 = vunpack.c.l.b16 %v53
  %v168 = vunpack.c.h.b16 %v53
  %v169 = vunpack.c.l.b16 %v54
  %v170 = vunpack.c.h.b16 %v54
  %v171 = vunpack.c.l.b16 %v55
  %v172 = vunpack.c.h.b16 %v55
  %v173 = vpack.c.b16 %v105, %v101
  %v174 = vpack.c.b16 %v106, %v102
  %v175 = vpack.c.b16 %v107, %v103
  %v176 = vpack.c.b16 %v108, %v104
  %v177 = vpack.c.b16 %v113, %v109
  %v178 = vpack.c.b16 %v114, %v110
  %v179 = vpack.c.b16 %v115, %v111
  %v180 = vpack.c.b16 %v116, %v112
  %v181 = vpack.c.b16 %v121, %v117
  %v182 = vpack.c.b16 %v122, %v118
  %v183 = vpack.c.b16 %v123, %v119
  %v184 = vpack.c.b16 %v124, %v120
  %v185 = vpack.c.b16 %v129, %v125
  %v186 = vpack.c.b16 %v130, %v126
  %v187 = vpack.c.b16 %v131, %v127
  %v188 = vpack.c.b16 %v132, %v128
  %v189 = vpack.c.b16 %v137, %v133
  %v190 = vpack.c.b16 %v138, %v134
  %v191 = vpack.c.b16 %v139, %v135
  %v192 = vpack.c.b16 %v140, %v136
  %v193 = vpack.c.b16 %v145, %v141
  %v194 = vpack.c.b16 %v146, %v142
  %v195 = vpack.c.b16 %v147, %v143
  %v196 = vpack.c.b16 %v148, %v144
  %v197 = vpack.c.b16 %v153, %v149
  %v198 = vpack.c.b16 %v154, %v150
  %v199 = vpack.c.b16 %v155, %v151
  %v200 = vpack.c.b16 %v156, %v152
  %v201 = vpack.c.b16 %v161, %v157
  %v202 = vpack.c.b16 %v162, %v158
  %v203 = vpack.c.b16 %v163, %v159
  %v204 = vpack.c.b16 %v164, %v160
  %v205 = vpack.c.b16 %v169, %v165
  %v206 = vpack.c.b16 %v170, %v166
  %v207 = vpack.c.b16 %v171, %v167
  %v208 = vpack.c.b16 %v172, %v168
  %vm245 = vcmask 130048
  %v247 = vsel %vm245, %v63, 0
  %249 = vmatpush.bf16.msra.mxu0 %v201
  %250 = vmatpush.bf16.msra.mxu0 %v197
  %251 = vmatpush.bf16.msra.mxu0 %v193
  %252 = vmatpush.bf16.msra.mxu0 %v189
  %253 = vmatpush.bf16.msra.mxu0 %v185
  %254 = vmatpush.bf16.msra.mxu0 %v181
  %255 = vmatpush.bf16.msra.mxu0 %v177
  %256 = vmatpush.bf16.msra.mxu0 %v173
  %257 = vmatmul.bf16.gmra.mxu0 %v62
  %v258 = vpop.f32.mrf.mxu0
  %v259 = vadd.f32 0.0, %v258
  %v260 = vpop.f32.mrf.mxu0
  %v261 = vadd.f32 0.0, %v260
  %262 = vdwg.mxu0
  %263 = vmatpush.bf16.msra.mxu0 0
  %264 = vmatpush.bf16.msra.mxu0 0
  %265 = vmatpush.bf16.msra.mxu0 0
  %266 = vmatpush.bf16.msra.mxu0 0
  %267 = vmatpush.bf16.msra.mxu0 0
  %268 = vmatpush.bf16.msra.mxu0 0
  %269 = vmatpush.bf16.msra.mxu0 0
  %270 = vmatpush.bf16.msra.mxu0 %v205
  %271 = vmatmul.bf16.gmra.mxu0 %v247
  %v272 = vpop.f32.mrf.mxu0
  %v273 = vadd.f32 %v259, %v272
  %v274 = vpop.f32.mrf.mxu0
  %v275 = vadd.f32 %v261, %v274
  %276 = vdwg.mxu0
  %277 = vmatpush.bf16.msra.mxu0 %v202
  %278 = vmatpush.bf16.msra.mxu0 %v198
  %279 = vmatpush.bf16.msra.mxu0 %v194
  %280 = vmatpush.bf16.msra.mxu0 %v190
  %281 = vmatpush.bf16.msra.mxu0 %v186
  %282 = vmatpush.bf16.msra.mxu0 %v182
  %283 = vmatpush.bf16.msra.mxu0 %v178
  %284 = vmatpush.bf16.msra.mxu0 %v174
  %285 = vmatmul.bf16.gmra.mxu0 %v62
  %v286 = vpop.f32.mrf.mxu0
  %v287 = vadd.f32 0.0, %v286
  %v288 = vpop.f32.mrf.mxu0
  %v289 = vadd.f32 0.0, %v288
  %290 = vdwg.mxu0
  %291 = vmatpush.bf16.msra.mxu0 0
  %292 = vmatpush.bf16.msra.mxu0 0
  %293 = vmatpush.bf16.msra.mxu0 0
  %294 = vmatpush.bf16.msra.mxu0 0
  %295 = vmatpush.bf16.msra.mxu0 0
  %296 = vmatpush.bf16.msra.mxu0 0
  %297 = vmatpush.bf16.msra.mxu0 0
  %298 = vmatpush.bf16.msra.mxu0 %v206
  %299 = vmatmul.bf16.gmra.mxu0 %v247
  %v300 = vpop.f32.mrf.mxu0
  %v301 = vadd.f32 %v287, %v300
  %v302 = vpop.f32.mrf.mxu0
  %v303 = vadd.f32 %v289, %v302
  %304 = vdwg.mxu0
  %305 = vmatpush.bf16.msra.mxu0 %v203
  %306 = vmatpush.bf16.msra.mxu0 %v199
  %307 = vmatpush.bf16.msra.mxu0 %v195
  %308 = vmatpush.bf16.msra.mxu0 %v191
  %309 = vmatpush.bf16.msra.mxu0 %v187
  %310 = vmatpush.bf16.msra.mxu0 %v183
  %311 = vmatpush.bf16.msra.mxu0 %v179
  %312 = vmatpush.bf16.msra.mxu0 %v175
  %313 = vmatmul.bf16.gmra.mxu0 %v62
  %v314 = vpop.f32.mrf.mxu0
  %v315 = vadd.f32 0.0, %v314
  %v316 = vpop.f32.mrf.mxu0
  %v317 = vadd.f32 0.0, %v316
  %318 = vdwg.mxu0
  %319 = vmatpush.bf16.msra.mxu0 0
  %320 = vmatpush.bf16.msra.mxu0 0
  %321 = vmatpush.bf16.msra.mxu0 0
  %322 = vmatpush.bf16.msra.mxu0 0
  %323 = vmatpush.bf16.msra.mxu0 0
  %324 = vmatpush.bf16.msra.mxu0 0
  %325 = vmatpush.bf16.msra.mxu0 0
  %326 = vmatpush.bf16.msra.mxu0 %v207
  %327 = vmatmul.bf16.gmra.mxu0 %v247
  %v328 = vpop.f32.mrf.mxu0
  %v329 = vadd.f32 %v315, %v328
  %v330 = vpop.f32.mrf.mxu0
  %v331 = vadd.f32 %v317, %v330
  %332 = vdwg.mxu0
  %333 = vmatpush.bf16.msra.mxu0 %v204
  %334 = vmatpush.bf16.msra.mxu0 %v200
  %335 = vmatpush.bf16.msra.mxu0 %v196
  %336 = vmatpush.bf16.msra.mxu0 %v192
  %337 = vmatpush.bf16.msra.mxu0 %v188
  %338 = vmatpush.bf16.msra.mxu0 %v184
  %339 = vmatpush.bf16.msra.mxu0 %v180
  %340 = vmatpush.bf16.msra.mxu0 %v176
  %341 = vmatmul.bf16.gmra.mxu0 %v62
  %v342 = vpop.f32.mrf.mxu0
  %v343 = vadd.f32 0.0, %v342
  %v344 = vpop.f32.mrf.mxu0
  %v345 = vadd.f32 0.0, %v344
  %346 = vdwg.mxu0
  %347 = vmatpush.bf16.msra.mxu0 0
  %348 = vmatpush.bf16.msra.mxu0 0
  %349 = vmatpush.bf16.msra.mxu0 0
  %350 = vmatpush.bf16.msra.mxu0 0
  %351 = vmatpush.bf16.msra.mxu0 0
  %352 = vmatpush.bf16.msra.mxu0 0
  %353 = vmatpush.bf16.msra.mxu0 0
  %354 = vmatpush.bf16.msra.mxu0 %v208
  %355 = vmatmul.bf16.gmra.mxu0 %v247
  %v356 = vpop.f32.mrf.mxu0
  %v357 = vadd.f32 %v343, %v356
  %v358 = vpop.f32.mrf.mxu0
  %v359 = vadd.f32 %v345, %v358
  %360 = vdwg.mxu0
  %v361 = vld [vmem:[%s1] sm:$0xff]
  %v362 = vld [vmem:[%s1 + $0x8] sm:$0xff]
  %364 = vset.pattern.permute.xlu0 0
  %365 = vperm.xlu0 %364, %v361
  %v366 = vpop.permute.xlu0 %365
  %369 = vset.pattern.permute.xlu0 0
  %370 = vperm.xlu0 %369, %v362
  %v371 = vpop.permute.xlu0 %370
  %v373 = vmul.f32 %v273, %v366
  %v374 = vmul.f32 %v301, %v366
  %v375 = vmul.f32 %v329, %v366
  %v376 = vmul.f32 %v357, %v366
  %v377 = vmul.f32 %v275, %v371
  %v378 = vmul.f32 %v303, %v371
  %v379 = vmul.f32 %v331, %v371
  %v380 = vmul.f32 %v359, %v371
  %v381 = vld [vmem:[%s2] sm:$0xff]
  %v382 = vld [vmem:[%s2 + $0x8] sm:$0xff]
  %384 = vset.pattern.permute.xlu0 0
  %385 = vperm.xlu0 %384, %v381
  %v386 = vpop.permute.xlu0 %385
  %389 = vset.pattern.permute.xlu0 0
  %390 = vperm.xlu0 %389, %v382
  %v391 = vpop.permute.xlu0 %390
  %v393 = vadd.f32 %v373, %v386
  %v394 = vadd.f32 %v374, %v386
  %v395 = vadd.f32 %v375, %v386
  %v396 = vadd.f32 %v376, %v386
  %v397 = vadd.f32 %v377, %v391
  %v398 = vadd.f32 %v378, %v391
  %v399 = vadd.f32 %v379, %v391
  %v400 = vadd.f32 %v380, %v391
  %v401 = vmax.f32 %v393, 0.0
  %v402 = vmax.f32 %v394, 0.0
  %v403 = vmax.f32 %v395, 0.0
  %v404 = vmax.f32 %v396, 0.0
  %v405 = vmax.f32 %v397, 0.0
  %v406 = vmax.f32 %v398, 0.0
  %v407 = vmax.f32 %v399, 0.0
  %v408 = vmax.f32 %v400, 0.0
  %409 = vst [vmem:[%s4] sm:$0xff] %v401
  %410 = vst [vmem:[%s4 + $0x8] sm:$0xff] %v402
  %411 = vst [vmem:[%s4 + $0x10] sm:$0xff] %v403
  %412 = vst [vmem:[%s4 + $0x18] sm:$0xff] %v404
  %413 = vst [vmem:[%s4 + $0x20] sm:$0xff] %v405
  %414 = vst [vmem:[%s4 + $0x28] sm:$0xff] %v406
  %415 = vst [vmem:[%s4 + $0x30] sm:$0xff] %v407
  %416 = vst [vmem:[%s4 + $0x38] sm:$0xff] %v408
  // Predicated region
  $region18: #{resnet18_forward.26} parent=0 // pred_check
    _
  $region19: #{resnet18_forward.26} parent=0 // pred_check_branch
    %418 = sbr.rel (0) target = $region21
  $region20: #{resnet18_forward.26} parent=0 // pred_region
    _
  $region21: #{resnet18_forward.26} parent=0 // pred_fallthru
    _
  // Predicated region
  $region22: #{resnet18_forward.26} parent=0 // pred_check
    _
  $region23: #{resnet18_forward.26} parent=0 // pred_check_branch
    %420 = sbr.rel (0) target = $region25
  $region24: #{resnet18_forward.26} parent=0 // pred_region
    _
  $region25: #{resnet18_forward.26} parent=0 // pred_fallthru
    _

// kernel: resnet18_forward.27
$region0: #{resnet18_forward.27}
  #allocation0 [shape = 'u32[]', space=smem, size = 0x4, offset = 0x4, fixed_abs, tag = 'smem constant byte address 0x4 - core index']
  #allocation1 [shape = 'u32[72,128]{1,0:T(1,128)}', space=vmem, size = 0x9000, scoped, tag = 'internal scratch']
  %s0 = inlined_call_operand.vmem [shape: bf16[16,16], index: 0, kind: input, shape index: {}]
  %s1 = inlined_call_operand.vmem [shape: f32[16,1], index: 1, kind: input, shape index: {}]
  %s2 = inlined_call_operand.vmem [shape: f32[16,1], index: 2, kind: input, shape index: {}]
  %s3 = inlined_call_operand.vmem [shape: bf16[16,512], index: 3, kind: input, shape index: {}]
  %s4 = inlined_call_operand.vmem [shape: f32[16,512], index: 4, kind: output, shape index: {}]
  %s5 = sld [smem:[#allocation0]]
  $region26: #{resnet18_forward.27} parent=0
    _
  %s7 = ssub.s32 1, %s5
  %s8 = scalar_select 0, %s7, %s5
  // Predicated region
  $region2: #{resnet18_forward.27} parent=0 // pred_check
    _
  $region3: #{resnet18_forward.27} parent=0 // pred_check_branch
    %10 = sbr.rel (0) target = $region5
  $region4: #{resnet18_forward.27} parent=0 // pred_region
    _
  $region5: #{resnet18_forward.27} parent=0 // pred_fallthru
    _
  // Predicated region
  $region6: #{resnet18_forward.27} parent=0 // pred_check
    _
  $region7: #{resnet18_forward.27} parent=0 // pred_check_branch
    %12 = sbr.rel (0) target = $region9
  $region8: #{resnet18_forward.27} parent=0 // pred_region
    _
  $region9: #{resnet18_forward.27} parent=0 // pred_fallthru
    _
  // Predicated region
  $region10: #{resnet18_forward.27} parent=0 // pred_check
    _
  $region11: #{resnet18_forward.27} parent=0 // pred_check_branch
    %14 = sbr.rel (0) target = $region13
  $region12: #{resnet18_forward.27} parent=0 // pred_region
    _
  $region13: #{resnet18_forward.27} parent=0 // pred_fallthru
    _
  // Predicated region
  $region14: #{resnet18_forward.27} parent=0 // pred_check
    _
  $region15: #{resnet18_forward.27} parent=0 // pred_check_branch
    %16 = sbr.rel (0) target = $region17
  $region16: #{resnet18_forward.27} parent=0 // pred_region
    _
  $region17: #{resnet18_forward.27} parent=0 // pred_fallthru
    _
  %v18 = vld [vmem:[%s0] sm:$0xf]
  %v19 = vld [vmem:[%s0 + $0x4] sm:$0xf]
  %v20 = vld [vmem:[%s3] sm:$0xff]
  %v21 = vld [vmem:[%s3 + $0x8] sm:$0xff]
  %v22 = vld [vmem:[%s3 + $0x10] sm:$0xff]
  %v23 = vld [vmem:[%s3 + $0x18] sm:$0xff]
  %v26 = vunpack.c.l.b16 %v18
  %v27 = vunpack.c.l.b16 %v19
  %v28 = vpack.c.b16 %v27, %v26
  %v33 = vunpack.c.l.b16 %v20
  %v34 = vunpack.c.h.b16 %v20
  %v35 = vunpack.c.l.b16 %v21
  %v36 = vunpack.c.h.b16 %v21
  %v37 = vunpack.c.l.b16 %v22
  %v38 = vunpack.c.h.b16 %v22
  %v39 = vunpack.c.l.b16 %v23
  %v40 = vunpack.c.h.b16 %v23
  %v41 = vpack.c.b16 %v37, %v33
  %v42 = vpack.c.b16 %v38, %v34
  %v43 = vpack.c.b16 %v39, %v35
  %v44 = vpack.c.b16 %v40, %v36
  %vm49 = vcmask 130048
  %v51 = vsel %vm49, %v28, 0
  %53 = vmatpush.bf16.msra.mxu0 0
  %54 = vmatpush.bf16.msra.mxu0 0
  %55 = vmatpush.bf16.msra.mxu0 0
  %56 = vmatpush.bf16.msra.mxu0 0
  %57 = vmatpush.bf16.msra.mxu0 0
  %58 = vmatpush.bf16.msra.mxu0 0
  %59 = vmatpush.bf16.msra.mxu0 0
  %60 = vmatpush.bf16.msra.mxu0 %v41
  %61 = vmatmul.bf16.gmra.mxu0 %v51
  %v62 = vpop.f32.mrf.mxu0
  %v63 = vadd.f32 0.0, %v62
  %v64 = vpop.f32.mrf.mxu0
  %v65 = vadd.f32 0.0, %v64
  %66 = vdwg.mxu0
  %67 = vmatpush.bf16.msra.mxu0 0
  %68 = vmatpush.bf16.msra.mxu0 0
  %69 = vmatpush.bf16.msra.mxu0 0
  %70 = vmatpush.bf16.msra.mxu0 0
  %71 = vmatpush.bf16.msra.mxu0 0
  %72 = vmatpush.bf16.msra.mxu0 0
  %73 = vmatpush.bf16.msra.mxu0 0
  %74 = vmatpush.bf16.msra.mxu0 %v42
  %75 = vmatmul.bf16.gmra.mxu0 %v51
  %v76 = vpop.f32.mrf.mxu0
  %v77 = vadd.f32 0.0, %v76
  %v78 = vpop.f32.mrf.mxu0
  %v79 = vadd.f32 0.0, %v78
  %80 = vdwg.mxu0
  %81 = vmatpush.bf16.msra.mxu0 0
  %82 = vmatpush.bf16.msra.mxu0 0
  %83 = vmatpush.bf16.msra.mxu0 0
  %84 = vmatpush.bf16.msra.mxu0 0
  %85 = vmatpush.bf16.msra.mxu0 0
  %86 = vmatpush.bf16.msra.mxu0 0
  %87 = vmatpush.bf16.msra.mxu0 0
  %88 = vmatpush.bf16.msra.mxu0 %v43
  %89 = vmatmul.bf16.gmra.mxu0 %v51
  %v90 = vpop.f32.mrf.mxu0
  %v91 = vadd.f32 0.0, %v90
  %v92 = vpop.f32.mrf.mxu0
  %v93 = vadd.f32 0.0, %v92
  %94 = vdwg.mxu0
  %95 = vmatpush.bf16.msra.mxu0 0
  %96 = vmatpush.bf16.msra.mxu0 0
  %97 = vmatpush.bf16.msra.mxu0 0
  %98 = vmatpush.bf16.msra.mxu0 0
  %99 = vmatpush.bf16.msra.mxu0 0
  %100 = vmatpush.bf16.msra.mxu0 0
  %101 = vmatpush.bf16.msra.mxu0 0
  %102 = vmatpush.bf16.msra.mxu0 %v44
  %103 = vmatmul.bf16.gmra.mxu0 %v51
  %v104 = vpop.f32.mrf.mxu0
  %v105 = vadd.f32 0.0, %v104
  %v106 = vpop.f32.mrf.mxu0
  %v107 = vadd.f32 0.0, %v106
  %108 = vdwg.mxu0
  %v109 = vld [vmem:[%s1] sm:$0xff]
  %v110 = vld [vmem:[%s1 + $0x8] sm:$0xff]
  %112 = vset.pattern.permute.xlu0 0
  %113 = vperm.xlu0 %112, %v109
  %v114 = vpop.permute.xlu0 %113
  %117 = vset.pattern.permute.xlu0 0
  %118 = vperm.xlu0 %117, %v110
  %v119 = vpop.permute.xlu0 %118
  %v121 = vmul.f32 %v63, %v114
  %v122 = vmul.f32 %v77, %v114
  %v123 = vmul.f32 %v91, %v114
  %v124 = vmul.f32 %v105, %v114
  %v125 = vmul.f32 %v65, %v119
  %v126 = vmul.f32 %v79, %v119
  %v127 = vmul.f32 %v93, %v119
  %v128 = vmul.f32 %v107, %v119
  %v129 = vld [vmem:[%s2] sm:$0xff]
  %v130 = vld [vmem:[%s2 + $0x8] sm:$0xff]
  %132 = vset.pattern.permute.xlu0 0
  %133 = vperm.xlu0 %132, %v129
  %v134 = vpop.permute.xlu0 %133
  %137 = vset.pattern.permute.xlu0 0
  %138 = vperm.xlu0 %137, %v130
  %v139 = vpop.permute.xlu0 %138
  %v141 = vadd.f32 %v121, %v134
  %v142 = vadd.f32 %v122, %v134
  %v143 = vadd.f32 %v123, %v134
  %v144 = vadd.f32 %v124, %v134
  %v145 = vadd.f32 %v125, %v139
  %v146 = vadd.f32 %v126, %v139
  %v147 = vadd.f32 %v127, %v139
  %v148 = vadd.f32 %v128, %v139
  %149 = vst [vmem:[%s4] sm:$0xff] %v141
  %150 = vst [vmem:[%s4 + $0x8] sm:$0xff] %v142
  %151 = vst [vmem:[%s4 + $0x10] sm:$0xff] %v143
  %152 = vst [vmem:[%s4 + $0x18] sm:$0xff] %v144
  %153 = vst [vmem:[%s4 + $0x20] sm:$0xff] %v145
  %154 = vst [vmem:[%s4 + $0x28] sm:$0xff] %v146
  %155 = vst [vmem:[%s4 + $0x30] sm:$0xff] %v147
  %156 = vst [vmem:[%s4 + $0x38] sm:$0xff] %v148
  // Predicated region
  $region18: #{resnet18_forward.27} parent=0 // pred_check
    _
  $region19: #{resnet18_forward.27} parent=0 // pred_check_branch
    %158 = sbr.rel (0) target = $region21
  $region20: #{resnet18_forward.27} parent=0 // pred_region
    _
  $region21: #{resnet18_forward.27} parent=0 // pred_fallthru
    _
  // Predicated region
  $region22: #{resnet18_forward.27} parent=0 // pred_check
    _
  $region23: #{resnet18_forward.27} parent=0 // pred_check_branch
    %160 = sbr.rel (0) target = $region25
  $region24: #{resnet18_forward.27} parent=0 // pred_region
    _
  $region25: #{resnet18_forward.27} parent=0 // pred_fallthru
    _

// kernel: resnet18_forward.28
$region0: #{resnet18_forward.28}
  #allocation0 [shape = 'u32[]', space=smem, size = 0x4, offset = 0x4, fixed_abs, tag = 'smem constant byte address 0x4 - core index']
  #allocation1 [shape = 'u32[72,128]{1,0:T(1,128)}', space=vmem, size = 0x9000, scoped, tag = 'internal scratch']
  %s0 = inlined_call_operand.vmem [shape: bf16[16,144], index: 0, kind: input, shape index: {}]
  %s1 = inlined_call_operand.vmem [shape: f32[16,1], index: 1, kind: input, shape index: {}]
  %s2 = inlined_call_operand.vmem [shape: f32[16,1], index: 2, kind: input, shape index: {}]
  %s3 = inlined_call_operand.vmem [shape: bf16[144,512], index: 3, kind: input, shape index: {}]
  %s4 = inlined_call_operand.vmem [shape: f32[16,512], index: 4, kind: input, shape index: {}]
  %s5 = inlined_call_operand.vmem [shape: f32[16,512], index: 5, kind: output, shape index: {}]
  %s6 = sld [smem:[#allocation0]]
  $region30: #{resnet18_forward.28} parent=0
    _
  %s8 = ssub.s32 1, %s6
  %s9 = scalar_select 0, %s8, %s6
  // Predicated region
  $region2: #{resnet18_forward.28} parent=0 // pred_check
    _
  $region3: #{resnet18_forward.28} parent=0 // pred_check_branch
    %11 = sbr.rel (0) target = $region5
  $region4: #{resnet18_forward.28} parent=0 // pred_region
    _
  $region5: #{resnet18_forward.28} parent=0 // pred_fallthru
    _
  // Predicated region
  $region6: #{resnet18_forward.28} parent=0 // pred_check
    _
  $region7: #{resnet18_forward.28} parent=0 // pred_check_branch
    %13 = sbr.rel (0) target = $region9
  $region8: #{resnet18_forward.28} parent=0 // pred_region
    _
  $region9: #{resnet18_forward.28} parent=0 // pred_fallthru
    _
  // Predicated region
  $region10: #{resnet18_forward.28} parent=0 // pred_check
    _
  $region11: #{resnet18_forward.28} parent=0 // pred_check_branch
    %15 = sbr.rel (0) target = $region13
  $region12: #{resnet18_forward.28} parent=0 // pred_region
    _
  $region13: #{resnet18_forward.28} parent=0 // pred_fallthru
    _
  // Predicated region
  $region14: #{resnet18_forward.28} parent=0 // pred_check
    _
  $region15: #{resnet18_forward.28} parent=0 // pred_check_branch
    %17 = sbr.rel (0) target = $region17
  $region16: #{resnet18_forward.28} parent=0 // pred_region
    _
  $region17: #{resnet18_forward.28} parent=0 // pred_fallthru
    _
  // Predicated region
  $region18: #{resnet18_forward.28} parent=0 // pred_check
    _
  $region19: #{resnet18_forward.28} parent=0 // pred_check_branch
    %19 = sbr.rel (0) target = $region21
  $region20: #{resnet18_forward.28} parent=0 // pred_region
    _
  $region21: #{resnet18_forward.28} parent=0 // pred_fallthru
    _
  %v21 = vld [vmem:[%s0] sm:$0xff]
  %v22 = vld [vmem:[%s0 + $0x8] sm:$0xff]
  %v23 = vld [vmem:[%s3] sm:$0xff]
  %v24 = vld [vmem:[%s3 + $0x8] sm:$0xff]
  %v25 = vld [vmem:[%s3 + $0x10] sm:$0xff]
  %v26 = vld [vmem:[%s3 + $0x18] sm:$0xff]
  %v27 = vld [vmem:[%s3 + $0x20] sm:$0xff]
  %v28 = vld [vmem:[%s3 + $0x28] sm:$0xff]
  %v29 = vld [vmem:[%s3 + $0x30] sm:$0xff]
  %v30 = vld [vmem:[%s3 + $0x38] sm:$0xff]
  %v31 = vld [vmem:[%s3 + $0x40] sm:$0xff]
  %v32 = vld [vmem:[%s3 + $0x48] sm:$0xff]
  %v33 = vld [vmem:[%s3 + $0x50] sm:$0xff]
  %v34 = vld [vmem:[%s3 + $0x58] sm:$0xff]
  %v35 = vld [vmem:[%s3 + $0x60] sm:$0xff]
  %v36 = vld [vmem:[%s3 + $0x68] sm:$0xff]
  %v37 = vld [vmem:[%s3 + $0x70] sm:$0xff]
  %v38 = vld [vmem:[%s3 + $0x78] sm:$0xff]
  %v39 = vld [vmem:[%s3 + $0x80] sm:$0xff]
  %v40 = vld [vmem:[%s3 + $0x88] sm:$0xff]
  %v41 = vld [vmem:[%s3 + $0x90] sm:$0xff]
  %v42 = vld [vmem:[%s3 + $0x98] sm:$0xff]
  %v43 = vld [vmem:[%s3 + $0xa0] sm:$0xff]
  %v44 = vld [vmem:[%s3 + $0xa8] sm:$0xff]
  %v45 = vld [vmem:[%s3 + $0xb0] sm:$0xff]
  %v46 = vld [vmem:[%s3 + $0xb8] sm:$0xff]
  %v47 = vld [vmem:[%s3 + $0xc0] sm:$0xff]
  %v48 = vld [vmem:[%s3 + $0xc8] sm:$0xff]
  %v49 = vld [vmem:[%s3 + $0xd0] sm:$0xff]
  %v50 = vld [vmem:[%s3 + $0xd8] sm:$0xff]
  %v51 = vld [vmem:[%s3 + $0xe0] sm:$0xff]
  %v52 = vld [vmem:[%s3 + $0xe8] sm:$0xff]
  %v53 = vld [vmem:[%s3 + $0xf0] sm:$0xff]
  %v54 = vld [vmem:[%s3 + $0xf8] sm:$0xff]
  %v55 = vld [vmem:[%s3 + $0x100] sm:$0xff]
  %v56 = vld [vmem:[%s3 + $0x108] sm:$0xff]
  %v57 = vld [vmem:[%s3 + $0x110] sm:$0xff]
  %v58 = vld [vmem:[%s3 + $0x118] sm:$0xff]
  %v61 = vunpack.c.l.b16 %v21
  %v62 = vunpack.c.h.b16 %v21
  %v63 = vunpack.c.l.b16 %v22
  %v64 = vunpack.c.h.b16 %v22
  %v65 = vpack.c.b16 %v63, %v61
  %v66 = vpack.c.b16 %v64, %v62
  %v104 = vunpack.c.l.b16 %v23
  %v105 = vunpack.c.h.b16 %v23
  %v106 = vunpack.c.l.b16 %v24
  %v107 = vunpack.c.h.b16 %v24
  %v108 = vunpack.c.l.b16 %v25
  %v109 = vunpack.c.h.b16 %v25
  %v110 = vunpack.c.l.b16 %v26
  %v111 = vunpack.c.h.b16 %v26
  %v112 = vunpack.c.l.b16 %v27
  %v113 = vunpack.c.h.b16 %v27
  %v114 = vunpack.c.l.b16 %v28
  %v115 = vunpack.c.h.b16 %v28
  %v116 = vunpack.c.l.b16 %v29
  %v117 = vunpack.c.h.b16 %v29
  %v118 = vunpack.c.l.b16 %v30
  %v119 = vunpack.c.h.b16 %v30
  %v120 = vunpack.c.l.b16 %v31
  %v121 = vunpack.c.h.b16 %v31
  %v122 = vunpack.c.l.b16 %v32
  %v123 = vunpack.c.h.b16 %v32
  %v124 = vunpack.c.l.b16 %v33
  %v125 = vunpack.c.h.b16 %v33
  %v126 = vunpack.c.l.b16 %v34
  %v127 = vunpack.c.h.b16 %v34
  %v128 = vunpack.c.l.b16 %v35
  %v129 = vunpack.c.h.b16 %v35
  %v130 = vunpack.c.l.b16 %v36
  %v131 = vunpack.c.h.b16 %v36
  %v132 = vunpack.c.l.b16 %v37
  %v133 = vunpack.c.h.b16 %v37
  %v134 = vunpack.c.l.b16 %v38
  %v135 = vunpack.c.h.b16 %v38
  %v136 = vunpack.c.l.b16 %v39
  %v137 = vunpack.c.h.b16 %v39
  %v138 = vunpack.c.l.b16 %v40
  %v139 = vunpack.c.h.b16 %v40
  %v140 = vunpack.c.l.b16 %v41
  %v141 = vunpack.c.h.b16 %v41
  %v142 = vunpack.c.l.b16 %v42
  %v143 = vunpack.c.h.b16 %v42
  %v144 = vunpack.c.l.b16 %v43
  %v145 = vunpack.c.h.b16 %v43
  %v146 = vunpack.c.l.b16 %v44
  %v147 = vunpack.c.h.b16 %v44
  %v148 = vunpack.c.l.b16 %v45
  %v149 = vunpack.c.h.b16 %v45
  %v150 = vunpack.c.l.b16 %v46
  %v151 = vunpack.c.h.b16 %v46
  %v152 = vunpack.c.l.b16 %v47
  %v153 = vunpack.c.h.b16 %v47
  %v154 = vunpack.c.l.b16 %v48
  %v155 = vunpack.c.h.b16 %v48
  %v156 = vunpack.c.l.b16 %v49
  %v157 = vunpack.c.h.b16 %v49
  %v158 = vunpack.c.l.b16 %v50
  %v159 = vunpack.c.h.b16 %v50
  %v160 = vunpack.c.l.b16 %v51
  %v161 = vunpack.c.h.b16 %v51
  %v162 = vunpack.c.l.b16 %v52
  %v163 = vunpack.c.h.b16 %v52
  %v164 = vunpack.c.l.b16 %v53
  %v165 = vunpack.c.h.b16 %v53
  %v166 = vunpack.c.l.b16 %v54
  %v167 = vunpack.c.h.b16 %v54
  %v168 = vunpack.c.l.b16 %v55
  %v169 = vunpack.c.h.b16 %v55
  %v170 = vunpack.c.l.b16 %v56
  %v171 = vunpack.c.h.b16 %v56
  %v172 = vunpack.c.l.b16 %v57
  %v173 = vunpack.c.h.b16 %v57
  %v174 = vunpack.c.l.b16 %v58
  %v175 = vunpack.c.h.b16 %v58
  %v176 = vpack.c.b16 %v108, %v104
  %v177 = vpack.c.b16 %v109, %v105
  %v178 = vpack.c.b16 %v110, %v106
  %v179 = vpack.c.b16 %v111, %v107
  %v180 = vpack.c.b16 %v116, %v112
  %v181 = vpack.c.b16 %v117, %v113
  %v182 = vpack.c.b16 %v118, %v114
  %v183 = vpack.c.b16 %v119, %v115
  %v184 = vpack.c.b16 %v124, %v120
  %v185 = vpack.c.b16 %v125, %v121
  %v186 = vpack.c.b16 %v126, %v122
  %v187 = vpack.c.b16 %v127, %v123
  %v188 = vpack.c.b16 %v132, %v128
  %v189 = vpack.c.b16 %v133, %v129
  %v190 = vpack.c.b16 %v134, %v130
  %v191 = vpack.c.b16 %v135, %v131
  %v192 = vpack.c.b16 %v140, %v136
  %v193 = vpack.c.b16 %v141, %v137
  %v194 = vpack.c.b16 %v142, %v138
  %v195 = vpack.c.b16 %v143, %v139
  %v196 = vpack.c.b16 %v148, %v144
  %v197 = vpack.c.b16 %v149, %v145
  %v198 = vpack.c.b16 %v150, %v146
  %v199 = vpack.c.b16 %v151, %v147
  %v200 = vpack.c.b16 %v156, %v152
  %v201 = vpack.c.b16 %v157, %v153
  %v202 = vpack.c.b16 %v158, %v154
  %v203 = vpack.c.b16 %v159, %v155
  %v204 = vpack.c.b16 %v164, %v160
  %v205 = vpack.c.b16 %v165, %v161
  %v206 = vpack.c.b16 %v166, %v162
  %v207 = vpack.c.b16 %v167, %v163
  %v208 = vpack.c.b16 %v172, %v168
  %v209 = vpack.c.b16 %v173, %v169
  %v210 = vpack.c.b16 %v174, %v170
  %v211 = vpack.c.b16 %v175, %v171
  %vm248 = vcmask 130048
  %v250 = vsel %vm248, %v66, 0
  %252 = vmatpush.bf16.msra.mxu0 %v204
  %253 = vmatpush.bf16.msra.mxu0 %v200
  %254 = vmatpush.bf16.msra.mxu0 %v196
  %255 = vmatpush.bf16.msra.mxu0 %v192
  %256 = vmatpush.bf16.msra.mxu0 %v188
  %257 = vmatpush.bf16.msra.mxu0 %v184
  %258 = vmatpush.bf16.msra.mxu0 %v180
  %259 = vmatpush.bf16.msra.mxu0 %v176
  %260 = vmatmul.bf16.gmra.mxu0 %v65
  %v261 = vpop.f32.mrf.mxu0
  %v262 = vadd.f32 0.0, %v261
  %v263 = vpop.f32.mrf.mxu0
  %v264 = vadd.f32 0.0, %v263
  %265 = vdwg.mxu0
  %266 = vmatpush.bf16.msra.mxu0 0
  %267 = vmatpush.bf16.msra.mxu0 0
  %268 = vmatpush.bf16.msra.mxu0 0
  %269 = vmatpush.bf16.msra.mxu0 0
  %270 = vmatpush.bf16.msra.mxu0 0
  %271 = vmatpush.bf16.msra.mxu0 0
  %272 = vmatpush.bf16.msra.mxu0 0
  %273 = vmatpush.bf16.msra.mxu0 %v208
  %274 = vmatmul.bf16.gmra.mxu0 %v250
  %v275 = vpop.f32.mrf.mxu0
  %v276 = vadd.f32 %v262, %v275
  %v277 = vpop.f32.mrf.mxu0
  %v278 = vadd.f32 %v264, %v277
  %279 = vdwg.mxu0
  %280 = vmatpush.bf16.msra.mxu0 %v205
  %281 = vmatpush.bf16.msra.mxu0 %v201
  %282 = vmatpush.bf16.msra.mxu0 %v197
  %283 = vmatpush.bf16.msra.mxu0 %v193
  %284 = vmatpush.bf16.msra.mxu0 %v189
  %285 = vmatpush.bf16.msra.mxu0 %v185
  %286 = vmatpush.bf16.msra.mxu0 %v181
  %287 = vmatpush.bf16.msra.mxu0 %v177
  %288 = vmatmul.bf16.gmra.mxu0 %v65
  %v289 = vpop.f32.mrf.mxu0
  %v290 = vadd.f32 0.0, %v289
  %v291 = vpop.f32.mrf.mxu0
  %v292 = vadd.f32 0.0, %v291
  %293 = vdwg.mxu0
  %294 = vmatpush.bf16.msra.mxu0 0
  %295 = vmatpush.bf16.msra.mxu0 0
  %296 = vmatpush.bf16.msra.mxu0 0
  %297 = vmatpush.bf16.msra.mxu0 0
  %298 = vmatpush.bf16.msra.mxu0 0
  %299 = vmatpush.bf16.msra.mxu0 0
  %300 = vmatpush.bf16.msra.mxu0 0
  %301 = vmatpush.bf16.msra.mxu0 %v209
  %302 = vmatmul.bf16.gmra.mxu0 %v250
  %v303 = vpop.f32.mrf.mxu0
  %v304 = vadd.f32 %v290, %v303
  %v305 = vpop.f32.mrf.mxu0
  %v306 = vadd.f32 %v292, %v305
  %307 = vdwg.mxu0
  %308 = vmatpush.bf16.msra.mxu0 %v206
  %309 = vmatpush.bf16.msra.mxu0 %v202
  %310 = vmatpush.bf16.msra.mxu0 %v198
  %311 = vmatpush.bf16.msra.mxu0 %v194
  %312 = vmatpush.bf16.msra.mxu0 %v190
  %313 = vmatpush.bf16.msra.mxu0 %v186
  %314 = vmatpush.bf16.msra.mxu0 %v182
  %315 = vmatpush.bf16.msra.mxu0 %v178
  %316 = vmatmul.bf16.gmra.mxu0 %v65
  %v317 = vpop.f32.mrf.mxu0
  %v318 = vadd.f32 0.0, %v317
  %v319 = vpop.f32.mrf.mxu0
  %v320 = vadd.f32 0.0, %v319
  %321 = vdwg.mxu0
  %322 = vmatpush.bf16.msra.mxu0 0
  %323 = vmatpush.bf16.msra.mxu0 0
  %324 = vmatpush.bf16.msra.mxu0 0
  %325 = vmatpush.bf16.msra.mxu0 0
  %326 = vmatpush.bf16.msra.mxu0 0
  %327 = vmatpush.bf16.msra.mxu0 0
  %328 = vmatpush.bf16.msra.mxu0 0
  %329 = vmatpush.bf16.msra.mxu0 %v210
  %330 = vmatmul.bf16.gmra.mxu0 %v250
  %v331 = vpop.f32.mrf.mxu0
  %v332 = vadd.f32 %v318, %v331
  %v333 = vpop.f32.mrf.mxu0
  %v334 = vadd.f32 %v320, %v333
  %335 = vdwg.mxu0
  %336 = vmatpush.bf16.msra.mxu0 %v207
  %337 = vmatpush.bf16.msra.mxu0 %v203
  %338 = vmatpush.bf16.msra.mxu0 %v199
  %339 = vmatpush.bf16.msra.mxu0 %v195
  %340 = vmatpush.bf16.msra.mxu0 %v191
  %341 = vmatpush.bf16.msra.mxu0 %v187
  %342 = vmatpush.bf16.msra.mxu0 %v183
  %343 = vmatpush.bf16.msra.mxu0 %v179
  %344 = vmatmul.bf16.gmra.mxu0 %v65
  %v345 = vpop.f32.mrf.mxu0
  %v346 = vadd.f32 0.0, %v345
  %v347 = vpop.f32.mrf.mxu0
  %v348 = vadd.f32 0.0, %v347
  %349 = vdwg.mxu0
  %350 = vmatpush.bf16.msra.mxu0 0
  %351 = vmatpush.bf16.msra.mxu0 0
  %352 = vmatpush.bf16.msra.mxu0 0
  %353 = vmatpush.bf16.msra.mxu0 0
  %354 = vmatpush.bf16.msra.mxu0 0
  %355 = vmatpush.bf16.msra.mxu0 0
  %356 = vmatpush.bf16.msra.mxu0 0
  %357 = vmatpush.bf16.msra.mxu0 %v211
  %358 = vmatmul.bf16.gmra.mxu0 %v250
  %v359 = vpop.f32.mrf.mxu0
  %v360 = vadd.f32 %v346, %v359
  %v361 = vpop.f32.mrf.mxu0
  %v362 = vadd.f32 %v348, %v361
  %363 = vdwg.mxu0
  %v364 = vld [vmem:[%s1] sm:$0xff]
  %v365 = vld [vmem:[%s1 + $0x8] sm:$0xff]
  %367 = vset.pattern.permute.xlu0 0
  %368 = vperm.xlu0 %367, %v364
  %v369 = vpop.permute.xlu0 %368
  %372 = vset.pattern.permute.xlu0 0
  %373 = vperm.xlu0 %372, %v365
  %v374 = vpop.permute.xlu0 %373
  %v376 = vmul.f32 %v276, %v369
  %v377 = vmul.f32 %v304, %v369
  %v378 = vmul.f32 %v332, %v369
  %v379 = vmul.f32 %v360, %v369
  %v380 = vmul.f32 %v278, %v374
  %v381 = vmul.f32 %v306, %v374
  %v382 = vmul.f32 %v334, %v374
  %v383 = vmul.f32 %v362, %v374
  %v384 = vld [vmem:[%s2] sm:$0xff]
  %v385 = vld [vmem:[%s2 + $0x8] sm:$0xff]
  %387 = vset.pattern.permute.xlu0 0
  %388 = vperm.xlu0 %387, %v384
  %v389 = vpop.permute.xlu0 %388
  %392 = vset.pattern.permute.xlu0 0
  %393 = vperm.xlu0 %392, %v385
  %v394 = vpop.permute.xlu0 %393
  %v396 = vadd.f32 %v376, %v389
  %v397 = vadd.f32 %v377, %v389
  %v398 = vadd.f32 %v378, %v389
  %v399 = vadd.f32 %v379, %v389
  %v400 = vadd.f32 %v380, %v394
  %v401 = vadd.f32 %v381, %v394
  %v402 = vadd.f32 %v382, %v394
  %v403 = vadd.f32 %v383, %v394
  %v404 = vld [vmem:[%s4] sm:$0xff]
  %v405 = vld [vmem:[%s4 + $0x8] sm:$0xff]
  %v406 = vld [vmem:[%s4 + $0x10] sm:$0xff]
  %v407 = vld [vmem:[%s4 + $0x18] sm:$0xff]
  %v408 = vld [vmem:[%s4 + $0x20] sm:$0xff]
  %v409 = vld [vmem:[%s4 + $0x28] sm:$0xff]
  %v410 = vld [vmem:[%s4 + $0x30] sm:$0xff]
  %v411 = vld [vmem:[%s4 + $0x38] sm:$0xff]
  %v412 = vadd.f32 %v396, %v404
  %v413 = vadd.f32 %v397, %v405
  %v414 = vadd.f32 %v398, %v406
  %v415 = vadd.f32 %v399, %v407
  %v416 = vadd.f32 %v400, %v408
  %v417 = vadd.f32 %v401, %v409
  %v418 = vadd.f32 %v402, %v410
  %v419 = vadd.f32 %v403, %v411
  %v420 = vmax.f32 %v412, 0.0
  %v421 = vmax.f32 %v413, 0.0
  %v422 = vmax.f32 %v414, 0.0
  %v423 = vmax.f32 %v415, 0.0
  %v424 = vmax.f32 %v416, 0.0
  %v425 = vmax.f32 %v417, 0.0
  %v426 = vmax.f32 %v418, 0.0
  %v427 = vmax.f32 %v419, 0.0
  %428 = vst [vmem:[%s5] sm:$0xff] %v420
  %429 = vst [vmem:[%s5 + $0x8] sm:$0xff] %v421
  %430 = vst [vmem:[%s5 + $0x10] sm:$0xff] %v422
  %431 = vst [vmem:[%s5 + $0x18] sm:$0xff] %v423
  %432 = vst [vmem:[%s5 + $0x20] sm:$0xff] %v424
  %433 = vst [vmem:[%s5 + $0x28] sm:$0xff] %v425
  %434 = vst [vmem:[%s5 + $0x30] sm:$0xff] %v426
  %435 = vst [vmem:[%s5 + $0x38] sm:$0xff] %v427
  // Predicated region
  $region22: #{resnet18_forward.28} parent=0 // pred_check
    _
  $region23: #{resnet18_forward.28} parent=0 // pred_check_branch
    %437 = sbr.rel (0) target = $region25
  $region24: #{resnet18_forward.28} parent=0 // pred_region
    _
  $region25: #{resnet18_forward.28} parent=0 // pred_fallthru
    _
  // Predicated region
  $region26: #{resnet18_forward.28} parent=0 // pred_check
    _
  $region27: #{resnet18_forward.28} parent=0 // pred_check_branch
    %439 = sbr.rel (0) target = $region29
  $region28: #{resnet18_forward.28} parent=0 // pred_region
    _
  $region29: #{resnet18_forward.28} parent=0 // pred_fallthru
    _

// kernel: resnet18_forward.31
$region0: #{resnet18_forward.31}
  #allocation0 [shape = 'u32[]', space=smem, size = 0x4, offset = 0x4, fixed_abs, tag = 'smem constant byte address 0x4 - core index']
  #allocation1 [shape = 'u32[72,128]{1,0:T(1,128)}', space=vmem, size = 0x9000, scoped, tag = 'internal scratch']
  %s0 = inlined_call_operand.vmem [shape: bf16[32,144], index: 0, kind: input, shape index: {}]
  %s1 = inlined_call_operand.vmem [shape: f32[32,1], index: 1, kind: input, shape index: {}]
  %s2 = inlined_call_operand.vmem [shape: f32[32,1], index: 2, kind: input, shape index: {}]
  %s3 = inlined_call_operand.vmem [shape: bf16[144,128], index: 3, kind: input, shape index: {}]
  %s4 = inlined_call_operand.vmem [shape: f32[32,128], index: 4, kind: output, shape index: {}]
  %s5 = sld [smem:[#allocation0]]
  $region26: #{resnet18_forward.31} parent=0
    _
  %s7 = ssub.s32 1, %s5
  %s8 = scalar_select 0, %s7, %s5
  // Predicated region
  $region2: #{resnet18_forward.31} parent=0 // pred_check
    _
  $region3: #{resnet18_forward.31} parent=0 // pred_check_branch
    %10 = sbr.rel (0) target = $region5
  $region4: #{resnet18_forward.31} parent=0 // pred_region
    _
  $region5: #{resnet18_forward.31} parent=0 // pred_fallthru
    _
  // Predicated region
  $region6: #{resnet18_forward.31} parent=0 // pred_check
    _
  $region7: #{resnet18_forward.31} parent=0 // pred_check_branch
    %12 = sbr.rel (0) target = $region9
  $region8: #{resnet18_forward.31} parent=0 // pred_region
    _
  $region9: #{resnet18_forward.31} parent=0 // pred_fallthru
    _
  // Predicated region
  $region10: #{resnet18_forward.31} parent=0 // pred_check
    _
  $region11: #{resnet18_forward.31} parent=0 // pred_check_branch
    %14 = sbr.rel (0) target = $region13
  $region12: #{resnet18_forward.31} parent=0 // pred_region
    _
  $region13: #{resnet18_forward.31} parent=0 // pred_fallthru
    _
  // Predicated region
  $region14: #{resnet18_forward.31} parent=0 // pred_check
    _
  $region15: #{resnet18_forward.31} parent=0 // pred_check_branch
    %16 = sbr.rel (0) target = $region17
  $region16: #{resnet18_forward.31} parent=0 // pred_region
    _
  $region17: #{resnet18_forward.31} parent=0 // pred_fallthru
    _
  %v18 = vld [vmem:[%s0] sm:$0xff]
  %v19 = vld [vmem:[%s0 + $0x8] sm:$0xff]
  %v20 = vld [vmem:[%s0 + $0x10] sm:$0xff]
  %v21 = vld [vmem:[%s0 + $0x18] sm:$0xff]
  %v22 = vld [vmem:[%s3] sm:$0xf]
  %v23 = vld [vmem:[%s3 + $0x4] sm:$0xf]
  %v24 = vld [vmem:[%s3 + $0x8] sm:$0xf]
  %v25 = vld [vmem:[%s3 + $0xc] sm:$0xf]
  %v26 = vld [vmem:[%s3 + $0x10] sm:$0xf]
  %v27 = vld [vmem:[%s3 + $0x14] sm:$0xf]
  %v28 = vld [vmem:[%s3 + $0x18] sm:$0xf]
  %v29 = vld [vmem:[%s3 + $0x1c] sm:$0xf]
  %v30 = vld [vmem:[%s3 + $0x20] sm:$0xf]
  %v31 = vld [vmem:[%s3 + $0x24] sm:$0xf]
  %v32 = vld [vmem:[%s3 + $0x28] sm:$0xf]
  %v33 = vld [vmem:[%s3 + $0x2c] sm:$0xf]
  %v34 = vld [vmem:[%s3 + $0x30] sm:$0xf]
  %v35 = vld [vmem:[%s3 + $0x34] sm:$0xf]
  %v36 = vld [vmem:[%s3 + $0x38] sm:$0xf]
  %v37 = vld [vmem:[%s3 + $0x3c] sm:$0xf]
  %v38 = vld [vmem:[%s3 + $0x40] sm:$0xf]
  %v39 = vld [vmem:[%s3 + $0x44] sm:$0xf]
  %v44 = vunpack.c.l.b16 %v18
  %v45 = vunpack.c.h.b16 %v18
  %v46 = vunpack.c.l.b16 %v19
  %v47 = vunpack.c.h.b16 %v19
  %v48 = vunpack.c.l.b16 %v20
  %v49 = vunpack.c.h.b16 %v20
  %v50 = vunpack.c.l.b16 %v21
  %v51 = vunpack.c.h.b16 %v21
  %v52 = vpack.c.b16 %v46, %v44
  %v53 = vpack.c.b16 %v47, %v45
  %v54 = vpack.c.b16 %v50, %v48
  %v55 = vpack.c.b16 %v51, %v49
  %v76 = vunpack.c.l.b16 %v22
  %v77 = vunpack.c.l.b16 %v23
  %v78 = vunpack.c.l.b16 %v24
  %v79 = vunpack.c.l.b16 %v25
  %v80 = vunpack.c.l.b16 %v26
  %v81 = vunpack.c.l.b16 %v27
  %v82 = vunpack.c.l.b16 %v28
  %v83 = vunpack.c.l.b16 %v29
  %v84 = vunpack.c.l.b16 %v30
  %v85 = vunpack.c.l.b16 %v31
  %v86 = vunpack.c.l.b16 %v32
  %v87 = vunpack.c.l.b16 %v33
  %v88 = vunpack.c.l.b16 %v34
  %v89 = vunpack.c.l.b16 %v35
  %v90 = vunpack.c.l.b16 %v36
  %v91 = vunpack.c.l.b16 %v37
  %v92 = vunpack.c.l.b16 %v38
  %v93 = vunpack.c.l.b16 %v39
  %v94 = vpack.c.b16 %v77, %v76
  %v95 = vpack.c.b16 %v79, %v78
  %v96 = vpack.c.b16 %v81, %v80
  %v97 = vpack.c.b16 %v83, %v82
  %v98 = vpack.c.b16 %v85, %v84
  %v99 = vpack.c.b16 %v87, %v86
  %v100 = vpack.c.b16 %v89, %v88
  %v101 = vpack.c.b16 %v91, %v90
  %v102 = vpack.c.b16 %v93, %v92
  %vm112 = vcmask 130048
  %v114 = vsel %vm112, %v53, 0
  %v117 = vsel %vm112, %v55, 0
  %119 = vmatpush.bf16.msra.mxu0 %v101
  %120 = vmatpush.bf16.msra.mxu0 %v100
  %121 = vmatpush.bf16.msra.mxu0 %v99
  %122 = vmatpush.bf16.msra.mxu0 %v98
  %123 = vmatpush.bf16.msra.mxu0 %v97
  %124 = vmatpush.bf16.msra.mxu0 %v96
  %125 = vmatpush.bf16.msra.mxu0 %v95
  %126 = vmatpush.bf16.msra.mxu0 %v94
  %127 = vmatmul.bf16.gmra.mxu0 %v52
  %v128 = vpop.f32.mrf.mxu0
  %v129 = vadd.f32 0.0, %v128
  %v130 = vpop.f32.mrf.mxu0
  %v131 = vadd.f32 0.0, %v130
  %132 = vmatmul.bf16.gmra.mxu0 %v54
  %v133 = vpop.f32.mrf.mxu0
  %v134 = vadd.f32 0.0, %v133
  %v135 = vpop.f32.mrf.mxu0
  %v136 = vadd.f32 0.0, %v135
  %137 = vdwg.mxu0
  %138 = vmatpush.bf16.msra.mxu0 0
  %139 = vmatpush.bf16.msra.mxu0 0
  %140 = vmatpush.bf16.msra.mxu0 0
  %141 = vmatpush.bf16.msra.mxu0 0
  %142 = vmatpush.bf16.msra.mxu0 0
  %143 = vmatpush.bf16.msra.mxu0 0
  %144 = vmatpush.bf16.msra.mxu0 0
  %145 = vmatpush.bf16.msra.mxu0 %v102
  %146 = vmatmul.bf16.gmra.mxu0 %v114
  %v147 = vpop.f32.mrf.mxu0
  %v148 = vadd.f32 %v129, %v147
  %v149 = vpop.f32.mrf.mxu0
  %v150 = vadd.f32 %v131, %v149
  %151 = vmatmul.bf16.gmra.mxu0 %v117
  %v152 = vpop.f32.mrf.mxu0
  %v153 = vadd.f32 %v134, %v152
  %v154 = vpop.f32.mrf.mxu0
  %v155 = vadd.f32 %v136, %v154
  %156 = vdwg.mxu0
  %v157 = vld [vmem:[%s1] sm:$0xff]
  %v158 = vld [vmem:[%s1 + $0x8] sm:$0xff]
  %v159 = vld [vmem:[%s1 + $0x10] sm:$0xff]
  %v160 = vld [vmem:[%s1 + $0x18] sm:$0xff]
  %162 = vset.pattern.permute.xlu0 0
  %163 = vperm.xlu0 %162, %v157
  %v164 = vpop.permute.xlu0 %163
  %167 = vset.pattern.permute.xlu0 0
  %168 = vperm.xlu0 %167, %v158
  %v169 = vpop.permute.xlu0 %168
  %172 = vset.pattern.permute.xlu0 0
  %173 = vperm.xlu0 %172, %v159
  %v174 = vpop.permute.xlu0 %173
  %177 = vset.pattern.permute.xlu0 0
  %178 = vperm.xlu0 %177, %v160
  %v179 = vpop.permute.xlu0 %178
  %v181 = vmul.f32 %v148, %v164
  %v182 = vmul.f32 %v150, %v169
  %v183 = vmul.f32 %v153, %v174
  %v184 = vmul.f32 %v155, %v179
  %v185 = vld [vmem:[%s2] sm:$0xff]
  %v186 = vld [vmem:[%s2 + $0x8] sm:$0xff]
  %v187 = vld [vmem:[%s2 + $0x10] sm:$0xff]
  %v188 = vld [vmem:[%s2 + $0x18] sm:$0xff]
  %190 = vset.pattern.permute.xlu0 0
  %191 = vperm.xlu0 %190, %v185
  %v192 = vpop.permute.xlu0 %191
  %195 = vset.pattern.permute.xlu0 0
  %196 = vperm.xlu0 %195, %v186
  %v197 = vpop.permute.xlu0 %196
  %200 = vset.pattern.permute.xlu0 0
  %201 = vperm.xlu0 %200, %v187
  %v202 = vpop.permute.xlu0 %201
  %205 = vset.pattern.permute.xlu0 0
  %206 = vperm.xlu0 %205, %v188
  %v207 = vpop.permute.xlu0 %206
  %v209 = vadd.f32 %v181, %v192
  %v210 = vadd.f32 %v182, %v197
  %v211 = vadd.f32 %v183, %v202
  %v212 = vadd.f32 %v184, %v207
  %v213 = vmax.f32 %v209, 0.0
  %v214 = vmax.f32 %v210, 0.0
  %v215 = vmax.f32 %v211, 0.0
  %v216 = vmax.f32 %v212, 0.0
  %217 = vst [vmem:[%s4] sm:$0xff] %v213
  %218 = vst [vmem:[%s4 + $0x8] sm:$0xff] %v214
  %219 = vst [vmem:[%s4 + $0x10] sm:$0xff] %v215
  %220 = vst [vmem:[%s4 + $0x18] sm:$0xff] %v216
  // Predicated region
  $region18: #{resnet18_forward.31} parent=0 // pred_check
    _
  $region19: #{resnet18_forward.31} parent=0 // pred_check_branch
    %222 = sbr.rel (0) target = $region21
  $region20: #{resnet18_forward.31} parent=0 // pred_region
    _
  $region21: #{resnet18_forward.31} parent=0 // pred_fallthru
    _
  // Predicated region
  $region22: #{resnet18_forward.31} parent=0 // pred_check
    _
  $region23: #{resnet18_forward.31} parent=0 // pred_check_branch
    %224 = sbr.rel (0) target = $region25
  $region24: #{resnet18_forward.31} parent=0 // pred_region
    _
  $region25: #{resnet18_forward.31} parent=0 // pred_fallthru
    _

// kernel: resnet18_forward.32
$region0: #{resnet18_forward.32}
  #allocation0 [shape = 'u32[]', space=smem, size = 0x4, offset = 0x4, fixed_abs, tag = 'smem constant byte address 0x4 - core index']
  #allocation1 [shape = 'u32[72,128]{1,0:T(1,128)}', space=vmem, size = 0x9000, scoped, tag = 'internal scratch']
  %s0 = inlined_call_operand.vmem [shape: bf16[32,16], index: 0, kind: input, shape index: {}]
  %s1 = inlined_call_operand.vmem [shape: f32[32,1], index: 1, kind: input, shape index: {}]
  %s2 = inlined_call_operand.vmem [shape: f32[32,1], index: 2, kind: input, shape index: {}]
  %s3 = inlined_call_operand.vmem [shape: bf16[16,128], index: 3, kind: input, shape index: {}]
  %s4 = inlined_call_operand.vmem [shape: f32[32,128], index: 4, kind: output, shape index: {}]
  %s5 = sld [smem:[#allocation0]]
  $region26: #{resnet18_forward.32} parent=0
    _
  %s7 = ssub.s32 1, %s5
  %s8 = scalar_select 0, %s7, %s5
  // Predicated region
  $region2: #{resnet18_forward.32} parent=0 // pred_check
    _
  $region3: #{resnet18_forward.32} parent=0 // pred_check_branch
    %10 = sbr.rel (0) target = $region5
  $region4: #{resnet18_forward.32} parent=0 // pred_region
    _
  $region5: #{resnet18_forward.32} parent=0 // pred_fallthru
    _
  // Predicated region
  $region6: #{resnet18_forward.32} parent=0 // pred_check
    _
  $region7: #{resnet18_forward.32} parent=0 // pred_check_branch
    %12 = sbr.rel (0) target = $region9
  $region8: #{resnet18_forward.32} parent=0 // pred_region
    _
  $region9: #{resnet18_forward.32} parent=0 // pred_fallthru
    _
  // Predicated region
  $region10: #{resnet18_forward.32} parent=0 // pred_check
    _
  $region11: #{resnet18_forward.32} parent=0 // pred_check_branch
    %14 = sbr.rel (0) target = $region13
  $region12: #{resnet18_forward.32} parent=0 // pred_region
    _
  $region13: #{resnet18_forward.32} parent=0 // pred_fallthru
    _
  // Predicated region
  $region14: #{resnet18_forward.32} parent=0 // pred_check
    _
  $region15: #{resnet18_forward.32} parent=0 // pred_check_branch
    %16 = sbr.rel (0) target = $region17
  $region16: #{resnet18_forward.32} parent=0 // pred_region
    _
  $region17: #{resnet18_forward.32} parent=0 // pred_fallthru
    _
  %v18 = vld [vmem:[%s0] sm:$0xf]
  %v19 = vld [vmem:[%s0 + $0x4] sm:$0xf]
  %v20 = vld [vmem:[%s0 + $0x8] sm:$0xf]
  %v21 = vld [vmem:[%s0 + $0xc] sm:$0xf]
  %v22 = vld [vmem:[%s3] sm:$0xf]
  %v23 = vld [vmem:[%s3 + $0x4] sm:$0xf]
  %v28 = vunpack.c.l.b16 %v18
  %v29 = vunpack.c.l.b16 %v19
  %v30 = vunpack.c.l.b16 %v20
  %v31 = vunpack.c.l.b16 %v21
  %v32 = vpack.c.b16 %v29, %v28
  %v33 = vpack.c.b16 %v31, %v30
  %v36 = vunpack.c.l.b16 %v22
  %v37 = vunpack.c.l.b16 %v23
  %v38 = vpack.c.b16 %v37, %v36
  %vm40 = vcmask 130048
  %v42 = vsel %vm40, %v32, 0
  %v45 = vsel %vm40, %v33, 0
  %47 = vmatpush.bf16.msra.mxu0 0
  %48 = vmatpush.bf16.msra.mxu0 0
  %49 = vmatpush.bf16.msra.mxu0 0
  %50 = vmatpush.bf16.msra.mxu0 0
  %51 = vmatpush.bf16.msra.mxu0 0
  %52 = vmatpush.bf16.msra.mxu0 0
  %53 = vmatpush.bf16.msra.mxu0 0
  %54 = vmatpush.bf16.msra.mxu0 %v38
  %55 = vmatmul.bf16.gmra.mxu0 %v42
  %v56 = vpop.f32.mrf.mxu0
  %v57 = vadd.f32 0.0, %v56
  %v58 = vpop.f32.mrf.mxu0
  %v59 = vadd.f32 0.0, %v58
  %60 = vmatmul.bf16.gmra.mxu0 %v45
  %v61 = vpop.f32.mrf.mxu0
  %v62 = vadd.f32 0.0, %v61
  %v63 = vpop.f32.mrf.mxu0
  %v64 = vadd.f32 0.0, %v63
  %65 = vdwg.mxu0
  %v66 = vld [vmem:[%s1] sm:$0xff]
  %v67 = vld [vmem:[%s1 + $0x8] sm:$0xff]
  %v68 = vld [vmem:[%s1 + $0x10] sm:$0xff]
  %v69 = vld [vmem:[%s1 + $0x18] sm:$0xff]
  %71 = vset.pattern.permute.xlu0 0
  %72 = vperm.xlu0 %71, %v66
  %v73 = vpop.permute.xlu0 %72
  %76 = vset.pattern.permute.xlu0 0
  %77 = vperm.xlu0 %76, %v67
  %v78 = vpop.permute.xlu0 %77
  %81 = vset.pattern.permute.xlu0 0
  %82 = vperm.xlu0 %81, %v68
  %v83 = vpop.permute.xlu0 %82
  %86 = vset.pattern.permute.xlu0 0
  %87 = vperm.xlu0 %86, %v69
  %v88 = vpop.permute.xlu0 %87
  %v90 = vmul.f32 %v57, %v73
  %v91 = vmul.f32 %v59, %v78
  %v92 = vmul.f32 %v62, %v83
  %v93 = vmul.f32 %v64, %v88
  %v94 = vld [vmem:[%s2] sm:$0xff]
  %v95 = vld [vmem:[%s2 + $0x8] sm:$0xff]
  %v96 = vld [vmem:[%s2 + $0x10] sm:$0xff]
  %v97 = vld [vmem:[%s2 + $0x18] sm:$0xff]
  %99 = vset.pattern.permute.xlu0 0
  %100 = vperm.xlu0 %99, %v94
  %v101 = vpop.permute.xlu0 %100
  %104 = vset.pattern.permute.xlu0 0
  %105 = vperm.xlu0 %104, %v95
  %v106 = vpop.permute.xlu0 %105
  %109 = vset.pattern.permute.xlu0 0
  %110 = vperm.xlu0 %109, %v96
  %v111 = vpop.permute.xlu0 %110
  %114 = vset.pattern.permute.xlu0 0
  %115 = vperm.xlu0 %114, %v97
  %v116 = vpop.permute.xlu0 %115
  %v118 = vadd.f32 %v90, %v101
  %v119 = vadd.f32 %v91, %v106
  %v120 = vadd.f32 %v92, %v111
  %v121 = vadd.f32 %v93, %v116
  %122 = vst [vmem:[%s4] sm:$0xff] %v118
  %123 = vst [vmem:[%s4 + $0x8] sm:$0xff] %v119
  %124 = vst [vmem:[%s4 + $0x10] sm:$0xff] %v120
  %125 = vst [vmem:[%s4 + $0x18] sm:$0xff] %v121
  // Predicated region
  $region18: #{resnet18_forward.32} parent=0 // pred_check
    _
  $region19: #{resnet18_forward.32} parent=0 // pred_check_branch
    %127 = sbr.rel (0) target = $region21
  $region20: #{resnet18_forward.32} parent=0 // pred_region
    _
  $region21: #{resnet18_forward.32} parent=0 // pred_fallthru
    _
  // Predicated region
  $region22: #{resnet18_forward.32} parent=0 // pred_check
    _
  $region23: #{resnet18_forward.32} parent=0 // pred_check_branch
    %129 = sbr.rel (0) target = $region25
  $region24: #{resnet18_forward.32} parent=0 // pred_region
    _
  $region25: #{resnet18_forward.32} parent=0 // pred_fallthru
    _

// kernel: resnet18_forward.34
$region0: #{resnet18_forward.34}
  #allocation0 [shape = 'u32[]', space=smem, size = 0x4, offset = 0x4, fixed_abs, tag = 'smem constant byte address 0x4 - core index']
  #allocation1 [shape = 'u32[72,128]{1,0:T(1,128)}', space=vmem, size = 0x9000, scoped, tag = 'internal scratch']
  %s0 = inlined_call_operand.vmem [shape: bf16[32,288], index: 0, kind: input, shape index: {}]
  %s1 = inlined_call_operand.vmem [shape: f32[32,1], index: 1, kind: input, shape index: {}]
  %s2 = inlined_call_operand.vmem [shape: f32[32,1], index: 2, kind: input, shape index: {}]
  %s3 = inlined_call_operand.vmem [shape: bf16[288,128], index: 3, kind: input, shape index: {}]
  %s4 = inlined_call_operand.vmem [shape: f32[32,128], index: 4, kind: output, shape index: {}]
  %s5 = sld [smem:[#allocation0]]
  $region26: #{resnet18_forward.34} parent=0
    _
  %s7 = ssub.s32 1, %s5
  %s8 = scalar_select 0, %s7, %s5
  // Predicated region
  $region2: #{resnet18_forward.34} parent=0 // pred_check
    _
  $region3: #{resnet18_forward.34} parent=0 // pred_check_branch
    %10 = sbr.rel (0) target = $region5
  $region4: #{resnet18_forward.34} parent=0 // pred_region
    _
  $region5: #{resnet18_forward.34} parent=0 // pred_fallthru
    _
  // Predicated region
  $region6: #{resnet18_forward.34} parent=0 // pred_check
    _
  $region7: #{resnet18_forward.34} parent=0 // pred_check_branch
    %12 = sbr.rel (0) target = $region9
  $region8: #{resnet18_forward.34} parent=0 // pred_region
    _
  $region9: #{resnet18_forward.34} parent=0 // pred_fallthru
    _
  // Predicated region
  $region10: #{resnet18_forward.34} parent=0 // pred_check
    _
  $region11: #{resnet18_forward.34} parent=0 // pred_check_branch
    %14 = sbr.rel (0) target = $region13
  $region12: #{resnet18_forward.34} parent=0 // pred_region
    _
  $region13: #{resnet18_forward.34} parent=0 // pred_fallthru
    _
  // Predicated region
  $region14: #{resnet18_forward.34} parent=0 // pred_check
    _
  $region15: #{resnet18_forward.34} parent=0 // pred_check_branch
    %16 = sbr.rel (0) target = $region17
  $region16: #{resnet18_forward.34} parent=0 // pred_region
    _
  $region17: #{resnet18_forward.34} parent=0 // pred_fallthru
    _
  %v18 = vld [vmem:[%s0] sm:$0xff]
  %v19 = vld [vmem:[%s0 + $0x8] sm:$0xf]
  %v20 = vld [vmem:[%s0 + $0xc] sm:$0xff]
  %v21 = vld [vmem:[%s0 + $0x14] sm:$0xf]
  %v22 = vld [vmem:[%s0 + $0x18] sm:$0xff]
  %v23 = vld [vmem:[%s0 + $0x20] sm:$0xf]
  %v24 = vld [vmem:[%s0 + $0x24] sm:$0xff]
  %v25 = vld [vmem:[%s0 + $0x2c] sm:$0xf]
  %v26 = vld [vmem:[%s3] sm:$0xf]
  %v27 = vld [vmem:[%s3 + $0x4] sm:$0xf]
  %v28 = vld [vmem:[%s3 + $0x8] sm:$0xf]
  %v29 = vld [vmem:[%s3 + $0xc] sm:$0xf]
  %v30 = vld [vmem:[%s3 + $0x10] sm:$0xf]
  %v31 = vld [vmem:[%s3 + $0x14] sm:$0xf]
  %v32 = vld [vmem:[%s3 + $0x18] sm:$0xf]
  %v33 = vld [vmem:[%s3 + $0x1c] sm:$0xf]
  %v34 = vld [vmem:[%s3 + $0x20] sm:$0xf]
  %v35 = vld [vmem:[%s3 + $0x24] sm:$0xf]
  %v36 = vld [vmem:[%s3 + $0x28] sm:$0xf]
  %v37 = vld [vmem:[%s3 + $0x2c] sm:$0xf]
  %v38 = vld [vmem:[%s3 + $0x30] sm:$0xf]
  %v39 = vld [vmem:[%s3 + $0x34] sm:$0xf]
  %v40 = vld [vmem:[%s3 + $0x38] sm:$0xf]
  %v41 = vld [vmem:[%s3 + $0x3c] sm:$0xf]
  %v42 = vld [vmem:[%s3 + $0x40] sm:$0xf]
  %v43 = vld [vmem:[%s3 + $0x44] sm:$0xf]
  %v44 = vld [vmem:[%s3 + $0x48] sm:$0xf]
  %v45 = vld [vmem:[%s3 + $0x4c] sm:$0xf]
  %v46 = vld [vmem:[%s3 + $0x50] sm:$0xf]
  %v47 = vld [vmem:[%s3 + $0x54] sm:$0xf]
  %v48 = vld [vmem:[%s3 + $0x58] sm:$0xf]
  %v49 = vld [vmem:[%s3 + $0x5c] sm:$0xf]
  %v50 = vld [vmem:[%s3 + $0x60] sm:$0xf]
  %v51 = vld [vmem:[%s3 + $0x64] sm:$0xf]
  %v52 = vld [vmem:[%s3 + $0x68] sm:$0xf]
  %v53 = vld [vmem:[%s3 + $0x6c] sm:$0xf]
  %v54 = vld [vmem:[%s3 + $0x70] sm:$0xf]
  %v55 = vld [vmem:[%s3 + $0x74] sm:$0xf]
  %v56 = vld [vmem:[%s3 + $0x78] sm:$0xf]
  %v57 = vld [vmem:[%s3 + $0x7c] sm:$0xf]
  %v58 = vld [vmem:[%s3 + $0x80] sm:$0xf]
  %v59 = vld [vmem:[%s3 + $0x84] sm:$0xf]
  %v60 = vld [vmem:[%s3 + $0x88] sm:$0xf]
  %v61 = vld [vmem:[%s3 + $0x8c] sm:$0xf]
  %v70 = vunpack.c.l.b16 %v18
  %v71 = vunpack.c.h.b16 %v18
  %v72 = vunpack.c.l.b16 %v19
  %v73 = vunpack.c.l.b16 %v20
  %v74 = vunpack.c.h.b16 %v20
  %v75 = vunpack.c.l.b16 %v21
  %v76 = vunpack.c.l.b16 %v22
  %v77 = vunpack.c.h.b16 %v22
  %v78 = vunpack.c.l.b16 %v23
  %v79 = vunpack.c.l.b16 %v24
  %v80 = vunpack.c.h.b16 %v24
  %v81 = vunpack.c.l.b16 %v25
  %v82 = vpack.c.b16 %v73, %v70
  %v83 = vpack.c.b16 %v74, %v71
  %v84 = vpack.c.b16 %v75, %v72
  %v85 = vpack.c.b16 %v79, %v76
  %v86 = vpack.c.b16 %v80, %v77
  %v87 = vpack.c.b16 %v81, %v78
  %v128 = vunpack.c.l.b16 %v26
  %v129 = vunpack.c.l.b16 %v27
  %v130 = vunpack.c.l.b16 %v28
  %v131 = vunpack.c.l.b16 %v29
  %v132 = vunpack.c.l.b16 %v30
  %v133 = vunpack.c.l.b16 %v31
  %v134 = vunpack.c.l.b16 %v32
  %v135 = vunpack.c.l.b16 %v33
  %v136 = vunpack.c.l.b16 %v34
  %v137 = vunpack.c.l.b16 %v35
  %v138 = vunpack.c.l.b16 %v36
  %v139 = vunpack.c.l.b16 %v37
  %v140 = vunpack.c.l.b16 %v38
  %v141 = vunpack.c.l.b16 %v39
  %v142 = vunpack.c.l.b16 %v40
  %v143 = vunpack.c.l.b16 %v41
  %v144 = vunpack.c.l.b16 %v42
  %v145 = vunpack.c.l.b16 %v43
  %v146 = vunpack.c.l.b16 %v44
  %v147 = vunpack.c.l.b16 %v45
  %v148 = vunpack.c.l.b16 %v46
  %v149 = vunpack.c.l.b16 %v47
  %v150 = vunpack.c.l.b16 %v48
  %v151 = vunpack.c.l.b16 %v49
  %v152 = vunpack.c.l.b16 %v50
  %v153 = vunpack.c.l.b16 %v51
  %v154 = vunpack.c.l.b16 %v52
  %v155 = vunpack.c.l.b16 %v53
  %v156 = vunpack.c.l.b16 %v54
  %v157 = vunpack.c.l.b16 %v55
  %v158 = vunpack.c.l.b16 %v56
  %v159 = vunpack.c.l.b16 %v57
  %v160 = vunpack.c.l.b16 %v58
  %v161 = vunpack.c.l.b16 %v59
  %v162 = vunpack.c.l.b16 %v60
  %v163 = vunpack.c.l.b16 %v61
  %v164 = vpack.c.b16 %v129, %v128
  %v165 = vpack.c.b16 %v131, %v130
  %v166 = vpack.c.b16 %v133, %v132
  %v167 = vpack.c.b16 %v135, %v134
  %v168 = vpack.c.b16 %v137, %v136
  %v169 = vpack.c.b16 %v139, %v138
  %v170 = vpack.c.b16 %v141, %v140
  %v171 = vpack.c.b16 %v143, %v142
  %v172 = vpack.c.b16 %v145, %v144
  %v173 = vpack.c.b16 %v147, %v146
  %v174 = vpack.c.b16 %v149, %v148
  %v175 = vpack.c.b16 %v151, %v150
  %v176 = vpack.c.b16 %v153, %v152
  %v177 = vpack.c.b16 %v155, %v154
  %v178 = vpack.c.b16 %v157, %v156
  %v179 = vpack.c.b16 %v159, %v158
  %v180 = vpack.c.b16 %v161, %v160
  %v181 = vpack.c.b16 %v163, %v162
  %vm200 = vcmask 261120
  %v202 = vsel %vm200, %v84, 0
  %v205 = vsel %vm200, %v87, 0
  %207 = vmatpush.bf16.msra.mxu0 %v171
  %208 = vmatpush.bf16.msra.mxu0 %v170
  %209 = vmatpush.bf16.msra.mxu0 %v169
  %210 = vmatpush.bf16.msra.mxu0 %v168
  %211 = vmatpush.bf16.msra.mxu0 %v167
  %212 = vmatpush.bf16.msra.mxu0 %v166
  %213 = vmatpush.bf16.msra.mxu0 %v165
  %214 = vmatpush.bf16.msra.mxu0 %v164
  %215 = vmatmul.bf16.gmra.mxu0 %v82
  %v216 = vpop.f32.mrf.mxu0
  %v217 = vadd.f32 0.0, %v216
  %v218 = vpop.f32.mrf.mxu0
  %v219 = vadd.f32 0.0, %v218
  %220 = vmatmul.bf16.gmra.mxu0 %v85
  %v221 = vpop.f32.mrf.mxu0
  %v222 = vadd.f32 0.0, %v221
  %v223 = vpop.f32.mrf.mxu0
  %v224 = vadd.f32 0.0, %v223
  %225 = vdwg.mxu0
  %226 = vmatpush.bf16.msra.mxu0 %v179
  %227 = vmatpush.bf16.msra.mxu0 %v178
  %228 = vmatpush.bf16.msra.mxu0 %v177
  %229 = vmatpush.bf16.msra.mxu0 %v176
  %230 = vmatpush.bf16.msra.mxu0 %v175
  %231 = vmatpush.bf16.msra.mxu0 %v174
  %232 = vmatpush.bf16.msra.mxu0 %v173
  %233 = vmatpush.bf16.msra.mxu0 %v172
  %234 = vmatmul.bf16.gmra.mxu0 %v83
  %v235 = vpop.f32.mrf.mxu0
  %v236 = vadd.f32 %v217, %v235
  %v237 = vpop.f32.mrf.mxu0
  %v238 = vadd.f32 %v219, %v237
  %239 = vmatmul.bf16.gmra.mxu0 %v86
  %v240 = vpop.f32.mrf.mxu0
  %v241 = vadd.f32 %v222, %v240
  %v242 = vpop.f32.mrf.mxu0
  %v243 = vadd.f32 %v224, %v242
  %244 = vdwg.mxu0
  %245 = vmatpush.bf16.msra.mxu0 0
  %246 = vmatpush.bf16.msra.mxu0 0
  %247 = vmatpush.bf16.msra.mxu0 0
  %248 = vmatpush.bf16.msra.mxu0 0
  %249 = vmatpush.bf16.msra.mxu0 0
  %250 = vmatpush.bf16.msra.mxu0 0
  %251 = vmatpush.bf16.msra.mxu0 %v181
  %252 = vmatpush.bf16.msra.mxu0 %v180
  %253 = vmatmul.bf16.gmra.mxu0 %v202
  %v254 = vpop.f32.mrf.mxu0
  %v255 = vadd.f32 %v236, %v254
  %v256 = vpop.f32.mrf.mxu0
  %v257 = vadd.f32 %v238, %v256
  %258 = vmatmul.bf16.gmra.mxu0 %v205
  %v259 = vpop.f32.mrf.mxu0
  %v260 = vadd.f32 %v241, %v259
  %v261 = vpop.f32.mrf.mxu0
  %v262 = vadd.f32 %v243, %v261
  %263 = vdwg.mxu0
  %v264 = vld [vmem:[%s1] sm:$0xff]
  %v265 = vld [vmem:[%s1 + $0x8] sm:$0xff]
  %v266 = vld [vmem:[%s1 + $0x10] sm:$0xff]
  %v267 = vld [vmem:[%s1 + $0x18] sm:$0xff]
  %269 = vset.pattern.permute.xlu0 0
  %270 = vperm.xlu0 %269, %v264
  %v271 = vpop.permute.xlu0 %270
  %274 = vset.pattern.permute.xlu0 0
  %275 = vperm.xlu0 %274, %v265
  %v276 = vpop.permute.xlu0 %275
  %279 = vset.pattern.permute.xlu0 0
  %280 = vperm.xlu0 %279, %v266
  %v281 = vpop.permute.xlu0 %280
  %284 = vset.pattern.permute.xlu0 0
  %285 = vperm.xlu0 %284, %v267
  %v286 = vpop.permute.xlu0 %285
  %v288 = vmul.f32 %v255, %v271
  %v289 = vmul.f32 %v257, %v276
  %v290 = vmul.f32 %v260, %v281
  %v291 = vmul.f32 %v262, %v286
  %v292 = vld [vmem:[%s2] sm:$0xff]
  %v293 = vld [vmem:[%s2 + $0x8] sm:$0xff]
  %v294 = vld [vmem:[%s2 + $0x10] sm:$0xff]
  %v295 = vld [vmem:[%s2 + $0x18] sm:$0xff]
  %297 = vset.pattern.permute.xlu0 0
  %298 = vperm.xlu0 %297, %v292
  %v299 = vpop.permute.xlu0 %298
  %302 = vset.pattern.permute.xlu0 0
  %303 = vperm.xlu0 %302, %v293
  %v304 = vpop.permute.xlu0 %303
  %307 = vset.pattern.permute.xlu0 0
  %308 = vperm.xlu0 %307, %v294
  %v309 = vpop.permute.xlu0 %308
  %312 = vset.pattern.permute.xlu0 0
  %313 = vperm.xlu0 %312, %v295
  %v314 = vpop.permute.xlu0 %313
  %v316 = vadd.f32 %v288, %v299
  %v317 = vadd.f32 %v289, %v304
  %v318 = vadd.f32 %v290, %v309
  %v319 = vadd.f32 %v291, %v314
  %v320 = vmax.f32 %v316, 0.0
  %v321 = vmax.f32 %v317, 0.0
  %v322 = vmax.f32 %v318, 0.0
  %v323 = vmax.f32 %v319, 0.0
  %324 = vst [vmem:[%s4] sm:$0xff] %v320
  %325 = vst [vmem:[%s4 + $0x8] sm:$0xff] %v321
  %326 = vst [vmem:[%s4 + $0x10] sm:$0xff] %v322
  %327 = vst [vmem:[%s4 + $0x18] sm:$0xff] %v323
  // Predicated region
  $region18: #{resnet18_forward.34} parent=0 // pred_check
    _
  $region19: #{resnet18_forward.34} parent=0 // pred_check_branch
    %329 = sbr.rel (0) target = $region21
  $region20: #{resnet18_forward.34} parent=0 // pred_region
    _
  $region21: #{resnet18_forward.34} parent=0 // pred_fallthru
    _
  // Predicated region
  $region22: #{resnet18_forward.34} parent=0 // pred_check
    _
  $region23: #{resnet18_forward.34} parent=0 // pred_check_branch
    %331 = sbr.rel (0) target = $region25
  $region24: #{resnet18_forward.34} parent=0 // pred_region
    _
  $region25: #{resnet18_forward.34} parent=0 // pred_fallthru
    _

// kernel: resnet18_forward.33
$region0: #{resnet18_forward.33}
  #allocation0 [shape = 'u32[]', space=smem, size = 0x4, offset = 0x4, fixed_abs, tag = 'smem constant byte address 0x4 - core index']
  #allocation1 [shape = 'u32[72,128]{1,0:T(1,128)}', space=vmem, size = 0x9000, scoped, tag = 'internal scratch']
  %s0 = inlined_call_operand.vmem [shape: bf16[32,288], index: 0, kind: input, shape index: {}]
  %s1 = inlined_call_operand.vmem [shape: f32[32,1], index: 1, kind: input, shape index: {}]
  %s2 = inlined_call_operand.vmem [shape: f32[32,1], index: 2, kind: input, shape index: {}]
  %s3 = inlined_call_operand.vmem [shape: bf16[288,128], index: 3, kind: input, shape index: {}]
  %s4 = inlined_call_operand.vmem [shape: f32[32,128], index: 4, kind: input, shape index: {}]
  %s5 = inlined_call_operand.vmem [shape: f32[32,128], index: 5, kind: output, shape index: {}]
  %s6 = sld [smem:[#allocation0]]
  $region30: #{resnet18_forward.33} parent=0
    _
  %s8 = ssub.s32 1, %s6
  %s9 = scalar_select 0, %s8, %s6
  // Predicated region
  $region2: #{resnet18_forward.33} parent=0 // pred_check
    _
  $region3: #{resnet18_forward.33} parent=0 // pred_check_branch
    %11 = sbr.rel (0) target = $region5
  $region4: #{resnet18_forward.33} parent=0 // pred_region
    _
  $region5: #{resnet18_forward.33} parent=0 // pred_fallthru
    _
  // Predicated region
  $region6: #{resnet18_forward.33} parent=0 // pred_check
    _
  $region7: #{resnet18_forward.33} parent=0 // pred_check_branch
    %13 = sbr.rel (0) target = $region9
  $region8: #{resnet18_forward.33} parent=0 // pred_region
    _
  $region9: #{resnet18_forward.33} parent=0 // pred_fallthru
    _
  // Predicated region
  $region10: #{resnet18_forward.33} parent=0 // pred_check
    _
  $region11: #{resnet18_forward.33} parent=0 // pred_check_branch
    %15 = sbr.rel (0) target = $region13
  $region12: #{resnet18_forward.33} parent=0 // pred_region
    _
  $region13: #{resnet18_forward.33} parent=0 // pred_fallthru
    _
  // Predicated region
  $region14: #{resnet18_forward.33} parent=0 // pred_check
    _
  $region15: #{resnet18_forward.33} parent=0 // pred_check_branch
    %17 = sbr.rel (0) target = $region17
  $region16: #{resnet18_forward.33} parent=0 // pred_region
    _
  $region17: #{resnet18_forward.33} parent=0 // pred_fallthru
    _
  // Predicated region
  $region18: #{resnet18_forward.33} parent=0 // pred_check
    _
  $region19: #{resnet18_forward.33} parent=0 // pred_check_branch
    %19 = sbr.rel (0) target = $region21
  $region20: #{resnet18_forward.33} parent=0 // pred_region
    _
  $region21: #{resnet18_forward.33} parent=0 // pred_fallthru
    _
  %v21 = vld [vmem:[%s0] sm:$0xff]
  %v22 = vld [vmem:[%s0 + $0x8] sm:$0xf]
  %v23 = vld [vmem:[%s0 + $0xc] sm:$0xff]
  %v24 = vld [vmem:[%s0 + $0x14] sm:$0xf]
  %v25 = vld [vmem:[%s0 + $0x18] sm:$0xff]
  %v26 = vld [vmem:[%s0 + $0x20] sm:$0xf]
  %v27 = vld [vmem:[%s0 + $0x24] sm:$0xff]
  %v28 = vld [vmem:[%s0 + $0x2c] sm:$0xf]
  %v29 = vld [vmem:[%s3] sm:$0xf]
  %v30 = vld [vmem:[%s3 + $0x4] sm:$0xf]
  %v31 = vld [vmem:[%s3 + $0x8] sm:$0xf]
  %v32 = vld [vmem:[%s3 + $0xc] sm:$0xf]
  %v33 = vld [vmem:[%s3 + $0x10] sm:$0xf]
  %v34 = vld [vmem:[%s3 + $0x14] sm:$0xf]
  %v35 = vld [vmem:[%s3 + $0x18] sm:$0xf]
  %v36 = vld [vmem:[%s3 + $0x1c] sm:$0xf]
  %v37 = vld [vmem:[%s3 + $0x20] sm:$0xf]
  %v38 = vld [vmem:[%s3 + $0x24] sm:$0xf]
  %v39 = vld [vmem:[%s3 + $0x28] sm:$0xf]
  %v40 = vld [vmem:[%s3 + $0x2c] sm:$0xf]
  %v41 = vld [vmem:[%s3 + $0x30] sm:$0xf]
  %v42 = vld [vmem:[%s3 + $0x34] sm:$0xf]
  %v43 = vld [vmem:[%s3 + $0x38] sm:$0xf]
  %v44 = vld [vmem:[%s3 + $0x3c] sm:$0xf]
  %v45 = vld [vmem:[%s3 + $0x40] sm:$0xf]
  %v46 = vld [vmem:[%s3 + $0x44] sm:$0xf]
  %v47 = vld [vmem:[%s3 + $0x48] sm:$0xf]
  %v48 = vld [vmem:[%s3 + $0x4c] sm:$0xf]
  %v49 = vld [vmem:[%s3 + $0x50] sm:$0xf]
  %v50 = vld [vmem:[%s3 + $0x54] sm:$0xf]
  %v51 = vld [vmem:[%s3 + $0x58] sm:$0xf]
  %v52 = vld [vmem:[%s3 + $0x5c] sm:$0xf]
  %v53 = vld [vmem:[%s3 + $0x60] sm:$0xf]
  %v54 = vld [vmem:[%s3 + $0x64] sm:$0xf]
  %v55 = vld [vmem:[%s3 + $0x68] sm:$0xf]
  %v56 = vld [vmem:[%s3 + $0x6c] sm:$0xf]
  %v57 = vld [vmem:[%s3 + $0x70] sm:$0xf]
  %v58 = vld [vmem:[%s3 + $0x74] sm:$0xf]
  %v59 = vld [vmem:[%s3 + $0x78] sm:$0xf]
  %v60 = vld [vmem:[%s3 + $0x7c] sm:$0xf]
  %v61 = vld [vmem:[%s3 + $0x80] sm:$0xf]
  %v62 = vld [vmem:[%s3 + $0x84] sm:$0xf]
  %v63 = vld [vmem:[%s3 + $0x88] sm:$0xf]
  %v64 = vld [vmem:[%s3 + $0x8c] sm:$0xf]
  %v73 = vunpack.c.l.b16 %v21
  %v74 = vunpack.c.h.b16 %v21
  %v75 = vunpack.c.l.b16 %v22
  %v76 = vunpack.c.l.b16 %v23
  %v77 = vunpack.c.h.b16 %v23
  %v78 = vunpack.c.l.b16 %v24
  %v79 = vunpack.c.l.b16 %v25
  %v80 = vunpack.c.h.b16 %v25
  %v81 = vunpack.c.l.b16 %v26
  %v82 = vunpack.c.l.b16 %v27
  %v83 = vunpack.c.h.b16 %v27
  %v84 = vunpack.c.l.b16 %v28
  %v85 = vpack.c.b16 %v76, %v73
  %v86 = vpack.c.b16 %v77, %v74
  %v87 = vpack.c.b16 %v78, %v75
  %v88 = vpack.c.b16 %v82, %v79
  %v89 = vpack.c.b16 %v83, %v80
  %v90 = vpack.c.b16 %v84, %v81
  %v131 = vunpack.c.l.b16 %v29
  %v132 = vunpack.c.l.b16 %v30
  %v133 = vunpack.c.l.b16 %v31
  %v134 = vunpack.c.l.b16 %v32
  %v135 = vunpack.c.l.b16 %v33
  %v136 = vunpack.c.l.b16 %v34
  %v137 = vunpack.c.l.b16 %v35
  %v138 = vunpack.c.l.b16 %v36
  %v139 = vunpack.c.l.b16 %v37
  %v140 = vunpack.c.l.b16 %v38
  %v141 = vunpack.c.l.b16 %v39
  %v142 = vunpack.c.l.b16 %v40
  %v143 = vunpack.c.l.b16 %v41
  %v144 = vunpack.c.l.b16 %v42
  %v145 = vunpack.c.l.b16 %v43
  %v146 = vunpack.c.l.b16 %v44
  %v147 = vunpack.c.l.b16 %v45
  %v148 = vunpack.c.l.b16 %v46
  %v149 = vunpack.c.l.b16 %v47
  %v150 = vunpack.c.l.b16 %v48
  %v151 = vunpack.c.l.b16 %v49
  %v152 = vunpack.c.l.b16 %v50
  %v153 = vunpack.c.l.b16 %v51
  %v154 = vunpack.c.l.b16 %v52
  %v155 = vunpack.c.l.b16 %v53
  %v156 = vunpack.c.l.b16 %v54
  %v157 = vunpack.c.l.b16 %v55
  %v158 = vunpack.c.l.b16 %v56
  %v159 = vunpack.c.l.b16 %v57
  %v160 = vunpack.c.l.b16 %v58
  %v161 = vunpack.c.l.b16 %v59
  %v162 = vunpack.c.l.b16 %v60
  %v163 = vunpack.c.l.b16 %v61
  %v164 = vunpack.c.l.b16 %v62
  %v165 = vunpack.c.l.b16 %v63
  %v166 = vunpack.c.l.b16 %v64
  %v167 = vpack.c.b16 %v132, %v131
  %v168 = vpack.c.b16 %v134, %v133
  %v169 = vpack.c.b16 %v136, %v135
  %v170 = vpack.c.b16 %v138, %v137
  %v171 = vpack.c.b16 %v140, %v139
  %v172 = vpack.c.b16 %v142, %v141
  %v173 = vpack.c.b16 %v144, %v143
  %v174 = vpack.c.b16 %v146, %v145
  %v175 = vpack.c.b16 %v148, %v147
  %v176 = vpack.c.b16 %v150, %v149
  %v177 = vpack.c.b16 %v152, %v151
  %v178 = vpack.c.b16 %v154, %v153
  %v179 = vpack.c.b16 %v156, %v155
  %v180 = vpack.c.b16 %v158, %v157
  %v181 = vpack.c.b16 %v160, %v159
  %v182 = vpack.c.b16 %v162, %v161
  %v183 = vpack.c.b16 %v164, %v163
  %v184 = vpack.c.b16 %v166, %v165
  %vm203 = vcmask 261120
  %v205 = vsel %vm203, %v87, 0
  %v208 = vsel %vm203, %v90, 0
  %210 = vmatpush.bf16.msra.mxu0 %v174
  %211 = vmatpush.bf16.msra.mxu0 %v173
  %212 = vmatpush.bf16.msra.mxu0 %v172
  %213 = vmatpush.bf16.msra.mxu0 %v171
  %214 = vmatpush.bf16.msra.mxu0 %v170
  %215 = vmatpush.bf16.msra.mxu0 %v169
  %216 = vmatpush.bf16.msra.mxu0 %v168
  %217 = vmatpush.bf16.msra.mxu0 %v167
  %218 = vmatmul.bf16.gmra.mxu0 %v85
  %v219 = vpop.f32.mrf.mxu0
  %v220 = vadd.f32 0.0, %v219
  %v221 = vpop.f32.mrf.mxu0
  %v222 = vadd.f32 0.0, %v221
  %223 = vmatmul.bf16.gmra.mxu0 %v88
  %v224 = vpop.f32.mrf.mxu0
  %v225 = vadd.f32 0.0, %v224
  %v226 = vpop.f32.mrf.mxu0
  %v227 = vadd.f32 0.0, %v226
  %228 = vdwg.mxu0
  %229 = vmatpush.bf16.msra.mxu0 %v182
  %230 = vmatpush.bf16.msra.mxu0 %v181
  %231 = vmatpush.bf16.msra.mxu0 %v180
  %232 = vmatpush.bf16.msra.mxu0 %v179
  %233 = vmatpush.bf16.msra.mxu0 %v178
  %234 = vmatpush.bf16.msra.mxu0 %v177
  %235 = vmatpush.bf16.msra.mxu0 %v176
  %236 = vmatpush.bf16.msra.mxu0 %v175
  %237 = vmatmul.bf16.gmra.mxu0 %v86
  %v238 = vpop.f32.mrf.mxu0
  %v239 = vadd.f32 %v220, %v238
  %v240 = vpop.f32.mrf.mxu0
  %v241 = vadd.f32 %v222, %v240
  %242 = vmatmul.bf16.gmra.mxu0 %v89
  %v243 = vpop.f32.mrf.mxu0
  %v244 = vadd.f32 %v225, %v243
  %v245 = vpop.f32.mrf.mxu0
  %v246 = vadd.f32 %v227, %v245
  %247 = vdwg.mxu0
  %248 = vmatpush.bf16.msra.mxu0 0
  %249 = vmatpush.bf16.msra.mxu0 0
  %250 = vmatpush.bf16.msra.mxu0 0
  %251 = vmatpush.bf16.msra.mxu0 0
  %252 = vmatpush.bf16.msra.mxu0 0
  %253 = vmatpush.bf16.msra.mxu0 0
  %254 = vmatpush.bf16.msra.mxu0 %v184
  %255 = vmatpush.bf16.msra.mxu0 %v183
  %256 = vmatmul.bf16.gmra.mxu0 %v205
  %v257 = vpop.f32.mrf.mxu0
  %v258 = vadd.f32 %v239, %v257
  %v259 = vpop.f32.mrf.mxu0
  %v260 = vadd.f32 %v241, %v259
  %261 = vmatmul.bf16.gmra.mxu0 %v208
  %v262 = vpop.f32.mrf.mxu0
  %v263 = vadd.f32 %v244, %v262
  %v264 = vpop.f32.mrf.mxu0
  %v265 = vadd.f32 %v246, %v264
  %266 = vdwg.mxu0
  %v267 = vld [vmem:[%s1] sm:$0xff]
  %v268 = vld [vmem:[%s1 + $0x8] sm:$0xff]
  %v269 = vld [vmem:[%s1 + $0x10] sm:$0xff]
  %v270 = vld [vmem:[%s1 + $0x18] sm:$0xff]
  %272 = vset.pattern.permute.xlu0 0
  %273 = vperm.xlu0 %272, %v267
  %v274 = vpop.permute.xlu0 %273
  %277 = vset.pattern.permute.xlu0 0
  %278 = vperm.xlu0 %277, %v268
  %v279 = vpop.permute.xlu0 %278
  %282 = vset.pattern.permute.xlu0 0
  %283 = vperm.xlu0 %282, %v269
  %v284 = vpop.permute.xlu0 %283
  %287 = vset.pattern.permute.xlu0 0
  %288 = vperm.xlu0 %287, %v270
  %v289 = vpop.permute.xlu0 %288
  %v291 = vmul.f32 %v258, %v274
  %v292 = vmul.f32 %v260, %v279
  %v293 = vmul.f32 %v263, %v284
  %v294 = vmul.f32 %v265, %v289
  %v295 = vld [vmem:[%s2] sm:$0xff]
  %v296 = vld [vmem:[%s2 + $0x8] sm:$0xff]
  %v297 = vld [vmem:[%s2 + $0x10] sm:$0xff]
  %v298 = vld [vmem:[%s2 + $0x18] sm:$0xff]
  %300 = vset.pattern.permute.xlu0 0
  %301 = vperm.xlu0 %300, %v295
  %v302 = vpop.permute.xlu0 %301
  %305 = vset.pattern.permute.xlu0 0
  %306 = vperm.xlu0 %305, %v296
  %v307 = vpop.permute.xlu0 %306
  %310 = vset.pattern.permute.xlu0 0
  %311 = vperm.xlu0 %310, %v297
  %v312 = vpop.permute.xlu0 %311
  %315 = vset.pattern.permute.xlu0 0
  %316 = vperm.xlu0 %315, %v298
  %v317 = vpop.permute.xlu0 %316
  %v319 = vadd.f32 %v291, %v302
  %v320 = vadd.f32 %v292, %v307
  %v321 = vadd.f32 %v293, %v312
  %v322 = vadd.f32 %v294, %v317
  %v323 = vld [vmem:[%s4] sm:$0xff]
  %v324 = vld [vmem:[%s4 + $0x8] sm:$0xff]
  %v325 = vld [vmem:[%s4 + $0x10] sm:$0xff]
  %v326 = vld [vmem:[%s4 + $0x18] sm:$0xff]
  %v327 = vadd.f32 %v319, %v323
  %v328 = vadd.f32 %v320, %v324
  %v329 = vadd.f32 %v321, %v325
  %v330 = vadd.f32 %v322, %v326
  %v331 = vmax.f32 %v327, 0.0
  %v332 = vmax.f32 %v328, 0.0
  %v333 = vmax.f32 %v329, 0.0
  %v334 = vmax.f32 %v330, 0.0
  %335 = vst [vmem:[%s5] sm:$0xff] %v331
  %336 = vst [vmem:[%s5 + $0x8] sm:$0xff] %v332
  %337 = vst [vmem:[%s5 + $0x10] sm:$0xff] %v333
  %338 = vst [vmem:[%s5 + $0x18] sm:$0xff] %v334
  // Predicated region
  $region22: #{resnet18_forward.33} parent=0 // pred_check
    _
  $region23: #{resnet18_forward.33} parent=0 // pred_check_branch
    %340 = sbr.rel (0) target = $region25
  $region24: #{resnet18_forward.33} parent=0 // pred_region
    _
  $region25: #{resnet18_forward.33} parent=0 // pred_fallthru
    _
  // Predicated region
  $region26: #{resnet18_forward.33} parent=0 // pred_check
    _
  $region27: #{resnet18_forward.33} parent=0 // pred_check_branch
    %342 = sbr.rel (0) target = $region29
  $region28: #{resnet18_forward.33} parent=0 // pred_region
    _
  $region29: #{resnet18_forward.33} parent=0 // pred_fallthru
    _

// kernel: resnet18_forward.36
$region0: #{resnet18_forward.36}
  #allocation0 [shape = 'u32[]', space=smem, size = 0x4, offset = 0x4, fixed_abs, tag = 'smem constant byte address 0x4 - core index']
  #allocation1 [shape = 'u32[72,128]{1,0:T(1,128)}', space=vmem, size = 0x9000, scoped, tag = 'internal scratch']
  %s0 = inlined_call_operand.vmem [shape: bf16[64,288], index: 0, kind: input, shape index: {}]
  %s1 = inlined_call_operand.vmem [shape: f32[64,1], index: 1, kind: input, shape index: {}]
  %s2 = inlined_call_operand.vmem [shape: f32[64,1], index: 2, kind: input, shape index: {}]
  %s3 = inlined_call_operand.vmem [shape: bf16[288,32], index: 3, kind: input, shape index: {}]
  %s4 = inlined_call_operand.vmem [shape: f32[64,32], index: 4, kind: output, shape index: {}]
  %s5 = sld [smem:[#allocation0]]
  $region26: #{resnet18_forward.36} parent=0
    _
  %s7 = ssub.s32 1, %s5
  %s8 = scalar_select 0, %s7, %s5
  // Predicated region
  $region2: #{resnet18_forward.36} parent=0 // pred_check
    _
  $region3: #{resnet18_forward.36} parent=0 // pred_check_branch
    %10 = sbr.rel (0) target = $region5
  $region4: #{resnet18_forward.36} parent=0 // pred_region
    _
  $region5: #{resnet18_forward.36} parent=0 // pred_fallthru
    _
  // Predicated region
  $region6: #{resnet18_forward.36} parent=0 // pred_check
    _
  $region7: #{resnet18_forward.36} parent=0 // pred_check_branch
    %12 = sbr.rel (0) target = $region9
  $region8: #{resnet18_forward.36} parent=0 // pred_region
    _
  $region9: #{resnet18_forward.36} parent=0 // pred_fallthru
    _
  // Predicated region
  $region10: #{resnet18_forward.36} parent=0 // pred_check
    _
  $region11: #{resnet18_forward.36} parent=0 // pred_check_branch
    %14 = sbr.rel (0) target = $region13
  $region12: #{resnet18_forward.36} parent=0 // pred_region
    _
  $region13: #{resnet18_forward.36} parent=0 // pred_fallthru
    _
  // Predicated region
  $region14: #{resnet18_forward.36} parent=0 // pred_check
    _
  $region15: #{resnet18_forward.36} parent=0 // pred_check_branch
    %16 = sbr.rel (0) target = $region17
  $region16: #{resnet18_forward.36} parent=0 // pred_region
    _
  $region17: #{resnet18_forward.36} parent=0 // pred_fallthru
    _
  %v18 = vld [vmem:[%s0] sm:$0xff]
  %v19 = vld [vmem:[%s0 + $0x8] sm:$0xf]
  %v20 = vld [vmem:[%s0 + $0xc] sm:$0xff]
  %v21 = vld [vmem:[%s0 + $0x14] sm:$0xf]
  %v22 = vld [vmem:[%s0 + $0x18] sm:$0xff]
  %v23 = vld [vmem:[%s0 + $0x20] sm:$0xf]
  %v24 = vld [vmem:[%s0 + $0x24] sm:$0xff]
  %v25 = vld [vmem:[%s0 + $0x2c] sm:$0xf]
  %v26 = vld [vmem:[%s0 + $0x30] sm:$0xff]
  %v27 = vld [vmem:[%s0 + $0x38] sm:$0xf]
  %v28 = vld [vmem:[%s0 + $0x3c] sm:$0xff]
  %v29 = vld [vmem:[%s0 + $0x44] sm:$0xf]
  %v30 = vld [vmem:[%s0 + $0x48] sm:$0xff]
  %v31 = vld [vmem:[%s0 + $0x50] sm:$0xf]
  %v32 = vld [vmem:[%s0 + $0x54] sm:$0xff]
  %v33 = vld [vmem:[%s0 + $0x5c] sm:$0xf]
  %v34 = vld [vmem:[%s3] sm:$0xf]
  %v35 = vld [vmem:[%s3 + $0x4] sm:$0xf]
  %v36 = vld [vmem:[%s3 + $0x8] sm:$0xf]
  %v37 = vld [vmem:[%s3 + $0xc] sm:$0xf]
  %v38 = vld [vmem:[%s3 + $0x10] sm:$0xf]
  %v39 = vld [vmem:[%s3 + $0x14] sm:$0xf]
  %v40 = vld [vmem:[%s3 + $0x18] sm:$0xf]
  %v41 = vld [vmem:[%s3 + $0x1c] sm:$0xf]
  %v42 = vld [vmem:[%s3 + $0x20] sm:$0xf]
  %v43 = vld [vmem:[%s3 + $0x24] sm:$0xf]
  %v44 = vld [vmem:[%s3 + $0x28] sm:$0xf]
  %v45 = vld [vmem:[%s3 + $0x2c] sm:$0xf]
  %v46 = vld [vmem:[%s3 + $0x30] sm:$0xf]
  %v47 = vld [vmem:[%s3 + $0x34] sm:$0xf]
  %v48 = vld [vmem:[%s3 + $0x38] sm:$0xf]
  %v49 = vld [vmem:[%s3 + $0x3c] sm:$0xf]
  %v50 = vld [vmem:[%s3 + $0x40] sm:$0xf]
  %v51 = vld [vmem:[%s3 + $0x44] sm:$0xf]
  %v52 = vld [vmem:[%s3 + $0x48] sm:$0xf]
  %v53 = vld [vmem:[%s3 + $0x4c] sm:$0xf]
  %v54 = vld [vmem:[%s3 + $0x50] sm:$0xf]
  %v55 = vld [vmem:[%s3 + $0x54] sm:$0xf]
  %v56 = vld [vmem:[%s3 + $0x58] sm:$0xf]
  %v57 = vld [vmem:[%s3 + $0x5c] sm:$0xf]
  %v58 = vld [vmem:[%s3 + $0x60] sm:$0xf]
  %v59 = vld [vmem:[%s3 + $0x64] sm:$0xf]
  %v60 = vld [vmem:[%s3 + $0x68] sm:$0xf]
  %v61 = vld [vmem:[%s3 + $0x6c] sm:$0xf]
  %v62 = vld [vmem:[%s3 + $0x70] sm:$0xf]
  %v63 = vld [vmem:[%s3 + $0x74] sm:$0xf]
  %v64 = vld [vmem:[%s3 + $0x78] sm:$0xf]
  %v65 = vld [vmem:[%s3 + $0x7c] sm:$0xf]
  %v66 = vld [vmem:[%s3 + $0x80] sm:$0xf]
  %v67 = vld [vmem:[%s3 + $0x84] sm:$0xf]
  %v68 = vld [vmem:[%s3 + $0x88] sm:$0xf]
  %v69 = vld [vmem:[%s3 + $0x8c] sm:$0xf]
  %v86 = vunpack.c.l.b16 %v18
  %v87 = vunpack.c.h.b16 %v18
  %v88 = vunpack.c.l.b16 %v19
  %v89 = vunpack.c.l.b16 %v20
  %v90 = vunpack.c.h.b16 %v20
  %v91 = vunpack.c.l.b16 %v21
  %v92 = vunpack.c.l.b16 %v22
  %v93 = vunpack.c.h.b16 %v22
  %v94 = vunpack.c.l.b16 %v23
  %v95 = vunpack.c.l.b16 %v24
  %v96 = vunpack.c.h.b16 %v24
  %v97 = vunpack.c.l.b16 %v25
  %v98 = vunpack.c.l.b16 %v26
  %v99 = vunpack.c.h.b16 %v26
  %v100 = vunpack.c.l.b16 %v27
  %v101 = vunpack.c.l.b16 %v28
  %v102 = vunpack.c.h.b16 %v28
  %v103 = vunpack.c.l.b16 %v29
  %v104 = vunpack.c.l.b16 %v30
  %v105 = vunpack.c.h.b16 %v30
  %v106 = vunpack.c.l.b16 %v31
  %v107 = vunpack.c.l.b16 %v32
  %v108 = vunpack.c.h.b16 %v32
  %v109 = vunpack.c.l.b16 %v33
  %v110 = vpack.c.b16 %v89, %v86
  %v111 = vpack.c.b16 %v90, %v87
  %v112 = vpack.c.b16 %v91, %v88
  %v113 = vpack.c.b16 %v95, %v92
  %v114 = vpack.c.b16 %v96, %v93
  %v115 = vpack.c.b16 %v97, %v94
  %v116 = vpack.c.b16 %v101, %v98
  %v117 = vpack.c.b16 %v102, %v99
  %v118 = vpack.c.b16 %v103, %v100
  %v119 = vpack.c.b16 %v107, %v104
  %v120 = vpack.c.b16 %v108, %v105
  %v121 = vpack.c.b16 %v109, %v106
  %v166 = vunpack.c.l.b16 %v34
  %v167 = vunpack.c.l.b16 %v35
  %v168 = vunpack.c.l.b16 %v36
  %v169 = vunpack.c.l.b16 %v37
  %v170 = vunpack.c.l.b16 %v38
  %v171 = vunpack.c.l.b16 %v39
  %v172 = vunpack.c.l.b16 %v40
  %v173 = vunpack.c.l.b16 %v41
  %v174 = vunpack.c.l.b16 %v42
  %v175 = vunpack.c.l.b16 %v43
  %v176 = vunpack.c.l.b16 %v44
  %v177 = vunpack.c.l.b16 %v45
  %v178 = vunpack.c.l.b16 %v46
  %v179 = vunpack.c.l.b16 %v47
  %v180 = vunpack.c.l.b16 %v48
  %v181 = vunpack.c.l.b16 %v49
  %v182 = vunpack.c.l.b16 %v50
  %v183 = vunpack.c.l.b16 %v51
  %v184 = vunpack.c.l.b16 %v52
  %v185 = vunpack.c.l.b16 %v53
  %v186 = vunpack.c.l.b16 %v54
  %v187 = vunpack.c.l.b16 %v55
  %v188 = vunpack.c.l.b16 %v56
  %v189 = vunpack.c.l.b16 %v57
  %v190 = vunpack.c.l.b16 %v58
  %v191 = vunpack.c.l.b16 %v59
  %v192 = vunpack.c.l.b16 %v60
  %v193 = vunpack.c.l.b16 %v61
  %v194 = vunpack.c.l.b16 %v62
  %v195 = vunpack.c.l.b16 %v63
  %v196 = vunpack.c.l.b16 %v64
  %v197 = vunpack.c.l.b16 %v65
  %v198 = vunpack.c.l.b16 %v66
  %v199 = vunpack.c.l.b16 %v67
  %v200 = vunpack.c.l.b16 %v68
  %v201 = vunpack.c.l.b16 %v69
  %v202 = vpack.c.b16 %v167, %v166
  %v203 = vpack.c.b16 %v169, %v168
  %v204 = vpack.c.b16 %v171, %v170
  %v205 = vpack.c.b16 %v173, %v172
  %v206 = vpack.c.b16 %v175, %v174
  %v207 = vpack.c.b16 %v177, %v176
  %v208 = vpack.c.b16 %v179, %v178
  %v209 = vpack.c.b16 %v181, %v180
  %v210 = vpack.c.b16 %v183, %v182
  %v211 = vpack.c.b16 %v185, %v184
  %v212 = vpack.c.b16 %v187, %v186
  %v213 = vpack.c.b16 %v189, %v188
  %v214 = vpack.c.b16 %v191, %v190
  %v215 = vpack.c.b16 %v193, %v192
  %v216 = vpack.c.b16 %v195, %v194
  %v217 = vpack.c.b16 %v197, %v196
  %v218 = vpack.c.b16 %v199, %v198
  %v219 = vpack.c.b16 %v201, %v200
  %vm238 = vcmask 261120
  %v240 = vsel %vm238, %v112, 0
  %v243 = vsel %vm238, %v115, 0
  %v246 = vsel %vm238, %v118, 0
  %v249 = vsel %vm238, %v121, 0
  %251 = vmatpush.bf16.msra.mxu0 %v209
  %252 = vmatpush.bf16.msra.mxu0 %v208
  %253 = vmatpush.bf16.msra.mxu0 %v207
  %254 = vmatpush.bf16.msra.mxu0 %v206
  %255 = vmatpush.bf16.msra.mxu0 %v205
  %256 = vmatpush.bf16.msra.mxu0 %v204
  %257 = vmatpush.bf16.msra.mxu0 %v203
  %258 = vmatpush.bf16.msra.mxu0 %v202
  %259 = vmatmul.bf16.gmra.mxu0 %v110
  %v260 = vpop.f32.mrf.mxu0
  %v261 = vadd.f32 0.0, %v260
  %v262 = vpop.f32.mrf.mxu0
  %v263 = vadd.f32 0.0, %v262
  %264 = vmatmul.bf16.gmra.mxu0 %v113
  %v265 = vpop.f32.mrf.mxu0
  %v266 = vadd.f32 0.0, %v265
  %v267 = vpop.f32.mrf.mxu0
  %v268 = vadd.f32 0.0, %v267
  %269 = vmatmul.bf16.gmra.mxu0 %v116
  %v270 = vpop.f32.mrf.mxu0
  %v271 = vadd.f32 0.0, %v270
  %v272 = vpop.f32.mrf.mxu0
  %v273 = vadd.f32 0.0, %v272
  %274 = vmatmul.bf16.gmra.mxu0 %v119
  %v275 = vpop.f32.mrf.mxu0
  %v276 = vadd.f32 0.0, %v275
  %v277 = vpop.f32.mrf.mxu0
  %v278 = vadd.f32 0.0, %v277
  %279 = vdwg.mxu0
  %280 = vmatpush.bf16.msra.mxu0 %v217
  %281 = vmatpush.bf16.msra.mxu0 %v216
  %282 = vmatpush.bf16.msra.mxu0 %v215
  %283 = vmatpush.bf16.msra.mxu0 %v214
  %284 = vmatpush.bf16.msra.mxu0 %v213
  %285 = vmatpush.bf16.msra.mxu0 %v212
  %286 = vmatpush.bf16.msra.mxu0 %v211
  %287 = vmatpush.bf16.msra.mxu0 %v210
  %288 = vmatmul.bf16.gmra.mxu0 %v111
  %v289 = vpop.f32.mrf.mxu0
  %v290 = vadd.f32 %v261, %v289
  %v291 = vpop.f32.mrf.mxu0
  %v292 = vadd.f32 %v263, %v291
  %293 = vmatmul.bf16.gmra.mxu0 %v114
  %v294 = vpop.f32.mrf.mxu0
  %v295 = vadd.f32 %v266, %v294
  %v296 = vpop.f32.mrf.mxu0
  %v297 = vadd.f32 %v268, %v296
  %298 = vmatmul.bf16.gmra.mxu0 %v117
  %v299 = vpop.f32.mrf.mxu0
  %v300 = vadd.f32 %v271, %v299
  %v301 = vpop.f32.mrf.mxu0
  %v302 = vadd.f32 %v273, %v301
  %303 = vmatmul.bf16.gmra.mxu0 %v120
  %v304 = vpop.f32.mrf.mxu0
  %v305 = vadd.f32 %v276, %v304
  %v306 = vpop.f32.mrf.mxu0
  %v307 = vadd.f32 %v278, %v306
  %308 = vdwg.mxu0
  %309 = vmatpush.bf16.msra.mxu0 0
  %310 = vmatpush.bf16.msra.mxu0 0
  %311 = vmatpush.bf16.msra.mxu0 0
  %312 = vmatpush.bf16.msra.mxu0 0
  %313 = vmatpush.bf16.msra.mxu0 0
  %314 = vmatpush.bf16.msra.mxu0 0
  %315 = vmatpush.bf16.msra.mxu0 %v219
  %316 = vmatpush.bf16.msra.mxu0 %v218
  %317 = vmatmul.bf16.gmra.mxu0 %v240
  %v318 = vpop.f32.mrf.mxu0
  %v319 = vadd.f32 %v290, %v318
  %v320 = vpop.f32.mrf.mxu0
  %v321 = vadd.f32 %v292, %v320
  %322 = vmatmul.bf16.gmra.mxu0 %v243
  %v323 = vpop.f32.mrf.mxu0
  %v324 = vadd.f32 %v295, %v323
  %v325 = vpop.f32.mrf.mxu0
  %v326 = vadd.f32 %v297, %v325
  %327 = vmatmul.bf16.gmra.mxu0 %v246
  %v328 = vpop.f32.mrf.mxu0
  %v329 = vadd.f32 %v300, %v328
  %v330 = vpop.f32.mrf.mxu0
  %v331 = vadd.f32 %v302, %v330
  %332 = vmatmul.bf16.gmra.mxu0 %v249
  %v333 = vpop.f32.mrf.mxu0
  %v334 = vadd.f32 %v305, %v333
  %v335 = vpop.f32.mrf.mxu0
  %v336 = vadd.f32 %v307, %v335
  %337 = vdwg.mxu0
  %v338 = vld [vmem:[%s1] sm:$0xff]
  %v339 = vld [vmem:[%s1 + $0x8] sm:$0xff]
  %v340 = vld [vmem:[%s1 + $0x10] sm:$0xff]
  %v341 = vld [vmem:[%s1 + $0x18] sm:$0xff]
  %v342 = vld [vmem:[%s1 + $0x20] sm:$0xff]
  %v343 = vld [vmem:[%s1 + $0x28] sm:$0xff]
  %v344 = vld [vmem:[%s1 + $0x30] sm:$0xff]
  %v345 = vld [vmem:[%s1 + $0x38] sm:$0xff]
  %347 = vset.pattern.permute.xlu0 0
  %348 = vperm.xlu0 %347, %v338
  %v349 = vpop.permute.xlu0 %348
  %352 = vset.pattern.permute.xlu0 0
  %353 = vperm.xlu0 %352, %v339
  %v354 = vpop.permute.xlu0 %353
  %357 = vset.pattern.permute.xlu0 0
  %358 = vperm.xlu0 %357, %v340
  %v359 = vpop.permute.xlu0 %358
  %362 = vset.pattern.permute.xlu0 0
  %363 = vperm.xlu0 %362, %v341
  %v364 = vpop.permute.xlu0 %363
  %367 = vset.pattern.permute.xlu0 0
  %368 = vperm.xlu0 %367, %v342
  %v369 = vpop.permute.xlu0 %368
  %372 = vset.pattern.permute.xlu0 0
  %373 = vperm.xlu0 %372, %v343
  %v374 = vpop.permute.xlu0 %373
  %377 = vset.pattern.permute.xlu0 0
  %378 = vperm.xlu0 %377, %v344
  %v379 = vpop.permute.xlu0 %378
  %382 = vset.pattern.permute.xlu0 0
  %383 = vperm.xlu0 %382, %v345
  %v384 = vpop.permute.xlu0 %383
  %v386 = vmul.f32 %v319, %v349
  %v387 = vmul.f32 %v321, %v354
  %v388 = vmul.f32 %v324, %v359
  %v389 = vmul.f32 %v326, %v364
  %v390 = vmul.f32 %v329, %v369
  %v391 = vmul.f32 %v331, %v374
  %v392 = vmul.f32 %v334, %v379
  %v393 = vmul.f32 %v336, %v384
  %v394 = vld [vmem:[%s2] sm:$0xff]
  %v395 = vld [vmem:[%s2 + $0x8] sm:$0xff]
  %v396 = vld [vmem:[%s2 + $0x10] sm:$0xff]
  %v397 = vld [vmem:[%s2 + $0x18] sm:$0xff]
  %v398 = vld [vmem:[%s2 + $0x20] sm:$0xff]
  %v399 = vld [vmem:[%s2 + $0x28] sm:$0xff]
  %v400 = vld [vmem:[%s2 + $0x30] sm:$0xff]
  %v401 = vld [vmem:[%s2 + $0x38] sm:$0xff]
  %403 = vset.pattern.permute.xlu0 0
  %404 = vperm.xlu0 %403, %v394
  %v405 = vpop.permute.xlu0 %404
  %408 = vset.pattern.permute.xlu0 0
  %409 = vperm.xlu0 %408, %v395
  %v410 = vpop.permute.xlu0 %409
  %413 = vset.pattern.permute.xlu0 0
  %414 = vperm.xlu0 %413, %v396
  %v415 = vpop.permute.xlu0 %414
  %418 = vset.pattern.permute.xlu0 0
  %419 = vperm.xlu0 %418, %v397
  %v420 = vpop.permute.xlu0 %419
  %423 = vset.pattern.permute.xlu0 0
  %424 = vperm.xlu0 %423, %v398
  %v425 = vpop.permute.xlu0 %424
  %428 = vset.pattern.permute.xlu0 0
  %429 = vperm.xlu0 %428, %v399
  %v430 = vpop.permute.xlu0 %429
  %433 = vset.pattern.permute.xlu0 0
  %434 = vperm.xlu0 %433, %v400
  %v435 = vpop.permute.xlu0 %434
  %438 = vset.pattern.permute.xlu0 0
  %439 = vperm.xlu0 %438, %v401
  %v440 = vpop.permute.xlu0 %439
  %v442 = vadd.f32 %v386, %v405
  %v443 = vadd.f32 %v387, %v410
  %v444 = vadd.f32 %v388, %v415
  %v445 = vadd.f32 %v389, %v420
  %v446 = vadd.f32 %v390, %v425
  %v447 = vadd.f32 %v391, %v430
  %v448 = vadd.f32 %v392, %v435
  %v449 = vadd.f32 %v393, %v440
  %v450 = vmax.f32 %v442, 0.0
  %v451 = vmax.f32 %v443, 0.0
  %v452 = vmax.f32 %v444, 0.0
  %v453 = vmax.f32 %v445, 0.0
  %v454 = vmax.f32 %v446, 0.0
  %v455 = vmax.f32 %v447, 0.0
  %v456 = vmax.f32 %v448, 0.0
  %v457 = vmax.f32 %v449, 0.0
  %458 = vst.msk [vmem:[%s4] sm:$0xff] %vm238, %v450
  %459 = vst.msk [vmem:[%s4 + $0x8] sm:$0xff] %vm238, %v451
  %460 = vst.msk [vmem:[%s4 + $0x10] sm:$0xff] %vm238, %v452
  %461 = vst.msk [vmem:[%s4 + $0x18] sm:$0xff] %vm238, %v453
  %462 = vst.msk [vmem:[%s4 + $0x20] sm:$0xff] %vm238, %v454
  %463 = vst.msk [vmem:[%s4 + $0x28] sm:$0xff] %vm238, %v455
  %464 = vst.msk [vmem:[%s4 + $0x30] sm:$0xff] %vm238, %v456
  %465 = vst.msk [vmem:[%s4 + $0x38] sm:$0xff] %vm238, %v457
  // Predicated region
  $region18: #{resnet18_forward.36} parent=0 // pred_check
    _
  $region19: #{resnet18_forward.36} parent=0 // pred_check_branch
    %467 = sbr.rel (0) target = $region21
  $region20: #{resnet18_forward.36} parent=0 // pred_region
    _
  $region21: #{resnet18_forward.36} parent=0 // pred_fallthru
    _
  // Predicated region
  $region22: #{resnet18_forward.36} parent=0 // pred_check
    _
  $region23: #{resnet18_forward.36} parent=0 // pred_check_branch
    %469 = sbr.rel (0) target = $region25
  $region24: #{resnet18_forward.36} parent=0 // pred_region
    _
  $region25: #{resnet18_forward.36} parent=0 // pred_fallthru
    _

// kernel: resnet18_forward.37
$region0: #{resnet18_forward.37}
  #allocation0 [shape = 'u32[]', space=smem, size = 0x4, offset = 0x4, fixed_abs, tag = 'smem constant byte address 0x4 - core index']
  #allocation1 [shape = 'u32[72,128]{1,0:T(1,128)}', space=vmem, size = 0x9000, scoped, tag = 'internal scratch']
  %s0 = inlined_call_operand.vmem [shape: bf16[64,32], index: 0, kind: input, shape index: {}]
  %s1 = inlined_call_operand.vmem [shape: f32[64,1], index: 1, kind: input, shape index: {}]
  %s2 = inlined_call_operand.vmem [shape: f32[64,1], index: 2, kind: input, shape index: {}]
  %s3 = inlined_call_operand.vmem [shape: bf16[32,32], index: 3, kind: input, shape index: {}]
  %s4 = inlined_call_operand.vmem [shape: f32[64,32], index: 4, kind: output, shape index: {}]
  %s5 = sld [smem:[#allocation0]]
  $region26: #{resnet18_forward.37} parent=0
    _
  %s7 = ssub.s32 1, %s5
  %s8 = scalar_select 0, %s7, %s5
  // Predicated region
  $region2: #{resnet18_forward.37} parent=0 // pred_check
    _
  $region3: #{resnet18_forward.37} parent=0 // pred_check_branch
    %10 = sbr.rel (0) target = $region5
  $region4: #{resnet18_forward.37} parent=0 // pred_region
    _
  $region5: #{resnet18_forward.37} parent=0 // pred_fallthru
    _
  // Predicated region
  $region6: #{resnet18_forward.37} parent=0 // pred_check
    _
  $region7: #{resnet18_forward.37} parent=0 // pred_check_branch
    %12 = sbr.rel (0) target = $region9
  $region8: #{resnet18_forward.37} parent=0 // pred_region
    _
  $region9: #{resnet18_forward.37} parent=0 // pred_fallthru
    _
  // Predicated region
  $region10: #{resnet18_forward.37} parent=0 // pred_check
    _
  $region11: #{resnet18_forward.37} parent=0 // pred_check_branch
    %14 = sbr.rel (0) target = $region13
  $region12: #{resnet18_forward.37} parent=0 // pred_region
    _
  $region13: #{resnet18_forward.37} parent=0 // pred_fallthru
    _
  // Predicated region
  $region14: #{resnet18_forward.37} parent=0 // pred_check
    _
  $region15: #{resnet18_forward.37} parent=0 // pred_check_branch
    %16 = sbr.rel (0) target = $region17
  $region16: #{resnet18_forward.37} parent=0 // pred_region
    _
  $region17: #{resnet18_forward.37} parent=0 // pred_fallthru
    _
  %v18 = vld [vmem:[%s0] sm:$0xf]
  %v19 = vld [vmem:[%s0 + $0x4] sm:$0xf]
  %v20 = vld [vmem:[%s0 + $0x8] sm:$0xf]
  %v21 = vld [vmem:[%s0 + $0xc] sm:$0xf]
  %v22 = vld [vmem:[%s0 + $0x10] sm:$0xf]
  %v23 = vld [vmem:[%s0 + $0x14] sm:$0xf]
  %v24 = vld [vmem:[%s0 + $0x18] sm:$0xf]
  %v25 = vld [vmem:[%s0 + $0x1c] sm:$0xf]
  %v26 = vld [vmem:[%s3] sm:$0xf]
  %v27 = vld [vmem:[%s3 + $0x4] sm:$0xf]
  %v28 = vld [vmem:[%s3 + $0x8] sm:$0xf]
  %v29 = vld [vmem:[%s3 + $0xc] sm:$0xf]
  %v38 = vunpack.c.l.b16 %v18
  %v39 = vunpack.c.l.b16 %v19
  %v40 = vunpack.c.l.b16 %v20
  %v41 = vunpack.c.l.b16 %v21
  %v42 = vunpack.c.l.b16 %v22
  %v43 = vunpack.c.l.b16 %v23
  %v44 = vunpack.c.l.b16 %v24
  %v45 = vunpack.c.l.b16 %v25
  %v46 = vpack.c.b16 %v39, %v38
  %v47 = vpack.c.b16 %v41, %v40
  %v48 = vpack.c.b16 %v43, %v42
  %v49 = vpack.c.b16 %v45, %v44
  %v54 = vunpack.c.l.b16 %v26
  %v55 = vunpack.c.l.b16 %v27
  %v56 = vunpack.c.l.b16 %v28
  %v57 = vunpack.c.l.b16 %v29
  %v58 = vpack.c.b16 %v55, %v54
  %v59 = vpack.c.b16 %v57, %v56
  %vm62 = vcmask 261120
  %v64 = vsel %vm62, %v46, 0
  %v67 = vsel %vm62, %v47, 0
  %v70 = vsel %vm62, %v48, 0
  %v73 = vsel %vm62, %v49, 0
  %75 = vmatpush.bf16.msra.mxu0 0
  %76 = vmatpush.bf16.msra.mxu0 0
  %77 = vmatpush.bf16.msra.mxu0 0
  %78 = vmatpush.bf16.msra.mxu0 0
  %79 = vmatpush.bf16.msra.mxu0 0
  %80 = vmatpush.bf16.msra.mxu0 0
  %81 = vmatpush.bf16.msra.mxu0 %v59
  %82 = vmatpush.bf16.msra.mxu0 %v58
  %83 = vmatmul.bf16.gmra.mxu0 %v64
  %v84 = vpop.f32.mrf.mxu0
  %v85 = vadd.f32 0.0, %v84
  %v86 = vpop.f32.mrf.mxu0
  %v87 = vadd.f32 0.0, %v86
  %88 = vmatmul.bf16.gmra.mxu0 %v67
  %v89 = vpop.f32.mrf.mxu0
  %v90 = vadd.f32 0.0, %v89
  %v91 = vpop.f32.mrf.mxu0
  %v92 = vadd.f32 0.0, %v91
  %93 = vmatmul.bf16.gmra.mxu0 %v70
  %v94 = vpop.f32.mrf.mxu0
  %v95 = vadd.f32 0.0, %v94
  %v96 = vpop.f32.mrf.mxu0
  %v97 = vadd.f32 0.0, %v96
  %98 = vmatmul.bf16.gmra.mxu0 %v73
  %v99 = vpop.f32.mrf.mxu0
  %v100 = vadd.f32 0.0, %v99
  %v101 = vpop.f32.mrf.mxu0
  %v102 = vadd.f32 0.0, %v101
  %103 = vdwg.mxu0
  %v104 = vld [vmem:[%s1] sm:$0xff]
  %v105 = vld [vmem:[%s1 + $0x8] sm:$0xff]
  %v106 = vld [vmem:[%s1 + $0x10] sm:$0xff]
  %v107 = vld [vmem:[%s1 + $0x18] sm:$0xff]
  %v108 = vld [vmem:[%s1 + $0x20] sm:$0xff]
  %v109 = vld [vmem:[%s1 + $0x28] sm:$0xff]
  %v110 = vld [vmem:[%s1 + $0x30] sm:$0xff]
  %v111 = vld [vmem:[%s1 + $0x38] sm:$0xff]
  %113 = vset.pattern.permute.xlu0 0
  %114 = vperm.xlu0 %113, %v104
  %v115 = vpop.permute.xlu0 %114
  %118 = vset.pattern.permute.xlu0 0
  %119 = vperm.xlu0 %118, %v105
  %v120 = vpop.permute.xlu0 %119
  %123 = vset.pattern.permute.xlu0 0
  %124 = vperm.xlu0 %123, %v106
  %v125 = vpop.permute.xlu0 %124
  %128 = vset.pattern.permute.xlu0 0
  %129 = vperm.xlu0 %128, %v107
  %v130 = vpop.permute.xlu0 %129
  %133 = vset.pattern.permute.xlu0 0
  %134 = vperm.xlu0 %133, %v108
  %v135 = vpop.permute.xlu0 %134
  %138 = vset.pattern.permute.xlu0 0
  %139 = vperm.xlu0 %138, %v109
  %v140 = vpop.permute.xlu0 %139
  %143 = vset.pattern.permute.xlu0 0
  %144 = vperm.xlu0 %143, %v110
  %v145 = vpop.permute.xlu0 %144
  %148 = vset.pattern.permute.xlu0 0
  %149 = vperm.xlu0 %148, %v111
  %v150 = vpop.permute.xlu0 %149
  %v152 = vmul.f32 %v85, %v115
  %v153 = vmul.f32 %v87, %v120
  %v154 = vmul.f32 %v90, %v125
  %v155 = vmul.f32 %v92, %v130
  %v156 = vmul.f32 %v95, %v135
  %v157 = vmul.f32 %v97, %v140
  %v158 = vmul.f32 %v100, %v145
  %v159 = vmul.f32 %v102, %v150
  %v160 = vld [vmem:[%s2] sm:$0xff]
  %v161 = vld [vmem:[%s2 + $0x8] sm:$0xff]
  %v162 = vld [vmem:[%s2 + $0x10] sm:$0xff]
  %v163 = vld [vmem:[%s2 + $0x18] sm:$0xff]
  %v164 = vld [vmem:[%s2 + $0x20] sm:$0xff]
  %v165 = vld [vmem:[%s2 + $0x28] sm:$0xff]
  %v166 = vld [vmem:[%s2 + $0x30] sm:$0xff]
  %v167 = vld [vmem:[%s2 + $0x38] sm:$0xff]
  %169 = vset.pattern.permute.xlu0 0
  %170 = vperm.xlu0 %169, %v160
  %v171 = vpop.permute.xlu0 %170
  %174 = vset.pattern.permute.xlu0 0
  %175 = vperm.xlu0 %174, %v161
  %v176 = vpop.permute.xlu0 %175
  %179 = vset.pattern.permute.xlu0 0
  %180 = vperm.xlu0 %179, %v162
  %v181 = vpop.permute.xlu0 %180
  %184 = vset.pattern.permute.xlu0 0
  %185 = vperm.xlu0 %184, %v163
  %v186 = vpop.permute.xlu0 %185
  %189 = vset.pattern.permute.xlu0 0
  %190 = vperm.xlu0 %189, %v164
  %v191 = vpop.permute.xlu0 %190
  %194 = vset.pattern.permute.xlu0 0
  %195 = vperm.xlu0 %194, %v165
  %v196 = vpop.permute.xlu0 %195
  %199 = vset.pattern.permute.xlu0 0
  %200 = vperm.xlu0 %199, %v166
  %v201 = vpop.permute.xlu0 %200
  %204 = vset.pattern.permute.xlu0 0
  %205 = vperm.xlu0 %204, %v167
  %v206 = vpop.permute.xlu0 %205
  %v208 = vadd.f32 %v152, %v171
  %v209 = vadd.f32 %v153, %v176
  %v210 = vadd.f32 %v154, %v181
  %v211 = vadd.f32 %v155, %v186
  %v212 = vadd.f32 %v156, %v191
  %v213 = vadd.f32 %v157, %v196
  %v214 = vadd.f32 %v158, %v201
  %v215 = vadd.f32 %v159, %v206
  %216 = vst.msk [vmem:[%s4] sm:$0xff] %vm62, %v208
  %217 = vst.msk [vmem:[%s4 + $0x8] sm:$0xff] %vm62, %v209
  %218 = vst.msk [vmem:[%s4 + $0x10] sm:$0xff] %vm62, %v210
  %219 = vst.msk [vmem:[%s4 + $0x18] sm:$0xff] %vm62, %v211
  %220 = vst.msk [vmem:[%s4 + $0x20] sm:$0xff] %vm62, %v212
  %221 = vst.msk [vmem:[%s4 + $0x28] sm:$0xff] %vm62, %v213
  %222 = vst.msk [vmem:[%s4 + $0x30] sm:$0xff] %vm62, %v214
  %223 = vst.msk [vmem:[%s4 + $0x38] sm:$0xff] %vm62, %v215
  // Predicated region
  $region18: #{resnet18_forward.37} parent=0 // pred_check
    _
  $region19: #{resnet18_forward.37} parent=0 // pred_check_branch
    %225 = sbr.rel (0) target = $region21
  $region20: #{resnet18_forward.37} parent=0 // pred_region
    _
  $region21: #{resnet18_forward.37} parent=0 // pred_fallthru
    _
  // Predicated region
  $region22: #{resnet18_forward.37} parent=0 // pred_check
    _
  $region23: #{resnet18_forward.37} parent=0 // pred_check_branch
    %227 = sbr.rel (0) target = $region25
  $region24: #{resnet18_forward.37} parent=0 // pred_region
    _
  $region25: #{resnet18_forward.37} parent=0 // pred_fallthru
    _

// kernel: resnet18_forward.39
$region0: #{resnet18_forward.39}
  #allocation0 [shape = 'u32[]', space=smem, size = 0x4, offset = 0x4, fixed_abs, tag = 'smem constant byte address 0x4 - core index']
  #allocation1 [shape = 'u32[72,128]{1,0:T(1,128)}', space=vmem, size = 0x9000, scoped, tag = 'internal scratch']
  %s0 = inlined_call_operand.vmem [shape: bf16[64,576], index: 0, kind: input, shape index: {}]
  %s1 = inlined_call_operand.vmem [shape: f32[64,1], index: 1, kind: input, shape index: {}]
  %s2 = inlined_call_operand.vmem [shape: f32[64,1], index: 2, kind: input, shape index: {}]
  %s3 = inlined_call_operand.vmem [shape: bf16[576,32], index: 3, kind: input, shape index: {}]
  %s4 = inlined_call_operand.vmem [shape: f32[64,32], index: 4, kind: output, shape index: {}]
  %s5 = sld [smem:[#allocation0]]
  $region26: #{resnet18_forward.39} parent=0
    _
  %s7 = ssub.s32 1, %s5
  %s8 = scalar_select 0, %s7, %s5
  // Predicated region
  $region2: #{resnet18_forward.39} parent=0 // pred_check
    _
  $region3: #{resnet18_forward.39} parent=0 // pred_check_branch
    %10 = sbr.rel (0) target = $region5
  $region4: #{resnet18_forward.39} parent=0 // pred_region
    _
  $region5: #{resnet18_forward.39} parent=0 // pred_fallthru
    _
  // Predicated region
  $region6: #{resnet18_forward.39} parent=0 // pred_check
    _
  $region7: #{resnet18_forward.39} parent=0 // pred_check_branch
    %12 = sbr.rel (0) target = $region9
  $region8: #{resnet18_forward.39} parent=0 // pred_region
    _
  $region9: #{resnet18_forward.39} parent=0 // pred_fallthru
    _
  // Predicated region
  $region10: #{resnet18_forward.39} parent=0 // pred_check
    _
  $region11: #{resnet18_forward.39} parent=0 // pred_check_branch
    %14 = sbr.rel (0) target = $region13
  $region12: #{resnet18_forward.39} parent=0 // pred_region
    _
  $region13: #{resnet18_forward.39} parent=0 // pred_fallthru
    _
  // Predicated region
  $region14: #{resnet18_forward.39} parent=0 // pred_check
    _
  $region15: #{resnet18_forward.39} parent=0 // pred_check_branch
    %16 = sbr.rel (0) target = $region17
  $region16: #{resnet18_forward.39} parent=0 // pred_region
    _
  $region17: #{resnet18_forward.39} parent=0 // pred_fallthru
    _
  %v18 = vld [vmem:[%s0] sm:$0xff]
  %v19 = vld [vmem:[%s0 + $0x8] sm:$0xff]
  %v20 = vld [vmem:[%s0 + $0x10] sm:$0xf]
  %v21 = vld [vmem:[%s0 + $0x14] sm:$0xff]
  %v22 = vld [vmem:[%s0 + $0x1c] sm:$0xff]
  %v23 = vld [vmem:[%s0 + $0x24] sm:$0xf]
  %v24 = vld [vmem:[%s0 + $0x28] sm:$0xff]
  %v25 = vld [vmem:[%s0 + $0x30] sm:$0xff]
  %v26 = vld [vmem:[%s0 + $0x38] sm:$0xf]
  %v27 = vld [vmem:[%s0 + $0x3c] sm:$0xff]
  %v28 = vld [vmem:[%s0 + $0x44] sm:$0xff]
  %v29 = vld [vmem:[%s0 + $0x4c] sm:$0xf]
  %v30 = vld [vmem:[%s0 + $0x50] sm:$0xff]
  %v31 = vld [vmem:[%s0 + $0x58] sm:$0xff]
  %v32 = vld [vmem:[%s0 + $0x60] sm:$0xf]
  %v33 = vld [vmem:[%s0 + $0x64] sm:$0xff]
  %v34 = vld [vmem:[%s0 + $0x6c] sm:$0xff]
  %v35 = vld [vmem:[%s0 + $0x74] sm:$0xf]
  %v36 = vld [vmem:[%s0 + $0x78] sm:$0xff]
  %v37 = vld [vmem:[%s0 + $0x80] sm:$0xff]
  %v38 = vld [vmem:[%s0 + $0x88] sm:$0xf]
  %v39 = vld [vmem:[%s0 + $0x8c] sm:$0xff]
  %v40 = vld [vmem:[%s0 + $0x94] sm:$0xff]
  %v41 = vld [vmem:[%s0 + $0x9c] sm:$0xf]
  %v42 = vld [vmem:[%s3] sm:$0xf]
  %v43 = vld [vmem:[%s3 + $0x4] sm:$0xf]
  %v44 = vld [vmem:[%s3 + $0x8] sm:$0xf]
  %v45 = vld [vmem:[%s3 + $0xc] sm:$0xf]
  %v46 = vld [vmem:[%s3 + $0x10] sm:$0xf]
  %v47 = vld [vmem:[%s3 + $0x14] sm:$0xf]
  %v48 = vld [vmem:[%s3 + $0x18] sm:$0xf]
  %v49 = vld [vmem:[%s3 + $0x1c] sm:$0xf]
  %v50 = vld [vmem:[%s3 + $0x20] sm:$0xf]
  %v51 = vld [vmem:[%s3 + $0x24] sm:$0xf]
  %v52 = vld [vmem:[%s3 + $0x28] sm:$0xf]
  %v53 = vld [vmem:[%s3 + $0x2c] sm:$0xf]
  %v54 = vld [vmem:[%s3 + $0x30] sm:$0xf]
  %v55 = vld [vmem:[%s3 + $0x34] sm:$0xf]
  %v56 = vld [vmem:[%s3 + $0x38] sm:$0xf]
  %v57 = vld [vmem:[%s3 + $0x3c] sm:$0xf]
  %v58 = vld [vmem:[%s3 + $0x40] sm:$0xf]
  %v59 = vld [vmem:[%s3 + $0x44] sm:$0xf]
  %v60 = vld [vmem:[%s3 + $0x48] sm:$0xf]
  %v61 = vld [vmem:[%s3 + $0x4c] sm:$0xf]
  %v62 = vld [vmem:[%s3 + $0x50] sm:$0xf]
  %v63 = vld [vmem:[%s3 + $0x54] sm:$0xf]
  %v64 = vld [vmem:[%s3 + $0x58] sm:$0xf]
  %v65 = vld [vmem:[%s3 + $0x5c] sm:$0xf]
  %v66 = vld [vmem:[%s3 + $0x60] sm:$0xf]
  %v67 = vld [vmem:[%s3 + $0x64] sm:$0xf]
  %v68 = vld [vmem:[%s3 + $0x68] sm:$0xf]
  %v69 = vld [vmem:[%s3 + $0x6c] sm:$0xf]
  %v70 = vld [vmem:[%s3 + $0x70] sm:$0xf]
  %v71 = vld [vmem:[%s3 + $0x74] sm:$0xf]
  %v72 = vld [vmem:[%s3 + $0x78] sm:$0xf]
  %v73 = vld [vmem:[%s3 + $0x7c] sm:$0xf]
  %v74 = vld [vmem:[%s3 + $0x80] sm:$0xf]
  %v75 = vld [vmem:[%s3 + $0x84] sm:$0xf]
  %v76 = vld [vmem:[%s3 + $0x88] sm:$0xf]
  %v77 = vld [vmem:[%s3 + $0x8c] sm:$0xf]
  %v78 = vld [vmem:[%s3 + $0x90] sm:$0xf]
  %v79 = vld [vmem:[%s3 + $0x94] sm:$0xf]
  %v80 = vld [vmem:[%s3 + $0x98] sm:$0xf]
  %v81 = vld [vmem:[%s3 + $0x9c] sm:$0xf]
  %v82 = vld [vmem:[%s3 + $0xa0] sm:$0xf]
  %v83 = vld [vmem:[%s3 + $0xa4] sm:$0xf]
  %v84 = vld [vmem:[%s3 + $0xa8] sm:$0xf]
  %v85 = vld [vmem:[%s3 + $0xac] sm:$0xf]
  %v86 = vld [vmem:[%s3 + $0xb0] sm:$0xf]
  %v87 = vld [vmem:[%s3 + $0xb4] sm:$0xf]
  %v88 = vld [vmem:[%s3 + $0xb8] sm:$0xf]
  %v89 = vld [vmem:[%s3 + $0xbc] sm:$0xf]
  %v90 = vld [vmem:[%s3 + $0xc0] sm:$0xf]
  %v91 = vld [vmem:[%s3 + $0xc4] sm:$0xf]
  %v92 = vld [vmem:[%s3 + $0xc8] sm:$0xf]
  %v93 = vld [vmem:[%s3 + $0xcc] sm:$0xf]
  %v94 = vld [vmem:[%s3 + $0xd0] sm:$0xf]
  %v95 = vld [vmem:[%s3 + $0xd4] sm:$0xf]
  %v96 = vld [vmem:[%s3 + $0xd8] sm:$0xf]
  %v97 = vld [vmem:[%s3 + $0xdc] sm:$0xf]
  %v98 = vld [vmem:[%s3 + $0xe0] sm:$0xf]
  %v99 = vld [vmem:[%s3 + $0xe4] sm:$0xf]
  %v100 = vld [vmem:[%s3 + $0xe8] sm:$0xf]
  %v101 = vld [vmem:[%s3 + $0xec] sm:$0xf]
  %v102 = vld [vmem:[%s3 + $0xf0] sm:$0xf]
  %v103 = vld [vmem:[%s3 + $0xf4] sm:$0xf]
  %v104 = vld [vmem:[%s3 + $0xf8] sm:$0xf]
  %v105 = vld [vmem:[%s3 + $0xfc] sm:$0xf]
  %v106 = vld [vmem:[%s3 + $0x100] sm:$0xf]
  %v107 = vld [vmem:[%s3 + $0x104] sm:$0xf]
  %v108 = vld [vmem:[%s3 + $0x108] sm:$0xf]
  %v109 = vld [vmem:[%s3 + $0x10c] sm:$0xf]
  %v110 = vld [vmem:[%s3 + $0x110] sm:$0xf]
  %v111 = vld [vmem:[%s3 + $0x114] sm:$0xf]
  %v112 = vld [vmem:[%s3 + $0x118] sm:$0xf]
  %v113 = vld [vmem:[%s3 + $0x11c] sm:$0xf]
  %v138 = vunpack.c.l.b16 %v18
  %v139 = vunpack.c.h.b16 %v18
  %v140 = vunpack.c.l.b16 %v19
  %v141 = vunpack.c.h.b16 %v19
  %v142 = vunpack.c.l.b16 %v20
  %v143 = vunpack.c.l.b16 %v21
  %v144 = vunpack.c.h.b16 %v21
  %v145 = vunpack.c.l.b16 %v22
  %v146 = vunpack.c.h.b16 %v22
  %v147 = vunpack.c.l.b16 %v23
  %v148 = vunpack.c.l.b16 %v24
  %v149 = vunpack.c.h.b16 %v24
  %v150 = vunpack.c.l.b16 %v25
  %v151 = vunpack.c.h.b16 %v25
  %v152 = vunpack.c.l.b16 %v26
  %v153 = vunpack.c.l.b16 %v27
  %v154 = vunpack.c.h.b16 %v27
  %v155 = vunpack.c.l.b16 %v28
  %v156 = vunpack.c.h.b16 %v28
  %v157 = vunpack.c.l.b16 %v29
  %v158 = vunpack.c.l.b16 %v30
  %v159 = vunpack.c.h.b16 %v30
  %v160 = vunpack.c.l.b16 %v31
  %v161 = vunpack.c.h.b16 %v31
  %v162 = vunpack.c.l.b16 %v32
  %v163 = vunpack.c.l.b16 %v33
  %v164 = vunpack.c.h.b16 %v33
  %v165 = vunpack.c.l.b16 %v34
  %v166 = vunpack.c.h.b16 %v34
  %v167 = vunpack.c.l.b16 %v35
  %v168 = vunpack.c.l.b16 %v36
  %v169 = vunpack.c.h.b16 %v36
  %v170 = vunpack.c.l.b16 %v37
  %v171 = vunpack.c.h.b16 %v37
  %v172 = vunpack.c.l.b16 %v38
  %v173 = vunpack.c.l.b16 %v39
  %v174 = vunpack.c.h.b16 %v39
  %v175 = vunpack.c.l.b16 %v40
  %v176 = vunpack.c.h.b16 %v40
  %v177 = vunpack.c.l.b16 %v41
  %v178 = vpack.c.b16 %v143, %v138
  %v179 = vpack.c.b16 %v144, %v139
  %v180 = vpack.c.b16 %v145, %v140
  %v181 = vpack.c.b16 %v146, %v141
  %v182 = vpack.c.b16 %v147, %v142
  %v183 = vpack.c.b16 %v153, %v148
  %v184 = vpack.c.b16 %v154, %v149
  %v185 = vpack.c.b16 %v155, %v150
  %v186 = vpack.c.b16 %v156, %v151
  %v187 = vpack.c.b16 %v157, %v152
  %v188 = vpack.c.b16 %v163, %v158
  %v189 = vpack.c.b16 %v164, %v159
  %v190 = vpack.c.b16 %v165, %v160
  %v191 = vpack.c.b16 %v166, %v161
  %v192 = vpack.c.b16 %v167, %v162
  %v193 = vpack.c.b16 %v173, %v168
  %v194 = vpack.c.b16 %v174, %v169
  %v195 = vpack.c.b16 %v175, %v170
  %v196 = vpack.c.b16 %v176, %v171
  %v197 = vpack.c.b16 %v177, %v172
  %v286 = vunpack.c.l.b16 %v42
  %v287 = vunpack.c.l.b16 %v43
  %v288 = vunpack.c.l.b16 %v44
  %v289 = vunpack.c.l.b16 %v45
  %v290 = vunpack.c.l.b16 %v46
  %v291 = vunpack.c.l.b16 %v47
  %v292 = vunpack.c.l.b16 %v48
  %v293 = vunpack.c.l.b16 %v49
  %v294 = vunpack.c.l.b16 %v50
  %v295 = vunpack.c.l.b16 %v51
  %v296 = vunpack.c.l.b16 %v52
  %v297 = vunpack.c.l.b16 %v53
  %v298 = vunpack.c.l.b16 %v54
  %v299 = vunpack.c.l.b16 %v55
  %v300 = vunpack.c.l.b16 %v56
  %v301 = vunpack.c.l.b16 %v57
  %v302 = vunpack.c.l.b16 %v58
  %v303 = vunpack.c.l.b16 %v59
  %v304 = vunpack.c.l.b16 %v60
  %v305 = vunpack.c.l.b16 %v61
  %v306 = vunpack.c.l.b16 %v62
  %v307 = vunpack.c.l.b16 %v63
  %v308 = vunpack.c.l.b16 %v64
  %v309 = vunpack.c.l.b16 %v65
  %v310 = vunpack.c.l.b16 %v66
  %v311 = vunpack.c.l.b16 %v67
  %v312 = vunpack.c.l.b16 %v68
  %v313 = vunpack.c.l.b16 %v69
  %v314 = vunpack.c.l.b16 %v70
  %v315 = vunpack.c.l.b16 %v71
  %v316 = vunpack.c.l.b16 %v72
  %v317 = vunpack.c.l.b16 %v73
  %v318 = vunpack.c.l.b16 %v74
  %v319 = vunpack.c.l.b16 %v75
  %v320 = vunpack.c.l.b16 %v76
  %v321 = vunpack.c.l.b16 %v77
  %v322 = vunpack.c.l.b16 %v78
  %v323 = vunpack.c.l.b16 %v79
  %v324 = vunpack.c.l.b16 %v80
  %v325 = vunpack.c.l.b16 %v81
  %v326 = vunpack.c.l.b16 %v82
  %v327 = vunpack.c.l.b16 %v83
  %v328 = vunpack.c.l.b16 %v84
  %v329 = vunpack.c.l.b16 %v85
  %v330 = vunpack.c.l.b16 %v86
  %v331 = vunpack.c.l.b16 %v87
  %v332 = vunpack.c.l.b16 %v88
  %v333 = vunpack.c.l.b16 %v89
  %v334 = vunpack.c.l.b16 %v90
  %v335 = vunpack.c.l.b16 %v91
  %v336 = vunpack.c.l.b16 %v92
  %v337 = vunpack.c.l.b16 %v93
  %v338 = vunpack.c.l.b16 %v94
  %v339 = vunpack.c.l.b16 %v95
  %v340 = vunpack.c.l.b16 %v96
  %v341 = vunpack.c.l.b16 %v97
  %v342 = vunpack.c.l.b16 %v98
  %v343 = vunpack.c.l.b16 %v99
  %v344 = vunpack.c.l.b16 %v100
  %v345 = vunpack.c.l.b16 %v101
  %v346 = vunpack.c.l.b16 %v102
  %v347 = vunpack.c.l.b16 %v103
  %v348 = vunpack.c.l.b16 %v104
  %v349 = vunpack.c.l.b16 %v105
  %v350 = vunpack.c.l.b16 %v106
  %v351 = vunpack.c.l.b16 %v107
  %v352 = vunpack.c.l.b16 %v108
  %v353 = vunpack.c.l.b16 %v109
  %v354 = vunpack.c.l.b16 %v110
  %v355 = vunpack.c.l.b16 %v111
  %v356 = vunpack.c.l.b16 %v112
  %v357 = vunpack.c.l.b16 %v113
  %v358 = vpack.c.b16 %v287, %v286
  %v359 = vpack.c.b16 %v289, %v288
  %v360 = vpack.c.b16 %v291, %v290
  %v361 = vpack.c.b16 %v293, %v292
  %v362 = vpack.c.b16 %v295, %v294
  %v363 = vpack.c.b16 %v297, %v296
  %v364 = vpack.c.b16 %v299, %v298
  %v365 = vpack.c.b16 %v301, %v300
  %v366 = vpack.c.b16 %v303, %v302
  %v367 = vpack.c.b16 %v305, %v304
  %v368 = vpack.c.b16 %v307, %v306
  %v369 = vpack.c.b16 %v309, %v308
  %v370 = vpack.c.b16 %v311, %v310
  %v371 = vpack.c.b16 %v313, %v312
  %v372 = vpack.c.b16 %v315, %v314
  %v373 = vpack.c.b16 %v317, %v316
  %v374 = vpack.c.b16 %v319, %v318
  %v375 = vpack.c.b16 %v321, %v320
  %v376 = vpack.c.b16 %v323, %v322
  %v377 = vpack.c.b16 %v325, %v324
  %v378 = vpack.c.b16 %v327, %v326
  %v379 = vpack.c.b16 %v329, %v328
  %v380 = vpack.c.b16 %v331, %v330
  %v381 = vpack.c.b16 %v333, %v332
  %v382 = vpack.c.b16 %v335, %v334
  %v383 = vpack.c.b16 %v337, %v336
  %v384 = vpack.c.b16 %v339, %v338
  %v385 = vpack.c.b16 %v341, %v340
  %v386 = vpack.c.b16 %v343, %v342
  %v387 = vpack.c.b16 %v345, %v344
  %v388 = vpack.c.b16 %v347, %v346
  %v389 = vpack.c.b16 %v349, %v348
  %v390 = vpack.c.b16 %v351, %v350
  %v391 = vpack.c.b16 %v353, %v352
  %v392 = vpack.c.b16 %v355, %v354
  %v393 = vpack.c.b16 %v357, %v356
  %vm430 = vcmask 523264
  %v432 = vsel %vm430, %v182, 0
  %v435 = vsel %vm430, %v187, 0
  %v438 = vsel %vm430, %v192, 0
  %v441 = vsel %vm430, %v197, 0
  %443 = vmatpush.bf16.msra.mxu0 %v365
  %444 = vmatpush.bf16.msra.mxu0 %v364
  %445 = vmatpush.bf16.msra.mxu0 %v363
  %446 = vmatpush.bf16.msra.mxu0 %v362
  %447 = vmatpush.bf16.msra.mxu0 %v361
  %448 = vmatpush.bf16.msra.mxu0 %v360
  %449 = vmatpush.bf16.msra.mxu0 %v359
  %450 = vmatpush.bf16.msra.mxu0 %v358
  %451 = vmatmul.bf16.gmra.mxu0 %v178
  %v452 = vpop.f32.mrf.mxu0
  %v453 = vadd.f32 0.0, %v452
  %v454 = vpop.f32.mrf.mxu0
  %v455 = vadd.f32 0.0, %v454
  %456 = vmatmul.bf16.gmra.mxu0 %v183
  %v457 = vpop.f32.mrf.mxu0
  %v458 = vadd.f32 0.0, %v457
  %v459 = vpop.f32.mrf.mxu0
  %v460 = vadd.f32 0.0, %v459
  %461 = vmatmul.bf16.gmra.mxu0 %v188
  %v462 = vpop.f32.mrf.mxu0
  %v463 = vadd.f32 0.0, %v462
  %v464 = vpop.f32.mrf.mxu0
  %v465 = vadd.f32 0.0, %v464
  %466 = vmatmul.bf16.gmra.mxu0 %v193
  %v467 = vpop.f32.mrf.mxu0
  %v468 = vadd.f32 0.0, %v467
  %v469 = vpop.f32.mrf.mxu0
  %v470 = vadd.f32 0.0, %v469
  %471 = vdwg.mxu0
  %472 = vmatpush.bf16.msra.mxu0 %v373
  %473 = vmatpush.bf16.msra.mxu0 %v372
  %474 = vmatpush.bf16.msra.mxu0 %v371
  %475 = vmatpush.bf16.msra.mxu0 %v370
  %476 = vmatpush.bf16.msra.mxu0 %v369
  %477 = vmatpush.bf16.msra.mxu0 %v368
  %478 = vmatpush.bf16.msra.mxu0 %v367
  %479 = vmatpush.bf16.msra.mxu0 %v366
  %480 = vmatmul.bf16.gmra.mxu0 %v179
  %v481 = vpop.f32.mrf.mxu0
  %v482 = vadd.f32 %v453, %v481
  %v483 = vpop.f32.mrf.mxu0
  %v484 = vadd.f32 %v455, %v483
  %485 = vmatmul.bf16.gmra.mxu0 %v184
  %v486 = vpop.f32.mrf.mxu0
  %v487 = vadd.f32 %v458, %v486
  %v488 = vpop.f32.mrf.mxu0
  %v489 = vadd.f32 %v460, %v488
  %490 = vmatmul.bf16.gmra.mxu0 %v189
  %v491 = vpop.f32.mrf.mxu0
  %v492 = vadd.f32 %v463, %v491
  %v493 = vpop.f32.mrf.mxu0
  %v494 = vadd.f32 %v465, %v493
  %495 = vmatmul.bf16.gmra.mxu0 %v194
  %v496 = vpop.f32.mrf.mxu0
  %v497 = vadd.f32 %v468, %v496
  %v498 = vpop.f32.mrf.mxu0
  %v499 = vadd.f32 %v470, %v498
  %500 = vdwg.mxu0
  %501 = vmatpush.bf16.msra.mxu0 %v381
  %502 = vmatpush.bf16.msra.mxu0 %v380
  %503 = vmatpush.bf16.msra.mxu0 %v379
  %504 = vmatpush.bf16.msra.mxu0 %v378
  %505 = vmatpush.bf16.msra.mxu0 %v377
  %506 = vmatpush.bf16.msra.mxu0 %v376
  %507 = vmatpush.bf16.msra.mxu0 %v375
  %508 = vmatpush.bf16.msra.mxu0 %v374
  %509 = vmatmul.bf16.gmra.mxu0 %v180
  %v510 = vpop.f32.mrf.mxu0
  %v511 = vadd.f32 %v482, %v510
  %v512 = vpop.f32.mrf.mxu0
  %v513 = vadd.f32 %v484, %v512
  %514 = vmatmul.bf16.gmra.mxu0 %v185
  %v515 = vpop.f32.mrf.mxu0
  %v516 = vadd.f32 %v487, %v515
  %v517 = vpop.f32.mrf.mxu0
  %v518 = vadd.f32 %v489, %v517
  %519 = vmatmul.bf16.gmra.mxu0 %v190
  %v520 = vpop.f32.mrf.mxu0
  %v521 = vadd.f32 %v492, %v520
  %v522 = vpop.f32.mrf.mxu0
  %v523 = vadd.f32 %v494, %v522
  %524 = vmatmul.bf16.gmra.mxu0 %v195
  %v525 = vpop.f32.mrf.mxu0
  %v526 = vadd.f32 %v497, %v525
  %v527 = vpop.f32.mrf.mxu0
  %v528 = vadd.f32 %v499, %v527
  %529 = vdwg.mxu0
  %530 = vmatpush.bf16.msra.mxu0 %v389
  %531 = vmatpush.bf16.msra.mxu0 %v388
  %532 = vmatpush.bf16.msra.mxu0 %v387
  %533 = vmatpush.bf16.msra.mxu0 %v386
  %534 = vmatpush.bf16.msra.mxu0 %v385
  %535 = vmatpush.bf16.msra.mxu0 %v384
  %536 = vmatpush.bf16.msra.mxu0 %v383
  %537 = vmatpush.bf16.msra.mxu0 %v382
  %538 = vmatmul.bf16.gmra.mxu0 %v181
  %v539 = vpop.f32.mrf.mxu0
  %v540 = vadd.f32 %v511, %v539
  %v541 = vpop.f32.mrf.mxu0
  %v542 = vadd.f32 %v513, %v541
  %543 = vmatmul.bf16.gmra.mxu0 %v186
  %v544 = vpop.f32.mrf.mxu0
  %v545 = vadd.f32 %v516, %v544
  %v546 = vpop.f32.mrf.mxu0
  %v547 = vadd.f32 %v518, %v546
  %548 = vmatmul.bf16.gmra.mxu0 %v191
  %v549 = vpop.f32.mrf.mxu0
  %v550 = vadd.f32 %v521, %v549
  %v551 = vpop.f32.mrf.mxu0
  %v552 = vadd.f32 %v523, %v551
  %553 = vmatmul.bf16.gmra.mxu0 %v196
  %v554 = vpop.f32.mrf.mxu0
  %v555 = vadd.f32 %v526, %v554
  %v556 = vpop.f32.mrf.mxu0
  %v557 = vadd.f32 %v528, %v556
  %558 = vdwg.mxu0
  %559 = vmatpush.bf16.msra.mxu0 0
  %560 = vmatpush.bf16.msra.mxu0 0
  %561 = vmatpush.bf16.msra.mxu0 0
  %562 = vmatpush.bf16.msra.mxu0 0
  %563 = vmatpush.bf16.msra.mxu0 %v393
  %564 = vmatpush.bf16.msra.mxu0 %v392
  %565 = vmatpush.bf16.msra.mxu0 %v391
  %566 = vmatpush.bf16.msra.mxu0 %v390
  %567 = vmatmul.bf16.gmra.mxu0 %v432
  %v568 = vpop.f32.mrf.mxu0
  %v569 = vadd.f32 %v540, %v568
  %v570 = vpop.f32.mrf.mxu0
  %v571 = vadd.f32 %v542, %v570
  %572 = vmatmul.bf16.gmra.mxu0 %v435
  %v573 = vpop.f32.mrf.mxu0
  %v574 = vadd.f32 %v545, %v573
  %v575 = vpop.f32.mrf.mxu0
  %v576 = vadd.f32 %v547, %v575
  %577 = vmatmul.bf16.gmra.mxu0 %v438
  %v578 = vpop.f32.mrf.mxu0
  %v579 = vadd.f32 %v550, %v578
  %v580 = vpop.f32.mrf.mxu0
  %v581 = vadd.f32 %v552, %v580
  %582 = vmatmul.bf16.gmra.mxu0 %v441
  %v583 = vpop.f32.mrf.mxu0
  %v584 = vadd.f32 %v555, %v583
  %v585 = vpop.f32.mrf.mxu0
  %v586 = vadd.f32 %v557, %v585
  %587 = vdwg.mxu0
  %v588 = vld [vmem:[%s1] sm:$0xff]
  %v589 = vld [vmem:[%s1 + $0x8] sm:$0xff]
  %v590 = vld [vmem:[%s1 + $0x10] sm:$0xff]
  %v591 = vld [vmem:[%s1 + $0x18] sm:$0xff]
  %v592 = vld [vmem:[%s1 + $0x20] sm:$0xff]
  %v593 = vld [vmem:[%s1 + $0x28] sm:$0xff]
  %v594 = vld [vmem:[%s1 + $0x30] sm:$0xff]
  %v595 = vld [vmem:[%s1 + $0x38] sm:$0xff]
  %597 = vset.pattern.permute.xlu0 0
  %598 = vperm.xlu0 %597, %v588
  %v599 = vpop.permute.xlu0 %598
  %602 = vset.pattern.permute.xlu0 0
  %603 = vperm.xlu0 %602, %v589
  %v604 = vpop.permute.xlu0 %603
  %607 = vset.pattern.permute.xlu0 0
  %608 = vperm.xlu0 %607, %v590
  %v609 = vpop.permute.xlu0 %608
  %612 = vset.pattern.permute.xlu0 0
  %613 = vperm.xlu0 %612, %v591
  %v614 = vpop.permute.xlu0 %613
  %617 = vset.pattern.permute.xlu0 0
  %618 = vperm.xlu0 %617, %v592
  %v619 = vpop.permute.xlu0 %618
  %622 = vset.pattern.permute.xlu0 0
  %623 = vperm.xlu0 %622, %v593
  %v624 = vpop.permute.xlu0 %623
  %627 = vset.pattern.permute.xlu0 0
  %628 = vperm.xlu0 %627, %v594
  %v629 = vpop.permute.xlu0 %628
  %632 = vset.pattern.permute.xlu0 0
  %633 = vperm.xlu0 %632, %v595
  %v634 = vpop.permute.xlu0 %633
  %v636 = vmul.f32 %v569, %v599
  %v637 = vmul.f32 %v571, %v604
  %v638 = vmul.f32 %v574, %v609
  %v639 = vmul.f32 %v576, %v614
  %v640 = vmul.f32 %v579, %v619
  %v641 = vmul.f32 %v581, %v624
  %v642 = vmul.f32 %v584, %v629
  %v643 = vmul.f32 %v586, %v634
  %v644 = vld [vmem:[%s2] sm:$0xff]
  %v645 = vld [vmem:[%s2 + $0x8] sm:$0xff]
  %v646 = vld [vmem:[%s2 + $0x10] sm:$0xff]
  %v647 = vld [vmem:[%s2 + $0x18] sm:$0xff]
  %v648 = vld [vmem:[%s2 + $0x20] sm:$0xff]
  %v649 = vld [vmem:[%s2 + $0x28] sm:$0xff]
  %v650 = vld [vmem:[%s2 + $0x30] sm:$0xff]
  %v651 = vld [vmem:[%s2 + $0x38] sm:$0xff]
  %653 = vset.pattern.permute.xlu0 0
  %654 = vperm.xlu0 %653, %v644
  %v655 = vpop.permute.xlu0 %654
  %658 = vset.pattern.permute.xlu0 0
  %659 = vperm.xlu0 %658, %v645
  %v660 = vpop.permute.xlu0 %659
  %663 = vset.pattern.permute.xlu0 0
  %664 = vperm.xlu0 %663, %v646
  %v665 = vpop.permute.xlu0 %664
  %668 = vset.pattern.permute.xlu0 0
  %669 = vperm.xlu0 %668, %v647
  %v670 = vpop.permute.xlu0 %669
  %673 = vset.pattern.permute.xlu0 0
  %674 = vperm.xlu0 %673, %v648
  %v675 = vpop.permute.xlu0 %674
  %678 = vset.pattern.permute.xlu0 0
  %679 = vperm.xlu0 %678, %v649
  %v680 = vpop.permute.xlu0 %679
  %683 = vset.pattern.permute.xlu0 0
  %684 = vperm.xlu0 %683, %v650
  %v685 = vpop.permute.xlu0 %684
  %688 = vset.pattern.permute.xlu0 0
  %689 = vperm.xlu0 %688, %v651
  %v690 = vpop.permute.xlu0 %689
  %v692 = vadd.f32 %v636, %v655
  %v693 = vadd.f32 %v637, %v660
  %v694 = vadd.f32 %v638, %v665
  %v695 = vadd.f32 %v639, %v670
  %v696 = vadd.f32 %v640, %v675
  %v697 = vadd.f32 %v641, %v680
  %v698 = vadd.f32 %v642, %v685
  %v699 = vadd.f32 %v643, %v690
  %v700 = vmax.f32 %v692, 0.0
  %v701 = vmax.f32 %v693, 0.0
  %v702 = vmax.f32 %v694, 0.0
  %v703 = vmax.f32 %v695, 0.0
  %v704 = vmax.f32 %v696, 0.0
  %v705 = vmax.f32 %v697, 0.0
  %v706 = vmax.f32 %v698, 0.0
  %v707 = vmax.f32 %v699, 0.0
  %vm708 = vcmask 261120
  %709 = vst.msk [vmem:[%s4] sm:$0xff] %vm708, %v700
  %710 = vst.msk [vmem:[%s4 + $0x8] sm:$0xff] %vm708, %v701
  %711 = vst.msk [vmem:[%s4 + $0x10] sm:$0xff] %vm708, %v702
  %712 = vst.msk [vmem:[%s4 + $0x18] sm:$0xff] %vm708, %v703
  %713 = vst.msk [vmem:[%s4 + $0x20] sm:$0xff] %vm708, %v704
  %714 = vst.msk [vmem:[%s4 + $0x28] sm:$0xff] %vm708, %v705
  %715 = vst.msk [vmem:[%s4 + $0x30] sm:$0xff] %vm708, %v706
  %716 = vst.msk [vmem:[%s4 + $0x38] sm:$0xff] %vm708, %v707
  // Predicated region
  $region18: #{resnet18_forward.39} parent=0 // pred_check
    _
  $region19: #{resnet18_forward.39} parent=0 // pred_check_branch
    %718 = sbr.rel (0) target = $region21
  $region20: #{resnet18_forward.39} parent=0 // pred_region
    _
  $region21: #{resnet18_forward.39} parent=0 // pred_fallthru
    _
  // Predicated region
  $region22: #{resnet18_forward.39} parent=0 // pred_check
    _
  $region23: #{resnet18_forward.39} parent=0 // pred_check_branch
    %720 = sbr.rel (0) target = $region25
  $region24: #{resnet18_forward.39} parent=0 // pred_region
    _
  $region25: #{resnet18_forward.39} parent=0 // pred_fallthru
    _

// kernel: resnet18_forward.38
$region0: #{resnet18_forward.38}
  #allocation0 [shape = 'u32[]', space=smem, size = 0x4, offset = 0x4, fixed_abs, tag = 'smem constant byte address 0x4 - core index']
  #allocation1 [shape = 'u32[72,128]{1,0:T(1,128)}', space=vmem, size = 0x9000, scoped, tag = 'internal scratch']
  %s0 = inlined_call_operand.vmem [shape: bf16[64,576], index: 0, kind: input, shape index: {}]
  %s1 = inlined_call_operand.vmem [shape: f32[64,1], index: 1, kind: input, shape index: {}]
  %s2 = inlined_call_operand.vmem [shape: f32[64,1], index: 2, kind: input, shape index: {}]
  %s3 = inlined_call_operand.vmem [shape: bf16[576,32], index: 3, kind: input, shape index: {}]
  %s4 = inlined_call_operand.vmem [shape: f32[64,32], index: 4, kind: input, shape index: {}]
  %s5 = inlined_call_operand.vmem [shape: f32[64,32], index: 5, kind: output, shape index: {}]
  %s6 = sld [smem:[#allocation0]]
  $region30: #{resnet18_forward.38} parent=0
    _
  %s8 = ssub.s32 1, %s6
  %s9 = scalar_select 0, %s8, %s6
  // Predicated region
  $region2: #{resnet18_forward.38} parent=0 // pred_check
    _
  $region3: #{resnet18_forward.38} parent=0 // pred_check_branch
    %11 = sbr.rel (0) target = $region5
  $region4: #{resnet18_forward.38} parent=0 // pred_region
    _
  $region5: #{resnet18_forward.38} parent=0 // pred_fallthru
    _
  // Predicated region
  $region6: #{resnet18_forward.38} parent=0 // pred_check
    _
  $region7: #{resnet18_forward.38} parent=0 // pred_check_branch
    %13 = sbr.rel (0) target = $region9
  $region8: #{resnet18_forward.38} parent=0 // pred_region
    _
  $region9: #{resnet18_forward.38} parent=0 // pred_fallthru
    _
  // Predicated region
  $region10: #{resnet18_forward.38} parent=0 // pred_check
    _
  $region11: #{resnet18_forward.38} parent=0 // pred_check_branch
    %15 = sbr.rel (0) target = $region13
  $region12: #{resnet18_forward.38} parent=0 // pred_region
    _
  $region13: #{resnet18_forward.38} parent=0 // pred_fallthru
    _
  // Predicated region
  $region14: #{resnet18_forward.38} parent=0 // pred_check
    _
  $region15: #{resnet18_forward.38} parent=0 // pred_check_branch
    %17 = sbr.rel (0) target = $region17
  $region16: #{resnet18_forward.38} parent=0 // pred_region
    _
  $region17: #{resnet18_forward.38} parent=0 // pred_fallthru
    _
  // Predicated region
  $region18: #{resnet18_forward.38} parent=0 // pred_check
    _
  $region19: #{resnet18_forward.38} parent=0 // pred_check_branch
    %19 = sbr.rel (0) target = $region21
  $region20: #{resnet18_forward.38} parent=0 // pred_region
    _
  $region21: #{resnet18_forward.38} parent=0 // pred_fallthru
    _
  %v21 = vld [vmem:[%s0] sm:$0xff]
  %v22 = vld [vmem:[%s0 + $0x8] sm:$0xff]
  %v23 = vld [vmem:[%s0 + $0x10] sm:$0xf]
  %v24 = vld [vmem:[%s0 + $0x14] sm:$0xff]
  %v25 = vld [vmem:[%s0 + $0x1c] sm:$0xff]
  %v26 = vld [vmem:[%s0 + $0x24] sm:$0xf]
  %v27 = vld [vmem:[%s0 + $0x28] sm:$0xff]
  %v28 = vld [vmem:[%s0 + $0x30] sm:$0xff]
  %v29 = vld [vmem:[%s0 + $0x38] sm:$0xf]
  %v30 = vld [vmem:[%s0 + $0x3c] sm:$0xff]
  %v31 = vld [vmem:[%s0 + $0x44] sm:$0xff]
  %v32 = vld [vmem:[%s0 + $0x4c] sm:$0xf]
  %v33 = vld [vmem:[%s0 + $0x50] sm:$0xff]
  %v34 = vld [vmem:[%s0 + $0x58] sm:$0xff]
  %v35 = vld [vmem:[%s0 + $0x60] sm:$0xf]
  %v36 = vld [vmem:[%s0 + $0x64] sm:$0xff]
  %v37 = vld [vmem:[%s0 + $0x6c] sm:$0xff]
  %v38 = vld [vmem:[%s0 + $0x74] sm:$0xf]
  %v39 = vld [vmem:[%s0 + $0x78] sm:$0xff]
  %v40 = vld [vmem:[%s0 + $0x80] sm:$0xff]
  %v41 = vld [vmem:[%s0 + $0x88] sm:$0xf]
  %v42 = vld [vmem:[%s0 + $0x8c] sm:$0xff]
  %v43 = vld [vmem:[%s0 + $0x94] sm:$0xff]
  %v44 = vld [vmem:[%s0 + $0x9c] sm:$0xf]
  %v45 = vld [vmem:[%s3] sm:$0xf]
  %v46 = vld [vmem:[%s3 + $0x4] sm:$0xf]
  %v47 = vld [vmem:[%s3 + $0x8] sm:$0xf]
  %v48 = vld [vmem:[%s3 + $0xc] sm:$0xf]
  %v49 = vld [vmem:[%s3 + $0x10] sm:$0xf]
  %v50 = vld [vmem:[%s3 + $0x14] sm:$0xf]
  %v51 = vld [vmem:[%s3 + $0x18] sm:$0xf]
  %v52 = vld [vmem:[%s3 + $0x1c] sm:$0xf]
  %v53 = vld [vmem:[%s3 + $0x20] sm:$0xf]
  %v54 = vld [vmem:[%s3 + $0x24] sm:$0xf]
  %v55 = vld [vmem:[%s3 + $0x28] sm:$0xf]
  %v56 = vld [vmem:[%s3 + $0x2c] sm:$0xf]
  %v57 = vld [vmem:[%s3 + $0x30] sm:$0xf]
  %v58 = vld [vmem:[%s3 + $0x34] sm:$0xf]
  %v59 = vld [vmem:[%s3 + $0x38] sm:$0xf]
  %v60 = vld [vmem:[%s3 + $0x3c] sm:$0xf]
  %v61 = vld [vmem:[%s3 + $0x40] sm:$0xf]
  %v62 = vld [vmem:[%s3 + $0x44] sm:$0xf]
  %v63 = vld [vmem:[%s3 + $0x48] sm:$0xf]
  %v64 = vld [vmem:[%s3 + $0x4c] sm:$0xf]
  %v65 = vld [vmem:[%s3 + $0x50] sm:$0xf]
  %v66 = vld [vmem:[%s3 + $0x54] sm:$0xf]
  %v67 = vld [vmem:[%s3 + $0x58] sm:$0xf]
  %v68 = vld [vmem:[%s3 + $0x5c] sm:$0xf]
  %v69 = vld [vmem:[%s3 + $0x60] sm:$0xf]
  %v70 = vld [vmem:[%s3 + $0x64] sm:$0xf]
  %v71 = vld [vmem:[%s3 + $0x68] sm:$0xf]
  %v72 = vld [vmem:[%s3 + $0x6c] sm:$0xf]
  %v73 = vld [vmem:[%s3 + $0x70] sm:$0xf]
  %v74 = vld [vmem:[%s3 + $0x74] sm:$0xf]
  %v75 = vld [vmem:[%s3 + $0x78] sm:$0xf]
  %v76 = vld [vmem:[%s3 + $0x7c] sm:$0xf]
  %v77 = vld [vmem:[%s3 + $0x80] sm:$0xf]
  %v78 = vld [vmem:[%s3 + $0x84] sm:$0xf]
  %v79 = vld [vmem:[%s3 + $0x88] sm:$0xf]
  %v80 = vld [vmem:[%s3 + $0x8c] sm:$0xf]
  %v81 = vld [vmem:[%s3 + $0x90] sm:$0xf]
  %v82 = vld [vmem:[%s3 + $0x94] sm:$0xf]
  %v83 = vld [vmem:[%s3 + $0x98] sm:$0xf]
  %v84 = vld [vmem:[%s3 + $0x9c] sm:$0xf]
  %v85 = vld [vmem:[%s3 + $0xa0] sm:$0xf]
  %v86 = vld [vmem:[%s3 + $0xa4] sm:$0xf]
  %v87 = vld [vmem:[%s3 + $0xa8] sm:$0xf]
  %v88 = vld [vmem:[%s3 + $0xac] sm:$0xf]
  %v89 = vld [vmem:[%s3 + $0xb0] sm:$0xf]
  %v90 = vld [vmem:[%s3 + $0xb4] sm:$0xf]
  %v91 = vld [vmem:[%s3 + $0xb8] sm:$0xf]
  %v92 = vld [vmem:[%s3 + $0xbc] sm:$0xf]
  %v93 = vld [vmem:[%s3 + $0xc0] sm:$0xf]
  %v94 = vld [vmem:[%s3 + $0xc4] sm:$0xf]
  %v95 = vld [vmem:[%s3 + $0xc8] sm:$0xf]
  %v96 = vld [vmem:[%s3 + $0xcc] sm:$0xf]
  %v97 = vld [vmem:[%s3 + $0xd0] sm:$0xf]
  %v98 = vld [vmem:[%s3 + $0xd4] sm:$0xf]
  %v99 = vld [vmem:[%s3 + $0xd8] sm:$0xf]
  %v100 = vld [vmem:[%s3 + $0xdc] sm:$0xf]
  %v101 = vld [vmem:[%s3 + $0xe0] sm:$0xf]
  %v102 = vld [vmem:[%s3 + $0xe4] sm:$0xf]
  %v103 = vld [vmem:[%s3 + $0xe8] sm:$0xf]
  %v104 = vld [vmem:[%s3 + $0xec] sm:$0xf]
  %v105 = vld [vmem:[%s3 + $0xf0] sm:$0xf]
  %v106 = vld [vmem:[%s3 + $0xf4] sm:$0xf]
  %v107 = vld [vmem:[%s3 + $0xf8] sm:$0xf]
  %v108 = vld [vmem:[%s3 + $0xfc] sm:$0xf]
  %v109 = vld [vmem:[%s3 + $0x100] sm:$0xf]
  %v110 = vld [vmem:[%s3 + $0x104] sm:$0xf]
  %v111 = vld [vmem:[%s3 + $0x108] sm:$0xf]
  %v112 = vld [vmem:[%s3 + $0x10c] sm:$0xf]
  %v113 = vld [vmem:[%s3 + $0x110] sm:$0xf]
  %v114 = vld [vmem:[%s3 + $0x114] sm:$0xf]
  %v115 = vld [vmem:[%s3 + $0x118] sm:$0xf]
  %v116 = vld [vmem:[%s3 + $0x11c] sm:$0xf]
  %v141 = vunpack.c.l.b16 %v21
  %v142 = vunpack.c.h.b16 %v21
  %v143 = vunpack.c.l.b16 %v22
  %v144 = vunpack.c.h.b16 %v22
  %v145 = vunpack.c.l.b16 %v23
  %v146 = vunpack.c.l.b16 %v24
  %v147 = vunpack.c.h.b16 %v24
  %v148 = vunpack.c.l.b16 %v25
  %v149 = vunpack.c.h.b16 %v25
  %v150 = vunpack.c.l.b16 %v26
  %v151 = vunpack.c.l.b16 %v27
  %v152 = vunpack.c.h.b16 %v27
  %v153 = vunpack.c.l.b16 %v28
  %v154 = vunpack.c.h.b16 %v28
  %v155 = vunpack.c.l.b16 %v29
  %v156 = vunpack.c.l.b16 %v30
  %v157 = vunpack.c.h.b16 %v30
  %v158 = vunpack.c.l.b16 %v31
  %v159 = vunpack.c.h.b16 %v31
  %v160 = vunpack.c.l.b16 %v32
  %v161 = vunpack.c.l.b16 %v33
  %v162 = vunpack.c.h.b16 %v33
  %v163 = vunpack.c.l.b16 %v34
  %v164 = vunpack.c.h.b16 %v34
  %v165 = vunpack.c.l.b16 %v35
  %v166 = vunpack.c.l.b16 %v36
  %v167 = vunpack.c.h.b16 %v36
  %v168 = vunpack.c.l.b16 %v37
  %v169 = vunpack.c.h.b16 %v37
  %v170 = vunpack.c.l.b16 %v38
  %v171 = vunpack.c.l.b16 %v39
  %v172 = vunpack.c.h.b16 %v39
  %v173 = vunpack.c.l.b16 %v40
  %v174 = vunpack.c.h.b16 %v40
  %v175 = vunpack.c.l.b16 %v41
  %v176 = vunpack.c.l.b16 %v42
  %v177 = vunpack.c.h.b16 %v42
  %v178 = vunpack.c.l.b16 %v43
  %v179 = vunpack.c.h.b16 %v43
  %v180 = vunpack.c.l.b16 %v44
  %v181 = vpack.c.b16 %v146, %v141
  %v182 = vpack.c.b16 %v147, %v142
  %v183 = vpack.c.b16 %v148, %v143
  %v184 = vpack.c.b16 %v149, %v144
  %v185 = vpack.c.b16 %v150, %v145
  %v186 = vpack.c.b16 %v156, %v151
  %v187 = vpack.c.b16 %v157, %v152
  %v188 = vpack.c.b16 %v158, %v153
  %v189 = vpack.c.b16 %v159, %v154
  %v190 = vpack.c.b16 %v160, %v155
  %v191 = vpack.c.b16 %v166, %v161
  %v192 = vpack.c.b16 %v167, %v162
  %v193 = vpack.c.b16 %v168, %v163
  %v194 = vpack.c.b16 %v169, %v164
  %v195 = vpack.c.b16 %v170, %v165
  %v196 = vpack.c.b16 %v176, %v171
  %v197 = vpack.c.b16 %v177, %v172
  %v198 = vpack.c.b16 %v178, %v173
  %v199 = vpack.c.b16 %v179, %v174
  %v200 = vpack.c.b16 %v180, %v175
  %v289 = vunpack.c.l.b16 %v45
  %v290 = vunpack.c.l.b16 %v46
  %v291 = vunpack.c.l.b16 %v47
  %v292 = vunpack.c.l.b16 %v48
  %v293 = vunpack.c.l.b16 %v49
  %v294 = vunpack.c.l.b16 %v50
  %v295 = vunpack.c.l.b16 %v51
  %v296 = vunpack.c.l.b16 %v52
  %v297 = vunpack.c.l.b16 %v53
  %v298 = vunpack.c.l.b16 %v54
  %v299 = vunpack.c.l.b16 %v55
  %v300 = vunpack.c.l.b16 %v56
  %v301 = vunpack.c.l.b16 %v57
  %v302 = vunpack.c.l.b16 %v58
  %v303 = vunpack.c.l.b16 %v59
  %v304 = vunpack.c.l.b16 %v60
  %v305 = vunpack.c.l.b16 %v61
  %v306 = vunpack.c.l.b16 %v62
  %v307 = vunpack.c.l.b16 %v63
  %v308 = vunpack.c.l.b16 %v64
  %v309 = vunpack.c.l.b16 %v65
  %v310 = vunpack.c.l.b16 %v66
  %v311 = vunpack.c.l.b16 %v67
  %v312 = vunpack.c.l.b16 %v68
  %v313 = vunpack.c.l.b16 %v69
  %v314 = vunpack.c.l.b16 %v70
  %v315 = vunpack.c.l.b16 %v71
  %v316 = vunpack.c.l.b16 %v72
  %v317 = vunpack.c.l.b16 %v73
  %v318 = vunpack.c.l.b16 %v74
  %v319 = vunpack.c.l.b16 %v75
  %v320 = vunpack.c.l.b16 %v76
  %v321 = vunpack.c.l.b16 %v77
  %v322 = vunpack.c.l.b16 %v78
  %v323 = vunpack.c.l.b16 %v79
  %v324 = vunpack.c.l.b16 %v80
  %v325 = vunpack.c.l.b16 %v81
  %v326 = vunpack.c.l.b16 %v82
  %v327 = vunpack.c.l.b16 %v83
  %v328 = vunpack.c.l.b16 %v84
  %v329 = vunpack.c.l.b16 %v85
  %v330 = vunpack.c.l.b16 %v86
  %v331 = vunpack.c.l.b16 %v87
  %v332 = vunpack.c.l.b16 %v88
  %v333 = vunpack.c.l.b16 %v89
  %v334 = vunpack.c.l.b16 %v90
  %v335 = vunpack.c.l.b16 %v91
  %v336 = vunpack.c.l.b16 %v92
  %v337 = vunpack.c.l.b16 %v93
  %v338 = vunpack.c.l.b16 %v94
  %v339 = vunpack.c.l.b16 %v95
  %v340 = vunpack.c.l.b16 %v96
  %v341 = vunpack.c.l.b16 %v97
  %v342 = vunpack.c.l.b16 %v98
  %v343 = vunpack.c.l.b16 %v99
  %v344 = vunpack.c.l.b16 %v100
  %v345 = vunpack.c.l.b16 %v101
  %v346 = vunpack.c.l.b16 %v102
  %v347 = vunpack.c.l.b16 %v103
  %v348 = vunpack.c.l.b16 %v104
  %v349 = vunpack.c.l.b16 %v105
  %v350 = vunpack.c.l.b16 %v106
  %v351 = vunpack.c.l.b16 %v107
  %v352 = vunpack.c.l.b16 %v108
  %v353 = vunpack.c.l.b16 %v109
  %v354 = vunpack.c.l.b16 %v110
  %v355 = vunpack.c.l.b16 %v111
  %v356 = vunpack.c.l.b16 %v112
  %v357 = vunpack.c.l.b16 %v113
  %v358 = vunpack.c.l.b16 %v114
  %v359 = vunpack.c.l.b16 %v115
  %v360 = vunpack.c.l.b16 %v116
  %v361 = vpack.c.b16 %v290, %v289
  %v362 = vpack.c.b16 %v292, %v291
  %v363 = vpack.c.b16 %v294, %v293
  %v364 = vpack.c.b16 %v296, %v295
  %v365 = vpack.c.b16 %v298, %v297
  %v366 = vpack.c.b16 %v300, %v299
  %v367 = vpack.c.b16 %v302, %v301
  %v368 = vpack.c.b16 %v304, %v303
  %v369 = vpack.c.b16 %v306, %v305
  %v370 = vpack.c.b16 %v308, %v307
  %v371 = vpack.c.b16 %v310, %v309
  %v372 = vpack.c.b16 %v312, %v311
  %v373 = vpack.c.b16 %v314, %v313
  %v374 = vpack.c.b16 %v316, %v315
  %v375 = vpack.c.b16 %v318, %v317
  %v376 = vpack.c.b16 %v320, %v319
  %v377 = vpack.c.b16 %v322, %v321
  %v378 = vpack.c.b16 %v324, %v323
  %v379 = vpack.c.b16 %v326, %v325
  %v380 = vpack.c.b16 %v328, %v327
  %v381 = vpack.c.b16 %v330, %v329
  %v382 = vpack.c.b16 %v332, %v331
  %v383 = vpack.c.b16 %v334, %v333
  %v384 = vpack.c.b16 %v336, %v335
  %v385 = vpack.c.b16 %v338, %v337
  %v386 = vpack.c.b16 %v340, %v339
  %v387 = vpack.c.b16 %v342, %v341
  %v388 = vpack.c.b16 %v344, %v343
  %v389 = vpack.c.b16 %v346, %v345
  %v390 = vpack.c.b16 %v348, %v347
  %v391 = vpack.c.b16 %v350, %v349
  %v392 = vpack.c.b16 %v352, %v351
  %v393 = vpack.c.b16 %v354, %v353
  %v394 = vpack.c.b16 %v356, %v355
  %v395 = vpack.c.b16 %v358, %v357
  %v396 = vpack.c.b16 %v360, %v359
  %vm433 = vcmask 523264
  %v435 = vsel %vm433, %v185, 0
  %v438 = vsel %vm433, %v190, 0
  %v441 = vsel %vm433, %v195, 0
  %v444 = vsel %vm433, %v200, 0
  %446 = vmatpush.bf16.msra.mxu0 %v368
  %447 = vmatpush.bf16.msra.mxu0 %v367
  %448 = vmatpush.bf16.msra.mxu0 %v366
  %449 = vmatpush.bf16.msra.mxu0 %v365
  %450 = vmatpush.bf16.msra.mxu0 %v364
  %451 = vmatpush.bf16.msra.mxu0 %v363
  %452 = vmatpush.bf16.msra.mxu0 %v362
  %453 = vmatpush.bf16.msra.mxu0 %v361
  %454 = vmatmul.bf16.gmra.mxu0 %v181
  %v455 = vpop.f32.mrf.mxu0
  %v456 = vadd.f32 0.0, %v455
  %v457 = vpop.f32.mrf.mxu0
  %v458 = vadd.f32 0.0, %v457
  %459 = vmatmul.bf16.gmra.mxu0 %v186
  %v460 = vpop.f32.mrf.mxu0
  %v461 = vadd.f32 0.0, %v460
  %v462 = vpop.f32.mrf.mxu0
  %v463 = vadd.f32 0.0, %v462
  %464 = vmatmul.bf16.gmra.mxu0 %v191
  %v465 = vpop.f32.mrf.mxu0
  %v466 = vadd.f32 0.0, %v465
  %v467 = vpop.f32.mrf.mxu0
  %v468 = vadd.f32 0.0, %v467
  %469 = vmatmul.bf16.gmra.mxu0 %v196
  %v470 = vpop.f32.mrf.mxu0
  %v471 = vadd.f32 0.0, %v470
  %v472 = vpop.f32.mrf.mxu0
  %v473 = vadd.f32 0.0, %v472
  %474 = vdwg.mxu0
  %475 = vmatpush.bf16.msra.mxu0 %v376
  %476 = vmatpush.bf16.msra.mxu0 %v375
  %477 = vmatpush.bf16.msra.mxu0 %v374
  %478 = vmatpush.bf16.msra.mxu0 %v373
  %479 = vmatpush.bf16.msra.mxu0 %v372
  %480 = vmatpush.bf16.msra.mxu0 %v371
  %481 = vmatpush.bf16.msra.mxu0 %v370
  %482 = vmatpush.bf16.msra.mxu0 %v369
  %483 = vmatmul.bf16.gmra.mxu0 %v182
  %v484 = vpop.f32.mrf.mxu0
  %v485 = vadd.f32 %v456, %v484
  %v486 = vpop.f32.mrf.mxu0
  %v487 = vadd.f32 %v458, %v486
  %488 = vmatmul.bf16.gmra.mxu0 %v187
  %v489 = vpop.f32.mrf.mxu0
  %v490 = vadd.f32 %v461, %v489
  %v491 = vpop.f32.mrf.mxu0
  %v492 = vadd.f32 %v463, %v491
  %493 = vmatmul.bf16.gmra.mxu0 %v192
  %v494 = vpop.f32.mrf.mxu0
  %v495 = vadd.f32 %v466, %v494
  %v496 = vpop.f32.mrf.mxu0
  %v497 = vadd.f32 %v468, %v496
  %498 = vmatmul.bf16.gmra.mxu0 %v197
  %v499 = vpop.f32.mrf.mxu0
  %v500 = vadd.f32 %v471, %v499
  %v501 = vpop.f32.mrf.mxu0
  %v502 = vadd.f32 %v473, %v501
  %503 = vdwg.mxu0
  %504 = vmatpush.bf16.msra.mxu0 %v384
  %505 = vmatpush.bf16.msra.mxu0 %v383
  %506 = vmatpush.bf16.msra.mxu0 %v382
  %507 = vmatpush.bf16.msra.mxu0 %v381
  %508 = vmatpush.bf16.msra.mxu0 %v380
  %509 = vmatpush.bf16.msra.mxu0 %v379
  %510 = vmatpush.bf16.msra.mxu0 %v378
  %511 = vmatpush.bf16.msra.mxu0 %v377
  %512 = vmatmul.bf16.gmra.mxu0 %v183
  %v513 = vpop.f32.mrf.mxu0
  %v514 = vadd.f32 %v485, %v513
  %v515 = vpop.f32.mrf.mxu0
  %v516 = vadd.f32 %v487, %v515
  %517 = vmatmul.bf16.gmra.mxu0 %v188
  %v518 = vpop.f32.mrf.mxu0
  %v519 = vadd.f32 %v490, %v518
  %v520 = vpop.f32.mrf.mxu0
  %v521 = vadd.f32 %v492, %v520
  %522 = vmatmul.bf16.gmra.mxu0 %v193
  %v523 = vpop.f32.mrf.mxu0
  %v524 = vadd.f32 %v495, %v523
  %v525 = vpop.f32.mrf.mxu0
  %v526 = vadd.f32 %v497, %v525
  %527 = vmatmul.bf16.gmra.mxu0 %v198
  %v528 = vpop.f32.mrf.mxu0
  %v529 = vadd.f32 %v500, %v528
  %v530 = vpop.f32.mrf.mxu0
  %v531 = vadd.f32 %v502, %v530
  %532 = vdwg.mxu0
  %533 = vmatpush.bf16.msra.mxu0 %v392
  %534 = vmatpush.bf16.msra.mxu0 %v391
  %535 = vmatpush.bf16.msra.mxu0 %v390
  %536 = vmatpush.bf16.msra.mxu0 %v389
  %537 = vmatpush.bf16.msra.mxu0 %v388
  %538 = vmatpush.bf16.msra.mxu0 %v387
  %539 = vmatpush.bf16.msra.mxu0 %v386
  %540 = vmatpush.bf16.msra.mxu0 %v385
  %541 = vmatmul.bf16.gmra.mxu0 %v184
  %v542 = vpop.f32.mrf.mxu0
  %v543 = vadd.f32 %v514, %v542
  %v544 = vpop.f32.mrf.mxu0
  %v545 = vadd.f32 %v516, %v544
  %546 = vmatmul.bf16.gmra.mxu0 %v189
  %v547 = vpop.f32.mrf.mxu0
  %v548 = vadd.f32 %v519, %v547
  %v549 = vpop.f32.mrf.mxu0
  %v550 = vadd.f32 %v521, %v549
  %551 = vmatmul.bf16.gmra.mxu0 %v194
  %v552 = vpop.f32.mrf.mxu0
  %v553 = vadd.f32 %v524, %v552
  %v554 = vpop.f32.mrf.mxu0
  %v555 = vadd.f32 %v526, %v554
  %556 = vmatmul.bf16.gmra.mxu0 %v199
  %v557 = vpop.f32.mrf.mxu0
  %v558 = vadd.f32 %v529, %v557
  %v559 = vpop.f32.mrf.mxu0
  %v560 = vadd.f32 %v531, %v559
  %561 = vdwg.mxu0
  %562 = vmatpush.bf16.msra.mxu0 0
  %563 = vmatpush.bf16.msra.mxu0 0
  %564 = vmatpush.bf16.msra.mxu0 0
  %565 = vmatpush.bf16.msra.mxu0 0
  %566 = vmatpush.bf16.msra.mxu0 %v396
  %567 = vmatpush.bf16.msra.mxu0 %v395
  %568 = vmatpush.bf16.msra.mxu0 %v394
  %569 = vmatpush.bf16.msra.mxu0 %v393
  %570 = vmatmul.bf16.gmra.mxu0 %v435
  %v571 = vpop.f32.mrf.mxu0
  %v572 = vadd.f32 %v543, %v571
  %v573 = vpop.f32.mrf.mxu0
  %v574 = vadd.f32 %v545, %v573
  %575 = vmatmul.bf16.gmra.mxu0 %v438
  %v576 = vpop.f32.mrf.mxu0
  %v577 = vadd.f32 %v548, %v576
  %v578 = vpop.f32.mrf.mxu0
  %v579 = vadd.f32 %v550, %v578
  %580 = vmatmul.bf16.gmra.mxu0 %v441
  %v581 = vpop.f32.mrf.mxu0
  %v582 = vadd.f32 %v553, %v581
  %v583 = vpop.f32.mrf.mxu0
  %v584 = vadd.f32 %v555, %v583
  %585 = vmatmul.bf16.gmra.mxu0 %v444
  %v586 = vpop.f32.mrf.mxu0
  %v587 = vadd.f32 %v558, %v586
  %v588 = vpop.f32.mrf.mxu0
  %v589 = vadd.f32 %v560, %v588
  %590 = vdwg.mxu0
  %v591 = vld [vmem:[%s1] sm:$0xff]
  %v592 = vld [vmem:[%s1 + $0x8] sm:$0xff]
  %v593 = vld [vmem:[%s1 + $0x10] sm:$0xff]
  %v594 = vld [vmem:[%s1 + $0x18] sm:$0xff]
  %v595 = vld [vmem:[%s1 + $0x20] sm:$0xff]
  %v596 = vld [vmem:[%s1 + $0x28] sm:$0xff]
  %v597 = vld [vmem:[%s1 + $0x30] sm:$0xff]
  %v598 = vld [vmem:[%s1 + $0x38] sm:$0xff]
  %600 = vset.pattern.permute.xlu0 0
  %601 = vperm.xlu0 %600, %v591
  %v602 = vpop.permute.xlu0 %601
  %605 = vset.pattern.permute.xlu0 0
  %606 = vperm.xlu0 %605, %v592
  %v607 = vpop.permute.xlu0 %606
  %610 = vset.pattern.permute.xlu0 0
  %611 = vperm.xlu0 %610, %v593
  %v612 = vpop.permute.xlu0 %611
  %615 = vset.pattern.permute.xlu0 0
  %616 = vperm.xlu0 %615, %v594
  %v617 = vpop.permute.xlu0 %616
  %620 = vset.pattern.permute.xlu0 0
  %621 = vperm.xlu0 %620, %v595
  %v622 = vpop.permute.xlu0 %621
  %625 = vset.pattern.permute.xlu0 0
  %626 = vperm.xlu0 %625, %v596
  %v627 = vpop.permute.xlu0 %626
  %630 = vset.pattern.permute.xlu0 0
  %631 = vperm.xlu0 %630, %v597
  %v632 = vpop.permute.xlu0 %631
  %635 = vset.pattern.permute.xlu0 0
  %636 = vperm.xlu0 %635, %v598
  %v637 = vpop.permute.xlu0 %636
  %v639 = vmul.f32 %v572, %v602
  %v640 = vmul.f32 %v574, %v607
  %v641 = vmul.f32 %v577, %v612
  %v642 = vmul.f32 %v579, %v617
  %v643 = vmul.f32 %v582, %v622
  %v644 = vmul.f32 %v584, %v627
  %v645 = vmul.f32 %v587, %v632
  %v646 = vmul.f32 %v589, %v637
  %v647 = vld [vmem:[%s2] sm:$0xff]
  %v648 = vld [vmem:[%s2 + $0x8] sm:$0xff]
  %v649 = vld [vmem:[%s2 + $0x10] sm:$0xff]
  %v650 = vld [vmem:[%s2 + $0x18] sm:$0xff]
  %v651 = vld [vmem:[%s2 + $0x20] sm:$0xff]
  %v652 = vld [vmem:[%s2 + $0x28] sm:$0xff]
  %v653 = vld [vmem:[%s2 + $0x30] sm:$0xff]
  %v654 = vld [vmem:[%s2 + $0x38] sm:$0xff]
  %656 = vset.pattern.permute.xlu0 0
  %657 = vperm.xlu0 %656, %v647
  %v658 = vpop.permute.xlu0 %657
  %661 = vset.pattern.permute.xlu0 0
  %662 = vperm.xlu0 %661, %v648
  %v663 = vpop.permute.xlu0 %662
  %666 = vset.pattern.permute.xlu0 0
  %667 = vperm.xlu0 %666, %v649
  %v668 = vpop.permute.xlu0 %667
  %671 = vset.pattern.permute.xlu0 0
  %672 = vperm.xlu0 %671, %v650
  %v673 = vpop.permute.xlu0 %672
  %676 = vset.pattern.permute.xlu0 0
  %677 = vperm.xlu0 %676, %v651
  %v678 = vpop.permute.xlu0 %677
  %681 = vset.pattern.permute.xlu0 0
  %682 = vperm.xlu0 %681, %v652
  %v683 = vpop.permute.xlu0 %682
  %686 = vset.pattern.permute.xlu0 0
  %687 = vperm.xlu0 %686, %v653
  %v688 = vpop.permute.xlu0 %687
  %691 = vset.pattern.permute.xlu0 0
  %692 = vperm.xlu0 %691, %v654
  %v693 = vpop.permute.xlu0 %692
  %v695 = vadd.f32 %v639, %v658
  %v696 = vadd.f32 %v640, %v663
  %v697 = vadd.f32 %v641, %v668
  %v698 = vadd.f32 %v642, %v673
  %v699 = vadd.f32 %v643, %v678
  %v700 = vadd.f32 %v644, %v683
  %v701 = vadd.f32 %v645, %v688
  %v702 = vadd.f32 %v646, %v693
  %v703 = vld [vmem:[%s4] sm:$0xff]
  %v704 = vld [vmem:[%s4 + $0x8] sm:$0xff]
  %v705 = vld [vmem:[%s4 + $0x10] sm:$0xff]
  %v706 = vld [vmem:[%s4 + $0x18] sm:$0xff]
  %v707 = vld [vmem:[%s4 + $0x20] sm:$0xff]
  %v708 = vld [vmem:[%s4 + $0x28] sm:$0xff]
  %v709 = vld [vmem:[%s4 + $0x30] sm:$0xff]
  %v710 = vld [vmem:[%s4 + $0x38] sm:$0xff]
  %v711 = vadd.f32 %v695, %v703
  %v712 = vadd.f32 %v696, %v704
  %v713 = vadd.f32 %v697, %v705
  %v714 = vadd.f32 %v698, %v706
  %v715 = vadd.f32 %v699, %v707
  %v716 = vadd.f32 %v700, %v708
  %v717 = vadd.f32 %v701, %v709
  %v718 = vadd.f32 %v702, %v710
  %v719 = vmax.f32 %v711, 0.0
  %v720 = vmax.f32 %v712, 0.0
  %v721 = vmax.f32 %v713, 0.0
  %v722 = vmax.f32 %v714, 0.0
  %v723 = vmax.f32 %v715, 0.0
  %v724 = vmax.f32 %v716, 0.0
  %v725 = vmax.f32 %v717, 0.0
  %v726 = vmax.f32 %v718, 0.0
  %vm727 = vcmask 261120
  %728 = vst.msk [vmem:[%s5] sm:$0xff] %vm727, %v719
  %729 = vst.msk [vmem:[%s5 + $0x8] sm:$0xff] %vm727, %v720
  %730 = vst.msk [vmem:[%s5 + $0x10] sm:$0xff] %vm727, %v721
  %731 = vst.msk [vmem:[%s5 + $0x18] sm:$0xff] %vm727, %v722
  %732 = vst.msk [vmem:[%s5 + $0x20] sm:$0xff] %vm727, %v723
  %733 = vst.msk [vmem:[%s5 + $0x28] sm:$0xff] %vm727, %v724
  %734 = vst.msk [vmem:[%s5 + $0x30] sm:$0xff] %vm727, %v725
  %735 = vst.msk [vmem:[%s5 + $0x38] sm:$0xff] %vm727, %v726
  // Predicated region
  $region22: #{resnet18_forward.38} parent=0 // pred_check
    _
  $region23: #{resnet18_forward.38} parent=0 // pred_check_branch
    %737 = sbr.rel (0) target = $region25
  $region24: #{resnet18_forward.38} parent=0 // pred_region
    _
  $region25: #{resnet18_forward.38} parent=0 // pred_fallthru
    _
  // Predicated region
  $region26: #{resnet18_forward.38} parent=0 // pred_check
    _
  $region27: #{resnet18_forward.38} parent=0 // pred_check_branch
    %739 = sbr.rel (0) target = $region29
  $region28: #{resnet18_forward.38} parent=0 // pred_region
    _
  $region29: #{resnet18_forward.38} parent=0 // pred_fallthru
    _

// kernel: resnet18_forward.41
$region0: #{resnet18_forward.41}
  #allocation0 [shape = 'u32[]', space=smem, size = 0x4, offset = 0x4, fixed_abs, tag = 'smem constant byte address 0x4 - core index']
  #allocation1 [shape = 'u32[72,128]{1,0:T(1,128)}', space=vmem, size = 0x9000, scoped, tag = 'internal scratch']
  %s0 = inlined_call_operand.vmem [shape: f32[64,2,16], index: 0, kind: input, shape index: {}]
  %s1 = inlined_call_operand.vmem [shape: f32[10,64], index: 1, kind: input, shape index: {}]
  %s2 = inlined_call_operand.vmem [shape: f32[10,1], index: 2, kind: input, shape index: {}]
  %s3 = inlined_call_operand.vmem [shape: f32[10,2], index: 3, kind: output, shape index: {}]
  %s4 = sld [smem:[#allocation0]]
  $region22: #{resnet18_forward.41} parent=0
    _
  %s6 = ssub.s32 1, %s4
  %s7 = scalar_select 0, %s6, %s4
  // Predicated region
  $region2: #{resnet18_forward.41} parent=0 // pred_check
    _
  $region3: #{resnet18_forward.41} parent=0 // pred_check_branch
    %9 = sbr.rel (0) target = $region5
  $region4: #{resnet18_forward.41} parent=0 // pred_region
    _
  $region5: #{resnet18_forward.41} parent=0 // pred_fallthru
    _
  // Predicated region
  $region6: #{resnet18_forward.41} parent=0 // pred_check
    _
  $region7: #{resnet18_forward.41} parent=0 // pred_check_branch
    %11 = sbr.rel (0) target = $region9
  $region8: #{resnet18_forward.41} parent=0 // pred_region
    _
  $region9: #{resnet18_forward.41} parent=0 // pred_fallthru
    _
  // Predicated region
  $region10: #{resnet18_forward.41} parent=0 // pred_check
    _
  $region11: #{resnet18_forward.41} parent=0 // pred_check_branch
    %13 = sbr.rel (0) target = $region13
  $region12: #{resnet18_forward.41} parent=0 // pred_region
    _
  $region13: #{resnet18_forward.41} parent=0 // pred_fallthru
    _
  %v14 = vld [vmem:[%s0] sm:$0x3]
  %v15 = vld [vmem:[%s0 + $0x2] sm:$0x3]
  %v16 = vld [vmem:[%s0 + $0x4] sm:$0x3]
  %v17 = vld [vmem:[%s0 + $0x6] sm:$0x3]
  %v18 = vld [vmem:[%s0 + $0x8] sm:$0x3]
  %v19 = vld [vmem:[%s0 + $0xa] sm:$0x3]
  %v20 = vld [vmem:[%s0 + $0xc] sm:$0x3]
  %v21 = vld [vmem:[%s0 + $0xe] sm:$0x3]
  %v22 = vld [vmem:[%s0 + $0x10] sm:$0x3]
  %v23 = vld [vmem:[%s0 + $0x12] sm:$0x3]
  %v24 = vld [vmem:[%s0 + $0x14] sm:$0x3]
  %v25 = vld [vmem:[%s0 + $0x16] sm:$0x3]
  %v26 = vld [vmem:[%s0 + $0x18] sm:$0x3]
  %v27 = vld [vmem:[%s0 + $0x1a] sm:$0x3]
  %v28 = vld [vmem:[%s0 + $0x1c] sm:$0x3]
  %v29 = vld [vmem:[%s0 + $0x1e] sm:$0x3]
  %v30 = vld [vmem:[%s0 + $0x20] sm:$0x3]
  %v31 = vld [vmem:[%s0 + $0x22] sm:$0x3]
  %v32 = vld [vmem:[%s0 + $0x24] sm:$0x3]
  %v33 = vld [vmem:[%s0 + $0x26] sm:$0x3]
  %v34 = vld [vmem:[%s0 + $0x28] sm:$0x3]
  %v35 = vld [vmem:[%s0 + $0x2a] sm:$0x3]
  %v36 = vld [vmem:[%s0 + $0x2c] sm:$0x3]
  %v37 = vld [vmem:[%s0 + $0x2e] sm:$0x3]
  %v38 = vld [vmem:[%s0 + $0x30] sm:$0x3]
  %v39 = vld [vmem:[%s0 + $0x32] sm:$0x3]
  %v40 = vld [vmem:[%s0 + $0x34] sm:$0x3]
  %v41 = vld [vmem:[%s0 + $0x36] sm:$0x3]
  %v42 = vld [vmem:[%s0 + $0x38] sm:$0x3]
  %v43 = vld [vmem:[%s0 + $0x3a] sm:$0x3]
  %v44 = vld [vmem:[%s0 + $0x3c] sm:$0x3]
  %v45 = vld [vmem:[%s0 + $0x3e] sm:$0x3]
  %v46 = vld [vmem:[%s0 + $0x40] sm:$0x3]
  %v47 = vld [vmem:[%s0 + $0x42] sm:$0x3]
  %v48 = vld [vmem:[%s0 + $0x44] sm:$0x3]
  %v49 = vld [vmem:[%s0 + $0x46] sm:$0x3]
  %v50 = vld [vmem:[%s0 + $0x48] sm:$0x3]
  %v51 = vld [vmem:[%s0 + $0x4a] sm:$0x3]
  %v52 = vld [vmem:[%s0 + $0x4c] sm:$0x3]
  %v53 = vld [vmem:[%s0 + $0x4e] sm:$0x3]
  %v54 = vld [vmem:[%s0 + $0x50] sm:$0x3]
  %v55 = vld [vmem:[%s0 + $0x52] sm:$0x3]
  %v56 = vld [vmem:[%s0 + $0x54] sm:$0x3]
  %v57 = vld [vmem:[%s0 + $0x56] sm:$0x3]
  %v58 = vld [vmem:[%s0 + $0x58] sm:$0x3]
  %v59 = vld [vmem:[%s0 + $0x5a] sm:$0x3]
  %v60 = vld [vmem:[%s0 + $0x5c] sm:$0x3]
  %v61 = vld [vmem:[%s0 + $0x5e] sm:$0x3]
  %v62 = vld [vmem:[%s0 + $0x60] sm:$0x3]
  %v63 = vld [vmem:[%s0 + $0x62] sm:$0x3]
  %v64 = vld [vmem:[%s0 + $0x64] sm:$0x3]
  %v65 = vld [vmem:[%s0 + $0x66] sm:$0x3]
  %v66 = vld [vmem:[%s0 + $0x68] sm:$0x3]
  %v67 = vld [vmem:[%s0 + $0x6a] sm:$0x3]
  %v68 = vld [vmem:[%s0 + $0x6c] sm:$0x3]
  %v69 = vld [vmem:[%s0 + $0x6e] sm:$0x3]
  %v70 = vld [vmem:[%s0 + $0x70] sm:$0x3]
  %v71 = vld [vmem:[%s0 + $0x72] sm:$0x3]
  %v72 = vld [vmem:[%s0 + $0x74] sm:$0x3]
  %v73 = vld [vmem:[%s0 + $0x76] sm:$0x3]
  %v74 = vld [vmem:[%s0 + $0x78] sm:$0x3]
  %v75 = vld [vmem:[%s0 + $0x7a] sm:$0x3]
  %v76 = vld [vmem:[%s0 + $0x7c] sm:$0x3]
  %v77 = vld [vmem:[%s0 + $0x7e] sm:$0x3]
  %vm78 = vcmask 123904
  %v79 = vsel %vm78, %v14, 0.0
  %80 = vadd.xlane.f32.xlu0 %v79
  %v81 = vpop.xlane.xlu0 %80
  %v82 = vsel %vm78, %v15, 0.0
  %83 = vadd.xlane.f32.xlu0 %v82
  %v84 = vpop.xlane.xlu0 %83
  %v85 = vsel %vm78, %v16, 0.0
  %86 = vadd.xlane.f32.xlu0 %v85
  %v87 = vpop.xlane.xlu0 %86
  %v88 = vsel %vm78, %v17, 0.0
  %89 = vadd.xlane.f32.xlu0 %v88
  %v90 = vpop.xlane.xlu0 %89
  %v91 = vsel %vm78, %v18, 0.0
  %92 = vadd.xlane.f32.xlu0 %v91
  %v93 = vpop.xlane.xlu0 %92
  %v94 = vsel %vm78, %v19, 0.0
  %95 = vadd.xlane.f32.xlu0 %v94
  %v96 = vpop.xlane.xlu0 %95
  %v97 = vsel %vm78, %v20, 0.0
  %98 = vadd.xlane.f32.xlu0 %v97
  %v99 = vpop.xlane.xlu0 %98
  %v100 = vsel %vm78, %v21, 0.0
  %101 = vadd.xlane.f32.xlu0 %v100
  %v102 = vpop.xlane.xlu0 %101
  %v103 = vsel %vm78, %v22, 0.0
  %104 = vadd.xlane.f32.xlu0 %v103
  %v105 = vpop.xlane.xlu0 %104
  %v106 = vsel %vm78, %v23, 0.0
  %107 = vadd.xlane.f32.xlu0 %v106
  %v108 = vpop.xlane.xlu0 %107
  %v109 = vsel %vm78, %v24, 0.0
  %110 = vadd.xlane.f32.xlu0 %v109
  %v111 = vpop.xlane.xlu0 %110
  %v112 = vsel %vm78, %v25, 0.0
  %113 = vadd.xlane.f32.xlu0 %v112
  %v114 = vpop.xlane.xlu0 %113
  %v115 = vsel %vm78, %v26, 0.0
  %116 = vadd.xlane.f32.xlu0 %v115
  %v117 = vpop.xlane.xlu0 %116
  %v118 = vsel %vm78, %v27, 0.0
  %119 = vadd.xlane.f32.xlu0 %v118
  %v120 = vpop.xlane.xlu0 %119
  %v121 = vsel %vm78, %v28, 0.0
  %122 = vadd.xlane.f32.xlu0 %v121
  %v123 = vpop.xlane.xlu0 %122
  %v124 = vsel %vm78, %v29, 0.0
  %125 = vadd.xlane.f32.xlu0 %v124
  %v126 = vpop.xlane.xlu0 %125
  %v127 = vsel %vm78, %v30, 0.0
  %128 = vadd.xlane.f32.xlu0 %v127
  %v129 = vpop.xlane.xlu0 %128
  %v130 = vsel %vm78, %v31, 0.0
  %131 = vadd.xlane.f32.xlu0 %v130
  %v132 = vpop.xlane.xlu0 %131
  %v133 = vsel %vm78, %v32, 0.0
  %134 = vadd.xlane.f32.xlu0 %v133
  %v135 = vpop.xlane.xlu0 %134
  %v136 = vsel %vm78, %v33, 0.0
  %137 = vadd.xlane.f32.xlu0 %v136
  %v138 = vpop.xlane.xlu0 %137
  %v139 = vsel %vm78, %v34, 0.0
  %140 = vadd.xlane.f32.xlu0 %v139
  %v141 = vpop.xlane.xlu0 %140
  %v142 = vsel %vm78, %v35, 0.0
  %143 = vadd.xlane.f32.xlu0 %v142
  %v144 = vpop.xlane.xlu0 %143
  %v145 = vsel %vm78, %v36, 0.0
  %146 = vadd.xlane.f32.xlu0 %v145
  %v147 = vpop.xlane.xlu0 %146
  %v148 = vsel %vm78, %v37, 0.0
  %149 = vadd.xlane.f32.xlu0 %v148
  %v150 = vpop.xlane.xlu0 %149
  %v151 = vsel %vm78, %v38, 0.0
  %152 = vadd.xlane.f32.xlu0 %v151
  %v153 = vpop.xlane.xlu0 %152
  %v154 = vsel %vm78, %v39, 0.0
  %155 = vadd.xlane.f32.xlu0 %v154
  %v156 = vpop.xlane.xlu0 %155
  %v157 = vsel %vm78, %v40, 0.0
  %158 = vadd.xlane.f32.xlu0 %v157
  %v159 = vpop.xlane.xlu0 %158
  %v160 = vsel %vm78, %v41, 0.0
  %161 = vadd.xlane.f32.xlu0 %v160
  %v162 = vpop.xlane.xlu0 %161
  %v163 = vsel %vm78, %v42, 0.0
  %164 = vadd.xlane.f32.xlu0 %v163
  %v165 = vpop.xlane.xlu0 %164
  %v166 = vsel %vm78, %v43, 0.0
  %167 = vadd.xlane.f32.xlu0 %v166
  %v168 = vpop.xlane.xlu0 %167
  %v169 = vsel %vm78, %v44, 0.0
  %170 = vadd.xlane.f32.xlu0 %v169
  %v171 = vpop.xlane.xlu0 %170
  %v172 = vsel %vm78, %v45, 0.0
  %173 = vadd.xlane.f32.xlu0 %v172
  %v174 = vpop.xlane.xlu0 %173
  %v175 = vsel %vm78, %v46, 0.0
  %176 = vadd.xlane.f32.xlu0 %v175
  %v177 = vpop.xlane.xlu0 %176
  %v178 = vsel %vm78, %v47, 0.0
  %179 = vadd.xlane.f32.xlu0 %v178
  %v180 = vpop.xlane.xlu0 %179
  %v181 = vsel %vm78, %v48, 0.0
  %182 = vadd.xlane.f32.xlu0 %v181
  %v183 = vpop.xlane.xlu0 %182
  %v184 = vsel %vm78, %v49, 0.0
  %185 = vadd.xlane.f32.xlu0 %v184
  %v186 = vpop.xlane.xlu0 %185
  %v187 = vsel %vm78, %v50, 0.0
  %188 = vadd.xlane.f32.xlu0 %v187
  %v189 = vpop.xlane.xlu0 %188
  %v190 = vsel %vm78, %v51, 0.0
  %191 = vadd.xlane.f32.xlu0 %v190
  %v192 = vpop.xlane.xlu0 %191
  %v193 = vsel %vm78, %v52, 0.0
  %194 = vadd.xlane.f32.xlu0 %v193
  %v195 = vpop.xlane.xlu0 %194
  %v196 = vsel %vm78, %v53, 0.0
  %197 = vadd.xlane.f32.xlu0 %v196
  %v198 = vpop.xlane.xlu0 %197
  %v199 = vsel %vm78, %v54, 0.0
  %200 = vadd.xlane.f32.xlu0 %v199
  %v201 = vpop.xlane.xlu0 %200
  %v202 = vsel %vm78, %v55, 0.0
  %203 = vadd.xlane.f32.xlu0 %v202
  %v204 = vpop.xlane.xlu0 %203
  %v205 = vsel %vm78, %v56, 0.0
  %206 = vadd.xlane.f32.xlu0 %v205
  %v207 = vpop.xlane.xlu0 %206
  %v208 = vsel %vm78, %v57, 0.0
  %209 = vadd.xlane.f32.xlu0 %v208
  %v210 = vpop.xlane.xlu0 %209
  %v211 = vsel %vm78, %v58, 0.0
  %212 = vadd.xlane.f32.xlu0 %v211
  %v213 = vpop.xlane.xlu0 %212
  %v214 = vsel %vm78, %v59, 0.0
  %215 = vadd.xlane.f32.xlu0 %v214
  %v216 = vpop.xlane.xlu0 %215
  %v217 = vsel %vm78, %v60, 0.0
  %218 = vadd.xlane.f32.xlu0 %v217
  %v219 = vpop.xlane.xlu0 %218
  %v220 = vsel %vm78, %v61, 0.0
  %221 = vadd.xlane.f32.xlu0 %v220
  %v222 = vpop.xlane.xlu0 %221
  %v223 = vsel %vm78, %v62, 0.0
  %224 = vadd.xlane.f32.xlu0 %v223
  %v225 = vpop.xlane.xlu0 %224
  %v226 = vsel %vm78, %v63, 0.0
  %227 = vadd.xlane.f32.xlu0 %v226
  %v228 = vpop.xlane.xlu0 %227
  %v229 = vsel %vm78, %v64, 0.0
  %230 = vadd.xlane.f32.xlu0 %v229
  %v231 = vpop.xlane.xlu0 %230
  %v232 = vsel %vm78, %v65, 0.0
  %233 = vadd.xlane.f32.xlu0 %v232
  %v234 = vpop.xlane.xlu0 %233
  %v235 = vsel %vm78, %v66, 0.0
  %236 = vadd.xlane.f32.xlu0 %v235
  %v237 = vpop.xlane.xlu0 %236
  %v238 = vsel %vm78, %v67, 0.0
  %239 = vadd.xlane.f32.xlu0 %v238
  %v240 = vpop.xlane.xlu0 %239
  %v241 = vsel %vm78, %v68, 0.0
  %242 = vadd.xlane.f32.xlu0 %v241
  %v243 = vpop.xlane.xlu0 %242
  %v244 = vsel %vm78, %v69, 0.0
  %245 = vadd.xlane.f32.xlu0 %v244
  %v246 = vpop.xlane.xlu0 %245
  %v247 = vsel %vm78, %v70, 0.0
  %248 = vadd.xlane.f32.xlu0 %v247
  %v249 = vpop.xlane.xlu0 %248
  %v250 = vsel %vm78, %v71, 0.0
  %251 = vadd.xlane.f32.xlu0 %v250
  %v252 = vpop.xlane.xlu0 %251
  %v253 = vsel %vm78, %v72, 0.0
  %254 = vadd.xlane.f32.xlu0 %v253
  %v255 = vpop.xlane.xlu0 %254
  %v256 = vsel %vm78, %v73, 0.0
  %257 = vadd.xlane.f32.xlu0 %v256
  %v258 = vpop.xlane.xlu0 %257
  %v259 = vsel %vm78, %v74, 0.0
  %260 = vadd.xlane.f32.xlu0 %v259
  %v261 = vpop.xlane.xlu0 %260
  %v262 = vsel %vm78, %v75, 0.0
  %263 = vadd.xlane.f32.xlu0 %v262
  %v264 = vpop.xlane.xlu0 %263
  %v265 = vsel %vm78, %v76, 0.0
  %266 = vadd.xlane.f32.xlu0 %v265
  %v267 = vpop.xlane.xlu0 %266
  %v268 = vsel %vm78, %v77, 0.0
  %269 = vadd.xlane.f32.xlu0 %v268
  %v270 = vpop.xlane.xlu0 %269
  %v271 = vrcp.pop 16.0
  %v272 = vmul.f32 16.0, %v271
  %v273 = vsub.f32 1.0, %v272
  %v274 = vmul.f32 %v271, %v273
  %v275 = vadd.f32 %v271, %v274
  %vm276 = vweird.f32 %v271
  %v277 = vsel %vm276, %v271, %v275
  %v278 = vmul.f32 %v81, %v277
  %v279 = vmul.f32 %v84, %v277
  %v280 = vmul.f32 %v87, %v277
  %v281 = vmul.f32 %v90, %v277
  %v282 = vmul.f32 %v93, %v277
  %v283 = vmul.f32 %v96, %v277
  %v284 = vmul.f32 %v99, %v277
  %v285 = vmul.f32 %v102, %v277
  %v286 = vmul.f32 %v105, %v277
  %v287 = vmul.f32 %v108, %v277
  %v288 = vmul.f32 %v111, %v277
  %v289 = vmul.f32 %v114, %v277
  %v290 = vmul.f32 %v117, %v277
  %v291 = vmul.f32 %v120, %v277
  %v292 = vmul.f32 %v123, %v277
  %v293 = vmul.f32 %v126, %v277
  %v294 = vmul.f32 %v129, %v277
  %v295 = vmul.f32 %v132, %v277
  %v296 = vmul.f32 %v135, %v277
  %v297 = vmul.f32 %v138, %v277
  %v298 = vmul.f32 %v141, %v277
  %v299 = vmul.f32 %v144, %v277
  %v300 = vmul.f32 %v147, %v277
  %v301 = vmul.f32 %v150, %v277
  %v302 = vmul.f32 %v153, %v277
  %v303 = vmul.f32 %v156, %v277
  %v304 = vmul.f32 %v159, %v277
  %v305 = vmul.f32 %v162, %v277
  %v306 = vmul.f32 %v165, %v277
  %v307 = vmul.f32 %v168, %v277
  %v308 = vmul.f32 %v171, %v277
  %v309 = vmul.f32 %v174, %v277
  %v310 = vmul.f32 %v177, %v277
  %v311 = vmul.f32 %v180, %v277
  %v312 = vmul.f32 %v183, %v277
  %v313 = vmul.f32 %v186, %v277
  %v314 = vmul.f32 %v189, %v277
  %v315 = vmul.f32 %v192, %v277
  %v316 = vmul.f32 %v195, %v277
  %v317 = vmul.f32 %v198, %v277
  %v318 = vmul.f32 %v201, %v277
  %v319 = vmul.f32 %v204, %v277
  %v320 = vmul.f32 %v207, %v277
  %v321 = vmul.f32 %v210, %v277
  %v322 = vmul.f32 %v213, %v277
  %v323 = vmul.f32 %v216, %v277
  %v324 = vmul.f32 %v219, %v277
  %v325 = vmul.f32 %v222, %v277
  %v326 = vmul.f32 %v225, %v277
  %v327 = vmul.f32 %v228, %v277
  %v328 = vmul.f32 %v231, %v277
  %v329 = vmul.f32 %v234, %v277
  %v330 = vmul.f32 %v237, %v277
  %v331 = vmul.f32 %v240, %v277
  %v332 = vmul.f32 %v243, %v277
  %v333 = vmul.f32 %v246, %v277
  %v334 = vmul.f32 %v249, %v277
  %v335 = vmul.f32 %v252, %v277
  %v336 = vmul.f32 %v255, %v277
  %v337 = vmul.f32 %v258, %v277
  %v338 = vmul.f32 %v261, %v277
  %v339 = vmul.f32 %v264, %v277
  %v340 = vmul.f32 %v267, %v277
  %v341 = vmul.f32 %v270, %v277
  %v342 = vld [vmem:[%s1] sm:$0xff]
  %v343 = vld [vmem:[%s1 + $0x8] sm:$0x3]
  %v344 = vld [vmem:[%s2] sm:$0xff]
  %v345 = vld [vmem:[%s2 + $0x8] sm:$0x3]
  %347 = vset.pattern.permute.xlu0 0
  %348 = vperm.xlu0 %347, %v344
  %v349 = vpop.permute.xlu0 %348
  %352 = vset.pattern.permute.xlu0 0
  %353 = vperm.xlu0 %352, %v345
  %v354 = vpop.permute.xlu0 %353
  %v420 = vlaneseq
  %v421 = vand.u32 %v420, 127
  %v422 = vperm.slane %v278, %v421
  %v423 = vperm.slane %v279, %v421
  %v424 = vperm.slane %v280, %v421
  %v425 = vperm.slane %v281, %v421
  %v426 = vperm.slane %v282, %v421
  %v427 = vperm.slane %v283, %v421
  %v428 = vperm.slane %v284, %v421
  %v429 = vperm.slane %v285, %v421
  %v430 = vperm.slane %v286, %v421
  %v431 = vperm.slane %v287, %v421
  %v432 = vperm.slane %v288, %v421
  %v433 = vperm.slane %v289, %v421
  %v434 = vperm.slane %v290, %v421
  %v435 = vperm.slane %v291, %v421
  %v436 = vperm.slane %v292, %v421
  %v437 = vperm.slane %v293, %v421
  %v438 = vperm.slane %v294, %v421
  %v439 = vperm.slane %v295, %v421
  %v440 = vperm.slane %v296, %v421
  %v441 = vperm.slane %v297, %v421
  %v442 = vperm.slane %v298, %v421
  %v443 = vperm.slane %v299, %v421
  %v444 = vperm.slane %v300, %v421
  %v445 = vperm.slane %v301, %v421
  %v446 = vperm.slane %v302, %v421
  %v447 = vperm.slane %v303, %v421
  %v448 = vperm.slane %v304, %v421
  %v449 = vperm.slane %v305, %v421
  %v450 = vperm.slane %v306, %v421
  %v451 = vperm.slane %v307, %v421
  %v452 = vperm.slane %v308, %v421
  %v453 = vperm.slane %v309, %v421
  %v454 = vperm.slane %v310, %v421
  %v455 = vperm.slane %v311, %v421
  %v456 = vperm.slane %v312, %v421
  %v457 = vperm.slane %v313, %v421
  %v458 = vperm.slane %v314, %v421
  %v459 = vperm.slane %v315, %v421
  %v460 = vperm.slane %v316, %v421
  %v461 = vperm.slane %v317, %v421
  %v462 = vperm.slane %v318, %v421
  %v463 = vperm.slane %v319, %v421
  %v464 = vperm.slane %v320, %v421
  %v465 = vperm.slane %v321, %v421
  %v466 = vperm.slane %v322, %v421
  %v467 = vperm.slane %v323, %v421
  %v468 = vperm.slane %v324, %v421
  %v469 = vperm.slane %v325, %v421
  %v470 = vperm.slane %v326, %v421
  %v471 = vperm.slane %v327, %v421
  %v472 = vperm.slane %v328, %v421
  %v473 = vperm.slane %v329, %v421
  %v474 = vperm.slane %v330, %v421
  %v475 = vperm.slane %v331, %v421
  %v476 = vperm.slane %v332, %v421
  %v477 = vperm.slane %v333, %v421
  %v478 = vperm.slane %v334, %v421
  %v479 = vperm.slane %v335, %v421
  %v480 = vperm.slane %v336, %v421
  %v481 = vperm.slane %v337, %v421
  %v482 = vperm.slane %v338, %v421
  %v483 = vperm.slane %v339, %v421
  %v484 = vperm.slane %v340, %v421
  %v485 = vperm.slane %v341, %v421
  %vm486 = vcmask 1041409
  %v487 = vsel %vm486, %v423, %v422
  %vm488 = vcmask 1042434
  %v489 = vsel %vm488, %v424, %v487
  %vm490 = vcmask 1043459
  %v491 = vsel %vm490, %v425, %v489
  %vm492 = vcmask 1044484
  %v493 = vsel %vm492, %v426, %v491
  %vm494 = vcmask 1045509
  %v495 = vsel %vm494, %v427, %v493
  %vm496 = vcmask 1046534
  %v497 = vsel %vm496, %v428, %v495
  %vm498 = vcmask 1047559
  %v499 = vsel %vm498, %v429, %v497
  %v500 = vsel %vm486, %v431, %v430
  %v501 = vsel %vm488, %v432, %v500
  %v502 = vsel %vm490, %v433, %v501
  %v503 = vsel %vm492, %v434, %v502
  %v504 = vsel %vm494, %v435, %v503
  %v505 = vsel %vm496, %v436, %v504
  %v506 = vsel %vm498, %v437, %v505
  %v507 = vsel %vm486, %v439, %v438
  %v508 = vsel %vm488, %v440, %v507
  %v509 = vsel %vm490, %v441, %v508
  %v510 = vsel %vm492, %v442, %v509
  %v511 = vsel %vm494, %v443, %v510
  %v512 = vsel %vm496, %v444, %v511
  %v513 = vsel %vm498, %v445, %v512
  %v514 = vsel %vm486, %v447, %v446
  %v515 = vsel %vm488, %v448, %v514
  %v516 = vsel %vm490, %v449, %v515
  %v517 = vsel %vm492, %v450, %v516
  %v518 = vsel %vm494, %v451, %v517
  %v519 = vsel %vm496, %v452, %v518
  %v520 = vsel %vm498, %v453, %v519
  %v521 = vsel %vm486, %v455, %v454
  %v522 = vsel %vm488, %v456, %v521
  %v523 = vsel %vm490, %v457, %v522
  %v524 = vsel %vm492, %v458, %v523
  %v525 = vsel %vm494, %v459, %v524
  %v526 = vsel %vm496, %v460, %v525
  %v527 = vsel %vm498, %v461, %v526
  %v528 = vsel %vm486, %v463, %v462
  %v529 = vsel %vm488, %v464, %v528
  %v530 = vsel %vm490, %v465, %v529
  %v531 = vsel %vm492, %v466, %v530
  %v532 = vsel %vm494, %v467, %v531
  %v533 = vsel %vm496, %v468, %v532
  %v534 = vsel %vm498, %v469, %v533
  %v535 = vsel %vm486, %v471, %v470
  %v536 = vsel %vm488, %v472, %v535
  %v537 = vsel %vm490, %v473, %v536
  %v538 = vsel %vm492, %v474, %v537
  %v539 = vsel %vm494, %v475, %v538
  %v540 = vsel %vm496, %v476, %v539
  %v541 = vsel %vm498, %v477, %v540
  %v542 = vsel %vm486, %v479, %v478
  %v543 = vsel %vm488, %v480, %v542
  %v544 = vsel %vm490, %v481, %v543
  %v545 = vsel %vm492, %v482, %v544
  %v546 = vsel %vm494, %v483, %v545
  %v547 = vsel %vm496, %v484, %v546
  %v548 = vsel %vm498, %v485, %v547
  %vm557 = vcmask 523264
  %v559 = vsel %vm557, %v342, 0
  %v562 = vsel %vm557, %v343, 0
  %564 = vmatpush.msra.mxu0 0.0
  %565 = vmatpush.msra.mxu0 0.0
  %566 = vmatpush.msra.mxu0 0.0
  %567 = vmatpush.msra.mxu0 0.0
  %568 = vmatpush.msra.mxu0 0.0
  %569 = vmatpush.msra.mxu0 0.0
  %570 = vmatpush.msra.mxu0 0.0
  %571 = vmatpush.msra.mxu0 0.0
  %572 = vmatpush.msra.mxu0 %v548
  %573 = vmatpush.msra.mxu0 %v541
  %574 = vmatpush.msra.mxu0 %v534
  %575 = vmatpush.msra.mxu0 %v527
  %576 = vmatpush.msra.mxu0 %v520
  %577 = vmatpush.msra.mxu0 %v513
  %578 = vmatpush.msra.mxu0 %v506
  %579 = vmatpush.msra.mxu0 %v499
  %580 = vmatmul.f32.gmra.mxu0 %v559
  %v581 = vpop.f32.mrf.mxu0
  %v582 = vadd.f32 %v349, %v581
  %583 = vmatmul.f32.gmra.mxu0 %v562
  %v584 = vpop.f32.mrf.mxu0
  %v585 = vadd.f32 %v354, %v584
  %586 = vdwg.mxu0
  %vm587 = vcmask 15360
  %588 = vst.msk [vmem:[%s3] sm:$0xff] %vm587, %v582
  %vm589 = vcmask 9216
  %590 = vst.msk [vmem:[%s3 + $0x8] sm:$0x3] %vm589, %v585
  // Predicated region
  $region14: #{resnet18_forward.41} parent=0 // pred_check
    _
  $region15: #{resnet18_forward.41} parent=0 // pred_check_branch
    %592 = sbr.rel (0) target = $region17
  $region16: #{resnet18_forward.41} parent=0 // pred_region
    _
  $region17: #{resnet18_forward.41} parent=0 // pred_fallthru
    _
  // Predicated region
  $region18: #{resnet18_forward.41} parent=0 // pred_check
    _
  $region19: #{resnet18_forward.41} parent=0 // pred_check_branch
    %594 = sbr.rel (0) target = $region21
  $region20: #{resnet18_forward.41} parent=0 // pred_region
    _
  $region21: #{resnet18_forward.41} parent=0 // pred_fallthru
    _

</llo_original>
